<compile_context>
chip_gen: v6e
topology: v6e:2x2x1
jax: 0.10.0
libtpu: 0.0.40
codegen_flags: <defaults>
</compile_context>

<pallas_src>
import math

import numpy as np
import jax
import jax.numpy as jnp
from jax.experimental import pallas as pl
from jax.experimental.pallas import tpu as pltpu

# ---- small config, consistent with the module (heads | d_model) ----
D_MODEL = 48
HEADS = 6
D_K = D_MODEL // HEADS
DEPTH = 2                       # module uses 6; small for the demo
VOCAB_SIZE = 32                 # len(all_chars) + 2  (synthetic)
PAD_TOKEN = VOCAB_SIZE - 1
SEQ_LEN = 16                    # model length; idx carries SEQ_LEN + 1 tokens
BATCH = 2
LN_EPS = 1e-8                   # module explicitly uses eps=1e-08


def _build_rot_matrix():
    """Signed block-diagonal permutation R with (x @ R) == rotate_half(x)
    applied independently inside every d_k-wide head block of the D axis."""
    half = D_K // 2
    rot = np.zeros((D_MODEL, D_MODEL), np.float32)
    for h in range(HEADS):
        base = h * D_K
        for j in range(half):
            rot[base + half + j, base + j] = -1.0   # first-half output = -x2
            rot[base + j, base + half + j] = 1.0    # second-half output = +x1
    return rot


_ROT_NP = _build_rot_matrix()


def _rope_tables(B, L):
    # TODO(synk): RotaryEmbedding class is not given in the reference; using
    # the standard half-split RoPE convention (theta_i = 10000^(-2i/d_k)).
    half = D_K // 2
    inv_freq = 1.0 / (10000.0 ** (jnp.arange(half, dtype=jnp.float32) / half))
    pos = jnp.arange(L, dtype=jnp.float32)
    freqs = pos[:, None] * inv_freq[None, :]                # [L, half]
    cos = jnp.cos(freqs)
    sin = jnp.sin(freqs)
    cos = jnp.tile(jnp.concatenate([cos, cos], axis=-1), (1, HEADS))   # [L, D]
    sin = jnp.tile(jnp.concatenate([sin, sin], axis=-1), (1, HEADS))
    return jnp.tile(cos, (B, 1)), jnp.tile(sin, (B, 1))     # [B*L, D]


# ------------------------- fused forward Pallas kernel ----------------------

def _fused_forward_kernel(x_ref, cos_ref, sin_ref, rot_ref,
                          w_in_ref, w_o_ref, c_fc_ref, c_proj_ref,
                          lm_w_ref, lm_b_ref, onehot_ref,
                          loss_ref, cnt_ref):
    f32 = jnp.float32
    L = SEQ_LEN

    x = x_ref[...]                       # [B*L, D]
    cos = cos_ref[...]
    sin = sin_ref[...]
    rot = rot_ref[...]

    row = jax.lax.broadcasted_iota(jnp.int32, (L, L), 0)
    col = jax.lax.broadcasted_iota(jnp.int32, (L, L), 1)
    causal_masked = col > row            # True where attention is disallowed

    def layer_norm(h):                   # F.layer_norm, eps=1e-8, no affine
        mu = jnp.mean(h, axis=-1, keepdims=True)
        hc = h - mu
        var = jnp.mean(hc * hc, axis=-1, keepdims=True)
        return hc * jax.lax.rsqrt(var + LN_EPS)

    def erf_approx(z):
        # TODO(synk): exact torch.erf replaced by the Abramowitz-Stegun 7.1.26
        # polynomial (max abs err ~1.5e-7) so the kernel only needs exp on EUP.
        sgn = jnp.where(z >= 0.0, 1.0, -1.0)
        a = jnp.abs(z)
        t = 1.0 / (1.0 + 0.3275911 * a)
        poly = ((((1.061405429 * t - 1.453152027) * t + 1.421413741) * t
                 - 0.284496736) * t + 0.254829592) * t
        return sgn * (1.0 - poly * jnp.exp(-a * a))

    def gelu_exact(h):                   # F.gelu default (erf form)
        return 0.5 * h * (1.0 + erf_approx(h * 0.7071067811865476))

    scale = 1.0 / math.sqrt(D_K)         # SDPA default scale

    for layer in range(DEPTH):
        # ------------------------- attention sub-block ----------------------
        h = layer_norm(x)
        qkv = jnp.dot(h, w_in_ref[layer], preferred_element_type=f32)   # [BL,3D]
        q = qkv[:, 0 * D_MODEL:1 * D_MODEL]
        k = qkv[:, 1 * D_MODEL:2 * D_MODEL]
        v = qkv[:, 2 * D_MODEL:3 * D_MODEL]

        # RoPE on the full [B*L, D] slab: rotate-half via one MXU matmul with a
        # signed permutation matrix, cos/sin tables tiled per head.
        q = q * cos + jnp.dot(q, rot, preferred_element_type=f32) * sin
        k = k * cos + jnp.dot(k, rot, preferred_element_type=f32) * sin

        batch_outs = []
        for b in range(BATCH):                       # static, unrolled
            r0 = b * L
            head_outs = []
            for hd in range(HEADS):                  # static, unrolled
                c0 = hd * D_K
                qh = q[r0:r0 + L, c0:c0 + D_K]
                kh = k[r0:r0 + L, c0:c0 + D_K]
                vh = v[r0:r0 + L, c0:c0 + D_K]
                s = jax.lax.dot_general(
                    qh, kh, (((1,), (1,)), ((), ())),
                    preferred_element_type=f32) * scale
                s = jnp.where(causal_masked, -jnp.inf, s)      # is_causal=True
                m = jnp.max(s, axis=-1, keepdims=True)
                p = jnp.exp(s - m)
                p = p * pl.reciprocal(jnp.sum(p, axis=-1, keepdims=True),
                                      approx=True)
                head_outs.append(jnp.dot(p, vh, preferred_element_type=f32))
            batch_outs.append(jnp.concatenate(head_outs, axis=-1))   # [L, D]
        attn = jnp.concatenate(batch_outs, axis=0)                   # [BL, D]
        x = x + jnp.dot(attn, w_o_ref[layer], preferred_element_type=f32)

        # ----------------------------- MLP sub-block ------------------------
        h = layer_norm(x)
        h = jnp.dot(h, c_fc_ref[layer], preferred_element_type=f32)
        h = gelu_exact(h)
        x = x + jnp.dot(h, c_proj_ref[layer], preferred_element_type=f32)

    # ------------- final LN + lm_head (+bias) + cross entropy ---------------
    xf = layer_norm(x)
    logits = jnp.dot(xf, lm_w_ref[...], preferred_element_type=f32) + lm_b_ref[...]
    mx = jnp.max(logits, axis=-1, keepdims=True)
    lse = jnp.log(jnp.sum(jnp.exp(logits - mx), axis=-1, keepdims=True)) + mx
    onehot = onehot_ref[...]                          # all-zero row for pad
    picked = jnp.sum(logits * onehot, axis=-1, keepdims=True)
    valid = jnp.sum(onehot, axis=-1, keepdims=True)   # 1.0 iff target != pad
    loss_ref[0] = jnp.sum((lse - picked) * valid)
    cnt_ref[0] = jnp.sum(valid)


# ------------------------------- wrapper (JAX) -------------------------------

def transformer_forward(params, idx):
    # idx: [B, T] int32. Default path (selectone == -1): returns scalar loss.
    x_tok = idx[:, :-1]
    targets = idx[:, 1:].reshape(-1)
    B, L = x_tok.shape
    assert B == BATCH and L == SEQ_LEN

    # Embedding gather stays in JAX (tiny, no clean Pallas win at this size).
    x = jnp.take(params["emb"], x_tok, axis=0).reshape(B * L, D_MODEL)
    cos_bl, sin_bl = _rope_tables(B, L)
    classes = jnp.arange(VOCAB_SIZE - 1, dtype=jnp.int32)
    onehot = (targets[:, None] == classes[None, :]).astype(jnp.float32)
    lm_b = params["lm_b"].reshape(1, VOCAB_SIZE - 1)

    vmem = pl.BlockSpec(memory_space=pltpu.MemorySpace.VMEM)
    smem = pl.BlockSpec(memory_space=pltpu.MemorySpace.SMEM)
    loss_sum, cnt = pl.pallas_call(
        _fused_forward_kernel,
        out_shape=(jax.ShapeDtypeStruct((1,), jnp.float32),
                   jax.ShapeDtypeStruct((1,), jnp.float32)),
        in_specs=[vmem] * 11,
        out_specs=(smem, smem),
    )(x, cos_bl, sin_bl, jnp.asarray(_ROT_NP),
      params["w_in"], params["w_o"], params["c_fc"], params["c_proj"],
      params["lm_w"], lm_b, onehot)

    # F.cross_entropy(..., ignore_index=pad): mean over non-pad targets,
    # guarded against the all-pad 0/0 edge case (return 0 instead of NaN).
    return jnp.where(cnt[0] > 0, loss_sum[0] / jnp.maximum(cnt[0], 1.0), 0.0)


# ------------------------- pure-JAX reference (check) ------------------------

def _layer_norm_ref(x):
    mu = jnp.mean(x, -1, keepdims=True)
    xc = x - mu
    var = jnp.mean(xc * xc, -1, keepdims=True)
    return xc * jax.lax.rsqrt(var + LN_EPS)


def _rope_ref(x):                       # x: [B, H, L, d_k]
    half = x.shape[-1] // 2
    L = x.shape[2]
    inv_freq = 1.0 / (10000.0 ** (jnp.arange(half, dtype=jnp.float32) / half))
    pos = jnp.arange(L, dtype=jnp.float32)
    freqs = pos[:, None] * inv_freq[None, :]
    cos = jnp.cos(freqs)[None, None]
    sin = jnp.sin(freqs)[None, None]
    x1, x2 = x[..., :half], x[..., half:]
    return jnp.concatenate([x1 * cos - x2 * sin, x1 * sin + x2 * cos], axis=-1)


def reference_forward(params, idx):
    with jax.default_matmul_precision("highest"):
        x_tok = idx[:, :-1]
        targets = idx[:, 1:].reshape(-1)
        B, L = x_tok.shape
        x = jnp.take(params["emb"], x_tok, axis=0)
        for layer in range(DEPTH):
            h = _layer_norm_ref(x)
            qkv = h @ params["w_in"][layer]
            q, k, v = jnp.split(qkv, 3, axis=-1)
            heads = lambda t: t.reshape(B, L, HEADS, D_K).transpose(0, 2, 1, 3)
            q, k, v = heads(q), heads(k), heads(v)
            q, k = _rope_ref(q), _rope_ref(k)
            s = jnp.einsum("bhqd,bhkd->bhqk", q, k) / math.sqrt(D_K)
            mask = jnp.tril(jnp.ones((L, L), dtype=bool))
            s = jnp.where(mask[None, None], s, -jnp.inf)
            p = jax.nn.softmax(s, axis=-1)
            o = jnp.einsum("bhqk,bhkd->bhqd", p, v)
            o = o.transpose(0, 2, 1, 3).reshape(B, L, D_MODEL)
            x = x + o @ params["w_o"][layer]
            h = _layer_norm_ref(x)
            h = jax.nn.gelu(h @ params["c_fc"][layer], approximate=False)
            x = x + h @ params["c_proj"][layer]
        x = _layer_norm_ref(x).reshape(B * L, D_MODEL)
        logits = x @ params["lm_w"] + params["lm_b"][None, :]
        logp = jax.nn.log_softmax(logits, axis=-1)
        valid = (targets != PAD_TOKEN).astype(jnp.float32)
        tgt = jnp.where(targets != PAD_TOKEN, targets, 0)
        nll = -jnp.take_along_axis(logp, tgt[:, None], axis=-1)[:, 0]
        return jnp.sum(nll * valid) / jnp.maximum(jnp.sum(valid), 1.0)


# ---------------------------------- params -----------------------------------

def init_params(key):
    keys = jax.random.split(key, 6)
    std = 0.02
    return {
        # kaiming_normal_ on embedding: std = sqrt(2 / fan_in), fan_in = d_model
        "emb": jax.random.normal(keys[0], (VOCAB_SIZE, D_MODEL), jnp.float32)
               * math.sqrt(2.0 / D_MODEL),
        "lm_w": jax.random.normal(keys[1], (D_MODEL, VOCAB_SIZE - 1), jnp.float32) * std,
        "lm_b": jnp.zeros((VOCAB_SIZE - 1,), jnp.float32),
        "w_in": jax.random.normal(keys[2], (DEPTH, D_MODEL, 3 * D_MODEL), jnp.float32) * std,
        "w_o": jax.random.normal(keys[3], (DEPTH, D_MODEL, D_MODEL), jnp.float32) * std,
        "c_fc": jax.random.normal(keys[4], (DEPTH, D_MODEL, 4 * D_MODEL), jnp.float32) * std,
        "c_proj": jax.random.normal(keys[5], (DEPTH, 4 * D_MODEL, D_MODEL), jnp.float32) * std,
    }


if __name__ == "__main__":
    key = jax.random.PRNGKey(0)
    pkey, dkey = jax.random.split(key)
    params = init_params(pkey)
    idx = jax.random.randint(dkey, (BATCH, SEQ_LEN + 1), 0, VOCAB_SIZE,
                             dtype=jnp.int32)

    loss = jax.jit(transformer_forward)(params, idx)
    jax.block_until_ready(loss)

    assert loss.shape == () and bool(jnp.isfinite(loss))
    ref = reference_forward(params, idx)
    assert bool(jnp.allclose(loss, ref, rtol=2e-2, atol=2e-2)), (loss, ref)
    print("KERNEL_OK")
</pallas_src>

<mosaic_0001>
module attributes {stable_mosaic.version = 11 : i64} {
  func.func @_fused_forward_kernel(%arg0: memref<32x48xf32, #tpu.memory_space<vmem>>, %arg1: memref<32x48xf32, #tpu.memory_space<vmem>>, %arg2: memref<32x48xf32, #tpu.memory_space<vmem>>, %arg3: memref<48x48xf32, #tpu.memory_space<vmem>>, %arg4: memref<2x48x144xf32, #tpu.memory_space<vmem>>, %arg5: memref<2x48x48xf32, #tpu.memory_space<vmem>>, %arg6: memref<2x48x192xf32, #tpu.memory_space<vmem>>, %arg7: memref<2x192x48xf32, #tpu.memory_space<vmem>>, %arg8: memref<48x31xf32, #tpu.memory_space<vmem>>, %arg9: memref<1x31xf32, #tpu.memory_space<vmem>>, %arg10: memref<32x31xf32, #tpu.memory_space<vmem>>, %arg11: memref<1xf32, #tpu.memory_space<smem>>, %arg12: memref<1xf32, #tpu.memory_space<smem>>) attributes {dimension_semantics = [], scalar_prefetch = 0 : i64, scratch_operands = 0 : i64, tpu.core_type = #tpu.core_type<tc>} {
    %c0 = arith.constant 0 : index
    %c0_0 = arith.constant 0 : index
    %0 = vector.load %arg0[%c0, %c0_0] : memref<32x48xf32, #tpu.memory_space<vmem>>, vector<32x48xf32>
    %c0_1 = arith.constant 0 : index
    %c0_2 = arith.constant 0 : index
    %1 = vector.load %arg1[%c0_1, %c0_2] : memref<32x48xf32, #tpu.memory_space<vmem>>, vector<32x48xf32>
    %c0_3 = arith.constant 0 : index
    %c0_4 = arith.constant 0 : index
    %2 = vector.load %arg2[%c0_3, %c0_4] : memref<32x48xf32, #tpu.memory_space<vmem>>, vector<32x48xf32>
    %c0_5 = arith.constant 0 : index
    %c0_6 = arith.constant 0 : index
    %3 = vector.load %arg3[%c0_5, %c0_6] : memref<48x48xf32, #tpu.memory_space<vmem>>, vector<48x48xf32>
    %4 = tpu.iota {dimensions = array<i32: 0>} : vector<16x16xi32>
    %5 = tpu.iota {dimensions = array<i32: 1>} : vector<16x16xi32>
    %6 = arith.cmpi sgt, %5, %4 : vector<16x16xi32>
    %cst = arith.constant dense<0.000000e+00> : vector<32xf32>
    %7 = vector.multi_reduction <add>, %0, %cst [1] : vector<32x48xf32> to vector<32xf32>
    %8 = vector.shape_cast %7 : vector<32xf32> to vector<32x1xf32>
    %cst_7 = arith.constant 4.800000e+01 : f32
    %9 = vector.broadcast %cst_7 : f32 to vector<32x1xf32>
    %10 = arith.divf %8, %9 : vector<32x1xf32>
    %11 = vector.broadcast %10 : vector<32x1xf32> to vector<32x48xf32>
    %12 = arith.subf %0, %11 : vector<32x48xf32>
    %13 = arith.mulf %12, %12 : vector<32x48xf32>
    %cst_8 = arith.constant dense<0.000000e+00> : vector<32xf32>
    %14 = vector.multi_reduction <add>, %13, %cst_8 [1] : vector<32x48xf32> to vector<32xf32>
    %15 = vector.shape_cast %14 : vector<32xf32> to vector<32x1xf32>
    %cst_9 = arith.constant 4.800000e+01 : f32
    %16 = vector.broadcast %cst_9 : f32 to vector<32x1xf32>
    %17 = arith.divf %15, %16 : vector<32x1xf32>
    %cst_10 = arith.constant 9.99999993E-9 : f32
    %18 = vector.broadcast %cst_10 : f32 to vector<32x1xf32>
    %19 = arith.addf %17, %18 : vector<32x1xf32>
    %20 = math.rsqrt %19 : vector<32x1xf32>
    %21 = vector.broadcast %20 : vector<32x1xf32> to vector<32x48xf32>
    %22 = arith.mulf %12, %21 : vector<32x48xf32>
    %c0_11 = arith.constant 0 : index
    %c0_12 = arith.constant 0 : index
    %c0_13 = arith.constant 0 : index
    %23 = vector.load %arg4[%c0_11, %c0_12, %c0_13] : memref<2x48x144xf32, #tpu.memory_space<vmem>>, vector<1x48x144xf32>
    %24 = vector.shape_cast %23 : vector<1x48x144xf32> to vector<48x144xf32>
    %cst_14 = arith.constant dense<0.000000e+00> : vector<32x144xf32>
    %25 = tpu.matmul %22, %24, %cst_14 {dimension_numbers = #tpu.dot_dimension_numbers<[1], [0], [0], [1], [0, 0, 1, 1], [], []>} : vector<32x48xf32>, vector<48x144xf32>, vector<32x144xf32> -> vector<32x144xf32>
    %26 = vector.extract_strided_slice %25 {offsets = [0, 0], sizes = [32, 48], strides = [1, 1]} : vector<32x144xf32> to vector<32x48xf32>
    %27 = vector.extract_strided_slice %25 {offsets = [0, 48], sizes = [32, 48], strides = [1, 1]} : vector<32x144xf32> to vector<32x48xf32>
    %28 = vector.extract_strided_slice %25 {offsets = [0, 96], sizes = [32, 48], strides = [1, 1]} : vector<32x144xf32> to vector<32x48xf32>
    %29 = arith.mulf %26, %1 : vector<32x48xf32>
    %cst_15 = arith.constant dense<0.000000e+00> : vector<32x48xf32>
    %30 = tpu.matmul %26, %3, %cst_15 {dimension_numbers = #tpu.dot_dimension_numbers<[1], [0], [0], [1], [0, 0, 1, 1], [], []>} : vector<32x48xf32>, vector<48x48xf32>, vector<32x48xf32> -> vector<32x48xf32>
    %31 = arith.mulf %30, %2 : vector<32x48xf32>
    %32 = arith.addf %29, %31 : vector<32x48xf32>
    %33 = arith.mulf %27, %1 : vector<32x48xf32>
    %cst_16 = arith.constant dense<0.000000e+00> : vector<32x48xf32>
    %34 = tpu.matmul %27, %3, %cst_16 {dimension_numbers = #tpu.dot_dimension_numbers<[1], [0], [0], [1], [0, 0, 1, 1], [], []>} : vector<32x48xf32>, vector<48x48xf32>, vector<32x48xf32> -> vector<32x48xf32>
    %35 = arith.mulf %34, %2 : vector<32x48xf32>
    %36 = arith.addf %33, %35 : vector<32x48xf32>
    %37 = vector.extract_strided_slice %32 {offsets = [0, 0], sizes = [16, 8], strides = [1, 1]} : vector<32x48xf32> to vector<16x8xf32>
    %38 = vector.extract_strided_slice %36 {offsets = [0, 0], sizes = [16, 8], strides = [1, 1]} : vector<32x48xf32> to vector<16x8xf32>
    %39 = vector.extract_strided_slice %28 {offsets = [0, 0], sizes = [16, 8], strides = [1, 1]} : vector<32x48xf32> to vector<16x8xf32>
    %cst_17 = arith.constant dense<0.000000e+00> : vector<16x16xf32>
    %40 = tpu.matmul %37, %38, %cst_17 {dimension_numbers = #tpu.dot_dimension_numbers<[1], [1], [0], [0], [0, 0, 1, 0], [], []>} : vector<16x8xf32>, vector<16x8xf32>, vector<16x16xf32> -> vector<16x16xf32>
    %cst_18 = arith.constant 0.353553385 : f32
    %41 = vector.broadcast %cst_18 : f32 to vector<16x16xf32>
    %42 = arith.mulf %40, %41 : vector<16x16xf32>
    %cst_19 = arith.constant 0xFF800000 : f32
    %43 = vector.broadcast %cst_19 : f32 to vector<16x16xf32>
    %44 = arith.select %6, %43, %42 : vector<16x16xi1>, vector<16x16xf32>
    %cst_20 = arith.constant dense<0xFF800000> : vector<16xf32>
    %45 = vector.multi_reduction <maximumf>, %44, %cst_20 [1] : vector<16x16xf32> to vector<16xf32>
    %46 = vector.shape_cast %45 : vector<16xf32> to vector<16x1xf32>
    %47 = vector.broadcast %46 : vector<16x1xf32> to vector<16x16xf32>
    %48 = arith.subf %44, %47 : vector<16x16xf32>
    %49 = math.exp %48 : vector<16x16xf32>
    %cst_21 = arith.constant dense<0.000000e+00> : vector<16xf32>
    %50 = vector.multi_reduction <add>, %49, %cst_21 [1] : vector<16x16xf32> to vector<16xf32>
    %51 = vector.shape_cast %50 : vector<16xf32> to vector<16x1xf32>
    %52 = tpu.reciprocal %51 {approx = true} : vector<16x1xf32> -> vector<16x1xf32>
    %53 = vector.broadcast %52 : vector<16x1xf32> to vector<16x16xf32>
    %54 = arith.mulf %49, %53 : vector<16x16xf32>
    %cst_22 = arith.constant dense<0.000000e+00> : vector<16x8xf32>
    %55 = tpu.matmul %54, %39, %cst_22 {dimension_numbers = #tpu.dot_dimension_numbers<[1], [0], [0], [1], [0, 0, 1, 1], [], []>} : vector<16x16xf32>, vector<16x8xf32>, vector<16x8xf32> -> vector<16x8xf32>
    %56 = vector.extract_strided_slice %32 {offsets = [0, 8], sizes = [16, 8], strides = [1, 1]} : vector<32x48xf32> to vector<16x8xf32>
    %57 = vector.extract_strided_slice %36 {offsets = [0, 8], sizes = [16, 8], strides = [1, 1]} : vector<32x48xf32> to vector<16x8xf32>
    %58 = vector.extract_strided_slice %28 {offsets = [0, 8], sizes = [16, 8], strides = [1, 1]} : vector<32x48xf32> to vector<16x8xf32>
    %cst_23 = arith.constant dense<0.000000e+00> : vector<16x16xf32>
    %59 = tpu.matmul %56, %57, %cst_23 {dimension_numbers = #tpu.dot_dimension_numbers<[1], [1], [0], [0], [0, 0, 1, 0], [], []>} : vector<16x8xf32>, vector<16x8xf32>, vector<16x16xf32> -> vector<16x16xf32>
    %cst_24 = arith.constant 0.353553385 : f32
    %60 = vector.broadcast %cst_24 : f32 to vector<16x16xf32>
    %61 = arith.mulf %59, %60 : vector<16x16xf32>
    %cst_25 = arith.constant 0xFF800000 : f32
    %62 = vector.broadcast %cst_25 : f32 to vector<16x16xf32>
    %63 = arith.select %6, %62, %61 : vector<16x16xi1>, vector<16x16xf32>
    %cst_26 = arith.constant dense<0xFF800000> : vector<16xf32>
    %64 = vector.multi_reduction <maximumf>, %63, %cst_26 [1] : vector<16x16xf32> to vector<16xf32>
    %65 = vector.shape_cast %64 : vector<16xf32> to vector<16x1xf32>
    %66 = vector.broadcast %65 : vector<16x1xf32> to vector<16x16xf32>
    %67 = arith.subf %63, %66 : vector<16x16xf32>
    %68 = math.exp %67 : vector<16x16xf32>
    %cst_27 = arith.constant dense<0.000000e+00> : vector<16xf32>
    %69 = vector.multi_reduction <add>, %68, %cst_27 [1] : vector<16x16xf32> to vector<16xf32>
    %70 = vector.shape_cast %69 : vector<16xf32> to vector<16x1xf32>
    %71 = tpu.reciprocal %70 {approx = true} : vector<16x1xf32> -> vector<16x1xf32>
    %72 = vector.broadcast %71 : vector<16x1xf32> to vector<16x16xf32>
    %73 = arith.mulf %68, %72 : vector<16x16xf32>
    %cst_28 = arith.constant dense<0.000000e+00> : vector<16x8xf32>
    %74 = tpu.matmul %73, %58, %cst_28 {dimension_numbers = #tpu.dot_dimension_numbers<[1], [0], [0], [1], [0, 0, 1, 1], [], []>} : vector<16x16xf32>, vector<16x8xf32>, vector<16x8xf32> -> vector<16x8xf32>
    %75 = vector.extract_strided_slice %32 {offsets = [0, 16], sizes = [16, 8], strides = [1, 1]} : vector<32x48xf32> to vector<16x8xf32>
    %76 = vector.extract_strided_slice %36 {offsets = [0, 16], sizes = [16, 8], strides = [1, 1]} : vector<32x48xf32> to vector<16x8xf32>
    %77 = vector.extract_strided_slice %28 {offsets = [0, 16], sizes = [16, 8], strides = [1, 1]} : vector<32x48xf32> to vector<16x8xf32>
    %cst_29 = arith.constant dense<0.000000e+00> : vector<16x16xf32>
    %78 = tpu.matmul %75, %76, %cst_29 {dimension_numbers = #tpu.dot_dimension_numbers<[1], [1], [0], [0], [0, 0, 1, 0], [], []>} : vector<16x8xf32>, vector<16x8xf32>, vector<16x16xf32> -> vector<16x16xf32>
    %cst_30 = arith.constant 0.353553385 : f32
    %79 = vector.broadcast %cst_30 : f32 to vector<16x16xf32>
    %80 = arith.mulf %78, %79 : vector<16x16xf32>
    %cst_31 = arith.constant 0xFF800000 : f32
    %81 = vector.broadcast %cst_31 : f32 to vector<16x16xf32>
    %82 = arith.select %6, %81, %80 : vector<16x16xi1>, vector<16x16xf32>
    %cst_32 = arith.constant dense<0xFF800000> : vector<16xf32>
    %83 = vector.multi_reduction <maximumf>, %82, %cst_32 [1] : vector<16x16xf32> to vector<16xf32>
    %84 = vector.shape_cast %83 : vector<16xf32> to vector<16x1xf32>
    %85 = vector.broadcast %84 : vector<16x1xf32> to vector<16x16xf32>
    %86 = arith.subf %82, %85 : vector<16x16xf32>
    %87 = math.exp %86 : vector<16x16xf32>
    %cst_33 = arith.constant dense<0.000000e+00> : vector<16xf32>
    %88 = vector.multi_reduction <add>, %87, %cst_33 [1] : vector<16x16xf32> to vector<16xf32>
    %89 = vector.shape_cast %88 : vector<16xf32> to vector<16x1xf32>
    %90 = tpu.reciprocal %89 {approx = true} : vector<16x1xf32> -> vector<16x1xf32>
    %91 = vector.broadcast %90 : vector<16x1xf32> to vector<16x16xf32>
    %92 = arith.mulf %87, %91 : vector<16x16xf32>
    %cst_34 = arith.constant dense<0.000000e+00> : vector<16x8xf32>
    %93 = tpu.matmul %92, %77, %cst_34 {dimension_numbers = #tpu.dot_dimension_numbers<[1], [0], [0], [1], [0, 0, 1, 1], [], []>} : vector<16x16xf32>, vector<16x8xf32>, vector<16x8xf32> -> vector<16x8xf32>
    %94 = vector.extract_strided_slice %32 {offsets = [0, 24], sizes = [16, 8], strides = [1, 1]} : vector<32x48xf32> to vector<16x8xf32>
    %95 = vector.extract_strided_slice %36 {offsets = [0, 24], sizes = [16, 8], strides = [1, 1]} : vector<32x48xf32> to vector<16x8xf32>
    %96 = vector.extract_strided_slice %28 {offsets = [0, 24], sizes = [16, 8], strides = [1, 1]} : vector<32x48xf32> to vector<16x8xf32>
    %cst_35 = arith.constant dense<0.000000e+00> : vector<16x16xf32>
    %97 = tpu.matmul %94, %95, %cst_35 {dimension_numbers = #tpu.dot_dimension_numbers<[1], [1], [0], [0], [0, 0, 1, 0], [], []>} : vector<16x8xf32>, vector<16x8xf32>, vector<16x16xf32> -> vector<16x16xf32>
    %cst_36 = arith.constant 0.353553385 : f32
    %98 = vector.broadcast %cst_36 : f32 to vector<16x16xf32>
    %99 = arith.mulf %97, %98 : vector<16x16xf32>
    %cst_37 = arith.constant 0xFF800000 : f32
    %100 = vector.broadcast %cst_37 : f32 to vector<16x16xf32>
    %101 = arith.select %6, %100, %99 : vector<16x16xi1>, vector<16x16xf32>
    %cst_38 = arith.constant dense<0xFF800000> : vector<16xf32>
    %102 = vector.multi_reduction <maximumf>, %101, %cst_38 [1] : vector<16x16xf32> to vector<16xf32>
    %103 = vector.shape_cast %102 : vector<16xf32> to vector<16x1xf32>
    %104 = vector.broadcast %103 : vector<16x1xf32> to vector<16x16xf32>
    %105 = arith.subf %101, %104 : vector<16x16xf32>
    %106 = math.exp %105 : vector<16x16xf32>
    %cst_39 = arith.constant dense<0.000000e+00> : vector<16xf32>
    %107 = vector.multi_reduction <add>, %106, %cst_39 [1] : vector<16x16xf32> to vector<16xf32>
    %108 = vector.shape_cast %107 : vector<16xf32> to vector<16x1xf32>
    %109 = tpu.reciprocal %108 {approx = true} : vector<16x1xf32> -> vector<16x1xf32>
    %110 = vector.broadcast %109 : vector<16x1xf32> to vector<16x16xf32>
    %111 = arith.mulf %106, %110 : vector<16x16xf32>
    %cst_40 = arith.constant dense<0.000000e+00> : vector<16x8xf32>
    %112 = tpu.matmul %111, %96, %cst_40 {dimension_numbers = #tpu.dot_dimension_numbers<[1], [0], [0], [1], [0, 0, 1, 1], [], []>} : vector<16x16xf32>, vector<16x8xf32>, vector<16x8xf32> -> vector<16x8xf32>
    %113 = vector.extract_strided_slice %32 {offsets = [0, 32], sizes = [16, 8], strides = [1, 1]} : vector<32x48xf32> to vector<16x8xf32>
    %114 = vector.extract_strided_slice %36 {offsets = [0, 32], sizes = [16, 8], strides = [1, 1]} : vector<32x48xf32> to vector<16x8xf32>
    %115 = vector.extract_strided_slice %28 {offsets = [0, 32], sizes = [16, 8], strides = [1, 1]} : vector<32x48xf32> to vector<16x8xf32>
    %cst_41 = arith.constant dense<0.000000e+00> : vector<16x16xf32>
    %116 = tpu.matmul %113, %114, %cst_41 {dimension_numbers = #tpu.dot_dimension_numbers<[1], [1], [0], [0], [0, 0, 1, 0], [], []>} : vector<16x8xf32>, vector<16x8xf32>, vector<16x16xf32> -> vector<16x16xf32>
    %cst_42 = arith.constant 0.353553385 : f32
    %117 = vector.broadcast %cst_42 : f32 to vector<16x16xf32>
    %118 = arith.mulf %116, %117 : vector<16x16xf32>
    %cst_43 = arith.constant 0xFF800000 : f32
    %119 = vector.broadcast %cst_43 : f32 to vector<16x16xf32>
    %120 = arith.select %6, %119, %118 : vector<16x16xi1>, vector<16x16xf32>
    %cst_44 = arith.constant dense<0xFF800000> : vector<16xf32>
    %121 = vector.multi_reduction <maximumf>, %120, %cst_44 [1] : vector<16x16xf32> to vector<16xf32>
    %122 = vector.shape_cast %121 : vector<16xf32> to vector<16x1xf32>
    %123 = vector.broadcast %122 : vector<16x1xf32> to vector<16x16xf32>
    %124 = arith.subf %120, %123 : vector<16x16xf32>
    %125 = math.exp %124 : vector<16x16xf32>
    %cst_45 = arith.constant dense<0.000000e+00> : vector<16xf32>
    %126 = vector.multi_reduction <add>, %125, %cst_45 [1] : vector<16x16xf32> to vector<16xf32>
    %127 = vector.shape_cast %126 : vector<16xf32> to vector<16x1xf32>
    %128 = tpu.reciprocal %127 {approx = true} : vector<16x1xf32> -> vector<16x1xf32>
    %129 = vector.broadcast %128 : vector<16x1xf32> to vector<16x16xf32>
    %130 = arith.mulf %125, %129 : vector<16x16xf32>
    %cst_46 = arith.constant dense<0.000000e+00> : vector<16x8xf32>
    %131 = tpu.matmul %130, %115, %cst_46 {dimension_numbers = #tpu.dot_dimension_numbers<[1], [0], [0], [1], [0, 0, 1, 1], [], []>} : vector<16x16xf32>, vector<16x8xf32>, vector<16x8xf32> -> vector<16x8xf32>
    %132 = vector.extract_strided_slice %32 {offsets = [0, 40], sizes = [16, 8], strides = [1, 1]} : vector<32x48xf32> to vector<16x8xf32>
    %133 = vector.extract_strided_slice %36 {offsets = [0, 40], sizes = [16, 8], strides = [1, 1]} : vector<32x48xf32> to vector<16x8xf32>
    %134 = vector.extract_strided_slice %28 {offsets = [0, 40], sizes = [16, 8], strides = [1, 1]} : vector<32x48xf32> to vector<16x8xf32>
    %cst_47 = arith.constant dense<0.000000e+00> : vector<16x16xf32>
    %135 = tpu.matmul %132, %133, %cst_47 {dimension_numbers = #tpu.dot_dimension_numbers<[1], [1], [0], [0], [0, 0, 1, 0], [], []>} : vector<16x8xf32>, vector<16x8xf32>, vector<16x16xf32> -> vector<16x16xf32>
    %cst_48 = arith.constant 0.353553385 : f32
    %136 = vector.broadcast %cst_48 : f32 to vector<16x16xf32>
    %137 = arith.mulf %135, %136 : vector<16x16xf32>
    %cst_49 = arith.constant 0xFF800000 : f32
    %138 = vector.broadcast %cst_49 : f32 to vector<16x16xf32>
    %139 = arith.select %6, %138, %137 : vector<16x16xi1>, vector<16x16xf32>
    %cst_50 = arith.constant dense<0xFF800000> : vector<16xf32>
    %140 = vector.multi_reduction <maximumf>, %139, %cst_50 [1] : vector<16x16xf32> to vector<16xf32>
    %141 = vector.shape_cast %140 : vector<16xf32> to vector<16x1xf32>
    %142 = vector.broadcast %141 : vector<16x1xf32> to vector<16x16xf32>
    %143 = arith.subf %139, %142 : vector<16x16xf32>
    %144 = math.exp %143 : vector<16x16xf32>
    %cst_51 = arith.constant dense<0.000000e+00> : vector<16xf32>
    %145 = vector.multi_reduction <add>, %144, %cst_51 [1] : vector<16x16xf32> to vector<16xf32>
    %146 = vector.shape_cast %145 : vector<16xf32> to vector<16x1xf32>
    %147 = tpu.reciprocal %146 {approx = true} : vector<16x1xf32> -> vector<16x1xf32>
    %148 = vector.broadcast %147 : vector<16x1xf32> to vector<16x16xf32>
    %149 = arith.mulf %144, %148 : vector<16x16xf32>
    %cst_52 = arith.constant dense<0.000000e+00> : vector<16x8xf32>
    %150 = tpu.matmul %149, %134, %cst_52 {dimension_numbers = #tpu.dot_dimension_numbers<[1], [0], [0], [1], [0, 0, 1, 1], [], []>} : vector<16x16xf32>, vector<16x8xf32>, vector<16x8xf32> -> vector<16x8xf32>
    %151 = tpu.concatenate %55, %74, %93, %112, %131, %150 in 1 : vector<16x8xf32>, vector<16x8xf32>, vector<16x8xf32>, vector<16x8xf32>, vector<16x8xf32>, vector<16x8xf32> -> vector<16x48xf32>
    %152 = vector.extract_strided_slice %32 {offsets = [16, 0], sizes = [16, 8], strides = [1, 1]} : vector<32x48xf32> to vector<16x8xf32>
    %153 = vector.extract_strided_slice %36 {offsets = [16, 0], sizes = [16, 8], strides = [1, 1]} : vector<32x48xf32> to vector<16x8xf32>
    %154 = vector.extract_strided_slice %28 {offsets = [16, 0], sizes = [16, 8], strides = [1, 1]} : vector<32x48xf32> to vector<16x8xf32>
    %cst_53 = arith.constant dense<0.000000e+00> : vector<16x16xf32>
    %155 = tpu.matmul %152, %153, %cst_53 {dimension_numbers = #tpu.dot_dimension_numbers<[1], [1], [0], [0], [0, 0, 1, 0], [], []>} : vector<16x8xf32>, vector<16x8xf32>, vector<16x16xf32> -> vector<16x16xf32>
    %cst_54 = arith.constant 0.353553385 : f32
    %156 = vector.broadcast %cst_54 : f32 to vector<16x16xf32>
    %157 = arith.mulf %155, %156 : vector<16x16xf32>
    %cst_55 = arith.constant 0xFF800000 : f32
    %158 = vector.broadcast %cst_55 : f32 to vector<16x16xf32>
    %159 = arith.select %6, %158, %157 : vector<16x16xi1>, vector<16x16xf32>
    %cst_56 = arith.constant dense<0xFF800000> : vector<16xf32>
    %160 = vector.multi_reduction <maximumf>, %159, %cst_56 [1] : vector<16x16xf32> to vector<16xf32>
    %161 = vector.shape_cast %160 : vector<16xf32> to vector<16x1xf32>
    %162 = vector.broadcast %161 : vector<16x1xf32> to vector<16x16xf32>
    %163 = arith.subf %159, %162 : vector<16x16xf32>
    %164 = math.exp %163 : vector<16x16xf32>
    %cst_57 = arith.constant dense<0.000000e+00> : vector<16xf32>
    %165 = vector.multi_reduction <add>, %164, %cst_57 [1] : vector<16x16xf32> to vector<16xf32>
    %166 = vector.shape_cast %165 : vector<16xf32> to vector<16x1xf32>
    %167 = tpu.reciprocal %166 {approx = true} : vector<16x1xf32> -> vector<16x1xf32>
    %168 = vector.broadcast %167 : vector<16x1xf32> to vector<16x16xf32>
    %169 = arith.mulf %164, %168 : vector<16x16xf32>
    %cst_58 = arith.constant dense<0.000000e+00> : vector<16x8xf32>
    %170 = tpu.matmul %169, %154, %cst_58 {dimension_numbers = #tpu.dot_dimension_numbers<[1], [0], [0], [1], [0, 0, 1, 1], [], []>} : vector<16x16xf32>, vector<16x8xf32>, vector<16x8xf32> -> vector<16x8xf32>
    %171 = vector.extract_strided_slice %32 {offsets = [16, 8], sizes = [16, 8], strides = [1, 1]} : vector<32x48xf32> to vector<16x8xf32>
    %172 = vector.extract_strided_slice %36 {offsets = [16, 8], sizes = [16, 8], strides = [1, 1]} : vector<32x48xf32> to vector<16x8xf32>
    %173 = vector.extract_strided_slice %28 {offsets = [16, 8], sizes = [16, 8], strides = [1, 1]} : vector<32x48xf32> to vector<16x8xf32>
    %cst_59 = arith.constant dense<0.000000e+00> : vector<16x16xf32>
    %174 = tpu.matmul %171, %172, %cst_59 {dimension_numbers = #tpu.dot_dimension_numbers<[1], [1], [0], [0], [0, 0, 1, 0], [], []>} : vector<16x8xf32>, vector<16x8xf32>, vector<16x16xf32> -> vector<16x16xf32>
    %cst_60 = arith.constant 0.353553385 : f32
    %175 = vector.broadcast %cst_60 : f32 to vector<16x16xf32>
    %176 = arith.mulf %174, %175 : vector<16x16xf32>
    %cst_61 = arith.constant 0xFF800000 : f32
    %177 = vector.broadcast %cst_61 : f32 to vector<16x16xf32>
    %178 = arith.select %6, %177, %176 : vector<16x16xi1>, vector<16x16xf32>
    %cst_62 = arith.constant dense<0xFF800000> : vector<16xf32>
    %179 = vector.multi_reduction <maximumf>, %178, %cst_62 [1] : vector<16x16xf32> to vector<16xf32>
    %180 = vector.shape_cast %179 : vector<16xf32> to vector<16x1xf32>
    %181 = vector.broadcast %180 : vector<16x1xf32> to vector<16x16xf32>
    %182 = arith.subf %178, %181 : vector<16x16xf32>
    %183 = math.exp %182 : vector<16x16xf32>
    %cst_63 = arith.constant dense<0.000000e+00> : vector<16xf32>
    %184 = vector.multi_reduction <add>, %183, %cst_63 [1] : vector<16x16xf32> to vector<16xf32>
    %185 = vector.shape_cast %184 : vector<16xf32> to vector<16x1xf32>
    %186 = tpu.reciprocal %185 {approx = true} : vector<16x1xf32> -> vector<16x1xf32>
    %187 = vector.broadcast %186 : vector<16x1xf32> to vector<16x16xf32>
    %188 = arith.mulf %183, %187 : vector<16x16xf32>
    %cst_64 = arith.constant dense<0.000000e+00> : vector<16x8xf32>
    %189 = tpu.matmul %188, %173, %cst_64 {dimension_numbers = #tpu.dot_dimension_numbers<[1], [0], [0], [1], [0, 0, 1, 1], [], []>} : vector<16x16xf32>, vector<16x8xf32>, vector<16x8xf32> -> vector<16x8xf32>
    %190 = vector.extract_strided_slice %32 {offsets = [16, 16], sizes = [16, 8], strides = [1, 1]} : vector<32x48xf32> to vector<16x8xf32>
    %191 = vector.extract_strided_slice %36 {offsets = [16, 16], sizes = [16, 8], strides = [1, 1]} : vector<32x48xf32> to vector<16x8xf32>
    %192 = vector.extract_strided_slice %28 {offsets = [16, 16], sizes = [16, 8], strides = [1, 1]} : vector<32x48xf32> to vector<16x8xf32>
    %cst_65 = arith.constant dense<0.000000e+00> : vector<16x16xf32>
    %193 = tpu.matmul %190, %191, %cst_65 {dimension_numbers = #tpu.dot_dimension_numbers<[1], [1], [0], [0], [0, 0, 1, 0], [], []>} : vector<16x8xf32>, vector<16x8xf32>, vector<16x16xf32> -> vector<16x16xf32>
    %cst_66 = arith.constant 0.353553385 : f32
    %194 = vector.broadcast %cst_66 : f32 to vector<16x16xf32>
    %195 = arith.mulf %193, %194 : vector<16x16xf32>
    %cst_67 = arith.constant 0xFF800000 : f32
    %196 = vector.broadcast %cst_67 : f32 to vector<16x16xf32>
    %197 = arith.select %6, %196, %195 : vector<16x16xi1>, vector<16x16xf32>
    %cst_68 = arith.constant dense<0xFF800000> : vector<16xf32>
    %198 = vector.multi_reduction <maximumf>, %197, %cst_68 [1] : vector<16x16xf32> to vector<16xf32>
    %199 = vector.shape_cast %198 : vector<16xf32> to vector<16x1xf32>
    %200 = vector.broadcast %199 : vector<16x1xf32> to vector<16x16xf32>
    %201 = arith.subf %197, %200 : vector<16x16xf32>
    %202 = math.exp %201 : vector<16x16xf32>
    %cst_69 = arith.constant dense<0.000000e+00> : vector<16xf32>
    %203 = vector.multi_reduction <add>, %202, %cst_69 [1] : vector<16x16xf32> to vector<16xf32>
    %204 = vector.shape_cast %203 : vector<16xf32> to vector<16x1xf32>
    %205 = tpu.reciprocal %204 {approx = true} : vector<16x1xf32> -> vector<16x1xf32>
    %206 = vector.broadcast %205 : vector<16x1xf32> to vector<16x16xf32>
    %207 = arith.mulf %202, %206 : vector<16x16xf32>
    %cst_70 = arith.constant dense<0.000000e+00> : vector<16x8xf32>
    %208 = tpu.matmul %207, %192, %cst_70 {dimension_numbers = #tpu.dot_dimension_numbers<[1], [0], [0], [1], [0, 0, 1, 1], [], []>} : vector<16x16xf32>, vector<16x8xf32>, vector<16x8xf32> -> vector<16x8xf32>
    %209 = vector.extract_strided_slice %32 {offsets = [16, 24], sizes = [16, 8], strides = [1, 1]} : vector<32x48xf32> to vector<16x8xf32>
    %210 = vector.extract_strided_slice %36 {offsets = [16, 24], sizes = [16, 8], strides = [1, 1]} : vector<32x48xf32> to vector<16x8xf32>
    %211 = vector.extract_strided_slice %28 {offsets = [16, 24], sizes = [16, 8], strides = [1, 1]} : vector<32x48xf32> to vector<16x8xf32>
    %cst_71 = arith.constant dense<0.000000e+00> : vector<16x16xf32>
    %212 = tpu.matmul %209, %210, %cst_71 {dimension_numbers = #tpu.dot_dimension_numbers<[1], [1], [0], [0], [0, 0, 1, 0], [], []>} : vector<16x8xf32>, vector<16x8xf32>, vector<16x16xf32> -> vector<16x16xf32>
    %cst_72 = arith.constant 0.353553385 : f32
    %213 = vector.broadcast %cst_72 : f32 to vector<16x16xf32>
    %214 = arith.mulf %212, %213 : vector<16x16xf32>
    %cst_73 = arith.constant 0xFF800000 : f32
    %215 = vector.broadcast %cst_73 : f32 to vector<16x16xf32>
    %216 = arith.select %6, %215, %214 : vector<16x16xi1>, vector<16x16xf32>
    %cst_74 = arith.constant dense<0xFF800000> : vector<16xf32>
    %217 = vector.multi_reduction <maximumf>, %216, %cst_74 [1] : vector<16x16xf32> to vector<16xf32>
    %218 = vector.shape_cast %217 : vector<16xf32> to vector<16x1xf32>
    %219 = vector.broadcast %218 : vector<16x1xf32> to vector<16x16xf32>
    %220 = arith.subf %216, %219 : vector<16x16xf32>
    %221 = math.exp %220 : vector<16x16xf32>
    %cst_75 = arith.constant dense<0.000000e+00> : vector<16xf32>
    %222 = vector.multi_reduction <add>, %221, %cst_75 [1] : vector<16x16xf32> to vector<16xf32>
    %223 = vector.shape_cast %222 : vector<16xf32> to vector<16x1xf32>
    %224 = tpu.reciprocal %223 {approx = true} : vector<16x1xf32> -> vector<16x1xf32>
    %225 = vector.broadcast %224 : vector<16x1xf32> to vector<16x16xf32>
    %226 = arith.mulf %221, %225 : vector<16x16xf32>
    %cst_76 = arith.constant dense<0.000000e+00> : vector<16x8xf32>
    %227 = tpu.matmul %226, %211, %cst_76 {dimension_numbers = #tpu.dot_dimension_numbers<[1], [0], [0], [1], [0, 0, 1, 1], [], []>} : vector<16x16xf32>, vector<16x8xf32>, vector<16x8xf32> -> vector<16x8xf32>
    %228 = vector.extract_strided_slice %32 {offsets = [16, 32], sizes = [16, 8], strides = [1, 1]} : vector<32x48xf32> to vector<16x8xf32>
    %229 = vector.extract_strided_slice %36 {offsets = [16, 32], sizes = [16, 8], strides = [1, 1]} : vector<32x48xf32> to vector<16x8xf32>
    %230 = vector.extract_strided_slice %28 {offsets = [16, 32], sizes = [16, 8], strides = [1, 1]} : vector<32x48xf32> to vector<16x8xf32>
    %cst_77 = arith.constant dense<0.000000e+00> : vector<16x16xf32>
    %231 = tpu.matmul %228, %229, %cst_77 {dimension_numbers = #tpu.dot_dimension_numbers<[1], [1], [0], [0], [0, 0, 1, 0], [], []>} : vector<16x8xf32>, vector<16x8xf32>, vector<16x16xf32> -> vector<16x16xf32>
    %cst_78 = arith.constant 0.353553385 : f32
    %232 = vector.broadcast %cst_78 : f32 to vector<16x16xf32>
    %233 = arith.mulf %231, %232 : vector<16x16xf32>
    %cst_79 = arith.constant 0xFF800000 : f32
    %234 = vector.broadcast %cst_79 : f32 to vector<16x16xf32>
    %235 = arith.select %6, %234, %233 : vector<16x16xi1>, vector<16x16xf32>
    %cst_80 = arith.constant dense<0xFF800000> : vector<16xf32>
    %236 = vector.multi_reduction <maximumf>, %235, %cst_80 [1] : vector<16x16xf32> to vector<16xf32>
    %237 = vector.shape_cast %236 : vector<16xf32> to vector<16x1xf32>
    %238 = vector.broadcast %237 : vector<16x1xf32> to vector<16x16xf32>
    %239 = arith.subf %235, %238 : vector<16x16xf32>
    %240 = math.exp %239 : vector<16x16xf32>
    %cst_81 = arith.constant dense<0.000000e+00> : vector<16xf32>
    %241 = vector.multi_reduction <add>, %240, %cst_81 [1] : vector<16x16xf32> to vector<16xf32>
    %242 = vector.shape_cast %241 : vector<16xf32> to vector<16x1xf32>
    %243 = tpu.reciprocal %242 {approx = true} : vector<16x1xf32> -> vector<16x1xf32>
    %244 = vector.broadcast %243 : vector<16x1xf32> to vector<16x16xf32>
    %245 = arith.mulf %240, %244 : vector<16x16xf32>
    %cst_82 = arith.constant dense<0.000000e+00> : vector<16x8xf32>
    %246 = tpu.matmul %245, %230, %cst_82 {dimension_numbers = #tpu.dot_dimension_numbers<[1], [0], [0], [1], [0, 0, 1, 1], [], []>} : vector<16x16xf32>, vector<16x8xf32>, vector<16x8xf32> -> vector<16x8xf32>
    %247 = vector.extract_strided_slice %32 {offsets = [16, 40], sizes = [16, 8], strides = [1, 1]} : vector<32x48xf32> to vector<16x8xf32>
    %248 = vector.extract_strided_slice %36 {offsets = [16, 40], sizes = [16, 8], strides = [1, 1]} : vector<32x48xf32> to vector<16x8xf32>
    %249 = vector.extract_strided_slice %28 {offsets = [16, 40], sizes = [16, 8], strides = [1, 1]} : vector<32x48xf32> to vector<16x8xf32>
    %cst_83 = arith.constant dense<0.000000e+00> : vector<16x16xf32>
    %250 = tpu.matmul %247, %248, %cst_83 {dimension_numbers = #tpu.dot_dimension_numbers<[1], [1], [0], [0], [0, 0, 1, 0], [], []>} : vector<16x8xf32>, vector<16x8xf32>, vector<16x16xf32> -> vector<16x16xf32>
    %cst_84 = arith.constant 0.353553385 : f32
    %251 = vector.broadcast %cst_84 : f32 to vector<16x16xf32>
    %252 = arith.mulf %250, %251 : vector<16x16xf32>
    %cst_85 = arith.constant 0xFF800000 : f32
    %253 = vector.broadcast %cst_85 : f32 to vector<16x16xf32>
    %254 = arith.select %6, %253, %252 : vector<16x16xi1>, vector<16x16xf32>
    %cst_86 = arith.constant dense<0xFF800000> : vector<16xf32>
    %255 = vector.multi_reduction <maximumf>, %254, %cst_86 [1] : vector<16x16xf32> to vector<16xf32>
    %256 = vector.shape_cast %255 : vector<16xf32> to vector<16x1xf32>
    %257 = vector.broadcast %256 : vector<16x1xf32> to vector<16x16xf32>
    %258 = arith.subf %254, %257 : vector<16x16xf32>
    %259 = math.exp %258 : vector<16x16xf32>
    %cst_87 = arith.constant dense<0.000000e+00> : vector<16xf32>
    %260 = vector.multi_reduction <add>, %259, %cst_87 [1] : vector<16x16xf32> to vector<16xf32>
    %261 = vector.shape_cast %260 : vector<16xf32> to vector<16x1xf32>
    %262 = tpu.reciprocal %261 {approx = true} : vector<16x1xf32> -> vector<16x1xf32>
    %263 = vector.broadcast %262 : vector<16x1xf32> to vector<16x16xf32>
    %264 = arith.mulf %259, %263 : vector<16x16xf32>
    %cst_88 = arith.constant dense<0.000000e+00> : vector<16x8xf32>
    %265 = tpu.matmul %264, %249, %cst_88 {dimension_numbers = #tpu.dot_dimension_numbers<[1], [0], [0], [1], [0, 0, 1, 1], [], []>} : vector<16x16xf32>, vector<16x8xf32>, vector<16x8xf32> -> vector<16x8xf32>
    %266 = tpu.concatenate %170, %189, %208, %227, %246, %265 in 1 : vector<16x8xf32>, vector<16x8xf32>, vector<16x8xf32>, vector<16x8xf32>, vector<16x8xf32>, vector<16x8xf32> -> vector<16x48xf32>
    %267 = tpu.concatenate %151, %266 in 0 : vector<16x48xf32>, vector<16x48xf32> -> vector<32x48xf32>
    %c0_89 = arith.constant 0 : index
    %c0_90 = arith.constant 0 : index
    %c0_91 = arith.constant 0 : index
    %268 = vector.load %arg5[%c0_89, %c0_90, %c0_91] : memref<2x48x48xf32, #tpu.memory_space<vmem>>, vector<1x48x48xf32>
    %269 = vector.shape_cast %268 : vector<1x48x48xf32> to vector<48x48xf32>
    %cst_92 = arith.constant dense<0.000000e+00> : vector<32x48xf32>
    %270 = tpu.matmul %267, %269, %cst_92 {dimension_numbers = #tpu.dot_dimension_numbers<[1], [0], [0], [1], [0, 0, 1, 1], [], []>} : vector<32x48xf32>, vector<48x48xf32>, vector<32x48xf32> -> vector<32x48xf32>
    %271 = arith.addf %0, %270 : vector<32x48xf32>
    %cst_93 = arith.constant dense<0.000000e+00> : vector<32xf32>
    %272 = vector.multi_reduction <add>, %271, %cst_93 [1] : vector<32x48xf32> to vector<32xf32>
    %273 = vector.shape_cast %272 : vector<32xf32> to vector<32x1xf32>
    %cst_94 = arith.constant 4.800000e+01 : f32
    %274 = vector.broadcast %cst_94 : f32 to vector<32x1xf32>
    %275 = arith.divf %273, %274 : vector<32x1xf32>
    %276 = vector.broadcast %275 : vector<32x1xf32> to vector<32x48xf32>
    %277 = arith.subf %271, %276 : vector<32x48xf32>
    %278 = arith.mulf %277, %277 : vector<32x48xf32>
    %cst_95 = arith.constant dense<0.000000e+00> : vector<32xf32>
    %279 = vector.multi_reduction <add>, %278, %cst_95 [1] : vector<32x48xf32> to vector<32xf32>
    %280 = vector.shape_cast %279 : vector<32xf32> to vector<32x1xf32>
    %cst_96 = arith.constant 4.800000e+01 : f32
    %281 = vector.broadcast %cst_96 : f32 to vector<32x1xf32>
    %282 = arith.divf %280, %281 : vector<32x1xf32>
    %cst_97 = arith.constant 9.99999993E-9 : f32
    %283 = vector.broadcast %cst_97 : f32 to vector<32x1xf32>
    %284 = arith.addf %282, %283 : vector<32x1xf32>
    %285 = math.rsqrt %284 : vector<32x1xf32>
    %286 = vector.broadcast %285 : vector<32x1xf32> to vector<32x48xf32>
    %287 = arith.mulf %277, %286 : vector<32x48xf32>
    %c0_98 = arith.constant 0 : index
    %c0_99 = arith.constant 0 : index
    %c0_100 = arith.constant 0 : index
    %288 = vector.load %arg6[%c0_98, %c0_99, %c0_100] : memref<2x48x192xf32, #tpu.memory_space<vmem>>, vector<1x48x192xf32>
    %289 = vector.shape_cast %288 : vector<1x48x192xf32> to vector<48x192xf32>
    %cst_101 = arith.constant dense<0.000000e+00> : vector<32x192xf32>
    %290 = tpu.matmul %287, %289, %cst_101 {dimension_numbers = #tpu.dot_dimension_numbers<[1], [0], [0], [1], [0, 0, 1, 1], [], []>} : vector<32x48xf32>, vector<48x192xf32>, vector<32x192xf32> -> vector<32x192xf32>
    %cst_102 = arith.constant 5.000000e-01 : f32
    %291 = vector.broadcast %cst_102 : f32 to vector<32x192xf32>
    %292 = arith.mulf %291, %290 : vector<32x192xf32>
    %cst_103 = arith.constant 0.707106769 : f32
    %293 = vector.broadcast %cst_103 : f32 to vector<32x192xf32>
    %294 = arith.mulf %290, %293 : vector<32x192xf32>
    %cst_104 = arith.constant 0.000000e+00 : f32
    %295 = vector.broadcast %cst_104 : f32 to vector<32x192xf32>
    %296 = arith.cmpf oge, %294, %295 : vector<32x192xf32>
    %cst_105 = arith.constant 1.000000e+00 : f32
    %cst_106 = arith.constant -1.000000e+00 : f32
    %297 = vector.broadcast %cst_105 : f32 to vector<32x192xf32>
    %298 = vector.broadcast %cst_106 : f32 to vector<32x192xf32>
    %299 = arith.select %296, %297, %298 : vector<32x192xi1>, vector<32x192xf32>
    %300 = math.absf %294 : vector<32x192xf32>
    %cst_107 = arith.constant 0.327591091 : f32
    %301 = vector.broadcast %cst_107 : f32 to vector<32x192xf32>
    %302 = arith.mulf %301, %300 : vector<32x192xf32>
    %cst_108 = arith.constant 1.000000e+00 : f32
    %303 = vector.broadcast %cst_108 : f32 to vector<32x192xf32>
    %304 = arith.addf %303, %302 : vector<32x192xf32>
    %cst_109 = arith.constant 1.000000e+00 : f32
    %305 = vector.broadcast %cst_109 : f32 to vector<32x192xf32>
    %306 = arith.divf %305, %304 : vector<32x192xf32>
    %cst_110 = arith.constant 1.06140542 : f32
    %307 = vector.broadcast %cst_110 : f32 to vector<32x192xf32>
    %308 = arith.mulf %307, %306 : vector<32x192xf32>
    %cst_111 = arith.constant 1.45315206 : f32
    %309 = vector.broadcast %cst_111 : f32 to vector<32x192xf32>
    %310 = arith.subf %308, %309 : vector<32x192xf32>
    %311 = arith.mulf %310, %306 : vector<32x192xf32>
    %cst_112 = arith.constant 1.42141378 : f32
    %312 = vector.broadcast %cst_112 : f32 to vector<32x192xf32>
    %313 = arith.addf %311, %312 : vector<32x192xf32>
    %314 = arith.mulf %313, %306 : vector<32x192xf32>
    %cst_113 = arith.constant 0.284496725 : f32
    %315 = vector.broadcast %cst_113 : f32 to vector<32x192xf32>
    %316 = arith.subf %314, %315 : vector<32x192xf32>
    %317 = arith.mulf %316, %306 : vector<32x192xf32>
    %cst_114 = arith.constant 0.254829586 : f32
    %318 = vector.broadcast %cst_114 : f32 to vector<32x192xf32>
    %319 = arith.addf %317, %318 : vector<32x192xf32>
    %320 = arith.mulf %319, %306 : vector<32x192xf32>
    %cst_115 = arith.constant 0.000000e+00 : f32
    %321 = vector.broadcast %cst_115 : f32 to vector<32x192xf32>
    %322 = arith.subf %321, %300 : vector<32x192xf32>
    %323 = arith.mulf %322, %300 : vector<32x192xf32>
    %324 = math.exp %323 : vector<32x192xf32>
    %325 = arith.mulf %320, %324 : vector<32x192xf32>
    %cst_116 = arith.constant 1.000000e+00 : f32
    %326 = vector.broadcast %cst_116 : f32 to vector<32x192xf32>
    %327 = arith.subf %326, %325 : vector<32x192xf32>
    %328 = arith.mulf %299, %327 : vector<32x192xf32>
    %cst_117 = arith.constant 1.000000e+00 : f32
    %329 = vector.broadcast %cst_117 : f32 to vector<32x192xf32>
    %330 = arith.addf %329, %328 : vector<32x192xf32>
    %331 = arith.mulf %292, %330 : vector<32x192xf32>
    %c0_118 = arith.constant 0 : index
    %c0_119 = arith.constant 0 : index
    %c0_120 = arith.constant 0 : index
    %332 = vector.load %arg7[%c0_118, %c0_119, %c0_120] : memref<2x192x48xf32, #tpu.memory_space<vmem>>, vector<1x192x48xf32>
    %333 = vector.shape_cast %332 : vector<1x192x48xf32> to vector<192x48xf32>
    %cst_121 = arith.constant dense<0.000000e+00> : vector<32x48xf32>
    %334 = tpu.matmul %331, %333, %cst_121 {dimension_numbers = #tpu.dot_dimension_numbers<[1], [0], [0], [1], [0, 0, 1, 1], [], []>} : vector<32x192xf32>, vector<192x48xf32>, vector<32x48xf32> -> vector<32x48xf32>
    %335 = arith.addf %271, %334 : vector<32x48xf32>
    %cst_122 = arith.constant dense<0.000000e+00> : vector<32xf32>
    %336 = vector.multi_reduction <add>, %335, %cst_122 [1] : vector<32x48xf32> to vector<32xf32>
    %337 = vector.shape_cast %336 : vector<32xf32> to vector<32x1xf32>
    %cst_123 = arith.constant 4.800000e+01 : f32
    %338 = vector.broadcast %cst_123 : f32 to vector<32x1xf32>
    %339 = arith.divf %337, %338 : vector<32x1xf32>
    %340 = vector.broadcast %339 : vector<32x1xf32> to vector<32x48xf32>
    %341 = arith.subf %335, %340 : vector<32x48xf32>
    %342 = arith.mulf %341, %341 : vector<32x48xf32>
    %cst_124 = arith.constant dense<0.000000e+00> : vector<32xf32>
    %343 = vector.multi_reduction <add>, %342, %cst_124 [1] : vector<32x48xf32> to vector<32xf32>
    %344 = vector.shape_cast %343 : vector<32xf32> to vector<32x1xf32>
    %cst_125 = arith.constant 4.800000e+01 : f32
    %345 = vector.broadcast %cst_125 : f32 to vector<32x1xf32>
    %346 = arith.divf %344, %345 : vector<32x1xf32>
    %cst_126 = arith.constant 9.99999993E-9 : f32
    %347 = vector.broadcast %cst_126 : f32 to vector<32x1xf32>
    %348 = arith.addf %346, %347 : vector<32x1xf32>
    %349 = math.rsqrt %348 : vector<32x1xf32>
    %350 = vector.broadcast %349 : vector<32x1xf32> to vector<32x48xf32>
    %351 = arith.mulf %341, %350 : vector<32x48xf32>
    %c1 = arith.constant 1 : index
    %c0_127 = arith.constant 0 : index
    %c0_128 = arith.constant 0 : index
    %352 = vector.load %arg4[%c1, %c0_127, %c0_128] : memref<2x48x144xf32, #tpu.memory_space<vmem>>, vector<1x48x144xf32>
    %353 = vector.shape_cast %352 : vector<1x48x144xf32> to vector<48x144xf32>
    %cst_129 = arith.constant dense<0.000000e+00> : vector<32x144xf32>
    %354 = tpu.matmul %351, %353, %cst_129 {dimension_numbers = #tpu.dot_dimension_numbers<[1], [0], [0], [1], [0, 0, 1, 1], [], []>} : vector<32x48xf32>, vector<48x144xf32>, vector<32x144xf32> -> vector<32x144xf32>
    %355 = vector.extract_strided_slice %354 {offsets = [0, 0], sizes = [32, 48], strides = [1, 1]} : vector<32x144xf32> to vector<32x48xf32>
    %356 = vector.extract_strided_slice %354 {offsets = [0, 48], sizes = [32, 48], strides = [1, 1]} : vector<32x144xf32> to vector<32x48xf32>
    %357 = vector.extract_strided_slice %354 {offsets = [0, 96], sizes = [32, 48], strides = [1, 1]} : vector<32x144xf32> to vector<32x48xf32>
    %358 = arith.mulf %355, %1 : vector<32x48xf32>
    %cst_130 = arith.constant dense<0.000000e+00> : vector<32x48xf32>
    %359 = tpu.matmul %355, %3, %cst_130 {dimension_numbers = #tpu.dot_dimension_numbers<[1], [0], [0], [1], [0, 0, 1, 1], [], []>} : vector<32x48xf32>, vector<48x48xf32>, vector<32x48xf32> -> vector<32x48xf32>
    %360 = arith.mulf %359, %2 : vector<32x48xf32>
    %361 = arith.addf %358, %360 : vector<32x48xf32>
    %362 = arith.mulf %356, %1 : vector<32x48xf32>
    %cst_131 = arith.constant dense<0.000000e+00> : vector<32x48xf32>
    %363 = tpu.matmul %356, %3, %cst_131 {dimension_numbers = #tpu.dot_dimension_numbers<[1], [0], [0], [1], [0, 0, 1, 1], [], []>} : vector<32x48xf32>, vector<48x48xf32>, vector<32x48xf32> -> vector<32x48xf32>
    %364 = arith.mulf %363, %2 : vector<32x48xf32>
    %365 = arith.addf %362, %364 : vector<32x48xf32>
    %366 = vector.extract_strided_slice %361 {offsets = [0, 0], sizes = [16, 8], strides = [1, 1]} : vector<32x48xf32> to vector<16x8xf32>
    %367 = vector.extract_strided_slice %365 {offsets = [0, 0], sizes = [16, 8], strides = [1, 1]} : vector<32x48xf32> to vector<16x8xf32>
    %368 = vector.extract_strided_slice %357 {offsets = [0, 0], sizes = [16, 8], strides = [1, 1]} : vector<32x48xf32> to vector<16x8xf32>
    %cst_132 = arith.constant dense<0.000000e+00> : vector<16x16xf32>
    %369 = tpu.matmul %366, %367, %cst_132 {dimension_numbers = #tpu.dot_dimension_numbers<[1], [1], [0], [0], [0, 0, 1, 0], [], []>} : vector<16x8xf32>, vector<16x8xf32>, vector<16x16xf32> -> vector<16x16xf32>
    %cst_133 = arith.constant 0.353553385 : f32
    %370 = vector.broadcast %cst_133 : f32 to vector<16x16xf32>
    %371 = arith.mulf %369, %370 : vector<16x16xf32>
    %cst_134 = arith.constant 0xFF800000 : f32
    %372 = vector.broadcast %cst_134 : f32 to vector<16x16xf32>
    %373 = arith.select %6, %372, %371 : vector<16x16xi1>, vector<16x16xf32>
    %cst_135 = arith.constant dense<0xFF800000> : vector<16xf32>
    %374 = vector.multi_reduction <maximumf>, %373, %cst_135 [1] : vector<16x16xf32> to vector<16xf32>
    %375 = vector.shape_cast %374 : vector<16xf32> to vector<16x1xf32>
    %376 = vector.broadcast %375 : vector<16x1xf32> to vector<16x16xf32>
    %377 = arith.subf %373, %376 : vector<16x16xf32>
    %378 = math.exp %377 : vector<16x16xf32>
    %cst_136 = arith.constant dense<0.000000e+00> : vector<16xf32>
    %379 = vector.multi_reduction <add>, %378, %cst_136 [1] : vector<16x16xf32> to vector<16xf32>
    %380 = vector.shape_cast %379 : vector<16xf32> to vector<16x1xf32>
    %381 = tpu.reciprocal %380 {approx = true} : vector<16x1xf32> -> vector<16x1xf32>
    %382 = vector.broadcast %381 : vector<16x1xf32> to vector<16x16xf32>
    %383 = arith.mulf %378, %382 : vector<16x16xf32>
    %cst_137 = arith.constant dense<0.000000e+00> : vector<16x8xf32>
    %384 = tpu.matmul %383, %368, %cst_137 {dimension_numbers = #tpu.dot_dimension_numbers<[1], [0], [0], [1], [0, 0, 1, 1], [], []>} : vector<16x16xf32>, vector<16x8xf32>, vector<16x8xf32> -> vector<16x8xf32>
    %385 = vector.extract_strided_slice %361 {offsets = [0, 8], sizes = [16, 8], strides = [1, 1]} : vector<32x48xf32> to vector<16x8xf32>
    %386 = vector.extract_strided_slice %365 {offsets = [0, 8], sizes = [16, 8], strides = [1, 1]} : vector<32x48xf32> to vector<16x8xf32>
    %387 = vector.extract_strided_slice %357 {offsets = [0, 8], sizes = [16, 8], strides = [1, 1]} : vector<32x48xf32> to vector<16x8xf32>
    %cst_138 = arith.constant dense<0.000000e+00> : vector<16x16xf32>
    %388 = tpu.matmul %385, %386, %cst_138 {dimension_numbers = #tpu.dot_dimension_numbers<[1], [1], [0], [0], [0, 0, 1, 0], [], []>} : vector<16x8xf32>, vector<16x8xf32>, vector<16x16xf32> -> vector<16x16xf32>
    %cst_139 = arith.constant 0.353553385 : f32
    %389 = vector.broadcast %cst_139 : f32 to vector<16x16xf32>
    %390 = arith.mulf %388, %389 : vector<16x16xf32>
    %cst_140 = arith.constant 0xFF800000 : f32
    %391 = vector.broadcast %cst_140 : f32 to vector<16x16xf32>
    %392 = arith.select %6, %391, %390 : vector<16x16xi1>, vector<16x16xf32>
    %cst_141 = arith.constant dense<0xFF800000> : vector<16xf32>
    %393 = vector.multi_reduction <maximumf>, %392, %cst_141 [1] : vector<16x16xf32> to vector<16xf32>
    %394 = vector.shape_cast %393 : vector<16xf32> to vector<16x1xf32>
    %395 = vector.broadcast %394 : vector<16x1xf32> to vector<16x16xf32>
    %396 = arith.subf %392, %395 : vector<16x16xf32>
    %397 = math.exp %396 : vector<16x16xf32>
    %cst_142 = arith.constant dense<0.000000e+00> : vector<16xf32>
    %398 = vector.multi_reduction <add>, %397, %cst_142 [1] : vector<16x16xf32> to vector<16xf32>
    %399 = vector.shape_cast %398 : vector<16xf32> to vector<16x1xf32>
    %400 = tpu.reciprocal %399 {approx = true} : vector<16x1xf32> -> vector<16x1xf32>
    %401 = vector.broadcast %400 : vector<16x1xf32> to vector<16x16xf32>
    %402 = arith.mulf %397, %401 : vector<16x16xf32>
    %cst_143 = arith.constant dense<0.000000e+00> : vector<16x8xf32>
    %403 = tpu.matmul %402, %387, %cst_143 {dimension_numbers = #tpu.dot_dimension_numbers<[1], [0], [0], [1], [0, 0, 1, 1], [], []>} : vector<16x16xf32>, vector<16x8xf32>, vector<16x8xf32> -> vector<16x8xf32>
    %404 = vector.extract_strided_slice %361 {offsets = [0, 16], sizes = [16, 8], strides = [1, 1]} : vector<32x48xf32> to vector<16x8xf32>
    %405 = vector.extract_strided_slice %365 {offsets = [0, 16], sizes = [16, 8], strides = [1, 1]} : vector<32x48xf32> to vector<16x8xf32>
    %406 = vector.extract_strided_slice %357 {offsets = [0, 16], sizes = [16, 8], strides = [1, 1]} : vector<32x48xf32> to vector<16x8xf32>
    %cst_144 = arith.constant dense<0.000000e+00> : vector<16x16xf32>
    %407 = tpu.matmul %404, %405, %cst_144 {dimension_numbers = #tpu.dot_dimension_numbers<[1], [1], [0], [0], [0, 0, 1, 0], [], []>} : vector<16x8xf32>, vector<16x8xf32>, vector<16x16xf32> -> vector<16x16xf32>
    %cst_145 = arith.constant 0.353553385 : f32
    %408 = vector.broadcast %cst_145 : f32 to vector<16x16xf32>
    %409 = arith.mulf %407, %408 : vector<16x16xf32>
    %cst_146 = arith.constant 0xFF800000 : f32
    %410 = vector.broadcast %cst_146 : f32 to vector<16x16xf32>
    %411 = arith.select %6, %410, %409 : vector<16x16xi1>, vector<16x16xf32>
    %cst_147 = arith.constant dense<0xFF800000> : vector<16xf32>
    %412 = vector.multi_reduction <maximumf>, %411, %cst_147 [1] : vector<16x16xf32> to vector<16xf32>
    %413 = vector.shape_cast %412 : vector<16xf32> to vector<16x1xf32>
    %414 = vector.broadcast %413 : vector<16x1xf32> to vector<16x16xf32>
    %415 = arith.subf %411, %414 : vector<16x16xf32>
    %416 = math.exp %415 : vector<16x16xf32>
    %cst_148 = arith.constant dense<0.000000e+00> : vector<16xf32>
    %417 = vector.multi_reduction <add>, %416, %cst_148 [1] : vector<16x16xf32> to vector<16xf32>
    %418 = vector.shape_cast %417 : vector<16xf32> to vector<16x1xf32>
    %419 = tpu.reciprocal %418 {approx = true} : vector<16x1xf32> -> vector<16x1xf32>
    %420 = vector.broadcast %419 : vector<16x1xf32> to vector<16x16xf32>
    %421 = arith.mulf %416, %420 : vector<16x16xf32>
    %cst_149 = arith.constant dense<0.000000e+00> : vector<16x8xf32>
    %422 = tpu.matmul %421, %406, %cst_149 {dimension_numbers = #tpu.dot_dimension_numbers<[1], [0], [0], [1], [0, 0, 1, 1], [], []>} : vector<16x16xf32>, vector<16x8xf32>, vector<16x8xf32> -> vector<16x8xf32>
    %423 = vector.extract_strided_slice %361 {offsets = [0, 24], sizes = [16, 8], strides = [1, 1]} : vector<32x48xf32> to vector<16x8xf32>
    %424 = vector.extract_strided_slice %365 {offsets = [0, 24], sizes = [16, 8], strides = [1, 1]} : vector<32x48xf32> to vector<16x8xf32>
    %425 = vector.extract_strided_slice %357 {offsets = [0, 24], sizes = [16, 8], strides = [1, 1]} : vector<32x48xf32> to vector<16x8xf32>
    %cst_150 = arith.constant dense<0.000000e+00> : vector<16x16xf32>
    %426 = tpu.matmul %423, %424, %cst_150 {dimension_numbers = #tpu.dot_dimension_numbers<[1], [1], [0], [0], [0, 0, 1, 0], [], []>} : vector<16x8xf32>, vector<16x8xf32>, vector<16x16xf32> -> vector<16x16xf32>
    %cst_151 = arith.constant 0.353553385 : f32
    %427 = vector.broadcast %cst_151 : f32 to vector<16x16xf32>
    %428 = arith.mulf %426, %427 : vector<16x16xf32>
    %cst_152 = arith.constant 0xFF800000 : f32
    %429 = vector.broadcast %cst_152 : f32 to vector<16x16xf32>
    %430 = arith.select %6, %429, %428 : vector<16x16xi1>, vector<16x16xf32>
    %cst_153 = arith.constant dense<0xFF800000> : vector<16xf32>
    %431 = vector.multi_reduction <maximumf>, %430, %cst_153 [1] : vector<16x16xf32> to vector<16xf32>
    %432 = vector.shape_cast %431 : vector<16xf32> to vector<16x1xf32>
    %433 = vector.broadcast %432 : vector<16x1xf32> to vector<16x16xf32>
    %434 = arith.subf %430, %433 : vector<16x16xf32>
    %435 = math.exp %434 : vector<16x16xf32>
    %cst_154 = arith.constant dense<0.000000e+00> : vector<16xf32>
    %436 = vector.multi_reduction <add>, %435, %cst_154 [1] : vector<16x16xf32> to vector<16xf32>
    %437 = vector.shape_cast %436 : vector<16xf32> to vector<16x1xf32>
    %438 = tpu.reciprocal %437 {approx = true} : vector<16x1xf32> -> vector<16x1xf32>
    %439 = vector.broadcast %438 : vector<16x1xf32> to vector<16x16xf32>
    %440 = arith.mulf %435, %439 : vector<16x16xf32>
    %cst_155 = arith.constant dense<0.000000e+00> : vector<16x8xf32>
    %441 = tpu.matmul %440, %425, %cst_155 {dimension_numbers = #tpu.dot_dimension_numbers<[1], [0], [0], [1], [0, 0, 1, 1], [], []>} : vector<16x16xf32>, vector<16x8xf32>, vector<16x8xf32> -> vector<16x8xf32>
    %442 = vector.extract_strided_slice %361 {offsets = [0, 32], sizes = [16, 8], strides = [1, 1]} : vector<32x48xf32> to vector<16x8xf32>
    %443 = vector.extract_strided_slice %365 {offsets = [0, 32], sizes = [16, 8], strides = [1, 1]} : vector<32x48xf32> to vector<16x8xf32>
    %444 = vector.extract_strided_slice %357 {offsets = [0, 32], sizes = [16, 8], strides = [1, 1]} : vector<32x48xf32> to vector<16x8xf32>
    %cst_156 = arith.constant dense<0.000000e+00> : vector<16x16xf32>
    %445 = tpu.matmul %442, %443, %cst_156 {dimension_numbers = #tpu.dot_dimension_numbers<[1], [1], [0], [0], [0, 0, 1, 0], [], []>} : vector<16x8xf32>, vector<16x8xf32>, vector<16x16xf32> -> vector<16x16xf32>
    %cst_157 = arith.constant 0.353553385 : f32
    %446 = vector.broadcast %cst_157 : f32 to vector<16x16xf32>
    %447 = arith.mulf %445, %446 : vector<16x16xf32>
    %cst_158 = arith.constant 0xFF800000 : f32
    %448 = vector.broadcast %cst_158 : f32 to vector<16x16xf32>
    %449 = arith.select %6, %448, %447 : vector<16x16xi1>, vector<16x16xf32>
    %cst_159 = arith.constant dense<0xFF800000> : vector<16xf32>
    %450 = vector.multi_reduction <maximumf>, %449, %cst_159 [1] : vector<16x16xf32> to vector<16xf32>
    %451 = vector.shape_cast %450 : vector<16xf32> to vector<16x1xf32>
    %452 = vector.broadcast %451 : vector<16x1xf32> to vector<16x16xf32>
    %453 = arith.subf %449, %452 : vector<16x16xf32>
    %454 = math.exp %453 : vector<16x16xf32>
    %cst_160 = arith.constant dense<0.000000e+00> : vector<16xf32>
    %455 = vector.multi_reduction <add>, %454, %cst_160 [1] : vector<16x16xf32> to vector<16xf32>
    %456 = vector.shape_cast %455 : vector<16xf32> to vector<16x1xf32>
    %457 = tpu.reciprocal %456 {approx = true} : vector<16x1xf32> -> vector<16x1xf32>
    %458 = vector.broadcast %457 : vector<16x1xf32> to vector<16x16xf32>
    %459 = arith.mulf %454, %458 : vector<16x16xf32>
    %cst_161 = arith.constant dense<0.000000e+00> : vector<16x8xf32>
    %460 = tpu.matmul %459, %444, %cst_161 {dimension_numbers = #tpu.dot_dimension_numbers<[1], [0], [0], [1], [0, 0, 1, 1], [], []>} : vector<16x16xf32>, vector<16x8xf32>, vector<16x8xf32> -> vector<16x8xf32>
    %461 = vector.extract_strided_slice %361 {offsets = [0, 40], sizes = [16, 8], strides = [1, 1]} : vector<32x48xf32> to vector<16x8xf32>
    %462 = vector.extract_strided_slice %365 {offsets = [0, 40], sizes = [16, 8], strides = [1, 1]} : vector<32x48xf32> to vector<16x8xf32>
    %463 = vector.extract_strided_slice %357 {offsets = [0, 40], sizes = [16, 8], strides = [1, 1]} : vector<32x48xf32> to vector<16x8xf32>
    %cst_162 = arith.constant dense<0.000000e+00> : vector<16x16xf32>
    %464 = tpu.matmul %461, %462, %cst_162 {dimension_numbers = #tpu.dot_dimension_numbers<[1], [1], [0], [0], [0, 0, 1, 0], [], []>} : vector<16x8xf32>, vector<16x8xf32>, vector<16x16xf32> -> vector<16x16xf32>
    %cst_163 = arith.constant 0.353553385 : f32
    %465 = vector.broadcast %cst_163 : f32 to vector<16x16xf32>
    %466 = arith.mulf %464, %465 : vector<16x16xf32>
    %cst_164 = arith.constant 0xFF800000 : f32
    %467 = vector.broadcast %cst_164 : f32 to vector<16x16xf32>
    %468 = arith.select %6, %467, %466 : vector<16x16xi1>, vector<16x16xf32>
    %cst_165 = arith.constant dense<0xFF800000> : vector<16xf32>
    %469 = vector.multi_reduction <maximumf>, %468, %cst_165 [1] : vector<16x16xf32> to vector<16xf32>
    %470 = vector.shape_cast %469 : vector<16xf32> to vector<16x1xf32>
    %471 = vector.broadcast %470 : vector<16x1xf32> to vector<16x16xf32>
    %472 = arith.subf %468, %471 : vector<16x16xf32>
    %473 = math.exp %472 : vector<16x16xf32>
    %cst_166 = arith.constant dense<0.000000e+00> : vector<16xf32>
    %474 = vector.multi_reduction <add>, %473, %cst_166 [1] : vector<16x16xf32> to vector<16xf32>
    %475 = vector.shape_cast %474 : vector<16xf32> to vector<16x1xf32>
    %476 = tpu.reciprocal %475 {approx = true} : vector<16x1xf32> -> vector<16x1xf32>
    %477 = vector.broadcast %476 : vector<16x1xf32> to vector<16x16xf32>
    %478 = arith.mulf %473, %477 : vector<16x16xf32>
    %cst_167 = arith.constant dense<0.000000e+00> : vector<16x8xf32>
    %479 = tpu.matmul %478, %463, %cst_167 {dimension_numbers = #tpu.dot_dimension_numbers<[1], [0], [0], [1], [0, 0, 1, 1], [], []>} : vector<16x16xf32>, vector<16x8xf32>, vector<16x8xf32> -> vector<16x8xf32>
    %480 = tpu.concatenate %384, %403, %422, %441, %460, %479 in 1 : vector<16x8xf32>, vector<16x8xf32>, vector<16x8xf32>, vector<16x8xf32>, vector<16x8xf32>, vector<16x8xf32> -> vector<16x48xf32>
    %481 = vector.extract_strided_slice %361 {offsets = [16, 0], sizes = [16, 8], strides = [1, 1]} : vector<32x48xf32> to vector<16x8xf32>
    %482 = vector.extract_strided_slice %365 {offsets = [16, 0], sizes = [16, 8], strides = [1, 1]} : vector<32x48xf32> to vector<16x8xf32>
    %483 = vector.extract_strided_slice %357 {offsets = [16, 0], sizes = [16, 8], strides = [1, 1]} : vector<32x48xf32> to vector<16x8xf32>
    %cst_168 = arith.constant dense<0.000000e+00> : vector<16x16xf32>
    %484 = tpu.matmul %481, %482, %cst_168 {dimension_numbers = #tpu.dot_dimension_numbers<[1], [1], [0], [0], [0, 0, 1, 0], [], []>} : vector<16x8xf32>, vector<16x8xf32>, vector<16x16xf32> -> vector<16x16xf32>
    %cst_169 = arith.constant 0.353553385 : f32
    %485 = vector.broadcast %cst_169 : f32 to vector<16x16xf32>
    %486 = arith.mulf %484, %485 : vector<16x16xf32>
    %cst_170 = arith.constant 0xFF800000 : f32
    %487 = vector.broadcast %cst_170 : f32 to vector<16x16xf32>
    %488 = arith.select %6, %487, %486 : vector<16x16xi1>, vector<16x16xf32>
    %cst_171 = arith.constant dense<0xFF800000> : vector<16xf32>
    %489 = vector.multi_reduction <maximumf>, %488, %cst_171 [1] : vector<16x16xf32> to vector<16xf32>
    %490 = vector.shape_cast %489 : vector<16xf32> to vector<16x1xf32>
    %491 = vector.broadcast %490 : vector<16x1xf32> to vector<16x16xf32>
    %492 = arith.subf %488, %491 : vector<16x16xf32>
    %493 = math.exp %492 : vector<16x16xf32>
    %cst_172 = arith.constant dense<0.000000e+00> : vector<16xf32>
    %494 = vector.multi_reduction <add>, %493, %cst_172 [1] : vector<16x16xf32> to vector<16xf32>
    %495 = vector.shape_cast %494 : vector<16xf32> to vector<16x1xf32>
    %496 = tpu.reciprocal %495 {approx = true} : vector<16x1xf32> -> vector<16x1xf32>
    %497 = vector.broadcast %496 : vector<16x1xf32> to vector<16x16xf32>
    %498 = arith.mulf %493, %497 : vector<16x16xf32>
    %cst_173 = arith.constant dense<0.000000e+00> : vector<16x8xf32>
    %499 = tpu.matmul %498, %483, %cst_173 {dimension_numbers = #tpu.dot_dimension_numbers<[1], [0], [0], [1], [0, 0, 1, 1], [], []>} : vector<16x16xf32>, vector<16x8xf32>, vector<16x8xf32> -> vector<16x8xf32>
    %500 = vector.extract_strided_slice %361 {offsets = [16, 8], sizes = [16, 8], strides = [1, 1]} : vector<32x48xf32> to vector<16x8xf32>
    %501 = vector.extract_strided_slice %365 {offsets = [16, 8], sizes = [16, 8], strides = [1, 1]} : vector<32x48xf32> to vector<16x8xf32>
    %502 = vector.extract_strided_slice %357 {offsets = [16, 8], sizes = [16, 8], strides = [1, 1]} : vector<32x48xf32> to vector<16x8xf32>
    %cst_174 = arith.constant dense<0.000000e+00> : vector<16x16xf32>
    %503 = tpu.matmul %500, %501, %cst_174 {dimension_numbers = #tpu.dot_dimension_numbers<[1], [1], [0], [0], [0, 0, 1, 0], [], []>} : vector<16x8xf32>, vector<16x8xf32>, vector<16x16xf32> -> vector<16x16xf32>
    %cst_175 = arith.constant 0.353553385 : f32
    %504 = vector.broadcast %cst_175 : f32 to vector<16x16xf32>
    %505 = arith.mulf %503, %504 : vector<16x16xf32>
    %cst_176 = arith.constant 0xFF800000 : f32
    %506 = vector.broadcast %cst_176 : f32 to vector<16x16xf32>
    %507 = arith.select %6, %506, %505 : vector<16x16xi1>, vector<16x16xf32>
    %cst_177 = arith.constant dense<0xFF800000> : vector<16xf32>
    %508 = vector.multi_reduction <maximumf>, %507, %cst_177 [1] : vector<16x16xf32> to vector<16xf32>
    %509 = vector.shape_cast %508 : vector<16xf32> to vector<16x1xf32>
    %510 = vector.broadcast %509 : vector<16x1xf32> to vector<16x16xf32>
    %511 = arith.subf %507, %510 : vector<16x16xf32>
    %512 = math.exp %511 : vector<16x16xf32>
    %cst_178 = arith.constant dense<0.000000e+00> : vector<16xf32>
    %513 = vector.multi_reduction <add>, %512, %cst_178 [1] : vector<16x16xf32> to vector<16xf32>
    %514 = vector.shape_cast %513 : vector<16xf32> to vector<16x1xf32>
    %515 = tpu.reciprocal %514 {approx = true} : vector<16x1xf32> -> vector<16x1xf32>
    %516 = vector.broadcast %515 : vector<16x1xf32> to vector<16x16xf32>
    %517 = arith.mulf %512, %516 : vector<16x16xf32>
    %cst_179 = arith.constant dense<0.000000e+00> : vector<16x8xf32>
    %518 = tpu.matmul %517, %502, %cst_179 {dimension_numbers = #tpu.dot_dimension_numbers<[1], [0], [0], [1], [0, 0, 1, 1], [], []>} : vector<16x16xf32>, vector<16x8xf32>, vector<16x8xf32> -> vector<16x8xf32>
    %519 = vector.extract_strided_slice %361 {offsets = [16, 16], sizes = [16, 8], strides = [1, 1]} : vector<32x48xf32> to vector<16x8xf32>
    %520 = vector.extract_strided_slice %365 {offsets = [16, 16], sizes = [16, 8], strides = [1, 1]} : vector<32x48xf32> to vector<16x8xf32>
    %521 = vector.extract_strided_slice %357 {offsets = [16, 16], sizes = [16, 8], strides = [1, 1]} : vector<32x48xf32> to vector<16x8xf32>
    %cst_180 = arith.constant dense<0.000000e+00> : vector<16x16xf32>
    %522 = tpu.matmul %519, %520, %cst_180 {dimension_numbers = #tpu.dot_dimension_numbers<[1], [1], [0], [0], [0, 0, 1, 0], [], []>} : vector<16x8xf32>, vector<16x8xf32>, vector<16x16xf32> -> vector<16x16xf32>
    %cst_181 = arith.constant 0.353553385 : f32
    %523 = vector.broadcast %cst_181 : f32 to vector<16x16xf32>
    %524 = arith.mulf %522, %523 : vector<16x16xf32>
    %cst_182 = arith.constant 0xFF800000 : f32
    %525 = vector.broadcast %cst_182 : f32 to vector<16x16xf32>
    %526 = arith.select %6, %525, %524 : vector<16x16xi1>, vector<16x16xf32>
    %cst_183 = arith.constant dense<0xFF800000> : vector<16xf32>
    %527 = vector.multi_reduction <maximumf>, %526, %cst_183 [1] : vector<16x16xf32> to vector<16xf32>
    %528 = vector.shape_cast %527 : vector<16xf32> to vector<16x1xf32>
    %529 = vector.broadcast %528 : vector<16x1xf32> to vector<16x16xf32>
    %530 = arith.subf %526, %529 : vector<16x16xf32>
    %531 = math.exp %530 : vector<16x16xf32>
    %cst_184 = arith.constant dense<0.000000e+00> : vector<16xf32>
    %532 = vector.multi_reduction <add>, %531, %cst_184 [1] : vector<16x16xf32> to vector<16xf32>
    %533 = vector.shape_cast %532 : vector<16xf32> to vector<16x1xf32>
    %534 = tpu.reciprocal %533 {approx = true} : vector<16x1xf32> -> vector<16x1xf32>
    %535 = vector.broadcast %534 : vector<16x1xf32> to vector<16x16xf32>
    %536 = arith.mulf %531, %535 : vector<16x16xf32>
    %cst_185 = arith.constant dense<0.000000e+00> : vector<16x8xf32>
    %537 = tpu.matmul %536, %521, %cst_185 {dimension_numbers = #tpu.dot_dimension_numbers<[1], [0], [0], [1], [0, 0, 1, 1], [], []>} : vector<16x16xf32>, vector<16x8xf32>, vector<16x8xf32> -> vector<16x8xf32>
    %538 = vector.extract_strided_slice %361 {offsets = [16, 24], sizes = [16, 8], strides = [1, 1]} : vector<32x48xf32> to vector<16x8xf32>
    %539 = vector.extract_strided_slice %365 {offsets = [16, 24], sizes = [16, 8], strides = [1, 1]} : vector<32x48xf32> to vector<16x8xf32>
    %540 = vector.extract_strided_slice %357 {offsets = [16, 24], sizes = [16, 8], strides = [1, 1]} : vector<32x48xf32> to vector<16x8xf32>
    %cst_186 = arith.constant dense<0.000000e+00> : vector<16x16xf32>
    %541 = tpu.matmul %538, %539, %cst_186 {dimension_numbers = #tpu.dot_dimension_numbers<[1], [1], [0], [0], [0, 0, 1, 0], [], []>} : vector<16x8xf32>, vector<16x8xf32>, vector<16x16xf32> -> vector<16x16xf32>
    %cst_187 = arith.constant 0.353553385 : f32
    %542 = vector.broadcast %cst_187 : f32 to vector<16x16xf32>
    %543 = arith.mulf %541, %542 : vector<16x16xf32>
    %cst_188 = arith.constant 0xFF800000 : f32
    %544 = vector.broadcast %cst_188 : f32 to vector<16x16xf32>
    %545 = arith.select %6, %544, %543 : vector<16x16xi1>, vector<16x16xf32>
    %cst_189 = arith.constant dense<0xFF800000> : vector<16xf32>
    %546 = vector.multi_reduction <maximumf>, %545, %cst_189 [1] : vector<16x16xf32> to vector<16xf32>
    %547 = vector.shape_cast %546 : vector<16xf32> to vector<16x1xf32>
    %548 = vector.broadcast %547 : vector<16x1xf32> to vector<16x16xf32>
    %549 = arith.subf %545, %548 : vector<16x16xf32>
    %550 = math.exp %549 : vector<16x16xf32>
    %cst_190 = arith.constant dense<0.000000e+00> : vector<16xf32>
    %551 = vector.multi_reduction <add>, %550, %cst_190 [1] : vector<16x16xf32> to vector<16xf32>
    %552 = vector.shape_cast %551 : vector<16xf32> to vector<16x1xf32>
    %553 = tpu.reciprocal %552 {approx = true} : vector<16x1xf32> -> vector<16x1xf32>
    %554 = vector.broadcast %553 : vector<16x1xf32> to vector<16x16xf32>
    %555 = arith.mulf %550, %554 : vector<16x16xf32>
    %cst_191 = arith.constant dense<0.000000e+00> : vector<16x8xf32>
    %556 = tpu.matmul %555, %540, %cst_191 {dimension_numbers = #tpu.dot_dimension_numbers<[1], [0], [0], [1], [0, 0, 1, 1], [], []>} : vector<16x16xf32>, vector<16x8xf32>, vector<16x8xf32> -> vector<16x8xf32>
    %557 = vector.extract_strided_slice %361 {offsets = [16, 32], sizes = [16, 8], strides = [1, 1]} : vector<32x48xf32> to vector<16x8xf32>
    %558 = vector.extract_strided_slice %365 {offsets = [16, 32], sizes = [16, 8], strides = [1, 1]} : vector<32x48xf32> to vector<16x8xf32>
    %559 = vector.extract_strided_slice %357 {offsets = [16, 32], sizes = [16, 8], strides = [1, 1]} : vector<32x48xf32> to vector<16x8xf32>
    %cst_192 = arith.constant dense<0.000000e+00> : vector<16x16xf32>
    %560 = tpu.matmul %557, %558, %cst_192 {dimension_numbers = #tpu.dot_dimension_numbers<[1], [1], [0], [0], [0, 0, 1, 0], [], []>} : vector<16x8xf32>, vector<16x8xf32>, vector<16x16xf32> -> vector<16x16xf32>
    %cst_193 = arith.constant 0.353553385 : f32
    %561 = vector.broadcast %cst_193 : f32 to vector<16x16xf32>
    %562 = arith.mulf %560, %561 : vector<16x16xf32>
    %cst_194 = arith.constant 0xFF800000 : f32
    %563 = vector.broadcast %cst_194 : f32 to vector<16x16xf32>
    %564 = arith.select %6, %563, %562 : vector<16x16xi1>, vector<16x16xf32>
    %cst_195 = arith.constant dense<0xFF800000> : vector<16xf32>
    %565 = vector.multi_reduction <maximumf>, %564, %cst_195 [1] : vector<16x16xf32> to vector<16xf32>
    %566 = vector.shape_cast %565 : vector<16xf32> to vector<16x1xf32>
    %567 = vector.broadcast %566 : vector<16x1xf32> to vector<16x16xf32>
    %568 = arith.subf %564, %567 : vector<16x16xf32>
    %569 = math.exp %568 : vector<16x16xf32>
    %cst_196 = arith.constant dense<0.000000e+00> : vector<16xf32>
    %570 = vector.multi_reduction <add>, %569, %cst_196 [1] : vector<16x16xf32> to vector<16xf32>
    %571 = vector.shape_cast %570 : vector<16xf32> to vector<16x1xf32>
    %572 = tpu.reciprocal %571 {approx = true} : vector<16x1xf32> -> vector<16x1xf32>
    %573 = vector.broadcast %572 : vector<16x1xf32> to vector<16x16xf32>
    %574 = arith.mulf %569, %573 : vector<16x16xf32>
    %cst_197 = arith.constant dense<0.000000e+00> : vector<16x8xf32>
    %575 = tpu.matmul %574, %559, %cst_197 {dimension_numbers = #tpu.dot_dimension_numbers<[1], [0], [0], [1], [0, 0, 1, 1], [], []>} : vector<16x16xf32>, vector<16x8xf32>, vector<16x8xf32> -> vector<16x8xf32>
    %576 = vector.extract_strided_slice %361 {offsets = [16, 40], sizes = [16, 8], strides = [1, 1]} : vector<32x48xf32> to vector<16x8xf32>
    %577 = vector.extract_strided_slice %365 {offsets = [16, 40], sizes = [16, 8], strides = [1, 1]} : vector<32x48xf32> to vector<16x8xf32>
    %578 = vector.extract_strided_slice %357 {offsets = [16, 40], sizes = [16, 8], strides = [1, 1]} : vector<32x48xf32> to vector<16x8xf32>
    %cst_198 = arith.constant dense<0.000000e+00> : vector<16x16xf32>
    %579 = tpu.matmul %576, %577, %cst_198 {dimension_numbers = #tpu.dot_dimension_numbers<[1], [1], [0], [0], [0, 0, 1, 0], [], []>} : vector<16x8xf32>, vector<16x8xf32>, vector<16x16xf32> -> vector<16x16xf32>
    %cst_199 = arith.constant 0.353553385 : f32
    %580 = vector.broadcast %cst_199 : f32 to vector<16x16xf32>
    %581 = arith.mulf %579, %580 : vector<16x16xf32>
    %cst_200 = arith.constant 0xFF800000 : f32
    %582 = vector.broadcast %cst_200 : f32 to vector<16x16xf32>
    %583 = arith.select %6, %582, %581 : vector<16x16xi1>, vector<16x16xf32>
    %cst_201 = arith.constant dense<0xFF800000> : vector<16xf32>
    %584 = vector.multi_reduction <maximumf>, %583, %cst_201 [1] : vector<16x16xf32> to vector<16xf32>
    %585 = vector.shape_cast %584 : vector<16xf32> to vector<16x1xf32>
    %586 = vector.broadcast %585 : vector<16x1xf32> to vector<16x16xf32>
    %587 = arith.subf %583, %586 : vector<16x16xf32>
    %588 = math.exp %587 : vector<16x16xf32>
    %cst_202 = arith.constant dense<0.000000e+00> : vector<16xf32>
    %589 = vector.multi_reduction <add>, %588, %cst_202 [1] : vector<16x16xf32> to vector<16xf32>
    %590 = vector.shape_cast %589 : vector<16xf32> to vector<16x1xf32>
    %591 = tpu.reciprocal %590 {approx = true} : vector<16x1xf32> -> vector<16x1xf32>
    %592 = vector.broadcast %591 : vector<16x1xf32> to vector<16x16xf32>
    %593 = arith.mulf %588, %592 : vector<16x16xf32>
    %cst_203 = arith.constant dense<0.000000e+00> : vector<16x8xf32>
    %594 = tpu.matmul %593, %578, %cst_203 {dimension_numbers = #tpu.dot_dimension_numbers<[1], [0], [0], [1], [0, 0, 1, 1], [], []>} : vector<16x16xf32>, vector<16x8xf32>, vector<16x8xf32> -> vector<16x8xf32>
    %595 = tpu.concatenate %499, %518, %537, %556, %575, %594 in 1 : vector<16x8xf32>, vector<16x8xf32>, vector<16x8xf32>, vector<16x8xf32>, vector<16x8xf32>, vector<16x8xf32> -> vector<16x48xf32>
    %596 = tpu.concatenate %480, %595 in 0 : vector<16x48xf32>, vector<16x48xf32> -> vector<32x48xf32>
    %c1_204 = arith.constant 1 : index
    %c0_205 = arith.constant 0 : index
    %c0_206 = arith.constant 0 : index
    %597 = vector.load %arg5[%c1_204, %c0_205, %c0_206] : memref<2x48x48xf32, #tpu.memory_space<vmem>>, vector<1x48x48xf32>
    %598 = vector.shape_cast %597 : vector<1x48x48xf32> to vector<48x48xf32>
    %cst_207 = arith.constant dense<0.000000e+00> : vector<32x48xf32>
    %599 = tpu.matmul %596, %598, %cst_207 {dimension_numbers = #tpu.dot_dimension_numbers<[1], [0], [0], [1], [0, 0, 1, 1], [], []>} : vector<32x48xf32>, vector<48x48xf32>, vector<32x48xf32> -> vector<32x48xf32>
    %600 = arith.addf %335, %599 : vector<32x48xf32>
    %cst_208 = arith.constant dense<0.000000e+00> : vector<32xf32>
    %601 = vector.multi_reduction <add>, %600, %cst_208 [1] : vector<32x48xf32> to vector<32xf32>
    %602 = vector.shape_cast %601 : vector<32xf32> to vector<32x1xf32>
    %cst_209 = arith.constant 4.800000e+01 : f32
    %603 = vector.broadcast %cst_209 : f32 to vector<32x1xf32>
    %604 = arith.divf %602, %603 : vector<32x1xf32>
    %605 = vector.broadcast %604 : vector<32x1xf32> to vector<32x48xf32>
    %606 = arith.subf %600, %605 : vector<32x48xf32>
    %607 = arith.mulf %606, %606 : vector<32x48xf32>
    %cst_210 = arith.constant dense<0.000000e+00> : vector<32xf32>
    %608 = vector.multi_reduction <add>, %607, %cst_210 [1] : vector<32x48xf32> to vector<32xf32>
    %609 = vector.shape_cast %608 : vector<32xf32> to vector<32x1xf32>
    %cst_211 = arith.constant 4.800000e+01 : f32
    %610 = vector.broadcast %cst_211 : f32 to vector<32x1xf32>
    %611 = arith.divf %609, %610 : vector<32x1xf32>
    %cst_212 = arith.constant 9.99999993E-9 : f32
    %612 = vector.broadcast %cst_212 : f32 to vector<32x1xf32>
    %613 = arith.addf %611, %612 : vector<32x1xf32>
    %614 = math.rsqrt %613 : vector<32x1xf32>
    %615 = vector.broadcast %614 : vector<32x1xf32> to vector<32x48xf32>
    %616 = arith.mulf %606, %615 : vector<32x48xf32>
    %c1_213 = arith.constant 1 : index
    %c0_214 = arith.constant 0 : index
    %c0_215 = arith.constant 0 : index
    %617 = vector.load %arg6[%c1_213, %c0_214, %c0_215] : memref<2x48x192xf32, #tpu.memory_space<vmem>>, vector<1x48x192xf32>
    %618 = vector.shape_cast %617 : vector<1x48x192xf32> to vector<48x192xf32>
    %cst_216 = arith.constant dense<0.000000e+00> : vector<32x192xf32>
    %619 = tpu.matmul %616, %618, %cst_216 {dimension_numbers = #tpu.dot_dimension_numbers<[1], [0], [0], [1], [0, 0, 1, 1], [], []>} : vector<32x48xf32>, vector<48x192xf32>, vector<32x192xf32> -> vector<32x192xf32>
    %cst_217 = arith.constant 5.000000e-01 : f32
    %620 = vector.broadcast %cst_217 : f32 to vector<32x192xf32>
    %621 = arith.mulf %620, %619 : vector<32x192xf32>
    %cst_218 = arith.constant 0.707106769 : f32
    %622 = vector.broadcast %cst_218 : f32 to vector<32x192xf32>
    %623 = arith.mulf %619, %622 : vector<32x192xf32>
    %cst_219 = arith.constant 0.000000e+00 : f32
    %624 = vector.broadcast %cst_219 : f32 to vector<32x192xf32>
    %625 = arith.cmpf oge, %623, %624 : vector<32x192xf32>
    %cst_220 = arith.constant 1.000000e+00 : f32
    %cst_221 = arith.constant -1.000000e+00 : f32
    %626 = vector.broadcast %cst_220 : f32 to vector<32x192xf32>
    %627 = vector.broadcast %cst_221 : f32 to vector<32x192xf32>
    %628 = arith.select %625, %626, %627 : vector<32x192xi1>, vector<32x192xf32>
    %629 = math.absf %623 : vector<32x192xf32>
    %cst_222 = arith.constant 0.327591091 : f32
    %630 = vector.broadcast %cst_222 : f32 to vector<32x192xf32>
    %631 = arith.mulf %630, %629 : vector<32x192xf32>
    %cst_223 = arith.constant 1.000000e+00 : f32
    %632 = vector.broadcast %cst_223 : f32 to vector<32x192xf32>
    %633 = arith.addf %632, %631 : vector<32x192xf32>
    %cst_224 = arith.constant 1.000000e+00 : f32
    %634 = vector.broadcast %cst_224 : f32 to vector<32x192xf32>
    %635 = arith.divf %634, %633 : vector<32x192xf32>
    %cst_225 = arith.constant 1.06140542 : f32
    %636 = vector.broadcast %cst_225 : f32 to vector<32x192xf32>
    %637 = arith.mulf %636, %635 : vector<32x192xf32>
    %cst_226 = arith.constant 1.45315206 : f32
    %638 = vector.broadcast %cst_226 : f32 to vector<32x192xf32>
    %639 = arith.subf %637, %638 : vector<32x192xf32>
    %640 = arith.mulf %639, %635 : vector<32x192xf32>
    %cst_227 = arith.constant 1.42141378 : f32
    %641 = vector.broadcast %cst_227 : f32 to vector<32x192xf32>
    %642 = arith.addf %640, %641 : vector<32x192xf32>
    %643 = arith.mulf %642, %635 : vector<32x192xf32>
    %cst_228 = arith.constant 0.284496725 : f32
    %644 = vector.broadcast %cst_228 : f32 to vector<32x192xf32>
    %645 = arith.subf %643, %644 : vector<32x192xf32>
    %646 = arith.mulf %645, %635 : vector<32x192xf32>
    %cst_229 = arith.constant 0.254829586 : f32
    %647 = vector.broadcast %cst_229 : f32 to vector<32x192xf32>
    %648 = arith.addf %646, %647 : vector<32x192xf32>
    %649 = arith.mulf %648, %635 : vector<32x192xf32>
    %cst_230 = arith.constant 0.000000e+00 : f32
    %650 = vector.broadcast %cst_230 : f32 to vector<32x192xf32>
    %651 = arith.subf %650, %629 : vector<32x192xf32>
    %652 = arith.mulf %651, %629 : vector<32x192xf32>
    %653 = math.exp %652 : vector<32x192xf32>
    %654 = arith.mulf %649, %653 : vector<32x192xf32>
    %cst_231 = arith.constant 1.000000e+00 : f32
    %655 = vector.broadcast %cst_231 : f32 to vector<32x192xf32>
    %656 = arith.subf %655, %654 : vector<32x192xf32>
    %657 = arith.mulf %628, %656 : vector<32x192xf32>
    %cst_232 = arith.constant 1.000000e+00 : f32
    %658 = vector.broadcast %cst_232 : f32 to vector<32x192xf32>
    %659 = arith.addf %658, %657 : vector<32x192xf32>
    %660 = arith.mulf %621, %659 : vector<32x192xf32>
    %c1_233 = arith.constant 1 : index
    %c0_234 = arith.constant 0 : index
    %c0_235 = arith.constant 0 : index
    %661 = vector.load %arg7[%c1_233, %c0_234, %c0_235] : memref<2x192x48xf32, #tpu.memory_space<vmem>>, vector<1x192x48xf32>
    %662 = vector.shape_cast %661 : vector<1x192x48xf32> to vector<192x48xf32>
    %cst_236 = arith.constant dense<0.000000e+00> : vector<32x48xf32>
    %663 = tpu.matmul %660, %662, %cst_236 {dimension_numbers = #tpu.dot_dimension_numbers<[1], [0], [0], [1], [0, 0, 1, 1], [], []>} : vector<32x192xf32>, vector<192x48xf32>, vector<32x48xf32> -> vector<32x48xf32>
    %664 = arith.addf %600, %663 : vector<32x48xf32>
    %cst_237 = arith.constant dense<0.000000e+00> : vector<32xf32>
    %665 = vector.multi_reduction <add>, %664, %cst_237 [1] : vector<32x48xf32> to vector<32xf32>
    %666 = vector.shape_cast %665 : vector<32xf32> to vector<32x1xf32>
    %cst_238 = arith.constant 4.800000e+01 : f32
    %667 = vector.broadcast %cst_238 : f32 to vector<32x1xf32>
    %668 = arith.divf %666, %667 : vector<32x1xf32>
    %669 = vector.broadcast %668 : vector<32x1xf32> to vector<32x48xf32>
    %670 = arith.subf %664, %669 : vector<32x48xf32>
    %671 = arith.mulf %670, %670 : vector<32x48xf32>
    %cst_239 = arith.constant dense<0.000000e+00> : vector<32xf32>
    %672 = vector.multi_reduction <add>, %671, %cst_239 [1] : vector<32x48xf32> to vector<32xf32>
    %673 = vector.shape_cast %672 : vector<32xf32> to vector<32x1xf32>
    %cst_240 = arith.constant 4.800000e+01 : f32
    %674 = vector.broadcast %cst_240 : f32 to vector<32x1xf32>
    %675 = arith.divf %673, %674 : vector<32x1xf32>
    %cst_241 = arith.constant 9.99999993E-9 : f32
    %676 = vector.broadcast %cst_241 : f32 to vector<32x1xf32>
    %677 = arith.addf %675, %676 : vector<32x1xf32>
    %678 = math.rsqrt %677 : vector<32x1xf32>
    %679 = vector.broadcast %678 : vector<32x1xf32> to vector<32x48xf32>
    %680 = arith.mulf %670, %679 : vector<32x48xf32>
    %c0_242 = arith.constant 0 : index
    %c0_243 = arith.constant 0 : index
    %681 = vector.load %arg8[%c0_242, %c0_243] : memref<48x31xf32, #tpu.memory_space<vmem>>, vector<48x31xf32>
    %cst_244 = arith.constant dense<0.000000e+00> : vector<32x31xf32>
    %682 = tpu.matmul %680, %681, %cst_244 {dimension_numbers = #tpu.dot_dimension_numbers<[1], [0], [0], [1], [0, 0, 1, 1], [], []>} : vector<32x48xf32>, vector<48x31xf32>, vector<32x31xf32> -> vector<32x31xf32>
    %c0_245 = arith.constant 0 : index
    %c0_246 = arith.constant 0 : index
    %683 = vector.load %arg9[%c0_245, %c0_246] : memref<1x31xf32, #tpu.memory_space<vmem>>, vector<1x31xf32>
    %684 = vector.broadcast %683 : vector<1x31xf32> to vector<32x31xf32>
    %685 = arith.addf %682, %684 : vector<32x31xf32>
    %cst_247 = arith.constant dense<0xFF800000> : vector<32xf32>
    %686 = vector.multi_reduction <maximumf>, %685, %cst_247 [1] : vector<32x31xf32> to vector<32xf32>
    %687 = vector.shape_cast %686 : vector<32xf32> to vector<32x1xf32>
    %688 = vector.broadcast %687 : vector<32x1xf32> to vector<32x31xf32>
    %689 = arith.subf %685, %688 : vector<32x31xf32>
    %690 = math.exp %689 : vector<32x31xf32>
    %cst_248 = arith.constant dense<0.000000e+00> : vector<32xf32>
    %691 = vector.multi_reduction <add>, %690, %cst_248 [1] : vector<32x31xf32> to vector<32xf32>
    %692 = vector.shape_cast %691 : vector<32xf32> to vector<32x1xf32>
    %693 = math.log %692 : vector<32x1xf32>
    %694 = arith.addf %693, %687 : vector<32x1xf32>
    %c0_249 = arith.constant 0 : index
    %c0_250 = arith.constant 0 : index
    %695 = vector.load %arg10[%c0_249, %c0_250] : memref<32x31xf32, #tpu.memory_space<vmem>>, vector<32x31xf32>
    %696 = arith.mulf %685, %695 : vector<32x31xf32>
    %cst_251 = arith.constant dense<0.000000e+00> : vector<32xf32>
    %697 = vector.multi_reduction <add>, %696, %cst_251 [1] : vector<32x31xf32> to vector<32xf32>
    %698 = vector.shape_cast %697 : vector<32xf32> to vector<32x1xf32>
    %cst_252 = arith.constant dense<0.000000e+00> : vector<32xf32>
    %699 = vector.multi_reduction <add>, %695, %cst_252 [1] : vector<32x31xf32> to vector<32xf32>
    %700 = vector.shape_cast %699 : vector<32xf32> to vector<32x1xf32>
    %701 = arith.subf %694, %698 : vector<32x1xf32>
    %702 = arith.mulf %701, %700 : vector<32x1xf32>
    %703 = vector.shape_cast %702 : vector<32x1xf32> to vector<1x32x1xf32>
    %cst_253 = arith.constant dense<0.000000e+00> : vector<1xf32>
    %704 = vector.multi_reduction <add>, %703, %cst_253 [1, 2] : vector<1x32x1xf32> to vector<1xf32>
    %705 = vector.shape_cast %704 : vector<1xf32> to vector<1x1x1xf32>
    %706 = vector.extract %705[0, 0, 0] : f32 from vector<1x1x1xf32>
    %c0_254 = arith.constant 0 : index
    %707 = memref.load %arg11[%c0_254] : memref<1xf32, #tpu.memory_space<smem>>
    memref.store %706, %arg11[%c0_254] : memref<1xf32, #tpu.memory_space<smem>>
    %708 = vector.shape_cast %700 : vector<32x1xf32> to vector<1x32x1xf32>
    %cst_255 = arith.constant dense<0.000000e+00> : vector<1xf32>
    %709 = vector.multi_reduction <add>, %708, %cst_255 [1, 2] : vector<1x32x1xf32> to vector<1xf32>
    %710 = vector.shape_cast %709 : vector<1xf32> to vector<1x1x1xf32>
    %711 = vector.extract %710[0, 0, 0] : f32 from vector<1x1x1xf32>
    %c0_256 = arith.constant 0 : index
    %712 = memref.load %arg12[%c0_256] : memref<1xf32, #tpu.memory_space<smem>>
    memref.store %711, %arg12[%c0_256] : memref<1xf32, #tpu.memory_space<smem>>
    return
  }
}

</mosaic_0001>

<llo_original>
// kernel: eq.8
$region0: #{eq.8}
  %s0 = inlined_call_operand.vmem [shape: s32[2,16], index: 0, kind: input, shape index: {}]
  %s1 = inlined_call_operand.vmem [shape: s32[32], index: 1, kind: output, shape index: {}]
  $region1: #{eq.8} parent=0
    #allocation0 [shape = 'u8[4096]{0}', space=vmem, size = 0x1000, scoped, tag = 'scoped mem for output reshape']
    #allocation1 [shape = 'u8[4096]{0}', space=vmem, size = 0x1000, scoped, tag = 'scoped mem for input reshape']
    %s3 = sshll.u32 1, 2
    %s4 = ssub.s32 %s3, 1
    %v5 = vld [vmem:[%s0] sm:%s4]
    %6 = vst [vmem:[#allocation1] sm:%s4] %v5
    %v7 = vld [vmem:[#allocation1] sm:$0x1]
    %vm8 = vcmask 130048
    %9 = vst.msk [vmem:[#allocation0] sm:$0x1] %vm8, %v7
    %s10 = scalar_lea.vmem [#allocation1], 1
    %v11 = vld [vmem:[%s10] sm:$0x1]
    %12 = vrot.lane.b32.xlu0 %v11, 16
    %v13 = vpop.permute.xlu0 %12
    %vm14 = vcmask 261248
    %15 = vst.msk [vmem:[#allocation0] sm:$0x1] %vm14, %v13
    %s17 = sshll.u32 1, 1
    %s18 = ssub.s32 %s17, 1
    %v20 = vld [vmem:[#allocation0] sm:%s18]
    %s21 = sshll.u32 1, 1
    %s22 = ssub.s32 %s21, 1
    %23 = vst [vmem:[%s1] sm:%s22] %v20

// kernel: transformer_forward.1
$region0: #{transformer_forward.1}
  #allocation0 [shape = 'u32[]', space=smem, size = 0x4, offset = 0x4, fixed_abs, tag = 'smem constant byte address 0x4 - core index']
  #allocation1 [shape = 'u32[144,128]{1,0:T(1,128)}', space=vmem, size = 0x12000, scoped, tag = 'internal scratch']
  %s0 = inlined_call_operand.vmem [shape: f32[32,48], index: 0, kind: input, shape index: {}]
  %s1 = inlined_call_operand.vmem [shape: f32[32,48], index: 1, kind: input, shape index: {}]
  %s2 = inlined_call_operand.vmem [shape: f32[32,48], index: 2, kind: input, shape index: {}]
  %s3 = inlined_call_operand.vmem [shape: f32[48,48], index: 3, kind: input, shape index: {}]
  %s4 = inlined_call_operand.vmem [shape: f32[2,48,144], index: 4, kind: input, shape index: {}]
  %s5 = inlined_call_operand.vmem [shape: f32[2,48,48], index: 5, kind: input, shape index: {}]
  %s6 = inlined_call_operand.vmem [shape: f32[2,48,192], index: 6, kind: input, shape index: {}]
  %s7 = inlined_call_operand.vmem [shape: f32[2,192,48], index: 7, kind: input, shape index: {}]
  %s8 = inlined_call_operand.vmem [shape: f32[48,31], index: 8, kind: input, shape index: {}]
  %s9 = inlined_call_operand.vmem [shape: f32[1,31], index: 9, kind: input, shape index: {}]
  %s10 = inlined_call_operand.vmem [shape: f32[32,31], index: 10, kind: input, shape index: {}]
  %s11 = inlined_call_operand.hbm [shape: f32[1], index: 11, kind: output, shape index: {0}]
  %s12 = inlined_call_operand.hbm [shape: f32[1], index: 12, kind: output, shape index: {1}]
  %13 = xla_tuple %s11, %s12
  %s14 = sld [smem:[#allocation0]]
  $region62: #{transformer_forward.1} parent=0
    _
  %s16 = ssub.s32 1, %s14
  %s17 = scalar_select 0, %s16, %s14
  $region1: #{transformer_forward.1} parent=0
    #allocation2 [shape = 'u8[512]{0}', space=smem, size = 0x200, scoped, tag = 'output window, operand 0, single buffered']
    #allocation3 [shape = 's32[1]{0}', space=sflag, size = 0x4, scoped, tag = 'scoped memory for transformer_forward.1']
    #allocation4 [shape = 'u8[512]{0}', space=smem, size = 0x200, scoped, tag = 'output window, operand 1, single buffered']
    #allocation5 [shape = 's32[1]{0}', space=sflag, size = 0x4, scoped, tag = 'scoped memory for transformer_forward.1']
    %18 = vsyncpa [#allocation3], 0
    %19 = vsyncpa [#allocation5], 0
    // Predicated region
    $region2: #{transformer_forward.1} parent=1 // pred_check
      _
    $region3: #{transformer_forward.1} parent=1 // pred_check_branch
      %21 = sbr.rel (0) target = $region5
    $region4: #{transformer_forward.1} parent=1 // pred_region
      _
    $region5: #{transformer_forward.1} parent=1 // pred_fallthru
      _
    // Predicated region
    $region6: #{transformer_forward.1} parent=1 // pred_check
      _
    $region7: #{transformer_forward.1} parent=1 // pred_check_branch
      %23 = sbr.rel (0) target = $region9
    $region8: #{transformer_forward.1} parent=1 // pred_region
      _
    $region9: #{transformer_forward.1} parent=1 // pred_fallthru
      _
    // Predicated region
    $region10: #{transformer_forward.1} parent=1 // pred_check
      _
    $region11: #{transformer_forward.1} parent=1 // pred_check_branch
      %25 = sbr.rel (0) target = $region13
    $region12: #{transformer_forward.1} parent=1 // pred_region
      _
    $region13: #{transformer_forward.1} parent=1 // pred_fallthru
      _
    // Predicated region
    $region14: #{transformer_forward.1} parent=1 // pred_check
      _
    $region15: #{transformer_forward.1} parent=1 // pred_check_branch
      %27 = sbr.rel (0) target = $region17
    $region16: #{transformer_forward.1} parent=1 // pred_region
      _
    $region17: #{transformer_forward.1} parent=1 // pred_fallthru
      _
    // Predicated region
    $region18: #{transformer_forward.1} parent=1 // pred_check
      _
    $region19: #{transformer_forward.1} parent=1 // pred_check_branch
      %29 = sbr.rel (0) target = $region21
    $region20: #{transformer_forward.1} parent=1 // pred_region
      _
    $region21: #{transformer_forward.1} parent=1 // pred_fallthru
      _
    // Predicated region
    $region22: #{transformer_forward.1} parent=1 // pred_check
      _
    $region23: #{transformer_forward.1} parent=1 // pred_check_branch
      %31 = sbr.rel (0) target = $region25
    $region24: #{transformer_forward.1} parent=1 // pred_region
      _
    $region25: #{transformer_forward.1} parent=1 // pred_fallthru
      _
    // Predicated region
    $region26: #{transformer_forward.1} parent=1 // pred_check
      _
    $region27: #{transformer_forward.1} parent=1 // pred_check_branch
      %33 = sbr.rel (0) target = $region29
    $region28: #{transformer_forward.1} parent=1 // pred_region
      _
    $region29: #{transformer_forward.1} parent=1 // pred_fallthru
      _
    // Predicated region
    $region30: #{transformer_forward.1} parent=1 // pred_check
      _
    $region31: #{transformer_forward.1} parent=1 // pred_check_branch
      %35 = sbr.rel (0) target = $region33
    $region32: #{transformer_forward.1} parent=1 // pred_region
      _
    $region33: #{transformer_forward.1} parent=1 // pred_fallthru
      _
    // Predicated region
    $region34: #{transformer_forward.1} parent=1 // pred_check
      _
    $region35: #{transformer_forward.1} parent=1 // pred_check_branch
      %37 = sbr.rel (0) target = $region37
    $region36: #{transformer_forward.1} parent=1 // pred_region
      _
    $region37: #{transformer_forward.1} parent=1 // pred_fallthru
      _
    // Predicated region
    $region38: #{transformer_forward.1} parent=1 // pred_check
      _
    $region39: #{transformer_forward.1} parent=1 // pred_check_branch
      %39 = sbr.rel (0) target = $region41
    $region40: #{transformer_forward.1} parent=1 // pred_region
      _
    $region41: #{transformer_forward.1} parent=1 // pred_fallthru
      _
    // Predicated region
    $region42: #{transformer_forward.1} parent=1 // pred_check
      _
    $region43: #{transformer_forward.1} parent=1 // pred_check_branch
      %41 = sbr.rel (0) target = $region45
    $region44: #{transformer_forward.1} parent=1 // pred_region
      _
    $region45: #{transformer_forward.1} parent=1 // pred_fallthru
      _
    %v42 = vld [vmem:[%s0] sm:$0xff]
    %v43 = vld [vmem:[%s0 + $0x8] sm:$0xff]
    %v44 = vld [vmem:[%s0 + $0x10] sm:$0xff]
    %v45 = vld [vmem:[%s0 + $0x18] sm:$0xff]
    %v46 = vld [vmem:[%s1] sm:$0xff]
    %v47 = vld [vmem:[%s1 + $0x8] sm:$0xff]
    %v48 = vld [vmem:[%s1 + $0x10] sm:$0xff]
    %v49 = vld [vmem:[%s1 + $0x18] sm:$0xff]
    %v50 = vld [vmem:[%s2] sm:$0xff]
    %v51 = vld [vmem:[%s2 + $0x8] sm:$0xff]
    %v52 = vld [vmem:[%s2 + $0x10] sm:$0xff]
    %v53 = vld [vmem:[%s2 + $0x18] sm:$0xff]
    %v54 = vld [vmem:[%s3] sm:$0xff]
    %v55 = vld [vmem:[%s3 + $0x8] sm:$0xff]
    %v56 = vld [vmem:[%s3 + $0x10] sm:$0xff]
    %v57 = vld [vmem:[%s3 + $0x18] sm:$0xff]
    %v58 = vld [vmem:[%s3 + $0x20] sm:$0xff]
    %v59 = vld [vmem:[%s3 + $0x28] sm:$0xff]
    %v60 = vlaneseq
    %v61 = vshrl.u32 %v60, 7
    %v62 = vadd.s32 %v61, 8
    %v63 = vlaneseq
    %v64 = vand.u32 %v63, 127
    %vm65 = vcmp.gt.s32.totalorder %v64, %v61
    %vm66 = vcmp.gt.s32.totalorder %v64, %v62
    %vm67 = vcmask 392192
    %v68 = vsel %vm67, %v42, 0.0
    %69 = vadd.xlane.f32.xlu0 %v68
    %v70 = vpop.xlane.xlu0 %69
    %v71 = vsel %vm67, %v43, 0.0
    %72 = vadd.xlane.f32.xlu0 %v71
    %v73 = vpop.xlane.xlu0 %72
    %v74 = vsel %vm67, %v44, 0.0
    %75 = vadd.xlane.f32.xlu0 %v74
    %v76 = vpop.xlane.xlu0 %75
    %v77 = vsel %vm67, %v45, 0.0
    %78 = vadd.xlane.f32.xlu0 %v77
    %v79 = vpop.xlane.xlu0 %78
    %v80 = vrcp.pop 48.0
    %v81 = vmul.f32 %v70, %v80
    %v82 = vmul.f32 %v73, %v80
    %v83 = vmul.f32 %v76, %v80
    %v84 = vmul.f32 %v79, %v80
    %v85 = vsub.f32 %v42, %v81
    %v86 = vsub.f32 %v43, %v82
    %v87 = vsub.f32 %v44, %v83
    %v88 = vsub.f32 %v45, %v84
    %v89 = vmul.f32 %v85, %v85
    %v90 = vmul.f32 %v86, %v86
    %v91 = vmul.f32 %v87, %v87
    %v92 = vmul.f32 %v88, %v88
    %v93 = vsel %vm67, %v89, 0.0
    %94 = vadd.xlane.f32.xlu0 %v93
    %v95 = vpop.xlane.xlu0 %94
    %v96 = vsel %vm67, %v90, 0.0
    %97 = vadd.xlane.f32.xlu0 %v96
    %v98 = vpop.xlane.xlu0 %97
    %v99 = vsel %vm67, %v91, 0.0
    %100 = vadd.xlane.f32.xlu0 %v99
    %v101 = vpop.xlane.xlu0 %100
    %v102 = vsel %vm67, %v92, 0.0
    %103 = vadd.xlane.f32.xlu0 %v102
    %v104 = vpop.xlane.xlu0 %103
    %v105 = vmul.f32 %v95, %v80
    %v106 = vmul.f32 %v98, %v80
    %v107 = vmul.f32 %v101, %v80
    %v108 = vmul.f32 %v104, %v80
    %v109 = vadd.f32 %v105, 1e-08
    %v110 = vadd.f32 %v106, 1e-08
    %v111 = vadd.f32 %v107, 1e-08
    %v112 = vadd.f32 %v108, 1e-08
    %v113 = vrsqrt.pop %v109
    %v114 = vrsqrt.pop %v110
    %v115 = vrsqrt.pop %v111
    %v116 = vrsqrt.pop %v112
    %v117 = vmul.f32 %v85, %v113
    %v118 = vmul.f32 %v86, %v114
    %v119 = vmul.f32 %v87, %v115
    %v120 = vmul.f32 %v88, %v116
    %v121 = vld [vmem:[%s4] sm:$0xff]
    %v122 = vld [vmem:[%s4 + $0x8] sm:$0xff]
    %v123 = vld [vmem:[%s4 + $0x10] sm:$0xff]
    %v124 = vld [vmem:[%s4 + $0x18] sm:$0xff]
    %v125 = vld [vmem:[%s4 + $0x20] sm:$0xff]
    %v126 = vld [vmem:[%s4 + $0x28] sm:$0xff]
    %v127 = vld [vmem:[%s4 + $0x30] sm:$0xff]
    %v128 = vld [vmem:[%s4 + $0x38] sm:$0xff]
    %v129 = vld [vmem:[%s4 + $0x40] sm:$0xff]
    %v130 = vld [vmem:[%s4 + $0x48] sm:$0xff]
    %v131 = vld [vmem:[%s4 + $0x50] sm:$0xff]
    %v132 = vld [vmem:[%s4 + $0x58] sm:$0xff]
    %v134 = vsel %vm67, %v117, 0
    %v137 = vsel %vm67, %v118, 0
    %v140 = vsel %vm67, %v119, 0
    %v143 = vsel %vm67, %v120, 0
    %145 = vmatprep.subr.mxu0 0.0
    %146 = vmatpush1.msra.mxu0 0.0
    %147 = vmatprep.subr.mxu0 0.0
    %148 = vmatpush1.msra.mxu0 0.0
    %149 = vmatprep.subr.mxu0 0.0
    %150 = vmatpush1.msra.mxu0 0.0
    %151 = vmatprep.subr.mxu0 0.0
    %152 = vmatpush1.msra.mxu0 0.0
    %153 = vmatprep.subr.mxu0 0.0
    %154 = vmatpush1.msra.mxu0 0.0
    %155 = vmatprep.subr.mxu0 0.0
    %156 = vmatpush1.msra.mxu0 0.0
    %157 = vmatprep.subr.mxu0 0.0
    %158 = vmatpush1.msra.mxu0 0.0
    %159 = vmatprep.subr.mxu0 0.0
    %160 = vmatpush1.msra.mxu0 0.0
    %161 = vmatprep.subr.mxu0 0.0
    %162 = vmatpush1.msra.mxu0 0.0
    %163 = vmatprep.subr.mxu0 0.0
    %164 = vmatpush1.msra.mxu0 0.0
    %165 = vmatprep.subr.mxu0 %v132
    %166 = vmatpush1.msra.mxu0 %v131
    %167 = vmatprep.subr.mxu0 %v130
    %168 = vmatpush1.msra.mxu0 %v129
    %169 = vmatprep.subr.mxu0 %v128
    %170 = vmatpush1.msra.mxu0 %v127
    %171 = vmatprep.subr.mxu0 %v126
    %172 = vmatpush1.msra.mxu0 %v125
    %173 = vmatprep.subr.mxu0 %v124
    %174 = vmatpush1.msra.mxu0 %v123
    %175 = vmatprep.subr.mxu0 %v122
    %176 = vmatpush1.msra.mxu0 %v121
    %177 = vmatprep.subr.mxu0 0.0
    %178 = vmatpush2.msra.mxu0 0.0
    %179 = vmatprep.subr.mxu0 0.0
    %180 = vmatpush2.msra.mxu0 0.0
    %181 = vmatprep.subr.mxu0 0.0
    %182 = vmatpush2.msra.mxu0 0.0
    %183 = vmatprep.subr.mxu0 0.0
    %184 = vmatpush2.msra.mxu0 0.0
    %185 = vmatprep.subr.mxu0 0.0
    %186 = vmatpush2.msra.mxu0 0.0
    %187 = vmatprep.subr.mxu0 0.0
    %188 = vmatpush2.msra.mxu0 0.0
    %189 = vmatprep.subr.mxu0 0.0
    %190 = vmatpush2.msra.mxu0 0.0
    %191 = vmatprep.subr.mxu0 0.0
    %192 = vmatpush2.msra.mxu0 0.0
    %193 = vmatprep.subr.mxu0 0.0
    %194 = vmatpush2.msra.mxu0 0.0
    %195 = vmatprep.subr.mxu0 0.0
    %196 = vmatpush2.msra.mxu0 0.0
    %197 = vmatprep.subr.mxu0 0.0
    %198 = vmatpush2.msra.mxu0 0.0
    %199 = vmatprep.subr.mxu0 0.0
    %200 = vmatpush2.msra.mxu0 0.0
    %201 = vmatprep.subr.mxu0 0.0
    %202 = vmatpush2.msra.mxu0 0.0
    %203 = vmatprep.subr.mxu0 0.0
    %204 = vmatpush2.msra.mxu0 0.0
    %205 = vmatprep.subr.mxu0 0.0
    %206 = vmatpush2.msra.mxu0 0.0
    %207 = vmatprep.subr.mxu0 0.0
    %208 = vmatpush2.msra.mxu0 0.0
    %209 = vmatprep.mubr.f32.mxu0 0.0
    %210 = vmatmul.mubr.f32.gmra.mxu0 %v134
    %v211 = vpop.f32.mrf.mxu0
    %v212 = vadd.f32 0.0, %v211
    %v213 = vpop.f32.mrf.mxu0
    %v214 = vadd.f32 0.0, %v213
    %215 = vmatprep.mubr.f32.mxu0 0.0
    %216 = vmatmul.mubr.f32.gmra.mxu0 %v137
    %v217 = vpop.f32.mrf.mxu0
    %v218 = vadd.f32 0.0, %v217
    %v219 = vpop.f32.mrf.mxu0
    %v220 = vadd.f32 0.0, %v219
    %221 = vmatprep.mubr.f32.mxu0 0.0
    %222 = vmatmul.mubr.f32.gmra.mxu0 %v140
    %v223 = vpop.f32.mrf.mxu0
    %v224 = vadd.f32 0.0, %v223
    %v225 = vpop.f32.mrf.mxu0
    %v226 = vadd.f32 0.0, %v225
    %227 = vmatprep.mubr.f32.mxu0 0.0
    %228 = vmatmul.mubr.f32.gmra.mxu0 %v143
    %v229 = vpop.f32.mrf.mxu0
    %v230 = vadd.f32 0.0, %v229
    %v231 = vpop.f32.mrf.mxu0
    %v232 = vadd.f32 0.0, %v231
    %233 = vdwg.mxu0
    %v234 = vmul.f32 %v212, %v46
    %v235 = vmul.f32 %v218, %v47
    %v236 = vmul.f32 %v224, %v48
    %v237 = vmul.f32 %v230, %v49
    %v239 = vsel %vm67, %v212, 0
    %v242 = vsel %vm67, %v218, 0
    %v245 = vsel %vm67, %v224, 0
    %v248 = vsel %vm67, %v230, 0
    %250 = vmatprep.subr.mxu0 0.0
    %251 = vmatpush1.msra.mxu0 0.0
    %252 = vmatprep.subr.mxu0 0.0
    %253 = vmatpush1.msra.mxu0 0.0
    %254 = vmatprep.subr.mxu0 0.0
    %255 = vmatpush1.msra.mxu0 0.0
    %256 = vmatprep.subr.mxu0 0.0
    %257 = vmatpush1.msra.mxu0 0.0
    %258 = vmatprep.subr.mxu0 0.0
    %259 = vmatpush1.msra.mxu0 0.0
    %260 = vmatprep.subr.mxu0 0.0
    %261 = vmatpush1.msra.mxu0 0.0
    %262 = vmatprep.subr.mxu0 0.0
    %263 = vmatpush1.msra.mxu0 0.0
    %264 = vmatprep.subr.mxu0 0.0
    %265 = vmatpush1.msra.mxu0 0.0
    %266 = vmatprep.subr.mxu0 0.0
    %267 = vmatpush1.msra.mxu0 0.0
    %268 = vmatprep.subr.mxu0 0.0
    %269 = vmatpush1.msra.mxu0 0.0
    %270 = vmatprep.subr.mxu0 0.0
    %271 = vmatpush1.msra.mxu0 %v59
    %272 = vmatprep.subr.mxu0 0.0
    %273 = vmatpush1.msra.mxu0 %v58
    %274 = vmatprep.subr.mxu0 0.0
    %275 = vmatpush1.msra.mxu0 %v57
    %276 = vmatprep.subr.mxu0 0.0
    %277 = vmatpush1.msra.mxu0 %v56
    %278 = vmatprep.subr.mxu0 0.0
    %279 = vmatpush1.msra.mxu0 %v55
    %280 = vmatprep.subr.mxu0 0.0
    %281 = vmatpush1.msra.mxu0 %v54
    %282 = vmatprep.subr.mxu0 0.0
    %283 = vmatpush2.msra.mxu0 0.0
    %284 = vmatprep.subr.mxu0 0.0
    %285 = vmatpush2.msra.mxu0 0.0
    %286 = vmatprep.subr.mxu0 0.0
    %287 = vmatpush2.msra.mxu0 0.0
    %288 = vmatprep.subr.mxu0 0.0
    %289 = vmatpush2.msra.mxu0 0.0
    %290 = vmatprep.subr.mxu0 0.0
    %291 = vmatpush2.msra.mxu0 0.0
    %292 = vmatprep.subr.mxu0 0.0
    %293 = vmatpush2.msra.mxu0 0.0
    %294 = vmatprep.subr.mxu0 0.0
    %295 = vmatpush2.msra.mxu0 0.0
    %296 = vmatprep.subr.mxu0 0.0
    %297 = vmatpush2.msra.mxu0 0.0
    %298 = vmatprep.subr.mxu0 0.0
    %299 = vmatpush2.msra.mxu0 0.0
    %300 = vmatprep.subr.mxu0 0.0
    %301 = vmatpush2.msra.mxu0 0.0
    %302 = vmatprep.subr.mxu0 0.0
    %303 = vmatpush2.msra.mxu0 0.0
    %304 = vmatprep.subr.mxu0 0.0
    %305 = vmatpush2.msra.mxu0 0.0
    %306 = vmatprep.subr.mxu0 0.0
    %307 = vmatpush2.msra.mxu0 0.0
    %308 = vmatprep.subr.mxu0 0.0
    %309 = vmatpush2.msra.mxu0 0.0
    %310 = vmatprep.subr.mxu0 0.0
    %311 = vmatpush2.msra.mxu0 0.0
    %312 = vmatprep.subr.mxu0 0.0
    %313 = vmatpush2.msra.mxu0 0.0
    %314 = vmatprep.mubr.f32.mxu0 0.0
    %315 = vmatmul.mubr.f32.gmra.mxu0 %v239
    %v316 = vpop.f32.mrf.mxu0
    %v317 = vadd.f32 0.0, %v316
    %v318 = vpop.f32.mrf.mxu0
    %319 = vmatprep.mubr.f32.mxu0 0.0
    %320 = vmatmul.mubr.f32.gmra.mxu0 %v242
    %v321 = vpop.f32.mrf.mxu0
    %v322 = vadd.f32 0.0, %v321
    %v323 = vpop.f32.mrf.mxu0
    %324 = vmatprep.mubr.f32.mxu0 0.0
    %325 = vmatmul.mubr.f32.gmra.mxu0 %v245
    %v326 = vpop.f32.mrf.mxu0
    %v327 = vadd.f32 0.0, %v326
    %v328 = vpop.f32.mrf.mxu0
    %329 = vmatprep.mubr.f32.mxu0 0.0
    %330 = vmatmul.mubr.f32.gmra.mxu0 %v248
    %v331 = vpop.f32.mrf.mxu0
    %v332 = vadd.f32 0.0, %v331
    %v333 = vpop.f32.mrf.mxu0
    %334 = vdwg.mxu0
    %v335 = vmul.f32 %v317, %v50
    %v336 = vmul.f32 %v322, %v51
    %v337 = vmul.f32 %v327, %v52
    %v338 = vmul.f32 %v332, %v53
    %v339 = vadd.f32 %v234, %v335
    %v340 = vadd.f32 %v235, %v336
    %v341 = vadd.f32 %v236, %v337
    %v342 = vadd.f32 %v237, %v338
    %347 = vrot.lane.b32.xlu0 %v46, 48
    %v348 = vpop.permute.xlu0 %347
    %349 = vrot.lane.b32.xlu0 %v47, 48
    %v350 = vpop.permute.xlu0 %349
    %351 = vrot.lane.b32.xlu0 %v48, 48
    %v352 = vpop.permute.xlu0 %351
    %353 = vrot.lane.b32.xlu0 %v49, 48
    %v354 = vpop.permute.xlu0 %353
    %v359 = vmul.f32 %v212, %v348
    %v360 = vmul.f32 %v218, %v350
    %v361 = vmul.f32 %v224, %v352
    %v362 = vmul.f32 %v230, %v354
    %363 = vrot.lane.b32.xlu0 %v212, 80
    %v364 = vpop.permute.xlu0 %363
    %365 = vrot.lane.b32.xlu0 %v218, 80
    %v366 = vpop.permute.xlu0 %365
    %367 = vrot.lane.b32.xlu0 %v224, 80
    %v368 = vpop.permute.xlu0 %367
    %369 = vrot.lane.b32.xlu0 %v230, 80
    %v370 = vpop.permute.xlu0 %369
    %v371 = vsel %vm67, %v364, 0
    %v373 = vsel %vm67, %v366, 0
    %v375 = vsel %vm67, %v368, 0
    %v377 = vsel %vm67, %v370, 0
    %379 = vmatprep.subr.mxu0 0.0
    %380 = vmatpush1.msra.mxu0 0.0
    %381 = vmatprep.subr.mxu0 0.0
    %382 = vmatpush1.msra.mxu0 0.0
    %383 = vmatprep.subr.mxu0 0.0
    %384 = vmatpush1.msra.mxu0 0.0
    %385 = vmatprep.subr.mxu0 0.0
    %386 = vmatpush1.msra.mxu0 0.0
    %387 = vmatprep.subr.mxu0 0.0
    %388 = vmatpush1.msra.mxu0 0.0
    %389 = vmatprep.subr.mxu0 0.0
    %390 = vmatpush1.msra.mxu0 0.0
    %391 = vmatprep.subr.mxu0 0.0
    %392 = vmatpush1.msra.mxu0 0.0
    %393 = vmatprep.subr.mxu0 0.0
    %394 = vmatpush1.msra.mxu0 0.0
    %395 = vmatprep.subr.mxu0 0.0
    %396 = vmatpush1.msra.mxu0 0.0
    %397 = vmatprep.subr.mxu0 0.0
    %398 = vmatpush1.msra.mxu0 0.0
    %399 = vmatprep.subr.mxu0 0.0
    %400 = vmatpush1.msra.mxu0 %v59
    %401 = vmatprep.subr.mxu0 0.0
    %402 = vmatpush1.msra.mxu0 %v58
    %403 = vmatprep.subr.mxu0 0.0
    %404 = vmatpush1.msra.mxu0 %v57
    %405 = vmatprep.subr.mxu0 0.0
    %406 = vmatpush1.msra.mxu0 %v56
    %407 = vmatprep.subr.mxu0 0.0
    %408 = vmatpush1.msra.mxu0 %v55
    %409 = vmatprep.subr.mxu0 0.0
    %410 = vmatpush1.msra.mxu0 %v54
    %411 = vmatprep.subr.mxu0 0.0
    %412 = vmatpush2.msra.mxu0 0.0
    %413 = vmatprep.subr.mxu0 0.0
    %414 = vmatpush2.msra.mxu0 0.0
    %415 = vmatprep.subr.mxu0 0.0
    %416 = vmatpush2.msra.mxu0 0.0
    %417 = vmatprep.subr.mxu0 0.0
    %418 = vmatpush2.msra.mxu0 0.0
    %419 = vmatprep.subr.mxu0 0.0
    %420 = vmatpush2.msra.mxu0 0.0
    %421 = vmatprep.subr.mxu0 0.0
    %422 = vmatpush2.msra.mxu0 0.0
    %423 = vmatprep.subr.mxu0 0.0
    %424 = vmatpush2.msra.mxu0 0.0
    %425 = vmatprep.subr.mxu0 0.0
    %426 = vmatpush2.msra.mxu0 0.0
    %427 = vmatprep.subr.mxu0 0.0
    %428 = vmatpush2.msra.mxu0 0.0
    %429 = vmatprep.subr.mxu0 0.0
    %430 = vmatpush2.msra.mxu0 0.0
    %431 = vmatprep.subr.mxu0 0.0
    %432 = vmatpush2.msra.mxu0 0.0
    %433 = vmatprep.subr.mxu0 0.0
    %434 = vmatpush2.msra.mxu0 0.0
    %435 = vmatprep.subr.mxu0 0.0
    %436 = vmatpush2.msra.mxu0 0.0
    %437 = vmatprep.subr.mxu0 0.0
    %438 = vmatpush2.msra.mxu0 0.0
    %439 = vmatprep.subr.mxu0 0.0
    %440 = vmatpush2.msra.mxu0 0.0
    %441 = vmatprep.subr.mxu0 0.0
    %442 = vmatpush2.msra.mxu0 0.0
    %443 = vmatprep.mubr.f32.mxu0 0.0
    %444 = vmatmul.mubr.f32.gmra.mxu0 %v371
    %v445 = vpop.f32.mrf.mxu0
    %v446 = vadd.f32 0.0, %v445
    %v447 = vpop.f32.mrf.mxu0
    %448 = vmatprep.mubr.f32.mxu0 0.0
    %449 = vmatmul.mubr.f32.gmra.mxu0 %v373
    %v450 = vpop.f32.mrf.mxu0
    %v451 = vadd.f32 0.0, %v450
    %v452 = vpop.f32.mrf.mxu0
    %453 = vmatprep.mubr.f32.mxu0 0.0
    %454 = vmatmul.mubr.f32.gmra.mxu0 %v375
    %v455 = vpop.f32.mrf.mxu0
    %v456 = vadd.f32 0.0, %v455
    %v457 = vpop.f32.mrf.mxu0
    %458 = vmatprep.mubr.f32.mxu0 0.0
    %459 = vmatmul.mubr.f32.gmra.mxu0 %v377
    %v460 = vpop.f32.mrf.mxu0
    %v461 = vadd.f32 0.0, %v460
    %v462 = vpop.f32.mrf.mxu0
    %463 = vdwg.mxu0
    %v464 = vmul.f32 %v446, %v50
    %v465 = vmul.f32 %v451, %v51
    %v466 = vmul.f32 %v456, %v52
    %v467 = vmul.f32 %v461, %v53
    %472 = vrot.lane.b32.xlu0 %v464, 48
    %v473 = vpop.permute.xlu0 %472
    %474 = vrot.lane.b32.xlu0 %v465, 48
    %v475 = vpop.permute.xlu0 %474
    %476 = vrot.lane.b32.xlu0 %v466, 48
    %v477 = vpop.permute.xlu0 %476
    %478 = vrot.lane.b32.xlu0 %v467, 48
    %v479 = vpop.permute.xlu0 %478
    %v484 = vadd.f32 %v359, %v473
    %v485 = vadd.f32 %v360, %v475
    %v486 = vadd.f32 %v361, %v477
    %v487 = vadd.f32 %v362, %v479
    %490 = vrot.lane.b32.xlu0 %v484, 80
    %v491 = vpop.permute.xlu0 %490
    %492 = vrot.lane.b32.xlu0 %v485, 80
    %v493 = vpop.permute.xlu0 %492
    %vm494 = vcmask 64512
    %v496 = vsel %vm494, %v339, 0
    %v499 = vsel %vm494, %v340, 0
    %v501 = vsel %vm494, %v491, 0
    %v503 = vsel %vm494, %v493, 0
    %505 = vmatprep.subr.mxu0 0.0
    %506 = vmatpush1.xpose.msra.mxu0 0.0
    %507 = vmatprep.subr.mxu0 0.0
    %508 = vmatpush1.xpose.msra.mxu0 0.0
    %509 = vmatprep.subr.mxu0 0.0
    %510 = vmatpush1.xpose.msra.mxu0 0.0
    %511 = vmatprep.subr.mxu0 0.0
    %512 = vmatpush1.xpose.msra.mxu0 0.0
    %513 = vmatprep.subr.mxu0 0.0
    %514 = vmatpush1.xpose.msra.mxu0 0.0
    %515 = vmatprep.subr.mxu0 0.0
    %516 = vmatpush1.xpose.msra.mxu0 0.0
    %517 = vmatprep.subr.mxu0 0.0
    %518 = vmatpush1.xpose.msra.mxu0 0.0
    %519 = vmatprep.subr.mxu0 0.0
    %520 = vmatpush1.xpose.msra.mxu0 0.0
    %521 = vmatprep.subr.mxu0 0.0
    %522 = vmatpush1.xpose.msra.mxu0 0.0
    %523 = vmatprep.subr.mxu0 0.0
    %524 = vmatpush1.xpose.msra.mxu0 0.0
    %525 = vmatprep.subr.mxu0 0.0
    %526 = vmatpush1.xpose.msra.mxu0 0.0
    %527 = vmatprep.subr.mxu0 0.0
    %528 = vmatpush1.xpose.msra.mxu0 0.0
    %529 = vmatprep.subr.mxu0 0.0
    %530 = vmatpush1.xpose.msra.mxu0 0.0
    %531 = vmatprep.subr.mxu0 0.0
    %532 = vmatpush1.xpose.msra.mxu0 0.0
    %533 = vmatprep.subr.mxu0 0.0
    %534 = vmatpush1.xpose.msra.mxu0 %v503
    %535 = vmatprep.subr.mxu0 0.0
    %536 = vmatpush1.xpose.msra.mxu0 %v501
    %537 = vmatprep.subr.mxu0 0.0
    %538 = vmatpush2.xpose.msra.mxu0 0.0
    %539 = vmatprep.subr.mxu0 0.0
    %540 = vmatpush2.xpose.msra.mxu0 0.0
    %541 = vmatprep.subr.mxu0 0.0
    %542 = vmatpush2.xpose.msra.mxu0 0.0
    %543 = vmatprep.subr.mxu0 0.0
    %544 = vmatpush2.xpose.msra.mxu0 0.0
    %545 = vmatprep.subr.mxu0 0.0
    %546 = vmatpush2.xpose.msra.mxu0 0.0
    %547 = vmatprep.subr.mxu0 0.0
    %548 = vmatpush2.xpose.msra.mxu0 0.0
    %549 = vmatprep.subr.mxu0 0.0
    %550 = vmatpush2.xpose.msra.mxu0 0.0
    %551 = vmatprep.subr.mxu0 0.0
    %552 = vmatpush2.xpose.msra.mxu0 0.0
    %553 = vmatprep.subr.mxu0 0.0
    %554 = vmatpush2.xpose.msra.mxu0 0.0
    %555 = vmatprep.subr.mxu0 0.0
    %556 = vmatpush2.xpose.msra.mxu0 0.0
    %557 = vmatprep.subr.mxu0 0.0
    %558 = vmatpush2.xpose.msra.mxu0 0.0
    %559 = vmatprep.subr.mxu0 0.0
    %560 = vmatpush2.xpose.msra.mxu0 0.0
    %561 = vmatprep.subr.mxu0 0.0
    %562 = vmatpush2.xpose.msra.mxu0 0.0
    %563 = vmatprep.subr.mxu0 0.0
    %564 = vmatpush2.xpose.msra.mxu0 0.0
    %565 = vmatprep.subr.mxu0 0.0
    %566 = vmatpush2.xpose.msra.mxu0 0.0
    %567 = vmatprep.subr.mxu0 0.0
    %568 = vmatpush2.xpose.msra.mxu0 0.0
    %569 = vmatprep.mubr.f32.mxu0 0.0
    %570 = vmatmul.mubr.f32.gmra.mxu0 %v496
    %v571 = vpop.f32.mrf.mxu0
    %v572 = vadd.f32 0.0, %v571
    %v573 = vpop.f32.mrf.mxu0
    %574 = vmatprep.mubr.f32.mxu0 0.0
    %575 = vmatmul.mubr.f32.gmra.mxu0 %v499
    %v576 = vpop.f32.mrf.mxu0
    %v577 = vadd.f32 0.0, %v576
    %v578 = vpop.f32.mrf.mxu0
    %579 = vdwg.mxu0
    %v580 = vmul.f32 %v572, 0.35355338
    %v581 = vmul.f32 %v577, 0.35355338
    %v582 = vsel %vm65, -inf, %v580
    %v583 = vsel %vm66, -inf, %v581
    %vm584 = vcmask 130048
    %v585 = vsel %vm584, %v582, -inf
    %586 = vmax.xlane.f32.xlu0 %v585
    %v587 = vpop.xlane.xlu0 %586
    %v588 = vsel %vm584, %v583, -inf
    %589 = vmax.xlane.f32.xlu0 %v588
    %v590 = vpop.xlane.xlu0 %589
    %v591 = vsub.f32 %v582, %v587
    %v592 = vsub.f32 %v583, %v590
    %v593 = vmul.f32 %v591, 1.442695
    %v594 = vpow.pop %v593
    %v595 = vmul.f32 %v592, 1.442695
    %v596 = vpow.pop %v595
    %v597 = vsel %vm584, %v594, 0.0
    %598 = vadd.xlane.f32.xlu0 %v597
    %v599 = vpop.xlane.xlu0 %598
    %v600 = vsel %vm584, %v596, 0.0
    %601 = vadd.xlane.f32.xlu0 %v600
    %v602 = vpop.xlane.xlu0 %601
    %v603 = vrcp.pop %v599
    %v604 = vrcp.pop %v602
    %v605 = vmul.f32 %v594, %v603
    %v606 = vmul.f32 %v596, %v604
    %607 = vrot.lane.b32.xlu0 %v212, 32
    %v608 = vpop.permute.xlu0 %607
    %609 = vrot.lane.b32.xlu0 %v218, 32
    %v610 = vpop.permute.xlu0 %609
    %v614 = vsel %vm584, %v605, 0
    %v617 = vsel %vm584, %v606, 0
    %619 = vmatprep.subr.mxu0 0.0
    %620 = vmatpush1.msra.mxu0 0.0
    %621 = vmatprep.subr.mxu0 0.0
    %622 = vmatpush1.msra.mxu0 0.0
    %623 = vmatprep.subr.mxu0 0.0
    %624 = vmatpush1.msra.mxu0 0.0
    %625 = vmatprep.subr.mxu0 0.0
    %626 = vmatpush1.msra.mxu0 0.0
    %627 = vmatprep.subr.mxu0 0.0
    %628 = vmatpush1.msra.mxu0 0.0
    %629 = vmatprep.subr.mxu0 0.0
    %630 = vmatpush1.msra.mxu0 0.0
    %631 = vmatprep.subr.mxu0 0.0
    %632 = vmatpush1.msra.mxu0 0.0
    %633 = vmatprep.subr.mxu0 0.0
    %634 = vmatpush1.msra.mxu0 0.0
    %635 = vmatprep.subr.mxu0 0.0
    %636 = vmatpush1.msra.mxu0 0.0
    %637 = vmatprep.subr.mxu0 0.0
    %638 = vmatpush1.msra.mxu0 0.0
    %639 = vmatprep.subr.mxu0 0.0
    %640 = vmatpush1.msra.mxu0 0.0
    %641 = vmatprep.subr.mxu0 0.0
    %642 = vmatpush1.msra.mxu0 0.0
    %643 = vmatprep.subr.mxu0 0.0
    %644 = vmatpush1.msra.mxu0 0.0
    %645 = vmatprep.subr.mxu0 0.0
    %646 = vmatpush1.msra.mxu0 0.0
    %647 = vmatprep.subr.mxu0 0.0
    %648 = vmatpush1.msra.mxu0 %v610
    %649 = vmatprep.subr.mxu0 0.0
    %650 = vmatpush1.msra.mxu0 %v608
    %651 = vmatprep.subr.mxu0 0.0
    %652 = vmatpush2.msra.mxu0 0.0
    %653 = vmatprep.subr.mxu0 0.0
    %654 = vmatpush2.msra.mxu0 0.0
    %655 = vmatprep.subr.mxu0 0.0
    %656 = vmatpush2.msra.mxu0 0.0
    %657 = vmatprep.subr.mxu0 0.0
    %658 = vmatpush2.msra.mxu0 0.0
    %659 = vmatprep.subr.mxu0 0.0
    %660 = vmatpush2.msra.mxu0 0.0
    %661 = vmatprep.subr.mxu0 0.0
    %662 = vmatpush2.msra.mxu0 0.0
    %663 = vmatprep.subr.mxu0 0.0
    %664 = vmatpush2.msra.mxu0 0.0
    %665 = vmatprep.subr.mxu0 0.0
    %666 = vmatpush2.msra.mxu0 0.0
    %667 = vmatprep.subr.mxu0 0.0
    %668 = vmatpush2.msra.mxu0 0.0
    %669 = vmatprep.subr.mxu0 0.0
    %670 = vmatpush2.msra.mxu0 0.0
    %671 = vmatprep.subr.mxu0 0.0
    %672 = vmatpush2.msra.mxu0 0.0
    %673 = vmatprep.subr.mxu0 0.0
    %674 = vmatpush2.msra.mxu0 0.0
    %675 = vmatprep.subr.mxu0 0.0
    %676 = vmatpush2.msra.mxu0 0.0
    %677 = vmatprep.subr.mxu0 0.0
    %678 = vmatpush2.msra.mxu0 0.0
    %679 = vmatprep.subr.mxu0 0.0
    %680 = vmatpush2.msra.mxu0 0.0
    %681 = vmatprep.subr.mxu0 0.0
    %682 = vmatpush2.msra.mxu0 0.0
    %683 = vmatprep.mubr.f32.mxu0 0.0
    %684 = vmatmul.mubr.f32.gmra.mxu0 %v614
    %v685 = vpop.f32.mrf.mxu0
    %v686 = vadd.f32 0.0, %v685
    %v687 = vpop.f32.mrf.mxu0
    %688 = vmatprep.mubr.f32.mxu0 0.0
    %689 = vmatmul.mubr.f32.gmra.mxu0 %v617
    %v690 = vpop.f32.mrf.mxu0
    %v691 = vadd.f32 0.0, %v690
    %v692 = vpop.f32.mrf.mxu0
    %693 = vdwg.mxu0
    %694 = vrot.lane.b32.xlu0 %v339, 120
    %v695 = vpop.permute.xlu0 %694
    %696 = vrot.lane.b32.xlu0 %v340, 120
    %v697 = vpop.permute.xlu0 %696
    %698 = vrot.lane.b32.xlu0 %v484, 72
    %v699 = vpop.permute.xlu0 %698
    %700 = vrot.lane.b32.xlu0 %v485, 72
    %v701 = vpop.permute.xlu0 %700
    %v702 = vsel %vm494, %v695, 0
    %v704 = vsel %vm494, %v697, 0
    %v706 = vsel %vm494, %v699, 0
    %v708 = vsel %vm494, %v701, 0
    %710 = vmatprep.subr.mxu0 0.0
    %711 = vmatpush1.xpose.msra.mxu0 0.0
    %712 = vmatprep.subr.mxu0 0.0
    %713 = vmatpush1.xpose.msra.mxu0 0.0
    %714 = vmatprep.subr.mxu0 0.0
    %715 = vmatpush1.xpose.msra.mxu0 0.0
    %716 = vmatprep.subr.mxu0 0.0
    %717 = vmatpush1.xpose.msra.mxu0 0.0
    %718 = vmatprep.subr.mxu0 0.0
    %719 = vmatpush1.xpose.msra.mxu0 0.0
    %720 = vmatprep.subr.mxu0 0.0
    %721 = vmatpush1.xpose.msra.mxu0 0.0
    %722 = vmatprep.subr.mxu0 0.0
    %723 = vmatpush1.xpose.msra.mxu0 0.0
    %724 = vmatprep.subr.mxu0 0.0
    %725 = vmatpush1.xpose.msra.mxu0 0.0
    %726 = vmatprep.subr.mxu0 0.0
    %727 = vmatpush1.xpose.msra.mxu0 0.0
    %728 = vmatprep.subr.mxu0 0.0
    %729 = vmatpush1.xpose.msra.mxu0 0.0
    %730 = vmatprep.subr.mxu0 0.0
    %731 = vmatpush1.xpose.msra.mxu0 0.0
    %732 = vmatprep.subr.mxu0 0.0
    %733 = vmatpush1.xpose.msra.mxu0 0.0
    %734 = vmatprep.subr.mxu0 0.0
    %735 = vmatpush1.xpose.msra.mxu0 0.0
    %736 = vmatprep.subr.mxu0 0.0
    %737 = vmatpush1.xpose.msra.mxu0 0.0
    %738 = vmatprep.subr.mxu0 0.0
    %739 = vmatpush1.xpose.msra.mxu0 %v708
    %740 = vmatprep.subr.mxu0 0.0
    %741 = vmatpush1.xpose.msra.mxu0 %v706
    %742 = vmatprep.subr.mxu0 0.0
    %743 = vmatpush2.xpose.msra.mxu0 0.0
    %744 = vmatprep.subr.mxu0 0.0
    %745 = vmatpush2.xpose.msra.mxu0 0.0
    %746 = vmatprep.subr.mxu0 0.0
    %747 = vmatpush2.xpose.msra.mxu0 0.0
    %748 = vmatprep.subr.mxu0 0.0
    %749 = vmatpush2.xpose.msra.mxu0 0.0
    %750 = vmatprep.subr.mxu0 0.0
    %751 = vmatpush2.xpose.msra.mxu0 0.0
    %752 = vmatprep.subr.mxu0 0.0
    %753 = vmatpush2.xpose.msra.mxu0 0.0
    %754 = vmatprep.subr.mxu0 0.0
    %755 = vmatpush2.xpose.msra.mxu0 0.0
    %756 = vmatprep.subr.mxu0 0.0
    %757 = vmatpush2.xpose.msra.mxu0 0.0
    %758 = vmatprep.subr.mxu0 0.0
    %759 = vmatpush2.xpose.msra.mxu0 0.0
    %760 = vmatprep.subr.mxu0 0.0
    %761 = vmatpush2.xpose.msra.mxu0 0.0
    %762 = vmatprep.subr.mxu0 0.0
    %763 = vmatpush2.xpose.msra.mxu0 0.0
    %764 = vmatprep.subr.mxu0 0.0
    %765 = vmatpush2.xpose.msra.mxu0 0.0
    %766 = vmatprep.subr.mxu0 0.0
    %767 = vmatpush2.xpose.msra.mxu0 0.0
    %768 = vmatprep.subr.mxu0 0.0
    %769 = vmatpush2.xpose.msra.mxu0 0.0
    %770 = vmatprep.subr.mxu0 0.0
    %771 = vmatpush2.xpose.msra.mxu0 0.0
    %772 = vmatprep.subr.mxu0 0.0
    %773 = vmatpush2.xpose.msra.mxu0 0.0
    %774 = vmatprep.mubr.f32.mxu0 0.0
    %775 = vmatmul.mubr.f32.gmra.mxu0 %v702
    %v776 = vpop.f32.mrf.mxu0
    %v777 = vadd.f32 0.0, %v776
    %v778 = vpop.f32.mrf.mxu0
    %779 = vmatprep.mubr.f32.mxu0 0.0
    %780 = vmatmul.mubr.f32.gmra.mxu0 %v704
    %v781 = vpop.f32.mrf.mxu0
    %v782 = vadd.f32 0.0, %v781
    %v783 = vpop.f32.mrf.mxu0
    %784 = vdwg.mxu0
    %v785 = vmul.f32 %v777, 0.35355338
    %v786 = vmul.f32 %v782, 0.35355338
    %v787 = vsel %vm65, -inf, %v785
    %v788 = vsel %vm66, -inf, %v786
    %v789 = vsel %vm584, %v787, -inf
    %790 = vmax.xlane.f32.xlu0 %v789
    %v791 = vpop.xlane.xlu0 %790
    %v792 = vsel %vm584, %v788, -inf
    %793 = vmax.xlane.f32.xlu0 %v792
    %v794 = vpop.xlane.xlu0 %793
    %v795 = vsub.f32 %v787, %v791
    %v796 = vsub.f32 %v788, %v794
    %v797 = vmul.f32 %v795, 1.442695
    %v798 = vpow.pop %v797
    %v799 = vmul.f32 %v796, 1.442695
    %v800 = vpow.pop %v799
    %v801 = vsel %vm584, %v798, 0.0
    %802 = vadd.xlane.f32.xlu0 %v801
    %v803 = vpop.xlane.xlu0 %802
    %v804 = vsel %vm584, %v800, 0.0
    %805 = vadd.xlane.f32.xlu0 %v804
    %v806 = vpop.xlane.xlu0 %805
    %v807 = vrcp.pop %v803
    %v808 = vrcp.pop %v806
    %v809 = vmul.f32 %v798, %v807
    %v810 = vmul.f32 %v800, %v808
    %811 = vrot.lane.b32.xlu0 %v212, 24
    %v812 = vpop.permute.xlu0 %811
    %813 = vrot.lane.b32.xlu0 %v218, 24
    %v814 = vpop.permute.xlu0 %813
    %v818 = vsel %vm584, %v809, 0
    %v821 = vsel %vm584, %v810, 0
    %823 = vmatprep.subr.mxu0 0.0
    %824 = vmatpush1.msra.mxu0 0.0
    %825 = vmatprep.subr.mxu0 0.0
    %826 = vmatpush1.msra.mxu0 0.0
    %827 = vmatprep.subr.mxu0 0.0
    %828 = vmatpush1.msra.mxu0 0.0
    %829 = vmatprep.subr.mxu0 0.0
    %830 = vmatpush1.msra.mxu0 0.0
    %831 = vmatprep.subr.mxu0 0.0
    %832 = vmatpush1.msra.mxu0 0.0
    %833 = vmatprep.subr.mxu0 0.0
    %834 = vmatpush1.msra.mxu0 0.0
    %835 = vmatprep.subr.mxu0 0.0
    %836 = vmatpush1.msra.mxu0 0.0
    %837 = vmatprep.subr.mxu0 0.0
    %838 = vmatpush1.msra.mxu0 0.0
    %839 = vmatprep.subr.mxu0 0.0
    %840 = vmatpush1.msra.mxu0 0.0
    %841 = vmatprep.subr.mxu0 0.0
    %842 = vmatpush1.msra.mxu0 0.0
    %843 = vmatprep.subr.mxu0 0.0
    %844 = vmatpush1.msra.mxu0 0.0
    %845 = vmatprep.subr.mxu0 0.0
    %846 = vmatpush1.msra.mxu0 0.0
    %847 = vmatprep.subr.mxu0 0.0
    %848 = vmatpush1.msra.mxu0 0.0
    %849 = vmatprep.subr.mxu0 0.0
    %850 = vmatpush1.msra.mxu0 0.0
    %851 = vmatprep.subr.mxu0 0.0
    %852 = vmatpush1.msra.mxu0 %v814
    %853 = vmatprep.subr.mxu0 0.0
    %854 = vmatpush1.msra.mxu0 %v812
    %855 = vmatprep.subr.mxu0 0.0
    %856 = vmatpush2.msra.mxu0 0.0
    %857 = vmatprep.subr.mxu0 0.0
    %858 = vmatpush2.msra.mxu0 0.0
    %859 = vmatprep.subr.mxu0 0.0
    %860 = vmatpush2.msra.mxu0 0.0
    %861 = vmatprep.subr.mxu0 0.0
    %862 = vmatpush2.msra.mxu0 0.0
    %863 = vmatprep.subr.mxu0 0.0
    %864 = vmatpush2.msra.mxu0 0.0
    %865 = vmatprep.subr.mxu0 0.0
    %866 = vmatpush2.msra.mxu0 0.0
    %867 = vmatprep.subr.mxu0 0.0
    %868 = vmatpush2.msra.mxu0 0.0
    %869 = vmatprep.subr.mxu0 0.0
    %870 = vmatpush2.msra.mxu0 0.0
    %871 = vmatprep.subr.mxu0 0.0
    %872 = vmatpush2.msra.mxu0 0.0
    %873 = vmatprep.subr.mxu0 0.0
    %874 = vmatpush2.msra.mxu0 0.0
    %875 = vmatprep.subr.mxu0 0.0
    %876 = vmatpush2.msra.mxu0 0.0
    %877 = vmatprep.subr.mxu0 0.0
    %878 = vmatpush2.msra.mxu0 0.0
    %879 = vmatprep.subr.mxu0 0.0
    %880 = vmatpush2.msra.mxu0 0.0
    %881 = vmatprep.subr.mxu0 0.0
    %882 = vmatpush2.msra.mxu0 0.0
    %883 = vmatprep.subr.mxu0 0.0
    %884 = vmatpush2.msra.mxu0 0.0
    %885 = vmatprep.subr.mxu0 0.0
    %886 = vmatpush2.msra.mxu0 0.0
    %887 = vmatprep.mubr.f32.mxu0 0.0
    %888 = vmatmul.mubr.f32.gmra.mxu0 %v818
    %v889 = vpop.f32.mrf.mxu0
    %v890 = vadd.f32 0.0, %v889
    %v891 = vpop.f32.mrf.mxu0
    %892 = vmatprep.mubr.f32.mxu0 0.0
    %893 = vmatmul.mubr.f32.gmra.mxu0 %v821
    %v894 = vpop.f32.mrf.mxu0
    %v895 = vadd.f32 0.0, %v894
    %v896 = vpop.f32.mrf.mxu0
    %897 = vdwg.mxu0
    %898 = vrot.lane.b32.xlu0 %v339, 112
    %v899 = vpop.permute.xlu0 %898
    %900 = vrot.lane.b32.xlu0 %v340, 112
    %v901 = vpop.permute.xlu0 %900
    %902 = vrot.lane.b32.xlu0 %v484, 64
    %v903 = vpop.permute.xlu0 %902
    %904 = vrot.lane.b32.xlu0 %v485, 64
    %v905 = vpop.permute.xlu0 %904
    %v906 = vsel %vm494, %v899, 0
    %v908 = vsel %vm494, %v901, 0
    %v910 = vsel %vm494, %v903, 0
    %v912 = vsel %vm494, %v905, 0
    %914 = vmatprep.subr.mxu0 0.0
    %915 = vmatpush1.xpose.msra.mxu0 0.0
    %916 = vmatprep.subr.mxu0 0.0
    %917 = vmatpush1.xpose.msra.mxu0 0.0
    %918 = vmatprep.subr.mxu0 0.0
    %919 = vmatpush1.xpose.msra.mxu0 0.0
    %920 = vmatprep.subr.mxu0 0.0
    %921 = vmatpush1.xpose.msra.mxu0 0.0
    %922 = vmatprep.subr.mxu0 0.0
    %923 = vmatpush1.xpose.msra.mxu0 0.0
    %924 = vmatprep.subr.mxu0 0.0
    %925 = vmatpush1.xpose.msra.mxu0 0.0
    %926 = vmatprep.subr.mxu0 0.0
    %927 = vmatpush1.xpose.msra.mxu0 0.0
    %928 = vmatprep.subr.mxu0 0.0
    %929 = vmatpush1.xpose.msra.mxu0 0.0
    %930 = vmatprep.subr.mxu0 0.0
    %931 = vmatpush1.xpose.msra.mxu0 0.0
    %932 = vmatprep.subr.mxu0 0.0
    %933 = vmatpush1.xpose.msra.mxu0 0.0
    %934 = vmatprep.subr.mxu0 0.0
    %935 = vmatpush1.xpose.msra.mxu0 0.0
    %936 = vmatprep.subr.mxu0 0.0
    %937 = vmatpush1.xpose.msra.mxu0 0.0
    %938 = vmatprep.subr.mxu0 0.0
    %939 = vmatpush1.xpose.msra.mxu0 0.0
    %940 = vmatprep.subr.mxu0 0.0
    %941 = vmatpush1.xpose.msra.mxu0 0.0
    %942 = vmatprep.subr.mxu0 0.0
    %943 = vmatpush1.xpose.msra.mxu0 %v912
    %944 = vmatprep.subr.mxu0 0.0
    %945 = vmatpush1.xpose.msra.mxu0 %v910
    %946 = vmatprep.subr.mxu0 0.0
    %947 = vmatpush2.xpose.msra.mxu0 0.0
    %948 = vmatprep.subr.mxu0 0.0
    %949 = vmatpush2.xpose.msra.mxu0 0.0
    %950 = vmatprep.subr.mxu0 0.0
    %951 = vmatpush2.xpose.msra.mxu0 0.0
    %952 = vmatprep.subr.mxu0 0.0
    %953 = vmatpush2.xpose.msra.mxu0 0.0
    %954 = vmatprep.subr.mxu0 0.0
    %955 = vmatpush2.xpose.msra.mxu0 0.0
    %956 = vmatprep.subr.mxu0 0.0
    %957 = vmatpush2.xpose.msra.mxu0 0.0
    %958 = vmatprep.subr.mxu0 0.0
    %959 = vmatpush2.xpose.msra.mxu0 0.0
    %960 = vmatprep.subr.mxu0 0.0
    %961 = vmatpush2.xpose.msra.mxu0 0.0
    %962 = vmatprep.subr.mxu0 0.0
    %963 = vmatpush2.xpose.msra.mxu0 0.0
    %964 = vmatprep.subr.mxu0 0.0
    %965 = vmatpush2.xpose.msra.mxu0 0.0
    %966 = vmatprep.subr.mxu0 0.0
    %967 = vmatpush2.xpose.msra.mxu0 0.0
    %968 = vmatprep.subr.mxu0 0.0
    %969 = vmatpush2.xpose.msra.mxu0 0.0
    %970 = vmatprep.subr.mxu0 0.0
    %971 = vmatpush2.xpose.msra.mxu0 0.0
    %972 = vmatprep.subr.mxu0 0.0
    %973 = vmatpush2.xpose.msra.mxu0 0.0
    %974 = vmatprep.subr.mxu0 0.0
    %975 = vmatpush2.xpose.msra.mxu0 0.0
    %976 = vmatprep.subr.mxu0 0.0
    %977 = vmatpush2.xpose.msra.mxu0 0.0
    %978 = vmatprep.mubr.f32.mxu0 0.0
    %979 = vmatmul.mubr.f32.gmra.mxu0 %v906
    %v980 = vpop.f32.mrf.mxu0
    %v981 = vadd.f32 0.0, %v980
    %v982 = vpop.f32.mrf.mxu0
    %983 = vmatprep.mubr.f32.mxu0 0.0
    %984 = vmatmul.mubr.f32.gmra.mxu0 %v908
    %v985 = vpop.f32.mrf.mxu0
    %v986 = vadd.f32 0.0, %v985
    %v987 = vpop.f32.mrf.mxu0
    %988 = vdwg.mxu0
    %v989 = vmul.f32 %v981, 0.35355338
    %v990 = vmul.f32 %v986, 0.35355338
    %v991 = vsel %vm65, -inf, %v989
    %v992 = vsel %vm66, -inf, %v990
    %v993 = vsel %vm584, %v991, -inf
    %994 = vmax.xlane.f32.xlu0 %v993
    %v995 = vpop.xlane.xlu0 %994
    %v996 = vsel %vm584, %v992, -inf
    %997 = vmax.xlane.f32.xlu0 %v996
    %v998 = vpop.xlane.xlu0 %997
    %v999 = vsub.f32 %v991, %v995
    %v1000 = vsub.f32 %v992, %v998
    %v1001 = vmul.f32 %v999, 1.442695
    %v1002 = vpow.pop %v1001
    %v1003 = vmul.f32 %v1000, 1.442695
    %v1004 = vpow.pop %v1003
    %v1005 = vsel %vm584, %v1002, 0.0
    %1006 = vadd.xlane.f32.xlu0 %v1005
    %v1007 = vpop.xlane.xlu0 %1006
    %v1008 = vsel %vm584, %v1004, 0.0
    %1009 = vadd.xlane.f32.xlu0 %v1008
    %v1010 = vpop.xlane.xlu0 %1009
    %v1011 = vrcp.pop %v1007
    %v1012 = vrcp.pop %v1010
    %v1013 = vmul.f32 %v1002, %v1011
    %v1014 = vmul.f32 %v1004, %v1012
    %1015 = vrot.lane.b32.xlu0 %v212, 16
    %v1016 = vpop.permute.xlu0 %1015
    %1017 = vrot.lane.b32.xlu0 %v218, 16
    %v1018 = vpop.permute.xlu0 %1017
    %v1022 = vsel %vm584, %v1013, 0
    %v1025 = vsel %vm584, %v1014, 0
    %1027 = vmatprep.subr.mxu0 0.0
    %1028 = vmatpush1.msra.mxu0 0.0
    %1029 = vmatprep.subr.mxu0 0.0
    %1030 = vmatpush1.msra.mxu0 0.0
    %1031 = vmatprep.subr.mxu0 0.0
    %1032 = vmatpush1.msra.mxu0 0.0
    %1033 = vmatprep.subr.mxu0 0.0
    %1034 = vmatpush1.msra.mxu0 0.0
    %1035 = vmatprep.subr.mxu0 0.0
    %1036 = vmatpush1.msra.mxu0 0.0
    %1037 = vmatprep.subr.mxu0 0.0
    %1038 = vmatpush1.msra.mxu0 0.0
    %1039 = vmatprep.subr.mxu0 0.0
    %1040 = vmatpush1.msra.mxu0 0.0
    %1041 = vmatprep.subr.mxu0 0.0
    %1042 = vmatpush1.msra.mxu0 0.0
    %1043 = vmatprep.subr.mxu0 0.0
    %1044 = vmatpush1.msra.mxu0 0.0
    %1045 = vmatprep.subr.mxu0 0.0
    %1046 = vmatpush1.msra.mxu0 0.0
    %1047 = vmatprep.subr.mxu0 0.0
    %1048 = vmatpush1.msra.mxu0 0.0
    %1049 = vmatprep.subr.mxu0 0.0
    %1050 = vmatpush1.msra.mxu0 0.0
    %1051 = vmatprep.subr.mxu0 0.0
    %1052 = vmatpush1.msra.mxu0 0.0
    %1053 = vmatprep.subr.mxu0 0.0
    %1054 = vmatpush1.msra.mxu0 0.0
    %1055 = vmatprep.subr.mxu0 0.0
    %1056 = vmatpush1.msra.mxu0 %v1018
    %1057 = vmatprep.subr.mxu0 0.0
    %1058 = vmatpush1.msra.mxu0 %v1016
    %1059 = vmatprep.subr.mxu0 0.0
    %1060 = vmatpush2.msra.mxu0 0.0
    %1061 = vmatprep.subr.mxu0 0.0
    %1062 = vmatpush2.msra.mxu0 0.0
    %1063 = vmatprep.subr.mxu0 0.0
    %1064 = vmatpush2.msra.mxu0 0.0
    %1065 = vmatprep.subr.mxu0 0.0
    %1066 = vmatpush2.msra.mxu0 0.0
    %1067 = vmatprep.subr.mxu0 0.0
    %1068 = vmatpush2.msra.mxu0 0.0
    %1069 = vmatprep.subr.mxu0 0.0
    %1070 = vmatpush2.msra.mxu0 0.0
    %1071 = vmatprep.subr.mxu0 0.0
    %1072 = vmatpush2.msra.mxu0 0.0
    %1073 = vmatprep.subr.mxu0 0.0
    %1074 = vmatpush2.msra.mxu0 0.0
    %1075 = vmatprep.subr.mxu0 0.0
    %1076 = vmatpush2.msra.mxu0 0.0
    %1077 = vmatprep.subr.mxu0 0.0
    %1078 = vmatpush2.msra.mxu0 0.0
    %1079 = vmatprep.subr.mxu0 0.0
    %1080 = vmatpush2.msra.mxu0 0.0
    %1081 = vmatprep.subr.mxu0 0.0
    %1082 = vmatpush2.msra.mxu0 0.0
    %1083 = vmatprep.subr.mxu0 0.0
    %1084 = vmatpush2.msra.mxu0 0.0
    %1085 = vmatprep.subr.mxu0 0.0
    %1086 = vmatpush2.msra.mxu0 0.0
    %1087 = vmatprep.subr.mxu0 0.0
    %1088 = vmatpush2.msra.mxu0 0.0
    %1089 = vmatprep.subr.mxu0 0.0
    %1090 = vmatpush2.msra.mxu0 0.0
    %1091 = vmatprep.mubr.f32.mxu0 0.0
    %1092 = vmatmul.mubr.f32.gmra.mxu0 %v1022
    %v1093 = vpop.f32.mrf.mxu0
    %v1094 = vadd.f32 0.0, %v1093
    %v1095 = vpop.f32.mrf.mxu0
    %1096 = vmatprep.mubr.f32.mxu0 0.0
    %1097 = vmatmul.mubr.f32.gmra.mxu0 %v1025
    %v1098 = vpop.f32.mrf.mxu0
    %v1099 = vadd.f32 0.0, %v1098
    %v1100 = vpop.f32.mrf.mxu0
    %1101 = vdwg.mxu0
    %1102 = vrot.lane.b32.xlu0 %v339, 104
    %v1103 = vpop.permute.xlu0 %1102
    %1104 = vrot.lane.b32.xlu0 %v340, 104
    %v1105 = vpop.permute.xlu0 %1104
    %1106 = vrot.lane.b32.xlu0 %v484, 56
    %v1107 = vpop.permute.xlu0 %1106
    %1108 = vrot.lane.b32.xlu0 %v485, 56
    %v1109 = vpop.permute.xlu0 %1108
    %v1110 = vsel %vm494, %v1103, 0
    %v1112 = vsel %vm494, %v1105, 0
    %v1114 = vsel %vm494, %v1107, 0
    %v1116 = vsel %vm494, %v1109, 0
    %1118 = vmatprep.subr.mxu0 0.0
    %1119 = vmatpush1.xpose.msra.mxu0 0.0
    %1120 = vmatprep.subr.mxu0 0.0
    %1121 = vmatpush1.xpose.msra.mxu0 0.0
    %1122 = vmatprep.subr.mxu0 0.0
    %1123 = vmatpush1.xpose.msra.mxu0 0.0
    %1124 = vmatprep.subr.mxu0 0.0
    %1125 = vmatpush1.xpose.msra.mxu0 0.0
    %1126 = vmatprep.subr.mxu0 0.0
    %1127 = vmatpush1.xpose.msra.mxu0 0.0
    %1128 = vmatprep.subr.mxu0 0.0
    %1129 = vmatpush1.xpose.msra.mxu0 0.0
    %1130 = vmatprep.subr.mxu0 0.0
    %1131 = vmatpush1.xpose.msra.mxu0 0.0
    %1132 = vmatprep.subr.mxu0 0.0
    %1133 = vmatpush1.xpose.msra.mxu0 0.0
    %1134 = vmatprep.subr.mxu0 0.0
    %1135 = vmatpush1.xpose.msra.mxu0 0.0
    %1136 = vmatprep.subr.mxu0 0.0
    %1137 = vmatpush1.xpose.msra.mxu0 0.0
    %1138 = vmatprep.subr.mxu0 0.0
    %1139 = vmatpush1.xpose.msra.mxu0 0.0
    %1140 = vmatprep.subr.mxu0 0.0
    %1141 = vmatpush1.xpose.msra.mxu0 0.0
    %1142 = vmatprep.subr.mxu0 0.0
    %1143 = vmatpush1.xpose.msra.mxu0 0.0
    %1144 = vmatprep.subr.mxu0 0.0
    %1145 = vmatpush1.xpose.msra.mxu0 0.0
    %1146 = vmatprep.subr.mxu0 0.0
    %1147 = vmatpush1.xpose.msra.mxu0 %v1116
    %1148 = vmatprep.subr.mxu0 0.0
    %1149 = vmatpush1.xpose.msra.mxu0 %v1114
    %1150 = vmatprep.subr.mxu0 0.0
    %1151 = vmatpush2.xpose.msra.mxu0 0.0
    %1152 = vmatprep.subr.mxu0 0.0
    %1153 = vmatpush2.xpose.msra.mxu0 0.0
    %1154 = vmatprep.subr.mxu0 0.0
    %1155 = vmatpush2.xpose.msra.mxu0 0.0
    %1156 = vmatprep.subr.mxu0 0.0
    %1157 = vmatpush2.xpose.msra.mxu0 0.0
    %1158 = vmatprep.subr.mxu0 0.0
    %1159 = vmatpush2.xpose.msra.mxu0 0.0
    %1160 = vmatprep.subr.mxu0 0.0
    %1161 = vmatpush2.xpose.msra.mxu0 0.0
    %1162 = vmatprep.subr.mxu0 0.0
    %1163 = vmatpush2.xpose.msra.mxu0 0.0
    %1164 = vmatprep.subr.mxu0 0.0
    %1165 = vmatpush2.xpose.msra.mxu0 0.0
    %1166 = vmatprep.subr.mxu0 0.0
    %1167 = vmatpush2.xpose.msra.mxu0 0.0
    %1168 = vmatprep.subr.mxu0 0.0
    %1169 = vmatpush2.xpose.msra.mxu0 0.0
    %1170 = vmatprep.subr.mxu0 0.0
    %1171 = vmatpush2.xpose.msra.mxu0 0.0
    %1172 = vmatprep.subr.mxu0 0.0
    %1173 = vmatpush2.xpose.msra.mxu0 0.0
    %1174 = vmatprep.subr.mxu0 0.0
    %1175 = vmatpush2.xpose.msra.mxu0 0.0
    %1176 = vmatprep.subr.mxu0 0.0
    %1177 = vmatpush2.xpose.msra.mxu0 0.0
    %1178 = vmatprep.subr.mxu0 0.0
    %1179 = vmatpush2.xpose.msra.mxu0 0.0
    %1180 = vmatprep.subr.mxu0 0.0
    %1181 = vmatpush2.xpose.msra.mxu0 0.0
    %1182 = vmatprep.mubr.f32.mxu0 0.0
    %1183 = vmatmul.mubr.f32.gmra.mxu0 %v1110
    %v1184 = vpop.f32.mrf.mxu0
    %v1185 = vadd.f32 0.0, %v1184
    %v1186 = vpop.f32.mrf.mxu0
    %1187 = vmatprep.mubr.f32.mxu0 0.0
    %1188 = vmatmul.mubr.f32.gmra.mxu0 %v1112
    %v1189 = vpop.f32.mrf.mxu0
    %v1190 = vadd.f32 0.0, %v1189
    %v1191 = vpop.f32.mrf.mxu0
    %1192 = vdwg.mxu0
    %v1193 = vmul.f32 %v1185, 0.35355338
    %v1194 = vmul.f32 %v1190, 0.35355338
    %v1195 = vsel %vm65, -inf, %v1193
    %v1196 = vsel %vm66, -inf, %v1194
    %v1197 = vsel %vm584, %v1195, -inf
    %1198 = vmax.xlane.f32.xlu0 %v1197
    %v1199 = vpop.xlane.xlu0 %1198
    %v1200 = vsel %vm584, %v1196, -inf
    %1201 = vmax.xlane.f32.xlu0 %v1200
    %v1202 = vpop.xlane.xlu0 %1201
    %v1203 = vsub.f32 %v1195, %v1199
    %v1204 = vsub.f32 %v1196, %v1202
    %v1205 = vmul.f32 %v1203, 1.442695
    %v1206 = vpow.pop %v1205
    %v1207 = vmul.f32 %v1204, 1.442695
    %v1208 = vpow.pop %v1207
    %v1209 = vsel %vm584, %v1206, 0.0
    %1210 = vadd.xlane.f32.xlu0 %v1209
    %v1211 = vpop.xlane.xlu0 %1210
    %v1212 = vsel %vm584, %v1208, 0.0
    %1213 = vadd.xlane.f32.xlu0 %v1212
    %v1214 = vpop.xlane.xlu0 %1213
    %v1215 = vrcp.pop %v1211
    %v1216 = vrcp.pop %v1214
    %v1217 = vmul.f32 %v1206, %v1215
    %v1218 = vmul.f32 %v1208, %v1216
    %1219 = vrot.lane.b32.xlu0 %v212, 8
    %v1220 = vpop.permute.xlu0 %1219
    %1221 = vrot.lane.b32.xlu0 %v218, 8
    %v1222 = vpop.permute.xlu0 %1221
    %v1226 = vsel %vm584, %v1217, 0
    %v1229 = vsel %vm584, %v1218, 0
    %1231 = vmatprep.subr.mxu0 0.0
    %1232 = vmatpush1.msra.mxu0 0.0
    %1233 = vmatprep.subr.mxu0 0.0
    %1234 = vmatpush1.msra.mxu0 0.0
    %1235 = vmatprep.subr.mxu0 0.0
    %1236 = vmatpush1.msra.mxu0 0.0
    %1237 = vmatprep.subr.mxu0 0.0
    %1238 = vmatpush1.msra.mxu0 0.0
    %1239 = vmatprep.subr.mxu0 0.0
    %1240 = vmatpush1.msra.mxu0 0.0
    %1241 = vmatprep.subr.mxu0 0.0
    %1242 = vmatpush1.msra.mxu0 0.0
    %1243 = vmatprep.subr.mxu0 0.0
    %1244 = vmatpush1.msra.mxu0 0.0
    %1245 = vmatprep.subr.mxu0 0.0
    %1246 = vmatpush1.msra.mxu0 0.0
    %1247 = vmatprep.subr.mxu0 0.0
    %1248 = vmatpush1.msra.mxu0 0.0
    %1249 = vmatprep.subr.mxu0 0.0
    %1250 = vmatpush1.msra.mxu0 0.0
    %1251 = vmatprep.subr.mxu0 0.0
    %1252 = vmatpush1.msra.mxu0 0.0
    %1253 = vmatprep.subr.mxu0 0.0
    %1254 = vmatpush1.msra.mxu0 0.0
    %1255 = vmatprep.subr.mxu0 0.0
    %1256 = vmatpush1.msra.mxu0 0.0
    %1257 = vmatprep.subr.mxu0 0.0
    %1258 = vmatpush1.msra.mxu0 0.0
    %1259 = vmatprep.subr.mxu0 0.0
    %1260 = vmatpush1.msra.mxu0 %v1222
    %1261 = vmatprep.subr.mxu0 0.0
    %1262 = vmatpush1.msra.mxu0 %v1220
    %1263 = vmatprep.subr.mxu0 0.0
    %1264 = vmatpush2.msra.mxu0 0.0
    %1265 = vmatprep.subr.mxu0 0.0
    %1266 = vmatpush2.msra.mxu0 0.0
    %1267 = vmatprep.subr.mxu0 0.0
    %1268 = vmatpush2.msra.mxu0 0.0
    %1269 = vmatprep.subr.mxu0 0.0
    %1270 = vmatpush2.msra.mxu0 0.0
    %1271 = vmatprep.subr.mxu0 0.0
    %1272 = vmatpush2.msra.mxu0 0.0
    %1273 = vmatprep.subr.mxu0 0.0
    %1274 = vmatpush2.msra.mxu0 0.0
    %1275 = vmatprep.subr.mxu0 0.0
    %1276 = vmatpush2.msra.mxu0 0.0
    %1277 = vmatprep.subr.mxu0 0.0
    %1278 = vmatpush2.msra.mxu0 0.0
    %1279 = vmatprep.subr.mxu0 0.0
    %1280 = vmatpush2.msra.mxu0 0.0
    %1281 = vmatprep.subr.mxu0 0.0
    %1282 = vmatpush2.msra.mxu0 0.0
    %1283 = vmatprep.subr.mxu0 0.0
    %1284 = vmatpush2.msra.mxu0 0.0
    %1285 = vmatprep.subr.mxu0 0.0
    %1286 = vmatpush2.msra.mxu0 0.0
    %1287 = vmatprep.subr.mxu0 0.0
    %1288 = vmatpush2.msra.mxu0 0.0
    %1289 = vmatprep.subr.mxu0 0.0
    %1290 = vmatpush2.msra.mxu0 0.0
    %1291 = vmatprep.subr.mxu0 0.0
    %1292 = vmatpush2.msra.mxu0 0.0
    %1293 = vmatprep.subr.mxu0 0.0
    %1294 = vmatpush2.msra.mxu0 0.0
    %1295 = vmatprep.mubr.f32.mxu0 0.0
    %1296 = vmatmul.mubr.f32.gmra.mxu0 %v1226
    %v1297 = vpop.f32.mrf.mxu0
    %v1298 = vadd.f32 0.0, %v1297
    %v1299 = vpop.f32.mrf.mxu0
    %1300 = vmatprep.mubr.f32.mxu0 0.0
    %1301 = vmatmul.mubr.f32.gmra.mxu0 %v1229
    %v1302 = vpop.f32.mrf.mxu0
    %v1303 = vadd.f32 0.0, %v1302
    %v1304 = vpop.f32.mrf.mxu0
    %1305 = vdwg.mxu0
    %1306 = vrot.lane.b32.xlu0 %v339, 96
    %v1307 = vpop.permute.xlu0 %1306
    %1308 = vrot.lane.b32.xlu0 %v340, 96
    %v1309 = vpop.permute.xlu0 %1308
    %1310 = vrot.lane.b32.xlu0 %v484, 48
    %v1311 = vpop.permute.xlu0 %1310
    %1312 = vrot.lane.b32.xlu0 %v485, 48
    %v1313 = vpop.permute.xlu0 %1312
    %v1314 = vsel %vm494, %v1307, 0
    %v1316 = vsel %vm494, %v1309, 0
    %v1318 = vsel %vm494, %v1311, 0
    %v1320 = vsel %vm494, %v1313, 0
    %1322 = vmatprep.subr.mxu0 0.0
    %1323 = vmatpush1.xpose.msra.mxu0 0.0
    %1324 = vmatprep.subr.mxu0 0.0
    %1325 = vmatpush1.xpose.msra.mxu0 0.0
    %1326 = vmatprep.subr.mxu0 0.0
    %1327 = vmatpush1.xpose.msra.mxu0 0.0
    %1328 = vmatprep.subr.mxu0 0.0
    %1329 = vmatpush1.xpose.msra.mxu0 0.0
    %1330 = vmatprep.subr.mxu0 0.0
    %1331 = vmatpush1.xpose.msra.mxu0 0.0
    %1332 = vmatprep.subr.mxu0 0.0
    %1333 = vmatpush1.xpose.msra.mxu0 0.0
    %1334 = vmatprep.subr.mxu0 0.0
    %1335 = vmatpush1.xpose.msra.mxu0 0.0
    %1336 = vmatprep.subr.mxu0 0.0
    %1337 = vmatpush1.xpose.msra.mxu0 0.0
    %1338 = vmatprep.subr.mxu0 0.0
    %1339 = vmatpush1.xpose.msra.mxu0 0.0
    %1340 = vmatprep.subr.mxu0 0.0
    %1341 = vmatpush1.xpose.msra.mxu0 0.0
    %1342 = vmatprep.subr.mxu0 0.0
    %1343 = vmatpush1.xpose.msra.mxu0 0.0
    %1344 = vmatprep.subr.mxu0 0.0
    %1345 = vmatpush1.xpose.msra.mxu0 0.0
    %1346 = vmatprep.subr.mxu0 0.0
    %1347 = vmatpush1.xpose.msra.mxu0 0.0
    %1348 = vmatprep.subr.mxu0 0.0
    %1349 = vmatpush1.xpose.msra.mxu0 0.0
    %1350 = vmatprep.subr.mxu0 0.0
    %1351 = vmatpush1.xpose.msra.mxu0 %v1320
    %1352 = vmatprep.subr.mxu0 0.0
    %1353 = vmatpush1.xpose.msra.mxu0 %v1318
    %1354 = vmatprep.subr.mxu0 0.0
    %1355 = vmatpush2.xpose.msra.mxu0 0.0
    %1356 = vmatprep.subr.mxu0 0.0
    %1357 = vmatpush2.xpose.msra.mxu0 0.0
    %1358 = vmatprep.subr.mxu0 0.0
    %1359 = vmatpush2.xpose.msra.mxu0 0.0
    %1360 = vmatprep.subr.mxu0 0.0
    %1361 = vmatpush2.xpose.msra.mxu0 0.0
    %1362 = vmatprep.subr.mxu0 0.0
    %1363 = vmatpush2.xpose.msra.mxu0 0.0
    %1364 = vmatprep.subr.mxu0 0.0
    %1365 = vmatpush2.xpose.msra.mxu0 0.0
    %1366 = vmatprep.subr.mxu0 0.0
    %1367 = vmatpush2.xpose.msra.mxu0 0.0
    %1368 = vmatprep.subr.mxu0 0.0
    %1369 = vmatpush2.xpose.msra.mxu0 0.0
    %1370 = vmatprep.subr.mxu0 0.0
    %1371 = vmatpush2.xpose.msra.mxu0 0.0
    %1372 = vmatprep.subr.mxu0 0.0
    %1373 = vmatpush2.xpose.msra.mxu0 0.0
    %1374 = vmatprep.subr.mxu0 0.0
    %1375 = vmatpush2.xpose.msra.mxu0 0.0
    %1376 = vmatprep.subr.mxu0 0.0
    %1377 = vmatpush2.xpose.msra.mxu0 0.0
    %1378 = vmatprep.subr.mxu0 0.0
    %1379 = vmatpush2.xpose.msra.mxu0 0.0
    %1380 = vmatprep.subr.mxu0 0.0
    %1381 = vmatpush2.xpose.msra.mxu0 0.0
    %1382 = vmatprep.subr.mxu0 0.0
    %1383 = vmatpush2.xpose.msra.mxu0 0.0
    %1384 = vmatprep.subr.mxu0 0.0
    %1385 = vmatpush2.xpose.msra.mxu0 0.0
    %1386 = vmatprep.mubr.f32.mxu0 0.0
    %1387 = vmatmul.mubr.f32.gmra.mxu0 %v1314
    %v1388 = vpop.f32.mrf.mxu0
    %v1389 = vadd.f32 0.0, %v1388
    %v1390 = vpop.f32.mrf.mxu0
    %1391 = vmatprep.mubr.f32.mxu0 0.0
    %1392 = vmatmul.mubr.f32.gmra.mxu0 %v1316
    %v1393 = vpop.f32.mrf.mxu0
    %v1394 = vadd.f32 0.0, %v1393
    %v1395 = vpop.f32.mrf.mxu0
    %1396 = vdwg.mxu0
    %v1397 = vmul.f32 %v1389, 0.35355338
    %v1398 = vmul.f32 %v1394, 0.35355338
    %v1399 = vsel %vm65, -inf, %v1397
    %v1400 = vsel %vm66, -inf, %v1398
    %v1401 = vsel %vm584, %v1399, -inf
    %1402 = vmax.xlane.f32.xlu0 %v1401
    %v1403 = vpop.xlane.xlu0 %1402
    %v1404 = vsel %vm584, %v1400, -inf
    %1405 = vmax.xlane.f32.xlu0 %v1404
    %v1406 = vpop.xlane.xlu0 %1405
    %v1407 = vsub.f32 %v1399, %v1403
    %v1408 = vsub.f32 %v1400, %v1406
    %v1409 = vmul.f32 %v1407, 1.442695
    %v1410 = vpow.pop %v1409
    %v1411 = vmul.f32 %v1408, 1.442695
    %v1412 = vpow.pop %v1411
    %v1413 = vsel %vm584, %v1410, 0.0
    %1414 = vadd.xlane.f32.xlu0 %v1413
    %v1415 = vpop.xlane.xlu0 %1414
    %v1416 = vsel %vm584, %v1412, 0.0
    %1417 = vadd.xlane.f32.xlu0 %v1416
    %v1418 = vpop.xlane.xlu0 %1417
    %v1419 = vrcp.pop %v1415
    %v1420 = vrcp.pop %v1418
    %v1421 = vmul.f32 %v1410, %v1419
    %v1422 = vmul.f32 %v1412, %v1420
    %v1424 = vsel %vm584, %v1421, 0
    %v1427 = vsel %vm584, %v1422, 0
    %1429 = vmatprep.subr.mxu0 0.0
    %1430 = vmatpush1.msra.mxu0 0.0
    %1431 = vmatprep.subr.mxu0 0.0
    %1432 = vmatpush1.msra.mxu0 0.0
    %1433 = vmatprep.subr.mxu0 0.0
    %1434 = vmatpush1.msra.mxu0 0.0
    %1435 = vmatprep.subr.mxu0 0.0
    %1436 = vmatpush1.msra.mxu0 0.0
    %1437 = vmatprep.subr.mxu0 0.0
    %1438 = vmatpush1.msra.mxu0 0.0
    %1439 = vmatprep.subr.mxu0 0.0
    %1440 = vmatpush1.msra.mxu0 0.0
    %1441 = vmatprep.subr.mxu0 0.0
    %1442 = vmatpush1.msra.mxu0 0.0
    %1443 = vmatprep.subr.mxu0 0.0
    %1444 = vmatpush1.msra.mxu0 0.0
    %1445 = vmatprep.subr.mxu0 0.0
    %1446 = vmatpush1.msra.mxu0 0.0
    %1447 = vmatprep.subr.mxu0 0.0
    %1448 = vmatpush1.msra.mxu0 0.0
    %1449 = vmatprep.subr.mxu0 0.0
    %1450 = vmatpush1.msra.mxu0 0.0
    %1451 = vmatprep.subr.mxu0 0.0
    %1452 = vmatpush1.msra.mxu0 0.0
    %1453 = vmatprep.subr.mxu0 0.0
    %1454 = vmatpush1.msra.mxu0 0.0
    %1455 = vmatprep.subr.mxu0 0.0
    %1456 = vmatpush1.msra.mxu0 0.0
    %1457 = vmatprep.subr.mxu0 0.0
    %1458 = vmatpush1.msra.mxu0 %v220
    %1459 = vmatprep.subr.mxu0 0.0
    %1460 = vmatpush1.msra.mxu0 %v214
    %1461 = vmatprep.subr.mxu0 0.0
    %1462 = vmatpush2.msra.mxu0 0.0
    %1463 = vmatprep.subr.mxu0 0.0
    %1464 = vmatpush2.msra.mxu0 0.0
    %1465 = vmatprep.subr.mxu0 0.0
    %1466 = vmatpush2.msra.mxu0 0.0
    %1467 = vmatprep.subr.mxu0 0.0
    %1468 = vmatpush2.msra.mxu0 0.0
    %1469 = vmatprep.subr.mxu0 0.0
    %1470 = vmatpush2.msra.mxu0 0.0
    %1471 = vmatprep.subr.mxu0 0.0
    %1472 = vmatpush2.msra.mxu0 0.0
    %1473 = vmatprep.subr.mxu0 0.0
    %1474 = vmatpush2.msra.mxu0 0.0
    %1475 = vmatprep.subr.mxu0 0.0
    %1476 = vmatpush2.msra.mxu0 0.0
    %1477 = vmatprep.subr.mxu0 0.0
    %1478 = vmatpush2.msra.mxu0 0.0
    %1479 = vmatprep.subr.mxu0 0.0
    %1480 = vmatpush2.msra.mxu0 0.0
    %1481 = vmatprep.subr.mxu0 0.0
    %1482 = vmatpush2.msra.mxu0 0.0
    %1483 = vmatprep.subr.mxu0 0.0
    %1484 = vmatpush2.msra.mxu0 0.0
    %1485 = vmatprep.subr.mxu0 0.0
    %1486 = vmatpush2.msra.mxu0 0.0
    %1487 = vmatprep.subr.mxu0 0.0
    %1488 = vmatpush2.msra.mxu0 0.0
    %1489 = vmatprep.subr.mxu0 0.0
    %1490 = vmatpush2.msra.mxu0 0.0
    %1491 = vmatprep.subr.mxu0 0.0
    %1492 = vmatpush2.msra.mxu0 0.0
    %1493 = vmatprep.mubr.f32.mxu0 0.0
    %1494 = vmatmul.mubr.f32.gmra.mxu0 %v1424
    %v1495 = vpop.f32.mrf.mxu0
    %v1496 = vadd.f32 0.0, %v1495
    %v1497 = vpop.f32.mrf.mxu0
    %1498 = vmatprep.mubr.f32.mxu0 0.0
    %1499 = vmatmul.mubr.f32.gmra.mxu0 %v1427
    %v1500 = vpop.f32.mrf.mxu0
    %v1501 = vadd.f32 0.0, %v1500
    %v1502 = vpop.f32.mrf.mxu0
    %1503 = vdwg.mxu0
    %1504 = vrot.lane.b32.xlu0 %v339, 88
    %v1505 = vpop.permute.xlu0 %1504
    %1506 = vrot.lane.b32.xlu0 %v340, 88
    %v1507 = vpop.permute.xlu0 %1506
    %1508 = vrot.lane.b32.xlu0 %v484, 40
    %v1509 = vpop.permute.xlu0 %1508
    %1510 = vrot.lane.b32.xlu0 %v485, 40
    %v1511 = vpop.permute.xlu0 %1510
    %v1512 = vsel %vm494, %v1505, 0
    %v1514 = vsel %vm494, %v1507, 0
    %v1516 = vsel %vm494, %v1509, 0
    %v1518 = vsel %vm494, %v1511, 0
    %1520 = vmatprep.subr.mxu0 0.0
    %1521 = vmatpush1.xpose.msra.mxu0 0.0
    %1522 = vmatprep.subr.mxu0 0.0
    %1523 = vmatpush1.xpose.msra.mxu0 0.0
    %1524 = vmatprep.subr.mxu0 0.0
    %1525 = vmatpush1.xpose.msra.mxu0 0.0
    %1526 = vmatprep.subr.mxu0 0.0
    %1527 = vmatpush1.xpose.msra.mxu0 0.0
    %1528 = vmatprep.subr.mxu0 0.0
    %1529 = vmatpush1.xpose.msra.mxu0 0.0
    %1530 = vmatprep.subr.mxu0 0.0
    %1531 = vmatpush1.xpose.msra.mxu0 0.0
    %1532 = vmatprep.subr.mxu0 0.0
    %1533 = vmatpush1.xpose.msra.mxu0 0.0
    %1534 = vmatprep.subr.mxu0 0.0
    %1535 = vmatpush1.xpose.msra.mxu0 0.0
    %1536 = vmatprep.subr.mxu0 0.0
    %1537 = vmatpush1.xpose.msra.mxu0 0.0
    %1538 = vmatprep.subr.mxu0 0.0
    %1539 = vmatpush1.xpose.msra.mxu0 0.0
    %1540 = vmatprep.subr.mxu0 0.0
    %1541 = vmatpush1.xpose.msra.mxu0 0.0
    %1542 = vmatprep.subr.mxu0 0.0
    %1543 = vmatpush1.xpose.msra.mxu0 0.0
    %1544 = vmatprep.subr.mxu0 0.0
    %1545 = vmatpush1.xpose.msra.mxu0 0.0
    %1546 = vmatprep.subr.mxu0 0.0
    %1547 = vmatpush1.xpose.msra.mxu0 0.0
    %1548 = vmatprep.subr.mxu0 0.0
    %1549 = vmatpush1.xpose.msra.mxu0 %v1518
    %1550 = vmatprep.subr.mxu0 0.0
    %1551 = vmatpush1.xpose.msra.mxu0 %v1516
    %1552 = vmatprep.subr.mxu0 0.0
    %1553 = vmatpush2.xpose.msra.mxu0 0.0
    %1554 = vmatprep.subr.mxu0 0.0
    %1555 = vmatpush2.xpose.msra.mxu0 0.0
    %1556 = vmatprep.subr.mxu0 0.0
    %1557 = vmatpush2.xpose.msra.mxu0 0.0
    %1558 = vmatprep.subr.mxu0 0.0
    %1559 = vmatpush2.xpose.msra.mxu0 0.0
    %1560 = vmatprep.subr.mxu0 0.0
    %1561 = vmatpush2.xpose.msra.mxu0 0.0
    %1562 = vmatprep.subr.mxu0 0.0
    %1563 = vmatpush2.xpose.msra.mxu0 0.0
    %1564 = vmatprep.subr.mxu0 0.0
    %1565 = vmatpush2.xpose.msra.mxu0 0.0
    %1566 = vmatprep.subr.mxu0 0.0
    %1567 = vmatpush2.xpose.msra.mxu0 0.0
    %1568 = vmatprep.subr.mxu0 0.0
    %1569 = vmatpush2.xpose.msra.mxu0 0.0
    %1570 = vmatprep.subr.mxu0 0.0
    %1571 = vmatpush2.xpose.msra.mxu0 0.0
    %1572 = vmatprep.subr.mxu0 0.0
    %1573 = vmatpush2.xpose.msra.mxu0 0.0
    %1574 = vmatprep.subr.mxu0 0.0
    %1575 = vmatpush2.xpose.msra.mxu0 0.0
    %1576 = vmatprep.subr.mxu0 0.0
    %1577 = vmatpush2.xpose.msra.mxu0 0.0
    %1578 = vmatprep.subr.mxu0 0.0
    %1579 = vmatpush2.xpose.msra.mxu0 0.0
    %1580 = vmatprep.subr.mxu0 0.0
    %1581 = vmatpush2.xpose.msra.mxu0 0.0
    %1582 = vmatprep.subr.mxu0 0.0
    %1583 = vmatpush2.xpose.msra.mxu0 0.0
    %1584 = vmatprep.mubr.f32.mxu0 0.0
    %1585 = vmatmul.mubr.f32.gmra.mxu0 %v1512
    %v1586 = vpop.f32.mrf.mxu0
    %v1587 = vadd.f32 0.0, %v1586
    %v1588 = vpop.f32.mrf.mxu0
    %1589 = vmatprep.mubr.f32.mxu0 0.0
    %1590 = vmatmul.mubr.f32.gmra.mxu0 %v1514
    %v1591 = vpop.f32.mrf.mxu0
    %v1592 = vadd.f32 0.0, %v1591
    %v1593 = vpop.f32.mrf.mxu0
    %1594 = vdwg.mxu0
    %v1595 = vmul.f32 %v1587, 0.35355338
    %v1596 = vmul.f32 %v1592, 0.35355338
    %v1597 = vsel %vm65, -inf, %v1595
    %v1598 = vsel %vm66, -inf, %v1596
    %v1599 = vsel %vm584, %v1597, -inf
    %1600 = vmax.xlane.f32.xlu0 %v1599
    %v1601 = vpop.xlane.xlu0 %1600
    %v1602 = vsel %vm584, %v1598, -inf
    %1603 = vmax.xlane.f32.xlu0 %v1602
    %v1604 = vpop.xlane.xlu0 %1603
    %v1605 = vsub.f32 %v1597, %v1601
    %v1606 = vsub.f32 %v1598, %v1604
    %v1607 = vmul.f32 %v1605, 1.442695
    %v1608 = vpow.pop %v1607
    %v1609 = vmul.f32 %v1606, 1.442695
    %v1610 = vpow.pop %v1609
    %v1611 = vsel %vm584, %v1608, 0.0
    %1612 = vadd.xlane.f32.xlu0 %v1611
    %v1613 = vpop.xlane.xlu0 %1612
    %v1614 = vsel %vm584, %v1610, 0.0
    %1615 = vadd.xlane.f32.xlu0 %v1614
    %v1616 = vpop.xlane.xlu0 %1615
    %v1617 = vrcp.pop %v1613
    %v1618 = vrcp.pop %v1616
    %v1619 = vmul.f32 %v1608, %v1617
    %v1620 = vmul.f32 %v1610, %v1618
    %1623 = vrot.lane.b32.xlu0 %v214, 120
    %v1624 = vpop.permute.xlu0 %1623
    %1625 = vrot.lane.b32.xlu0 %v220, 120
    %v1626 = vpop.permute.xlu0 %1625
    %v1630 = vsel %vm584, %v1619, 0
    %v1633 = vsel %vm584, %v1620, 0
    %1635 = vmatprep.subr.mxu0 0.0
    %1636 = vmatpush1.msra.mxu0 0.0
    %1637 = vmatprep.subr.mxu0 0.0
    %1638 = vmatpush1.msra.mxu0 0.0
    %1639 = vmatprep.subr.mxu0 0.0
    %1640 = vmatpush1.msra.mxu0 0.0
    %1641 = vmatprep.subr.mxu0 0.0
    %1642 = vmatpush1.msra.mxu0 0.0
    %1643 = vmatprep.subr.mxu0 0.0
    %1644 = vmatpush1.msra.mxu0 0.0
    %1645 = vmatprep.subr.mxu0 0.0
    %1646 = vmatpush1.msra.mxu0 0.0
    %1647 = vmatprep.subr.mxu0 0.0
    %1648 = vmatpush1.msra.mxu0 0.0
    %1649 = vmatprep.subr.mxu0 0.0
    %1650 = vmatpush1.msra.mxu0 0.0
    %1651 = vmatprep.subr.mxu0 0.0
    %1652 = vmatpush1.msra.mxu0 0.0
    %1653 = vmatprep.subr.mxu0 0.0
    %1654 = vmatpush1.msra.mxu0 0.0
    %1655 = vmatprep.subr.mxu0 0.0
    %1656 = vmatpush1.msra.mxu0 0.0
    %1657 = vmatprep.subr.mxu0 0.0
    %1658 = vmatpush1.msra.mxu0 0.0
    %1659 = vmatprep.subr.mxu0 0.0
    %1660 = vmatpush1.msra.mxu0 0.0
    %1661 = vmatprep.subr.mxu0 0.0
    %1662 = vmatpush1.msra.mxu0 0.0
    %1663 = vmatprep.subr.mxu0 0.0
    %1664 = vmatpush1.msra.mxu0 %v1626
    %1665 = vmatprep.subr.mxu0 0.0
    %1666 = vmatpush1.msra.mxu0 %v1624
    %1667 = vmatprep.subr.mxu0 0.0
    %1668 = vmatpush2.msra.mxu0 0.0
    %1669 = vmatprep.subr.mxu0 0.0
    %1670 = vmatpush2.msra.mxu0 0.0
    %1671 = vmatprep.subr.mxu0 0.0
    %1672 = vmatpush2.msra.mxu0 0.0
    %1673 = vmatprep.subr.mxu0 0.0
    %1674 = vmatpush2.msra.mxu0 0.0
    %1675 = vmatprep.subr.mxu0 0.0
    %1676 = vmatpush2.msra.mxu0 0.0
    %1677 = vmatprep.subr.mxu0 0.0
    %1678 = vmatpush2.msra.mxu0 0.0
    %1679 = vmatprep.subr.mxu0 0.0
    %1680 = vmatpush2.msra.mxu0 0.0
    %1681 = vmatprep.subr.mxu0 0.0
    %1682 = vmatpush2.msra.mxu0 0.0
    %1683 = vmatprep.subr.mxu0 0.0
    %1684 = vmatpush2.msra.mxu0 0.0
    %1685 = vmatprep.subr.mxu0 0.0
    %1686 = vmatpush2.msra.mxu0 0.0
    %1687 = vmatprep.subr.mxu0 0.0
    %1688 = vmatpush2.msra.mxu0 0.0
    %1689 = vmatprep.subr.mxu0 0.0
    %1690 = vmatpush2.msra.mxu0 0.0
    %1691 = vmatprep.subr.mxu0 0.0
    %1692 = vmatpush2.msra.mxu0 0.0
    %1693 = vmatprep.subr.mxu0 0.0
    %1694 = vmatpush2.msra.mxu0 0.0
    %1695 = vmatprep.subr.mxu0 0.0
    %1696 = vmatpush2.msra.mxu0 0.0
    %1697 = vmatprep.subr.mxu0 0.0
    %1698 = vmatpush2.msra.mxu0 0.0
    %1699 = vmatprep.mubr.f32.mxu0 0.0
    %1700 = vmatmul.mubr.f32.gmra.mxu0 %v1630
    %v1701 = vpop.f32.mrf.mxu0
    %v1702 = vadd.f32 0.0, %v1701
    %v1703 = vpop.f32.mrf.mxu0
    %1704 = vmatprep.mubr.f32.mxu0 0.0
    %1705 = vmatmul.mubr.f32.gmra.mxu0 %v1633
    %v1706 = vpop.f32.mrf.mxu0
    %v1707 = vadd.f32 0.0, %v1706
    %v1708 = vpop.f32.mrf.mxu0
    %1709 = vdwg.mxu0
    %1712 = vrot.lane.b32.xlu0 %v890, 8
    %v1713 = vpop.permute.xlu0 %1712
    %1714 = vrot.lane.b32.xlu0 %v895, 8
    %v1715 = vpop.permute.xlu0 %1714
    %1720 = vrot.lane.b32.xlu0 %v1094, 16
    %v1721 = vpop.permute.xlu0 %1720
    %1722 = vrot.lane.b32.xlu0 %v1099, 16
    %v1723 = vpop.permute.xlu0 %1722
    %1728 = vrot.lane.b32.xlu0 %v1298, 24
    %v1729 = vpop.permute.xlu0 %1728
    %1730 = vrot.lane.b32.xlu0 %v1303, 24
    %v1731 = vpop.permute.xlu0 %1730
    %1736 = vrot.lane.b32.xlu0 %v1496, 32
    %v1737 = vpop.permute.xlu0 %1736
    %1738 = vrot.lane.b32.xlu0 %v1501, 32
    %v1739 = vpop.permute.xlu0 %1738
    %1744 = vrot.lane.b32.xlu0 %v1702, 40
    %v1745 = vpop.permute.xlu0 %1744
    %1746 = vrot.lane.b32.xlu0 %v1707, 40
    %v1747 = vpop.permute.xlu0 %1746
    %v1750 = vsel %vm494, %v686, %v1713
    %v1751 = vsel %vm494, %v691, %v1715
    %v1752 = vsel %vm584, %v1750, %v1721
    %v1753 = vsel %vm584, %v1751, %v1723
    %vm1754 = vcmask 195584
    %v1755 = vsel %vm1754, %v1752, %v1729
    %v1756 = vsel %vm1754, %v1753, %v1731
    %vm1757 = vcmask 261120
    %v1758 = vsel %vm1757, %v1755, %v1737
    %v1759 = vsel %vm1757, %v1756, %v1739
    %vm1760 = vcmask 326656
    %v1761 = vsel %vm1760, %v1758, %v1745
    %v1762 = vsel %vm1760, %v1759, %v1747
    %1765 = vrot.lane.b32.xlu0 %v486, 80
    %v1766 = vpop.permute.xlu0 %1765
    %1767 = vrot.lane.b32.xlu0 %v487, 80
    %v1768 = vpop.permute.xlu0 %1767
    %v1770 = vsel %vm494, %v341, 0
    %v1773 = vsel %vm494, %v342, 0
    %v1775 = vsel %vm494, %v1766, 0
    %v1777 = vsel %vm494, %v1768, 0
    %1779 = vmatprep.subr.mxu0 0.0
    %1780 = vmatpush1.xpose.msra.mxu0 0.0
    %1781 = vmatprep.subr.mxu0 0.0
    %1782 = vmatpush1.xpose.msra.mxu0 0.0
    %1783 = vmatprep.subr.mxu0 0.0
    %1784 = vmatpush1.xpose.msra.mxu0 0.0
    %1785 = vmatprep.subr.mxu0 0.0
    %1786 = vmatpush1.xpose.msra.mxu0 0.0
    %1787 = vmatprep.subr.mxu0 0.0
    %1788 = vmatpush1.xpose.msra.mxu0 0.0
    %1789 = vmatprep.subr.mxu0 0.0
    %1790 = vmatpush1.xpose.msra.mxu0 0.0
    %1791 = vmatprep.subr.mxu0 0.0
    %1792 = vmatpush1.xpose.msra.mxu0 0.0
    %1793 = vmatprep.subr.mxu0 0.0
    %1794 = vmatpush1.xpose.msra.mxu0 0.0
    %1795 = vmatprep.subr.mxu0 0.0
    %1796 = vmatpush1.xpose.msra.mxu0 0.0
    %1797 = vmatprep.subr.mxu0 0.0
    %1798 = vmatpush1.xpose.msra.mxu0 0.0
    %1799 = vmatprep.subr.mxu0 0.0
    %1800 = vmatpush1.xpose.msra.mxu0 0.0
    %1801 = vmatprep.subr.mxu0 0.0
    %1802 = vmatpush1.xpose.msra.mxu0 0.0
    %1803 = vmatprep.subr.mxu0 0.0
    %1804 = vmatpush1.xpose.msra.mxu0 0.0
    %1805 = vmatprep.subr.mxu0 0.0
    %1806 = vmatpush1.xpose.msra.mxu0 0.0
    %1807 = vmatprep.subr.mxu0 0.0
    %1808 = vmatpush1.xpose.msra.mxu0 %v1777
    %1809 = vmatprep.subr.mxu0 0.0
    %1810 = vmatpush1.xpose.msra.mxu0 %v1775
    %1811 = vmatprep.subr.mxu0 0.0
    %1812 = vmatpush2.xpose.msra.mxu0 0.0
    %1813 = vmatprep.subr.mxu0 0.0
    %1814 = vmatpush2.xpose.msra.mxu0 0.0
    %1815 = vmatprep.subr.mxu0 0.0
    %1816 = vmatpush2.xpose.msra.mxu0 0.0
    %1817 = vmatprep.subr.mxu0 0.0
    %1818 = vmatpush2.xpose.msra.mxu0 0.0
    %1819 = vmatprep.subr.mxu0 0.0
    %1820 = vmatpush2.xpose.msra.mxu0 0.0
    %1821 = vmatprep.subr.mxu0 0.0
    %1822 = vmatpush2.xpose.msra.mxu0 0.0
    %1823 = vmatprep.subr.mxu0 0.0
    %1824 = vmatpush2.xpose.msra.mxu0 0.0
    %1825 = vmatprep.subr.mxu0 0.0
    %1826 = vmatpush2.xpose.msra.mxu0 0.0
    %1827 = vmatprep.subr.mxu0 0.0
    %1828 = vmatpush2.xpose.msra.mxu0 0.0
    %1829 = vmatprep.subr.mxu0 0.0
    %1830 = vmatpush2.xpose.msra.mxu0 0.0
    %1831 = vmatprep.subr.mxu0 0.0
    %1832 = vmatpush2.xpose.msra.mxu0 0.0
    %1833 = vmatprep.subr.mxu0 0.0
    %1834 = vmatpush2.xpose.msra.mxu0 0.0
    %1835 = vmatprep.subr.mxu0 0.0
    %1836 = vmatpush2.xpose.msra.mxu0 0.0
    %1837 = vmatprep.subr.mxu0 0.0
    %1838 = vmatpush2.xpose.msra.mxu0 0.0
    %1839 = vmatprep.subr.mxu0 0.0
    %1840 = vmatpush2.xpose.msra.mxu0 0.0
    %1841 = vmatprep.subr.mxu0 0.0
    %1842 = vmatpush2.xpose.msra.mxu0 0.0
    %1843 = vmatprep.mubr.f32.mxu0 0.0
    %1844 = vmatmul.mubr.f32.gmra.mxu0 %v1770
    %v1845 = vpop.f32.mrf.mxu0
    %v1846 = vadd.f32 0.0, %v1845
    %v1847 = vpop.f32.mrf.mxu0
    %1848 = vmatprep.mubr.f32.mxu0 0.0
    %1849 = vmatmul.mubr.f32.gmra.mxu0 %v1773
    %v1850 = vpop.f32.mrf.mxu0
    %v1851 = vadd.f32 0.0, %v1850
    %v1852 = vpop.f32.mrf.mxu0
    %1853 = vdwg.mxu0
    %v1854 = vmul.f32 %v1846, 0.35355338
    %v1855 = vmul.f32 %v1851, 0.35355338
    %v1856 = vsel %vm65, -inf, %v1854
    %v1857 = vsel %vm66, -inf, %v1855
    %v1858 = vsel %vm584, %v1856, -inf
    %1859 = vmax.xlane.f32.xlu0 %v1858
    %v1860 = vpop.xlane.xlu0 %1859
    %v1861 = vsel %vm584, %v1857, -inf
    %1862 = vmax.xlane.f32.xlu0 %v1861
    %v1863 = vpop.xlane.xlu0 %1862
    %v1864 = vsub.f32 %v1856, %v1860
    %v1865 = vsub.f32 %v1857, %v1863
    %v1866 = vmul.f32 %v1864, 1.442695
    %v1867 = vpow.pop %v1866
    %v1868 = vmul.f32 %v1865, 1.442695
    %v1869 = vpow.pop %v1868
    %v1870 = vsel %vm584, %v1867, 0.0
    %1871 = vadd.xlane.f32.xlu0 %v1870
    %v1872 = vpop.xlane.xlu0 %1871
    %v1873 = vsel %vm584, %v1869, 0.0
    %1874 = vadd.xlane.f32.xlu0 %v1873
    %v1875 = vpop.xlane.xlu0 %1874
    %v1876 = vrcp.pop %v1872
    %v1877 = vrcp.pop %v1875
    %v1878 = vmul.f32 %v1867, %v1876
    %v1879 = vmul.f32 %v1869, %v1877
    %1880 = vrot.lane.b32.xlu0 %v224, 32
    %v1881 = vpop.permute.xlu0 %1880
    %1882 = vrot.lane.b32.xlu0 %v230, 32
    %v1883 = vpop.permute.xlu0 %1882
    %v1887 = vsel %vm584, %v1878, 0
    %v1890 = vsel %vm584, %v1879, 0
    %1892 = vmatprep.subr.mxu0 0.0
    %1893 = vmatpush1.msra.mxu0 0.0
    %1894 = vmatprep.subr.mxu0 0.0
    %1895 = vmatpush1.msra.mxu0 0.0
    %1896 = vmatprep.subr.mxu0 0.0
    %1897 = vmatpush1.msra.mxu0 0.0
    %1898 = vmatprep.subr.mxu0 0.0
    %1899 = vmatpush1.msra.mxu0 0.0
    %1900 = vmatprep.subr.mxu0 0.0
    %1901 = vmatpush1.msra.mxu0 0.0
    %1902 = vmatprep.subr.mxu0 0.0
    %1903 = vmatpush1.msra.mxu0 0.0
    %1904 = vmatprep.subr.mxu0 0.0
    %1905 = vmatpush1.msra.mxu0 0.0
    %1906 = vmatprep.subr.mxu0 0.0
    %1907 = vmatpush1.msra.mxu0 0.0
    %1908 = vmatprep.subr.mxu0 0.0
    %1909 = vmatpush1.msra.mxu0 0.0
    %1910 = vmatprep.subr.mxu0 0.0
    %1911 = vmatpush1.msra.mxu0 0.0
    %1912 = vmatprep.subr.mxu0 0.0
    %1913 = vmatpush1.msra.mxu0 0.0
    %1914 = vmatprep.subr.mxu0 0.0
    %1915 = vmatpush1.msra.mxu0 0.0
    %1916 = vmatprep.subr.mxu0 0.0
    %1917 = vmatpush1.msra.mxu0 0.0
    %1918 = vmatprep.subr.mxu0 0.0
    %1919 = vmatpush1.msra.mxu0 0.0
    %1920 = vmatprep.subr.mxu0 0.0
    %1921 = vmatpush1.msra.mxu0 %v1883
    %1922 = vmatprep.subr.mxu0 0.0
    %1923 = vmatpush1.msra.mxu0 %v1881
    %1924 = vmatprep.subr.mxu0 0.0
    %1925 = vmatpush2.msra.mxu0 0.0
    %1926 = vmatprep.subr.mxu0 0.0
    %1927 = vmatpush2.msra.mxu0 0.0
    %1928 = vmatprep.subr.mxu0 0.0
    %1929 = vmatpush2.msra.mxu0 0.0
    %1930 = vmatprep.subr.mxu0 0.0
    %1931 = vmatpush2.msra.mxu0 0.0
    %1932 = vmatprep.subr.mxu0 0.0
    %1933 = vmatpush2.msra.mxu0 0.0
    %1934 = vmatprep.subr.mxu0 0.0
    %1935 = vmatpush2.msra.mxu0 0.0
    %1936 = vmatprep.subr.mxu0 0.0
    %1937 = vmatpush2.msra.mxu0 0.0
    %1938 = vmatprep.subr.mxu0 0.0
    %1939 = vmatpush2.msra.mxu0 0.0
    %1940 = vmatprep.subr.mxu0 0.0
    %1941 = vmatpush2.msra.mxu0 0.0
    %1942 = vmatprep.subr.mxu0 0.0
    %1943 = vmatpush2.msra.mxu0 0.0
    %1944 = vmatprep.subr.mxu0 0.0
    %1945 = vmatpush2.msra.mxu0 0.0
    %1946 = vmatprep.subr.mxu0 0.0
    %1947 = vmatpush2.msra.mxu0 0.0
    %1948 = vmatprep.subr.mxu0 0.0
    %1949 = vmatpush2.msra.mxu0 0.0
    %1950 = vmatprep.subr.mxu0 0.0
    %1951 = vmatpush2.msra.mxu0 0.0
    %1952 = vmatprep.subr.mxu0 0.0
    %1953 = vmatpush2.msra.mxu0 0.0
    %1954 = vmatprep.subr.mxu0 0.0
    %1955 = vmatpush2.msra.mxu0 0.0
    %1956 = vmatprep.mubr.f32.mxu0 0.0
    %1957 = vmatmul.mubr.f32.gmra.mxu0 %v1887
    %v1958 = vpop.f32.mrf.mxu0
    %v1959 = vadd.f32 0.0, %v1958
    %v1960 = vpop.f32.mrf.mxu0
    %1961 = vmatprep.mubr.f32.mxu0 0.0
    %1962 = vmatmul.mubr.f32.gmra.mxu0 %v1890
    %v1963 = vpop.f32.mrf.mxu0
    %v1964 = vadd.f32 0.0, %v1963
    %v1965 = vpop.f32.mrf.mxu0
    %1966 = vdwg.mxu0
    %1967 = vrot.lane.b32.xlu0 %v341, 120
    %v1968 = vpop.permute.xlu0 %1967
    %1969 = vrot.lane.b32.xlu0 %v342, 120
    %v1970 = vpop.permute.xlu0 %1969
    %1971 = vrot.lane.b32.xlu0 %v486, 72
    %v1972 = vpop.permute.xlu0 %1971
    %1973 = vrot.lane.b32.xlu0 %v487, 72
    %v1974 = vpop.permute.xlu0 %1973
    %v1975 = vsel %vm494, %v1968, 0
    %v1977 = vsel %vm494, %v1970, 0
    %v1979 = vsel %vm494, %v1972, 0
    %v1981 = vsel %vm494, %v1974, 0
    %1983 = vmatprep.subr.mxu0 0.0
    %1984 = vmatpush1.xpose.msra.mxu0 0.0
    %1985 = vmatprep.subr.mxu0 0.0
    %1986 = vmatpush1.xpose.msra.mxu0 0.0
    %1987 = vmatprep.subr.mxu0 0.0
    %1988 = vmatpush1.xpose.msra.mxu0 0.0
    %1989 = vmatprep.subr.mxu0 0.0
    %1990 = vmatpush1.xpose.msra.mxu0 0.0
    %1991 = vmatprep.subr.mxu0 0.0
    %1992 = vmatpush1.xpose.msra.mxu0 0.0
    %1993 = vmatprep.subr.mxu0 0.0
    %1994 = vmatpush1.xpose.msra.mxu0 0.0
    %1995 = vmatprep.subr.mxu0 0.0
    %1996 = vmatpush1.xpose.msra.mxu0 0.0
    %1997 = vmatprep.subr.mxu0 0.0
    %1998 = vmatpush1.xpose.msra.mxu0 0.0
    %1999 = vmatprep.subr.mxu0 0.0
    %2000 = vmatpush1.xpose.msra.mxu0 0.0
    %2001 = vmatprep.subr.mxu0 0.0
    %2002 = vmatpush1.xpose.msra.mxu0 0.0
    %2003 = vmatprep.subr.mxu0 0.0
    %2004 = vmatpush1.xpose.msra.mxu0 0.0
    %2005 = vmatprep.subr.mxu0 0.0
    %2006 = vmatpush1.xpose.msra.mxu0 0.0
    %2007 = vmatprep.subr.mxu0 0.0
    %2008 = vmatpush1.xpose.msra.mxu0 0.0
    %2009 = vmatprep.subr.mxu0 0.0
    %2010 = vmatpush1.xpose.msra.mxu0 0.0
    %2011 = vmatprep.subr.mxu0 0.0
    %2012 = vmatpush1.xpose.msra.mxu0 %v1981
    %2013 = vmatprep.subr.mxu0 0.0
    %2014 = vmatpush1.xpose.msra.mxu0 %v1979
    %2015 = vmatprep.subr.mxu0 0.0
    %2016 = vmatpush2.xpose.msra.mxu0 0.0
    %2017 = vmatprep.subr.mxu0 0.0
    %2018 = vmatpush2.xpose.msra.mxu0 0.0
    %2019 = vmatprep.subr.mxu0 0.0
    %2020 = vmatpush2.xpose.msra.mxu0 0.0
    %2021 = vmatprep.subr.mxu0 0.0
    %2022 = vmatpush2.xpose.msra.mxu0 0.0
    %2023 = vmatprep.subr.mxu0 0.0
    %2024 = vmatpush2.xpose.msra.mxu0 0.0
    %2025 = vmatprep.subr.mxu0 0.0
    %2026 = vmatpush2.xpose.msra.mxu0 0.0
    %2027 = vmatprep.subr.mxu0 0.0
    %2028 = vmatpush2.xpose.msra.mxu0 0.0
    %2029 = vmatprep.subr.mxu0 0.0
    %2030 = vmatpush2.xpose.msra.mxu0 0.0
    %2031 = vmatprep.subr.mxu0 0.0
    %2032 = vmatpush2.xpose.msra.mxu0 0.0
    %2033 = vmatprep.subr.mxu0 0.0
    %2034 = vmatpush2.xpose.msra.mxu0 0.0
    %2035 = vmatprep.subr.mxu0 0.0
    %2036 = vmatpush2.xpose.msra.mxu0 0.0
    %2037 = vmatprep.subr.mxu0 0.0
    %2038 = vmatpush2.xpose.msra.mxu0 0.0
    %2039 = vmatprep.subr.mxu0 0.0
    %2040 = vmatpush2.xpose.msra.mxu0 0.0
    %2041 = vmatprep.subr.mxu0 0.0
    %2042 = vmatpush2.xpose.msra.mxu0 0.0
    %2043 = vmatprep.subr.mxu0 0.0
    %2044 = vmatpush2.xpose.msra.mxu0 0.0
    %2045 = vmatprep.subr.mxu0 0.0
    %2046 = vmatpush2.xpose.msra.mxu0 0.0
    %2047 = vmatprep.mubr.f32.mxu0 0.0
    %2048 = vmatmul.mubr.f32.gmra.mxu0 %v1975
    %v2049 = vpop.f32.mrf.mxu0
    %v2050 = vadd.f32 0.0, %v2049
    %v2051 = vpop.f32.mrf.mxu0
    %2052 = vmatprep.mubr.f32.mxu0 0.0
    %2053 = vmatmul.mubr.f32.gmra.mxu0 %v1977
    %v2054 = vpop.f32.mrf.mxu0
    %v2055 = vadd.f32 0.0, %v2054
    %v2056 = vpop.f32.mrf.mxu0
    %2057 = vdwg.mxu0
    %v2058 = vmul.f32 %v2050, 0.35355338
    %v2059 = vmul.f32 %v2055, 0.35355338
    %v2060 = vsel %vm65, -inf, %v2058
    %v2061 = vsel %vm66, -inf, %v2059
    %v2062 = vsel %vm584, %v2060, -inf
    %2063 = vmax.xlane.f32.xlu0 %v2062
    %v2064 = vpop.xlane.xlu0 %2063
    %v2065 = vsel %vm584, %v2061, -inf
    %2066 = vmax.xlane.f32.xlu0 %v2065
    %v2067 = vpop.xlane.xlu0 %2066
    %v2068 = vsub.f32 %v2060, %v2064
    %v2069 = vsub.f32 %v2061, %v2067
    %v2070 = vmul.f32 %v2068, 1.442695
    %v2071 = vpow.pop %v2070
    %v2072 = vmul.f32 %v2069, 1.442695
    %v2073 = vpow.pop %v2072
    %v2074 = vsel %vm584, %v2071, 0.0
    %2075 = vadd.xlane.f32.xlu0 %v2074
    %v2076 = vpop.xlane.xlu0 %2075
    %v2077 = vsel %vm584, %v2073, 0.0
    %2078 = vadd.xlane.f32.xlu0 %v2077
    %v2079 = vpop.xlane.xlu0 %2078
    %v2080 = vrcp.pop %v2076
    %v2081 = vrcp.pop %v2079
    %v2082 = vmul.f32 %v2071, %v2080
    %v2083 = vmul.f32 %v2073, %v2081
    %2084 = vrot.lane.b32.xlu0 %v224, 24
    %v2085 = vpop.permute.xlu0 %2084
    %2086 = vrot.lane.b32.xlu0 %v230, 24
    %v2087 = vpop.permute.xlu0 %2086
    %v2091 = vsel %vm584, %v2082, 0
    %v2094 = vsel %vm584, %v2083, 0
    %2096 = vmatprep.subr.mxu0 0.0
    %2097 = vmatpush1.msra.mxu0 0.0
    %2098 = vmatprep.subr.mxu0 0.0
    %2099 = vmatpush1.msra.mxu0 0.0
    %2100 = vmatprep.subr.mxu0 0.0
    %2101 = vmatpush1.msra.mxu0 0.0
    %2102 = vmatprep.subr.mxu0 0.0
    %2103 = vmatpush1.msra.mxu0 0.0
    %2104 = vmatprep.subr.mxu0 0.0
    %2105 = vmatpush1.msra.mxu0 0.0
    %2106 = vmatprep.subr.mxu0 0.0
    %2107 = vmatpush1.msra.mxu0 0.0
    %2108 = vmatprep.subr.mxu0 0.0
    %2109 = vmatpush1.msra.mxu0 0.0
    %2110 = vmatprep.subr.mxu0 0.0
    %2111 = vmatpush1.msra.mxu0 0.0
    %2112 = vmatprep.subr.mxu0 0.0
    %2113 = vmatpush1.msra.mxu0 0.0
    %2114 = vmatprep.subr.mxu0 0.0
    %2115 = vmatpush1.msra.mxu0 0.0
    %2116 = vmatprep.subr.mxu0 0.0
    %2117 = vmatpush1.msra.mxu0 0.0
    %2118 = vmatprep.subr.mxu0 0.0
    %2119 = vmatpush1.msra.mxu0 0.0
    %2120 = vmatprep.subr.mxu0 0.0
    %2121 = vmatpush1.msra.mxu0 0.0
    %2122 = vmatprep.subr.mxu0 0.0
    %2123 = vmatpush1.msra.mxu0 0.0
    %2124 = vmatprep.subr.mxu0 0.0
    %2125 = vmatpush1.msra.mxu0 %v2087
    %2126 = vmatprep.subr.mxu0 0.0
    %2127 = vmatpush1.msra.mxu0 %v2085
    %2128 = vmatprep.subr.mxu0 0.0
    %2129 = vmatpush2.msra.mxu0 0.0
    %2130 = vmatprep.subr.mxu0 0.0
    %2131 = vmatpush2.msra.mxu0 0.0
    %2132 = vmatprep.subr.mxu0 0.0
    %2133 = vmatpush2.msra.mxu0 0.0
    %2134 = vmatprep.subr.mxu0 0.0
    %2135 = vmatpush2.msra.mxu0 0.0
    %2136 = vmatprep.subr.mxu0 0.0
    %2137 = vmatpush2.msra.mxu0 0.0
    %2138 = vmatprep.subr.mxu0 0.0
    %2139 = vmatpush2.msra.mxu0 0.0
    %2140 = vmatprep.subr.mxu0 0.0
    %2141 = vmatpush2.msra.mxu0 0.0
    %2142 = vmatprep.subr.mxu0 0.0
    %2143 = vmatpush2.msra.mxu0 0.0
    %2144 = vmatprep.subr.mxu0 0.0
    %2145 = vmatpush2.msra.mxu0 0.0
    %2146 = vmatprep.subr.mxu0 0.0
    %2147 = vmatpush2.msra.mxu0 0.0
    %2148 = vmatprep.subr.mxu0 0.0
    %2149 = vmatpush2.msra.mxu0 0.0
    %2150 = vmatprep.subr.mxu0 0.0
    %2151 = vmatpush2.msra.mxu0 0.0
    %2152 = vmatprep.subr.mxu0 0.0
    %2153 = vmatpush2.msra.mxu0 0.0
    %2154 = vmatprep.subr.mxu0 0.0
    %2155 = vmatpush2.msra.mxu0 0.0
    %2156 = vmatprep.subr.mxu0 0.0
    %2157 = vmatpush2.msra.mxu0 0.0
    %2158 = vmatprep.subr.mxu0 0.0
    %2159 = vmatpush2.msra.mxu0 0.0
    %2160 = vmatprep.mubr.f32.mxu0 0.0
    %2161 = vmatmul.mubr.f32.gmra.mxu0 %v2091
    %v2162 = vpop.f32.mrf.mxu0
    %v2163 = vadd.f32 0.0, %v2162
    %v2164 = vpop.f32.mrf.mxu0
    %2165 = vmatprep.mubr.f32.mxu0 0.0
    %2166 = vmatmul.mubr.f32.gmra.mxu0 %v2094
    %v2167 = vpop.f32.mrf.mxu0
    %v2168 = vadd.f32 0.0, %v2167
    %v2169 = vpop.f32.mrf.mxu0
    %2170 = vdwg.mxu0
    %2171 = vrot.lane.b32.xlu0 %v341, 112
    %v2172 = vpop.permute.xlu0 %2171
    %2173 = vrot.lane.b32.xlu0 %v342, 112
    %v2174 = vpop.permute.xlu0 %2173
    %2175 = vrot.lane.b32.xlu0 %v486, 64
    %v2176 = vpop.permute.xlu0 %2175
    %2177 = vrot.lane.b32.xlu0 %v487, 64
    %v2178 = vpop.permute.xlu0 %2177
    %v2179 = vsel %vm494, %v2172, 0
    %v2181 = vsel %vm494, %v2174, 0
    %v2183 = vsel %vm494, %v2176, 0
    %v2185 = vsel %vm494, %v2178, 0
    %2187 = vmatprep.subr.mxu0 0.0
    %2188 = vmatpush1.xpose.msra.mxu0 0.0
    %2189 = vmatprep.subr.mxu0 0.0
    %2190 = vmatpush1.xpose.msra.mxu0 0.0
    %2191 = vmatprep.subr.mxu0 0.0
    %2192 = vmatpush1.xpose.msra.mxu0 0.0
    %2193 = vmatprep.subr.mxu0 0.0
    %2194 = vmatpush1.xpose.msra.mxu0 0.0
    %2195 = vmatprep.subr.mxu0 0.0
    %2196 = vmatpush1.xpose.msra.mxu0 0.0
    %2197 = vmatprep.subr.mxu0 0.0
    %2198 = vmatpush1.xpose.msra.mxu0 0.0
    %2199 = vmatprep.subr.mxu0 0.0
    %2200 = vmatpush1.xpose.msra.mxu0 0.0
    %2201 = vmatprep.subr.mxu0 0.0
    %2202 = vmatpush1.xpose.msra.mxu0 0.0
    %2203 = vmatprep.subr.mxu0 0.0
    %2204 = vmatpush1.xpose.msra.mxu0 0.0
    %2205 = vmatprep.subr.mxu0 0.0
    %2206 = vmatpush1.xpose.msra.mxu0 0.0
    %2207 = vmatprep.subr.mxu0 0.0
    %2208 = vmatpush1.xpose.msra.mxu0 0.0
    %2209 = vmatprep.subr.mxu0 0.0
    %2210 = vmatpush1.xpose.msra.mxu0 0.0
    %2211 = vmatprep.subr.mxu0 0.0
    %2212 = vmatpush1.xpose.msra.mxu0 0.0
    %2213 = vmatprep.subr.mxu0 0.0
    %2214 = vmatpush1.xpose.msra.mxu0 0.0
    %2215 = vmatprep.subr.mxu0 0.0
    %2216 = vmatpush1.xpose.msra.mxu0 %v2185
    %2217 = vmatprep.subr.mxu0 0.0
    %2218 = vmatpush1.xpose.msra.mxu0 %v2183
    %2219 = vmatprep.subr.mxu0 0.0
    %2220 = vmatpush2.xpose.msra.mxu0 0.0
    %2221 = vmatprep.subr.mxu0 0.0
    %2222 = vmatpush2.xpose.msra.mxu0 0.0
    %2223 = vmatprep.subr.mxu0 0.0
    %2224 = vmatpush2.xpose.msra.mxu0 0.0
    %2225 = vmatprep.subr.mxu0 0.0
    %2226 = vmatpush2.xpose.msra.mxu0 0.0
    %2227 = vmatprep.subr.mxu0 0.0
    %2228 = vmatpush2.xpose.msra.mxu0 0.0
    %2229 = vmatprep.subr.mxu0 0.0
    %2230 = vmatpush2.xpose.msra.mxu0 0.0
    %2231 = vmatprep.subr.mxu0 0.0
    %2232 = vmatpush2.xpose.msra.mxu0 0.0
    %2233 = vmatprep.subr.mxu0 0.0
    %2234 = vmatpush2.xpose.msra.mxu0 0.0
    %2235 = vmatprep.subr.mxu0 0.0
    %2236 = vmatpush2.xpose.msra.mxu0 0.0
    %2237 = vmatprep.subr.mxu0 0.0
    %2238 = vmatpush2.xpose.msra.mxu0 0.0
    %2239 = vmatprep.subr.mxu0 0.0
    %2240 = vmatpush2.xpose.msra.mxu0 0.0
    %2241 = vmatprep.subr.mxu0 0.0
    %2242 = vmatpush2.xpose.msra.mxu0 0.0
    %2243 = vmatprep.subr.mxu0 0.0
    %2244 = vmatpush2.xpose.msra.mxu0 0.0
    %2245 = vmatprep.subr.mxu0 0.0
    %2246 = vmatpush2.xpose.msra.mxu0 0.0
    %2247 = vmatprep.subr.mxu0 0.0
    %2248 = vmatpush2.xpose.msra.mxu0 0.0
    %2249 = vmatprep.subr.mxu0 0.0
    %2250 = vmatpush2.xpose.msra.mxu0 0.0
    %2251 = vmatprep.mubr.f32.mxu0 0.0
    %2252 = vmatmul.mubr.f32.gmra.mxu0 %v2179
    %v2253 = vpop.f32.mrf.mxu0
    %v2254 = vadd.f32 0.0, %v2253
    %v2255 = vpop.f32.mrf.mxu0
    %2256 = vmatprep.mubr.f32.mxu0 0.0
    %2257 = vmatmul.mubr.f32.gmra.mxu0 %v2181
    %v2258 = vpop.f32.mrf.mxu0
    %v2259 = vadd.f32 0.0, %v2258
    %v2260 = vpop.f32.mrf.mxu0
    %2261 = vdwg.mxu0
    %v2262 = vmul.f32 %v2254, 0.35355338
    %v2263 = vmul.f32 %v2259, 0.35355338
    %v2264 = vsel %vm65, -inf, %v2262
    %v2265 = vsel %vm66, -inf, %v2263
    %v2266 = vsel %vm584, %v2264, -inf
    %2267 = vmax.xlane.f32.xlu0 %v2266
    %v2268 = vpop.xlane.xlu0 %2267
    %v2269 = vsel %vm584, %v2265, -inf
    %2270 = vmax.xlane.f32.xlu0 %v2269
    %v2271 = vpop.xlane.xlu0 %2270
    %v2272 = vsub.f32 %v2264, %v2268
    %v2273 = vsub.f32 %v2265, %v2271
    %v2274 = vmul.f32 %v2272, 1.442695
    %v2275 = vpow.pop %v2274
    %v2276 = vmul.f32 %v2273, 1.442695
    %v2277 = vpow.pop %v2276
    %v2278 = vsel %vm584, %v2275, 0.0
    %2279 = vadd.xlane.f32.xlu0 %v2278
    %v2280 = vpop.xlane.xlu0 %2279
    %v2281 = vsel %vm584, %v2277, 0.0
    %2282 = vadd.xlane.f32.xlu0 %v2281
    %v2283 = vpop.xlane.xlu0 %2282
    %v2284 = vrcp.pop %v2280
    %v2285 = vrcp.pop %v2283
    %v2286 = vmul.f32 %v2275, %v2284
    %v2287 = vmul.f32 %v2277, %v2285
    %2288 = vrot.lane.b32.xlu0 %v224, 16
    %v2289 = vpop.permute.xlu0 %2288
    %2290 = vrot.lane.b32.xlu0 %v230, 16
    %v2291 = vpop.permute.xlu0 %2290
    %v2295 = vsel %vm584, %v2286, 0
    %v2298 = vsel %vm584, %v2287, 0
    %2300 = vmatprep.subr.mxu0 0.0
    %2301 = vmatpush1.msra.mxu0 0.0
    %2302 = vmatprep.subr.mxu0 0.0
    %2303 = vmatpush1.msra.mxu0 0.0
    %2304 = vmatprep.subr.mxu0 0.0
    %2305 = vmatpush1.msra.mxu0 0.0
    %2306 = vmatprep.subr.mxu0 0.0
    %2307 = vmatpush1.msra.mxu0 0.0
    %2308 = vmatprep.subr.mxu0 0.0
    %2309 = vmatpush1.msra.mxu0 0.0
    %2310 = vmatprep.subr.mxu0 0.0
    %2311 = vmatpush1.msra.mxu0 0.0
    %2312 = vmatprep.subr.mxu0 0.0
    %2313 = vmatpush1.msra.mxu0 0.0
    %2314 = vmatprep.subr.mxu0 0.0
    %2315 = vmatpush1.msra.mxu0 0.0
    %2316 = vmatprep.subr.mxu0 0.0
    %2317 = vmatpush1.msra.mxu0 0.0
    %2318 = vmatprep.subr.mxu0 0.0
    %2319 = vmatpush1.msra.mxu0 0.0
    %2320 = vmatprep.subr.mxu0 0.0
    %2321 = vmatpush1.msra.mxu0 0.0
    %2322 = vmatprep.subr.mxu0 0.0
    %2323 = vmatpush1.msra.mxu0 0.0
    %2324 = vmatprep.subr.mxu0 0.0
    %2325 = vmatpush1.msra.mxu0 0.0
    %2326 = vmatprep.subr.mxu0 0.0
    %2327 = vmatpush1.msra.mxu0 0.0
    %2328 = vmatprep.subr.mxu0 0.0
    %2329 = vmatpush1.msra.mxu0 %v2291
    %2330 = vmatprep.subr.mxu0 0.0
    %2331 = vmatpush1.msra.mxu0 %v2289
    %2332 = vmatprep.subr.mxu0 0.0
    %2333 = vmatpush2.msra.mxu0 0.0
    %2334 = vmatprep.subr.mxu0 0.0
    %2335 = vmatpush2.msra.mxu0 0.0
    %2336 = vmatprep.subr.mxu0 0.0
    %2337 = vmatpush2.msra.mxu0 0.0
    %2338 = vmatprep.subr.mxu0 0.0
    %2339 = vmatpush2.msra.mxu0 0.0
    %2340 = vmatprep.subr.mxu0 0.0
    %2341 = vmatpush2.msra.mxu0 0.0
    %2342 = vmatprep.subr.mxu0 0.0
    %2343 = vmatpush2.msra.mxu0 0.0
    %2344 = vmatprep.subr.mxu0 0.0
    %2345 = vmatpush2.msra.mxu0 0.0
    %2346 = vmatprep.subr.mxu0 0.0
    %2347 = vmatpush2.msra.mxu0 0.0
    %2348 = vmatprep.subr.mxu0 0.0
    %2349 = vmatpush2.msra.mxu0 0.0
    %2350 = vmatprep.subr.mxu0 0.0
    %2351 = vmatpush2.msra.mxu0 0.0
    %2352 = vmatprep.subr.mxu0 0.0
    %2353 = vmatpush2.msra.mxu0 0.0
    %2354 = vmatprep.subr.mxu0 0.0
    %2355 = vmatpush2.msra.mxu0 0.0
    %2356 = vmatprep.subr.mxu0 0.0
    %2357 = vmatpush2.msra.mxu0 0.0
    %2358 = vmatprep.subr.mxu0 0.0
    %2359 = vmatpush2.msra.mxu0 0.0
    %2360 = vmatprep.subr.mxu0 0.0
    %2361 = vmatpush2.msra.mxu0 0.0
    %2362 = vmatprep.subr.mxu0 0.0
    %2363 = vmatpush2.msra.mxu0 0.0
    %2364 = vmatprep.mubr.f32.mxu0 0.0
    %2365 = vmatmul.mubr.f32.gmra.mxu0 %v2295
    %v2366 = vpop.f32.mrf.mxu0
    %v2367 = vadd.f32 0.0, %v2366
    %v2368 = vpop.f32.mrf.mxu0
    %2369 = vmatprep.mubr.f32.mxu0 0.0
    %2370 = vmatmul.mubr.f32.gmra.mxu0 %v2298
    %v2371 = vpop.f32.mrf.mxu0
    %v2372 = vadd.f32 0.0, %v2371
    %v2373 = vpop.f32.mrf.mxu0
    %2374 = vdwg.mxu0
    %2375 = vrot.lane.b32.xlu0 %v341, 104
    %v2376 = vpop.permute.xlu0 %2375
    %2377 = vrot.lane.b32.xlu0 %v342, 104
    %v2378 = vpop.permute.xlu0 %2377
    %2379 = vrot.lane.b32.xlu0 %v486, 56
    %v2380 = vpop.permute.xlu0 %2379
    %2381 = vrot.lane.b32.xlu0 %v487, 56
    %v2382 = vpop.permute.xlu0 %2381
    %v2383 = vsel %vm494, %v2376, 0
    %v2385 = vsel %vm494, %v2378, 0
    %v2387 = vsel %vm494, %v2380, 0
    %v2389 = vsel %vm494, %v2382, 0
    %2391 = vmatprep.subr.mxu0 0.0
    %2392 = vmatpush1.xpose.msra.mxu0 0.0
    %2393 = vmatprep.subr.mxu0 0.0
    %2394 = vmatpush1.xpose.msra.mxu0 0.0
    %2395 = vmatprep.subr.mxu0 0.0
    %2396 = vmatpush1.xpose.msra.mxu0 0.0
    %2397 = vmatprep.subr.mxu0 0.0
    %2398 = vmatpush1.xpose.msra.mxu0 0.0
    %2399 = vmatprep.subr.mxu0 0.0
    %2400 = vmatpush1.xpose.msra.mxu0 0.0
    %2401 = vmatprep.subr.mxu0 0.0
    %2402 = vmatpush1.xpose.msra.mxu0 0.0
    %2403 = vmatprep.subr.mxu0 0.0
    %2404 = vmatpush1.xpose.msra.mxu0 0.0
    %2405 = vmatprep.subr.mxu0 0.0
    %2406 = vmatpush1.xpose.msra.mxu0 0.0
    %2407 = vmatprep.subr.mxu0 0.0
    %2408 = vmatpush1.xpose.msra.mxu0 0.0
    %2409 = vmatprep.subr.mxu0 0.0
    %2410 = vmatpush1.xpose.msra.mxu0 0.0
    %2411 = vmatprep.subr.mxu0 0.0
    %2412 = vmatpush1.xpose.msra.mxu0 0.0
    %2413 = vmatprep.subr.mxu0 0.0
    %2414 = vmatpush1.xpose.msra.mxu0 0.0
    %2415 = vmatprep.subr.mxu0 0.0
    %2416 = vmatpush1.xpose.msra.mxu0 0.0
    %2417 = vmatprep.subr.mxu0 0.0
    %2418 = vmatpush1.xpose.msra.mxu0 0.0
    %2419 = vmatprep.subr.mxu0 0.0
    %2420 = vmatpush1.xpose.msra.mxu0 %v2389
    %2421 = vmatprep.subr.mxu0 0.0
    %2422 = vmatpush1.xpose.msra.mxu0 %v2387
    %2423 = vmatprep.subr.mxu0 0.0
    %2424 = vmatpush2.xpose.msra.mxu0 0.0
    %2425 = vmatprep.subr.mxu0 0.0
    %2426 = vmatpush2.xpose.msra.mxu0 0.0
    %2427 = vmatprep.subr.mxu0 0.0
    %2428 = vmatpush2.xpose.msra.mxu0 0.0
    %2429 = vmatprep.subr.mxu0 0.0
    %2430 = vmatpush2.xpose.msra.mxu0 0.0
    %2431 = vmatprep.subr.mxu0 0.0
    %2432 = vmatpush2.xpose.msra.mxu0 0.0
    %2433 = vmatprep.subr.mxu0 0.0
    %2434 = vmatpush2.xpose.msra.mxu0 0.0
    %2435 = vmatprep.subr.mxu0 0.0
    %2436 = vmatpush2.xpose.msra.mxu0 0.0
    %2437 = vmatprep.subr.mxu0 0.0
    %2438 = vmatpush2.xpose.msra.mxu0 0.0
    %2439 = vmatprep.subr.mxu0 0.0
    %2440 = vmatpush2.xpose.msra.mxu0 0.0
    %2441 = vmatprep.subr.mxu0 0.0
    %2442 = vmatpush2.xpose.msra.mxu0 0.0
    %2443 = vmatprep.subr.mxu0 0.0
    %2444 = vmatpush2.xpose.msra.mxu0 0.0
    %2445 = vmatprep.subr.mxu0 0.0
    %2446 = vmatpush2.xpose.msra.mxu0 0.0
    %2447 = vmatprep.subr.mxu0 0.0
    %2448 = vmatpush2.xpose.msra.mxu0 0.0
    %2449 = vmatprep.subr.mxu0 0.0
    %2450 = vmatpush2.xpose.msra.mxu0 0.0
    %2451 = vmatprep.subr.mxu0 0.0
    %2452 = vmatpush2.xpose.msra.mxu0 0.0
    %2453 = vmatprep.subr.mxu0 0.0
    %2454 = vmatpush2.xpose.msra.mxu0 0.0
    %2455 = vmatprep.mubr.f32.mxu0 0.0
    %2456 = vmatmul.mubr.f32.gmra.mxu0 %v2383
    %v2457 = vpop.f32.mrf.mxu0
    %v2458 = vadd.f32 0.0, %v2457
    %v2459 = vpop.f32.mrf.mxu0
    %2460 = vmatprep.mubr.f32.mxu0 0.0
    %2461 = vmatmul.mubr.f32.gmra.mxu0 %v2385
    %v2462 = vpop.f32.mrf.mxu0
    %v2463 = vadd.f32 0.0, %v2462
    %v2464 = vpop.f32.mrf.mxu0
    %2465 = vdwg.mxu0
    %v2466 = vmul.f32 %v2458, 0.35355338
    %v2467 = vmul.f32 %v2463, 0.35355338
    %v2468 = vsel %vm65, -inf, %v2466
    %v2469 = vsel %vm66, -inf, %v2467
    %v2470 = vsel %vm584, %v2468, -inf
    %2471 = vmax.xlane.f32.xlu0 %v2470
    %v2472 = vpop.xlane.xlu0 %2471
    %v2473 = vsel %vm584, %v2469, -inf
    %2474 = vmax.xlane.f32.xlu0 %v2473
    %v2475 = vpop.xlane.xlu0 %2474
    %v2476 = vsub.f32 %v2468, %v2472
    %v2477 = vsub.f32 %v2469, %v2475
    %v2478 = vmul.f32 %v2476, 1.442695
    %v2479 = vpow.pop %v2478
    %v2480 = vmul.f32 %v2477, 1.442695
    %v2481 = vpow.pop %v2480
    %v2482 = vsel %vm584, %v2479, 0.0
    %2483 = vadd.xlane.f32.xlu0 %v2482
    %v2484 = vpop.xlane.xlu0 %2483
    %v2485 = vsel %vm584, %v2481, 0.0
    %2486 = vadd.xlane.f32.xlu0 %v2485
    %v2487 = vpop.xlane.xlu0 %2486
    %v2488 = vrcp.pop %v2484
    %v2489 = vrcp.pop %v2487
    %v2490 = vmul.f32 %v2479, %v2488
    %v2491 = vmul.f32 %v2481, %v2489
    %2492 = vrot.lane.b32.xlu0 %v224, 8
    %v2493 = vpop.permute.xlu0 %2492
    %2494 = vrot.lane.b32.xlu0 %v230, 8
    %v2495 = vpop.permute.xlu0 %2494
    %v2499 = vsel %vm584, %v2490, 0
    %v2502 = vsel %vm584, %v2491, 0
    %2504 = vmatprep.subr.mxu0 0.0
    %2505 = vmatpush1.msra.mxu0 0.0
    %2506 = vmatprep.subr.mxu0 0.0
    %2507 = vmatpush1.msra.mxu0 0.0
    %2508 = vmatprep.subr.mxu0 0.0
    %2509 = vmatpush1.msra.mxu0 0.0
    %2510 = vmatprep.subr.mxu0 0.0
    %2511 = vmatpush1.msra.mxu0 0.0
    %2512 = vmatprep.subr.mxu0 0.0
    %2513 = vmatpush1.msra.mxu0 0.0
    %2514 = vmatprep.subr.mxu0 0.0
    %2515 = vmatpush1.msra.mxu0 0.0
    %2516 = vmatprep.subr.mxu0 0.0
    %2517 = vmatpush1.msra.mxu0 0.0
    %2518 = vmatprep.subr.mxu0 0.0
    %2519 = vmatpush1.msra.mxu0 0.0
    %2520 = vmatprep.subr.mxu0 0.0
    %2521 = vmatpush1.msra.mxu0 0.0
    %2522 = vmatprep.subr.mxu0 0.0
    %2523 = vmatpush1.msra.mxu0 0.0
    %2524 = vmatprep.subr.mxu0 0.0
    %2525 = vmatpush1.msra.mxu0 0.0
    %2526 = vmatprep.subr.mxu0 0.0
    %2527 = vmatpush1.msra.mxu0 0.0
    %2528 = vmatprep.subr.mxu0 0.0
    %2529 = vmatpush1.msra.mxu0 0.0
    %2530 = vmatprep.subr.mxu0 0.0
    %2531 = vmatpush1.msra.mxu0 0.0
    %2532 = vmatprep.subr.mxu0 0.0
    %2533 = vmatpush1.msra.mxu0 %v2495
    %2534 = vmatprep.subr.mxu0 0.0
    %2535 = vmatpush1.msra.mxu0 %v2493
    %2536 = vmatprep.subr.mxu0 0.0
    %2537 = vmatpush2.msra.mxu0 0.0
    %2538 = vmatprep.subr.mxu0 0.0
    %2539 = vmatpush2.msra.mxu0 0.0
    %2540 = vmatprep.subr.mxu0 0.0
    %2541 = vmatpush2.msra.mxu0 0.0
    %2542 = vmatprep.subr.mxu0 0.0
    %2543 = vmatpush2.msra.mxu0 0.0
    %2544 = vmatprep.subr.mxu0 0.0
    %2545 = vmatpush2.msra.mxu0 0.0
    %2546 = vmatprep.subr.mxu0 0.0
    %2547 = vmatpush2.msra.mxu0 0.0
    %2548 = vmatprep.subr.mxu0 0.0
    %2549 = vmatpush2.msra.mxu0 0.0
    %2550 = vmatprep.subr.mxu0 0.0
    %2551 = vmatpush2.msra.mxu0 0.0
    %2552 = vmatprep.subr.mxu0 0.0
    %2553 = vmatpush2.msra.mxu0 0.0
    %2554 = vmatprep.subr.mxu0 0.0
    %2555 = vmatpush2.msra.mxu0 0.0
    %2556 = vmatprep.subr.mxu0 0.0
    %2557 = vmatpush2.msra.mxu0 0.0
    %2558 = vmatprep.subr.mxu0 0.0
    %2559 = vmatpush2.msra.mxu0 0.0
    %2560 = vmatprep.subr.mxu0 0.0
    %2561 = vmatpush2.msra.mxu0 0.0
    %2562 = vmatprep.subr.mxu0 0.0
    %2563 = vmatpush2.msra.mxu0 0.0
    %2564 = vmatprep.subr.mxu0 0.0
    %2565 = vmatpush2.msra.mxu0 0.0
    %2566 = vmatprep.subr.mxu0 0.0
    %2567 = vmatpush2.msra.mxu0 0.0
    %2568 = vmatprep.mubr.f32.mxu0 0.0
    %2569 = vmatmul.mubr.f32.gmra.mxu0 %v2499
    %v2570 = vpop.f32.mrf.mxu0
    %v2571 = vadd.f32 0.0, %v2570
    %v2572 = vpop.f32.mrf.mxu0
    %2573 = vmatprep.mubr.f32.mxu0 0.0
    %2574 = vmatmul.mubr.f32.gmra.mxu0 %v2502
    %v2575 = vpop.f32.mrf.mxu0
    %v2576 = vadd.f32 0.0, %v2575
    %v2577 = vpop.f32.mrf.mxu0
    %2578 = vdwg.mxu0
    %2579 = vrot.lane.b32.xlu0 %v341, 96
    %v2580 = vpop.permute.xlu0 %2579
    %2581 = vrot.lane.b32.xlu0 %v342, 96
    %v2582 = vpop.permute.xlu0 %2581
    %2583 = vrot.lane.b32.xlu0 %v486, 48
    %v2584 = vpop.permute.xlu0 %2583
    %2585 = vrot.lane.b32.xlu0 %v487, 48
    %v2586 = vpop.permute.xlu0 %2585
    %v2587 = vsel %vm494, %v2580, 0
    %v2589 = vsel %vm494, %v2582, 0
    %v2591 = vsel %vm494, %v2584, 0
    %v2593 = vsel %vm494, %v2586, 0
    %2595 = vmatprep.subr.mxu0 0.0
    %2596 = vmatpush1.xpose.msra.mxu0 0.0
    %2597 = vmatprep.subr.mxu0 0.0
    %2598 = vmatpush1.xpose.msra.mxu0 0.0
    %2599 = vmatprep.subr.mxu0 0.0
    %2600 = vmatpush1.xpose.msra.mxu0 0.0
    %2601 = vmatprep.subr.mxu0 0.0
    %2602 = vmatpush1.xpose.msra.mxu0 0.0
    %2603 = vmatprep.subr.mxu0 0.0
    %2604 = vmatpush1.xpose.msra.mxu0 0.0
    %2605 = vmatprep.subr.mxu0 0.0
    %2606 = vmatpush1.xpose.msra.mxu0 0.0
    %2607 = vmatprep.subr.mxu0 0.0
    %2608 = vmatpush1.xpose.msra.mxu0 0.0
    %2609 = vmatprep.subr.mxu0 0.0
    %2610 = vmatpush1.xpose.msra.mxu0 0.0
    %2611 = vmatprep.subr.mxu0 0.0
    %2612 = vmatpush1.xpose.msra.mxu0 0.0
    %2613 = vmatprep.subr.mxu0 0.0
    %2614 = vmatpush1.xpose.msra.mxu0 0.0
    %2615 = vmatprep.subr.mxu0 0.0
    %2616 = vmatpush1.xpose.msra.mxu0 0.0
    %2617 = vmatprep.subr.mxu0 0.0
    %2618 = vmatpush1.xpose.msra.mxu0 0.0
    %2619 = vmatprep.subr.mxu0 0.0
    %2620 = vmatpush1.xpose.msra.mxu0 0.0
    %2621 = vmatprep.subr.mxu0 0.0
    %2622 = vmatpush1.xpose.msra.mxu0 0.0
    %2623 = vmatprep.subr.mxu0 0.0
    %2624 = vmatpush1.xpose.msra.mxu0 %v2593
    %2625 = vmatprep.subr.mxu0 0.0
    %2626 = vmatpush1.xpose.msra.mxu0 %v2591
    %2627 = vmatprep.subr.mxu0 0.0
    %2628 = vmatpush2.xpose.msra.mxu0 0.0
    %2629 = vmatprep.subr.mxu0 0.0
    %2630 = vmatpush2.xpose.msra.mxu0 0.0
    %2631 = vmatprep.subr.mxu0 0.0
    %2632 = vmatpush2.xpose.msra.mxu0 0.0
    %2633 = vmatprep.subr.mxu0 0.0
    %2634 = vmatpush2.xpose.msra.mxu0 0.0
    %2635 = vmatprep.subr.mxu0 0.0
    %2636 = vmatpush2.xpose.msra.mxu0 0.0
    %2637 = vmatprep.subr.mxu0 0.0
    %2638 = vmatpush2.xpose.msra.mxu0 0.0
    %2639 = vmatprep.subr.mxu0 0.0
    %2640 = vmatpush2.xpose.msra.mxu0 0.0
    %2641 = vmatprep.subr.mxu0 0.0
    %2642 = vmatpush2.xpose.msra.mxu0 0.0
    %2643 = vmatprep.subr.mxu0 0.0
    %2644 = vmatpush2.xpose.msra.mxu0 0.0
    %2645 = vmatprep.subr.mxu0 0.0
    %2646 = vmatpush2.xpose.msra.mxu0 0.0
    %2647 = vmatprep.subr.mxu0 0.0
    %2648 = vmatpush2.xpose.msra.mxu0 0.0
    %2649 = vmatprep.subr.mxu0 0.0
    %2650 = vmatpush2.xpose.msra.mxu0 0.0
    %2651 = vmatprep.subr.mxu0 0.0
    %2652 = vmatpush2.xpose.msra.mxu0 0.0
    %2653 = vmatprep.subr.mxu0 0.0
    %2654 = vmatpush2.xpose.msra.mxu0 0.0
    %2655 = vmatprep.subr.mxu0 0.0
    %2656 = vmatpush2.xpose.msra.mxu0 0.0
    %2657 = vmatprep.subr.mxu0 0.0
    %2658 = vmatpush2.xpose.msra.mxu0 0.0
    %2659 = vmatprep.mubr.f32.mxu0 0.0
    %2660 = vmatmul.mubr.f32.gmra.mxu0 %v2587
    %v2661 = vpop.f32.mrf.mxu0
    %v2662 = vadd.f32 0.0, %v2661
    %v2663 = vpop.f32.mrf.mxu0
    %2664 = vmatprep.mubr.f32.mxu0 0.0
    %2665 = vmatmul.mubr.f32.gmra.mxu0 %v2589
    %v2666 = vpop.f32.mrf.mxu0
    %v2667 = vadd.f32 0.0, %v2666
    %v2668 = vpop.f32.mrf.mxu0
    %2669 = vdwg.mxu0
    %v2670 = vmul.f32 %v2662, 0.35355338
    %v2671 = vmul.f32 %v2667, 0.35355338
    %v2672 = vsel %vm65, -inf, %v2670
    %v2673 = vsel %vm66, -inf, %v2671
    %v2674 = vsel %vm584, %v2672, -inf
    %2675 = vmax.xlane.f32.xlu0 %v2674
    %v2676 = vpop.xlane.xlu0 %2675
    %v2677 = vsel %vm584, %v2673, -inf
    %2678 = vmax.xlane.f32.xlu0 %v2677
    %v2679 = vpop.xlane.xlu0 %2678
    %v2680 = vsub.f32 %v2672, %v2676
    %v2681 = vsub.f32 %v2673, %v2679
    %v2682 = vmul.f32 %v2680, 1.442695
    %v2683 = vpow.pop %v2682
    %v2684 = vmul.f32 %v2681, 1.442695
    %v2685 = vpow.pop %v2684
    %v2686 = vsel %vm584, %v2683, 0.0
    %2687 = vadd.xlane.f32.xlu0 %v2686
    %v2688 = vpop.xlane.xlu0 %2687
    %v2689 = vsel %vm584, %v2685, 0.0
    %2690 = vadd.xlane.f32.xlu0 %v2689
    %v2691 = vpop.xlane.xlu0 %2690
    %v2692 = vrcp.pop %v2688
    %v2693 = vrcp.pop %v2691
    %v2694 = vmul.f32 %v2683, %v2692
    %v2695 = vmul.f32 %v2685, %v2693
    %v2697 = vsel %vm584, %v2694, 0
    %v2700 = vsel %vm584, %v2695, 0
    %2702 = vmatprep.subr.mxu0 0.0
    %2703 = vmatpush1.msra.mxu0 0.0
    %2704 = vmatprep.subr.mxu0 0.0
    %2705 = vmatpush1.msra.mxu0 0.0
    %2706 = vmatprep.subr.mxu0 0.0
    %2707 = vmatpush1.msra.mxu0 0.0
    %2708 = vmatprep.subr.mxu0 0.0
    %2709 = vmatpush1.msra.mxu0 0.0
    %2710 = vmatprep.subr.mxu0 0.0
    %2711 = vmatpush1.msra.mxu0 0.0
    %2712 = vmatprep.subr.mxu0 0.0
    %2713 = vmatpush1.msra.mxu0 0.0
    %2714 = vmatprep.subr.mxu0 0.0
    %2715 = vmatpush1.msra.mxu0 0.0
    %2716 = vmatprep.subr.mxu0 0.0
    %2717 = vmatpush1.msra.mxu0 0.0
    %2718 = vmatprep.subr.mxu0 0.0
    %2719 = vmatpush1.msra.mxu0 0.0
    %2720 = vmatprep.subr.mxu0 0.0
    %2721 = vmatpush1.msra.mxu0 0.0
    %2722 = vmatprep.subr.mxu0 0.0
    %2723 = vmatpush1.msra.mxu0 0.0
    %2724 = vmatprep.subr.mxu0 0.0
    %2725 = vmatpush1.msra.mxu0 0.0
    %2726 = vmatprep.subr.mxu0 0.0
    %2727 = vmatpush1.msra.mxu0 0.0
    %2728 = vmatprep.subr.mxu0 0.0
    %2729 = vmatpush1.msra.mxu0 0.0
    %2730 = vmatprep.subr.mxu0 0.0
    %2731 = vmatpush1.msra.mxu0 %v232
    %2732 = vmatprep.subr.mxu0 0.0
    %2733 = vmatpush1.msra.mxu0 %v226
    %2734 = vmatprep.subr.mxu0 0.0
    %2735 = vmatpush2.msra.mxu0 0.0
    %2736 = vmatprep.subr.mxu0 0.0
    %2737 = vmatpush2.msra.mxu0 0.0
    %2738 = vmatprep.subr.mxu0 0.0
    %2739 = vmatpush2.msra.mxu0 0.0
    %2740 = vmatprep.subr.mxu0 0.0
    %2741 = vmatpush2.msra.mxu0 0.0
    %2742 = vmatprep.subr.mxu0 0.0
    %2743 = vmatpush2.msra.mxu0 0.0
    %2744 = vmatprep.subr.mxu0 0.0
    %2745 = vmatpush2.msra.mxu0 0.0
    %2746 = vmatprep.subr.mxu0 0.0
    %2747 = vmatpush2.msra.mxu0 0.0
    %2748 = vmatprep.subr.mxu0 0.0
    %2749 = vmatpush2.msra.mxu0 0.0
    %2750 = vmatprep.subr.mxu0 0.0
    %2751 = vmatpush2.msra.mxu0 0.0
    %2752 = vmatprep.subr.mxu0 0.0
    %2753 = vmatpush2.msra.mxu0 0.0
    %2754 = vmatprep.subr.mxu0 0.0
    %2755 = vmatpush2.msra.mxu0 0.0
    %2756 = vmatprep.subr.mxu0 0.0
    %2757 = vmatpush2.msra.mxu0 0.0
    %2758 = vmatprep.subr.mxu0 0.0
    %2759 = vmatpush2.msra.mxu0 0.0
    %2760 = vmatprep.subr.mxu0 0.0
    %2761 = vmatpush2.msra.mxu0 0.0
    %2762 = vmatprep.subr.mxu0 0.0
    %2763 = vmatpush2.msra.mxu0 0.0
    %2764 = vmatprep.subr.mxu0 0.0
    %2765 = vmatpush2.msra.mxu0 0.0
    %2766 = vmatprep.mubr.f32.mxu0 0.0
    %2767 = vmatmul.mubr.f32.gmra.mxu0 %v2697
    %v2768 = vpop.f32.mrf.mxu0
    %v2769 = vadd.f32 0.0, %v2768
    %v2770 = vpop.f32.mrf.mxu0
    %2771 = vmatprep.mubr.f32.mxu0 0.0
    %2772 = vmatmul.mubr.f32.gmra.mxu0 %v2700
    %v2773 = vpop.f32.mrf.mxu0
    %v2774 = vadd.f32 0.0, %v2773
    %v2775 = vpop.f32.mrf.mxu0
    %2776 = vdwg.mxu0
    %2777 = vrot.lane.b32.xlu0 %v341, 88
    %v2778 = vpop.permute.xlu0 %2777
    %2779 = vrot.lane.b32.xlu0 %v342, 88
    %v2780 = vpop.permute.xlu0 %2779
    %2781 = vrot.lane.b32.xlu0 %v486, 40
    %v2782 = vpop.permute.xlu0 %2781
    %2783 = vrot.lane.b32.xlu0 %v487, 40
    %v2784 = vpop.permute.xlu0 %2783
    %v2785 = vsel %vm494, %v2778, 0
    %v2787 = vsel %vm494, %v2780, 0
    %v2789 = vsel %vm494, %v2782, 0
    %v2791 = vsel %vm494, %v2784, 0
    %2793 = vmatprep.subr.mxu0 0.0
    %2794 = vmatpush1.xpose.msra.mxu0 0.0
    %2795 = vmatprep.subr.mxu0 0.0
    %2796 = vmatpush1.xpose.msra.mxu0 0.0
    %2797 = vmatprep.subr.mxu0 0.0
    %2798 = vmatpush1.xpose.msra.mxu0 0.0
    %2799 = vmatprep.subr.mxu0 0.0
    %2800 = vmatpush1.xpose.msra.mxu0 0.0
    %2801 = vmatprep.subr.mxu0 0.0
    %2802 = vmatpush1.xpose.msra.mxu0 0.0
    %2803 = vmatprep.subr.mxu0 0.0
    %2804 = vmatpush1.xpose.msra.mxu0 0.0
    %2805 = vmatprep.subr.mxu0 0.0
    %2806 = vmatpush1.xpose.msra.mxu0 0.0
    %2807 = vmatprep.subr.mxu0 0.0
    %2808 = vmatpush1.xpose.msra.mxu0 0.0
    %2809 = vmatprep.subr.mxu0 0.0
    %2810 = vmatpush1.xpose.msra.mxu0 0.0
    %2811 = vmatprep.subr.mxu0 0.0
    %2812 = vmatpush1.xpose.msra.mxu0 0.0
    %2813 = vmatprep.subr.mxu0 0.0
    %2814 = vmatpush1.xpose.msra.mxu0 0.0
    %2815 = vmatprep.subr.mxu0 0.0
    %2816 = vmatpush1.xpose.msra.mxu0 0.0
    %2817 = vmatprep.subr.mxu0 0.0
    %2818 = vmatpush1.xpose.msra.mxu0 0.0
    %2819 = vmatprep.subr.mxu0 0.0
    %2820 = vmatpush1.xpose.msra.mxu0 0.0
    %2821 = vmatprep.subr.mxu0 0.0
    %2822 = vmatpush1.xpose.msra.mxu0 %v2791
    %2823 = vmatprep.subr.mxu0 0.0
    %2824 = vmatpush1.xpose.msra.mxu0 %v2789
    %2825 = vmatprep.subr.mxu0 0.0
    %2826 = vmatpush2.xpose.msra.mxu0 0.0
    %2827 = vmatprep.subr.mxu0 0.0
    %2828 = vmatpush2.xpose.msra.mxu0 0.0
    %2829 = vmatprep.subr.mxu0 0.0
    %2830 = vmatpush2.xpose.msra.mxu0 0.0
    %2831 = vmatprep.subr.mxu0 0.0
    %2832 = vmatpush2.xpose.msra.mxu0 0.0
    %2833 = vmatprep.subr.mxu0 0.0
    %2834 = vmatpush2.xpose.msra.mxu0 0.0
    %2835 = vmatprep.subr.mxu0 0.0
    %2836 = vmatpush2.xpose.msra.mxu0 0.0
    %2837 = vmatprep.subr.mxu0 0.0
    %2838 = vmatpush2.xpose.msra.mxu0 0.0
    %2839 = vmatprep.subr.mxu0 0.0
    %2840 = vmatpush2.xpose.msra.mxu0 0.0
    %2841 = vmatprep.subr.mxu0 0.0
    %2842 = vmatpush2.xpose.msra.mxu0 0.0
    %2843 = vmatprep.subr.mxu0 0.0
    %2844 = vmatpush2.xpose.msra.mxu0 0.0
    %2845 = vmatprep.subr.mxu0 0.0
    %2846 = vmatpush2.xpose.msra.mxu0 0.0
    %2847 = vmatprep.subr.mxu0 0.0
    %2848 = vmatpush2.xpose.msra.mxu0 0.0
    %2849 = vmatprep.subr.mxu0 0.0
    %2850 = vmatpush2.xpose.msra.mxu0 0.0
    %2851 = vmatprep.subr.mxu0 0.0
    %2852 = vmatpush2.xpose.msra.mxu0 0.0
    %2853 = vmatprep.subr.mxu0 0.0
    %2854 = vmatpush2.xpose.msra.mxu0 0.0
    %2855 = vmatprep.subr.mxu0 0.0
    %2856 = vmatpush2.xpose.msra.mxu0 0.0
    %2857 = vmatprep.mubr.f32.mxu0 0.0
    %2858 = vmatmul.mubr.f32.gmra.mxu0 %v2785
    %v2859 = vpop.f32.mrf.mxu0
    %v2860 = vadd.f32 0.0, %v2859
    %v2861 = vpop.f32.mrf.mxu0
    %2862 = vmatprep.mubr.f32.mxu0 0.0
    %2863 = vmatmul.mubr.f32.gmra.mxu0 %v2787
    %v2864 = vpop.f32.mrf.mxu0
    %v2865 = vadd.f32 0.0, %v2864
    %v2866 = vpop.f32.mrf.mxu0
    %2867 = vdwg.mxu0
    %v2868 = vmul.f32 %v2860, 0.35355338
    %v2869 = vmul.f32 %v2865, 0.35355338
    %v2870 = vsel %vm65, -inf, %v2868
    %v2871 = vsel %vm66, -inf, %v2869
    %v2872 = vsel %vm584, %v2870, -inf
    %2873 = vmax.xlane.f32.xlu0 %v2872
    %v2874 = vpop.xlane.xlu0 %2873
    %v2875 = vsel %vm584, %v2871, -inf
    %2876 = vmax.xlane.f32.xlu0 %v2875
    %v2877 = vpop.xlane.xlu0 %2876
    %v2878 = vsub.f32 %v2870, %v2874
    %v2879 = vsub.f32 %v2871, %v2877
    %v2880 = vmul.f32 %v2878, 1.442695
    %v2881 = vpow.pop %v2880
    %v2882 = vmul.f32 %v2879, 1.442695
    %v2883 = vpow.pop %v2882
    %v2884 = vsel %vm584, %v2881, 0.0
    %2885 = vadd.xlane.f32.xlu0 %v2884
    %v2886 = vpop.xlane.xlu0 %2885
    %v2887 = vsel %vm584, %v2883, 0.0
    %2888 = vadd.xlane.f32.xlu0 %v2887
    %v2889 = vpop.xlane.xlu0 %2888
    %v2890 = vrcp.pop %v2886
    %v2891 = vrcp.pop %v2889
    %v2892 = vmul.f32 %v2881, %v2890
    %v2893 = vmul.f32 %v2883, %v2891
    %2896 = vrot.lane.b32.xlu0 %v226, 120
    %v2897 = vpop.permute.xlu0 %2896
    %2898 = vrot.lane.b32.xlu0 %v232, 120
    %v2899 = vpop.permute.xlu0 %2898
    %v2903 = vsel %vm584, %v2892, 0
    %v2906 = vsel %vm584, %v2893, 0
    %2908 = vmatprep.subr.mxu0 0.0
    %2909 = vmatpush1.msra.mxu0 0.0
    %2910 = vmatprep.subr.mxu0 0.0
    %2911 = vmatpush1.msra.mxu0 0.0
    %2912 = vmatprep.subr.mxu0 0.0
    %2913 = vmatpush1.msra.mxu0 0.0
    %2914 = vmatprep.subr.mxu0 0.0
    %2915 = vmatpush1.msra.mxu0 0.0
    %2916 = vmatprep.subr.mxu0 0.0
    %2917 = vmatpush1.msra.mxu0 0.0
    %2918 = vmatprep.subr.mxu0 0.0
    %2919 = vmatpush1.msra.mxu0 0.0
    %2920 = vmatprep.subr.mxu0 0.0
    %2921 = vmatpush1.msra.mxu0 0.0
    %2922 = vmatprep.subr.mxu0 0.0
    %2923 = vmatpush1.msra.mxu0 0.0
    %2924 = vmatprep.subr.mxu0 0.0
    %2925 = vmatpush1.msra.mxu0 0.0
    %2926 = vmatprep.subr.mxu0 0.0
    %2927 = vmatpush1.msra.mxu0 0.0
    %2928 = vmatprep.subr.mxu0 0.0
    %2929 = vmatpush1.msra.mxu0 0.0
    %2930 = vmatprep.subr.mxu0 0.0
    %2931 = vmatpush1.msra.mxu0 0.0
    %2932 = vmatprep.subr.mxu0 0.0
    %2933 = vmatpush1.msra.mxu0 0.0
    %2934 = vmatprep.subr.mxu0 0.0
    %2935 = vmatpush1.msra.mxu0 0.0
    %2936 = vmatprep.subr.mxu0 0.0
    %2937 = vmatpush1.msra.mxu0 %v2899
    %2938 = vmatprep.subr.mxu0 0.0
    %2939 = vmatpush1.msra.mxu0 %v2897
    %2940 = vmatprep.subr.mxu0 0.0
    %2941 = vmatpush2.msra.mxu0 0.0
    %2942 = vmatprep.subr.mxu0 0.0
    %2943 = vmatpush2.msra.mxu0 0.0
    %2944 = vmatprep.subr.mxu0 0.0
    %2945 = vmatpush2.msra.mxu0 0.0
    %2946 = vmatprep.subr.mxu0 0.0
    %2947 = vmatpush2.msra.mxu0 0.0
    %2948 = vmatprep.subr.mxu0 0.0
    %2949 = vmatpush2.msra.mxu0 0.0
    %2950 = vmatprep.subr.mxu0 0.0
    %2951 = vmatpush2.msra.mxu0 0.0
    %2952 = vmatprep.subr.mxu0 0.0
    %2953 = vmatpush2.msra.mxu0 0.0
    %2954 = vmatprep.subr.mxu0 0.0
    %2955 = vmatpush2.msra.mxu0 0.0
    %2956 = vmatprep.subr.mxu0 0.0
    %2957 = vmatpush2.msra.mxu0 0.0
    %2958 = vmatprep.subr.mxu0 0.0
    %2959 = vmatpush2.msra.mxu0 0.0
    %2960 = vmatprep.subr.mxu0 0.0
    %2961 = vmatpush2.msra.mxu0 0.0
    %2962 = vmatprep.subr.mxu0 0.0
    %2963 = vmatpush2.msra.mxu0 0.0
    %2964 = vmatprep.subr.mxu0 0.0
    %2965 = vmatpush2.msra.mxu0 0.0
    %2966 = vmatprep.subr.mxu0 0.0
    %2967 = vmatpush2.msra.mxu0 0.0
    %2968 = vmatprep.subr.mxu0 0.0
    %2969 = vmatpush2.msra.mxu0 0.0
    %2970 = vmatprep.subr.mxu0 0.0
    %2971 = vmatpush2.msra.mxu0 0.0
    %2972 = vmatprep.mubr.f32.mxu0 0.0
    %2973 = vmatmul.mubr.f32.gmra.mxu0 %v2903
    %v2974 = vpop.f32.mrf.mxu0
    %v2975 = vadd.f32 0.0, %v2974
    %v2976 = vpop.f32.mrf.mxu0
    %2977 = vmatprep.mubr.f32.mxu0 0.0
    %2978 = vmatmul.mubr.f32.gmra.mxu0 %v2906
    %v2979 = vpop.f32.mrf.mxu0
    %v2980 = vadd.f32 0.0, %v2979
    %v2981 = vpop.f32.mrf.mxu0
    %2982 = vdwg.mxu0
    %2985 = vrot.lane.b32.xlu0 %v2163, 8
    %v2986 = vpop.permute.xlu0 %2985
    %2987 = vrot.lane.b32.xlu0 %v2168, 8
    %v2988 = vpop.permute.xlu0 %2987
    %2993 = vrot.lane.b32.xlu0 %v2367, 16
    %v2994 = vpop.permute.xlu0 %2993
    %2995 = vrot.lane.b32.xlu0 %v2372, 16
    %v2996 = vpop.permute.xlu0 %2995
    %3001 = vrot.lane.b32.xlu0 %v2571, 24
    %v3002 = vpop.permute.xlu0 %3001
    %3003 = vrot.lane.b32.xlu0 %v2576, 24
    %v3004 = vpop.permute.xlu0 %3003
    %3009 = vrot.lane.b32.xlu0 %v2769, 32
    %v3010 = vpop.permute.xlu0 %3009
    %3011 = vrot.lane.b32.xlu0 %v2774, 32
    %v3012 = vpop.permute.xlu0 %3011
    %3017 = vrot.lane.b32.xlu0 %v2975, 40
    %v3018 = vpop.permute.xlu0 %3017
    %3019 = vrot.lane.b32.xlu0 %v2980, 40
    %v3020 = vpop.permute.xlu0 %3019
    %v3023 = vsel %vm494, %v1959, %v2986
    %v3024 = vsel %vm494, %v1964, %v2988
    %v3025 = vsel %vm584, %v3023, %v2994
    %v3026 = vsel %vm584, %v3024, %v2996
    %v3027 = vsel %vm1754, %v3025, %v3002
    %v3028 = vsel %vm1754, %v3026, %v3004
    %v3029 = vsel %vm1757, %v3027, %v3010
    %v3030 = vsel %vm1757, %v3028, %v3012
    %v3031 = vsel %vm1760, %v3029, %v3018
    %v3032 = vsel %vm1760, %v3030, %v3020
    %v3033 = vld [vmem:[%s5] sm:$0xff]
    %v3034 = vld [vmem:[%s5 + $0x8] sm:$0xff]
    %v3035 = vld [vmem:[%s5 + $0x10] sm:$0xff]
    %v3036 = vld [vmem:[%s5 + $0x18] sm:$0xff]
    %v3037 = vld [vmem:[%s5 + $0x20] sm:$0xff]
    %v3038 = vld [vmem:[%s5 + $0x28] sm:$0xff]
    %v3040 = vsel %vm67, %v1761, 0
    %v3043 = vsel %vm67, %v1762, 0
    %v3046 = vsel %vm67, %v3031, 0
    %v3049 = vsel %vm67, %v3032, 0
    %3051 = vmatprep.subr.mxu0 0.0
    %3052 = vmatpush1.msra.mxu0 0.0
    %3053 = vmatprep.subr.mxu0 0.0
    %3054 = vmatpush1.msra.mxu0 0.0
    %3055 = vmatprep.subr.mxu0 0.0
    %3056 = vmatpush1.msra.mxu0 0.0
    %3057 = vmatprep.subr.mxu0 0.0
    %3058 = vmatpush1.msra.mxu0 0.0
    %3059 = vmatprep.subr.mxu0 0.0
    %3060 = vmatpush1.msra.mxu0 0.0
    %3061 = vmatprep.subr.mxu0 0.0
    %3062 = vmatpush1.msra.mxu0 0.0
    %3063 = vmatprep.subr.mxu0 0.0
    %3064 = vmatpush1.msra.mxu0 0.0
    %3065 = vmatprep.subr.mxu0 0.0
    %3066 = vmatpush1.msra.mxu0 0.0
    %3067 = vmatprep.subr.mxu0 0.0
    %3068 = vmatpush1.msra.mxu0 0.0
    %3069 = vmatprep.subr.mxu0 0.0
    %3070 = vmatpush1.msra.mxu0 0.0
    %3071 = vmatprep.subr.mxu0 0.0
    %3072 = vmatpush1.msra.mxu0 %v3038
    %3073 = vmatprep.subr.mxu0 0.0
    %3074 = vmatpush1.msra.mxu0 %v3037
    %3075 = vmatprep.subr.mxu0 0.0
    %3076 = vmatpush1.msra.mxu0 %v3036
    %3077 = vmatprep.subr.mxu0 0.0
    %3078 = vmatpush1.msra.mxu0 %v3035
    %3079 = vmatprep.subr.mxu0 0.0
    %3080 = vmatpush1.msra.mxu0 %v3034
    %3081 = vmatprep.subr.mxu0 0.0
    %3082 = vmatpush1.msra.mxu0 %v3033
    %3083 = vmatprep.subr.mxu0 0.0
    %3084 = vmatpush2.msra.mxu0 0.0
    %3085 = vmatprep.subr.mxu0 0.0
    %3086 = vmatpush2.msra.mxu0 0.0
    %3087 = vmatprep.subr.mxu0 0.0
    %3088 = vmatpush2.msra.mxu0 0.0
    %3089 = vmatprep.subr.mxu0 0.0
    %3090 = vmatpush2.msra.mxu0 0.0
    %3091 = vmatprep.subr.mxu0 0.0
    %3092 = vmatpush2.msra.mxu0 0.0
    %3093 = vmatprep.subr.mxu0 0.0
    %3094 = vmatpush2.msra.mxu0 0.0
    %3095 = vmatprep.subr.mxu0 0.0
    %3096 = vmatpush2.msra.mxu0 0.0
    %3097 = vmatprep.subr.mxu0 0.0
    %3098 = vmatpush2.msra.mxu0 0.0
    %3099 = vmatprep.subr.mxu0 0.0
    %3100 = vmatpush2.msra.mxu0 0.0
    %3101 = vmatprep.subr.mxu0 0.0
    %3102 = vmatpush2.msra.mxu0 0.0
    %3103 = vmatprep.subr.mxu0 0.0
    %3104 = vmatpush2.msra.mxu0 0.0
    %3105 = vmatprep.subr.mxu0 0.0
    %3106 = vmatpush2.msra.mxu0 0.0
    %3107 = vmatprep.subr.mxu0 0.0
    %3108 = vmatpush2.msra.mxu0 0.0
    %3109 = vmatprep.subr.mxu0 0.0
    %3110 = vmatpush2.msra.mxu0 0.0
    %3111 = vmatprep.subr.mxu0 0.0
    %3112 = vmatpush2.msra.mxu0 0.0
    %3113 = vmatprep.subr.mxu0 0.0
    %3114 = vmatpush2.msra.mxu0 0.0
    %3115 = vmatprep.mubr.f32.mxu0 0.0
    %3116 = vmatmul.mubr.f32.gmra.mxu0 %v3040
    %v3117 = vpop.f32.mrf.mxu0
    %v3118 = vadd.f32 0.0, %v3117
    %v3119 = vpop.f32.mrf.mxu0
    %3120 = vmatprep.mubr.f32.mxu0 0.0
    %3121 = vmatmul.mubr.f32.gmra.mxu0 %v3043
    %v3122 = vpop.f32.mrf.mxu0
    %v3123 = vadd.f32 0.0, %v3122
    %v3124 = vpop.f32.mrf.mxu0
    %3125 = vmatprep.mubr.f32.mxu0 0.0
    %3126 = vmatmul.mubr.f32.gmra.mxu0 %v3046
    %v3127 = vpop.f32.mrf.mxu0
    %v3128 = vadd.f32 0.0, %v3127
    %v3129 = vpop.f32.mrf.mxu0
    %3130 = vmatprep.mubr.f32.mxu0 0.0
    %3131 = vmatmul.mubr.f32.gmra.mxu0 %v3049
    %v3132 = vpop.f32.mrf.mxu0
    %v3133 = vadd.f32 0.0, %v3132
    %v3134 = vpop.f32.mrf.mxu0
    %3135 = vdwg.mxu0
    %v3136 = vadd.f32 %v42, %v3118
    %v3137 = vadd.f32 %v43, %v3123
    %v3138 = vadd.f32 %v44, %v3128
    %v3139 = vadd.f32 %v45, %v3133
    %v3140 = vsel %vm67, %v3136, 0.0
    %3141 = vadd.xlane.f32.xlu0 %v3140
    %v3142 = vpop.xlane.xlu0 %3141
    %v3143 = vsel %vm67, %v3137, 0.0
    %3144 = vadd.xlane.f32.xlu0 %v3143
    %v3145 = vpop.xlane.xlu0 %3144
    %v3146 = vsel %vm67, %v3138, 0.0
    %3147 = vadd.xlane.f32.xlu0 %v3146
    %v3148 = vpop.xlane.xlu0 %3147
    %v3149 = vsel %vm67, %v3139, 0.0
    %3150 = vadd.xlane.f32.xlu0 %v3149
    %v3151 = vpop.xlane.xlu0 %3150
    %v3152 = vmul.f32 %v3142, %v80
    %v3153 = vmul.f32 %v3145, %v80
    %v3154 = vmul.f32 %v3148, %v80
    %v3155 = vmul.f32 %v3151, %v80
    %v3156 = vsub.f32 %v3136, %v3152
    %v3157 = vsub.f32 %v3137, %v3153
    %v3158 = vsub.f32 %v3138, %v3154
    %v3159 = vsub.f32 %v3139, %v3155
    %v3160 = vmul.f32 %v3156, %v3156
    %v3161 = vmul.f32 %v3157, %v3157
    %v3162 = vmul.f32 %v3158, %v3158
    %v3163 = vmul.f32 %v3159, %v3159
    %v3164 = vsel %vm67, %v3160, 0.0
    %3165 = vadd.xlane.f32.xlu0 %v3164
    %v3166 = vpop.xlane.xlu0 %3165
    %v3167 = vsel %vm67, %v3161, 0.0
    %3168 = vadd.xlane.f32.xlu0 %v3167
    %v3169 = vpop.xlane.xlu0 %3168
    %v3170 = vsel %vm67, %v3162, 0.0
    %3171 = vadd.xlane.f32.xlu0 %v3170
    %v3172 = vpop.xlane.xlu0 %3171
    %v3173 = vsel %vm67, %v3163, 0.0
    %3174 = vadd.xlane.f32.xlu0 %v3173
    %v3175 = vpop.xlane.xlu0 %3174
    %v3176 = vmul.f32 %v3166, %v80
    %v3177 = vmul.f32 %v3169, %v80
    %v3178 = vmul.f32 %v3172, %v80
    %v3179 = vmul.f32 %v3175, %v80
    %v3180 = vadd.f32 %v3176, 1e-08
    %v3181 = vadd.f32 %v3177, 1e-08
    %v3182 = vadd.f32 %v3178, 1e-08
    %v3183 = vadd.f32 %v3179, 1e-08
    %v3184 = vrsqrt.pop %v3180
    %v3185 = vrsqrt.pop %v3181
    %v3186 = vrsqrt.pop %v3182
    %v3187 = vrsqrt.pop %v3183
    %v3188 = vmul.f32 %v3156, %v3184
    %v3189 = vmul.f32 %v3157, %v3185
    %v3190 = vmul.f32 %v3158, %v3186
    %v3191 = vmul.f32 %v3159, %v3187
    %v3192 = vld [vmem:[%s6] sm:$0xff]
    %v3193 = vld [vmem:[%s6 + $0x8] sm:$0xff]
    %v3194 = vld [vmem:[%s6 + $0x10] sm:$0xff]
    %v3195 = vld [vmem:[%s6 + $0x18] sm:$0xff]
    %v3196 = vld [vmem:[%s6 + $0x20] sm:$0xff]
    %v3197 = vld [vmem:[%s6 + $0x28] sm:$0xff]
    %v3198 = vld [vmem:[%s6 + $0x30] sm:$0xff]
    %v3199 = vld [vmem:[%s6 + $0x38] sm:$0xff]
    %v3200 = vld [vmem:[%s6 + $0x40] sm:$0xff]
    %v3201 = vld [vmem:[%s6 + $0x48] sm:$0xff]
    %v3202 = vld [vmem:[%s6 + $0x50] sm:$0xff]
    %v3203 = vld [vmem:[%s6 + $0x58] sm:$0xff]
    %v3205 = vsel %vm67, %v3188, 0
    %v3208 = vsel %vm67, %v3189, 0
    %v3211 = vsel %vm67, %v3190, 0
    %v3214 = vsel %vm67, %v3191, 0
    %3216 = vmatprep.subr.mxu0 0.0
    %3217 = vmatpush1.msra.mxu0 0.0
    %3218 = vmatprep.subr.mxu0 0.0
    %3219 = vmatpush1.msra.mxu0 0.0
    %3220 = vmatprep.subr.mxu0 0.0
    %3221 = vmatpush1.msra.mxu0 0.0
    %3222 = vmatprep.subr.mxu0 0.0
    %3223 = vmatpush1.msra.mxu0 0.0
    %3224 = vmatprep.subr.mxu0 0.0
    %3225 = vmatpush1.msra.mxu0 0.0
    %3226 = vmatprep.subr.mxu0 0.0
    %3227 = vmatpush1.msra.mxu0 0.0
    %3228 = vmatprep.subr.mxu0 0.0
    %3229 = vmatpush1.msra.mxu0 0.0
    %3230 = vmatprep.subr.mxu0 0.0
    %3231 = vmatpush1.msra.mxu0 0.0
    %3232 = vmatprep.subr.mxu0 0.0
    %3233 = vmatpush1.msra.mxu0 0.0
    %3234 = vmatprep.subr.mxu0 0.0
    %3235 = vmatpush1.msra.mxu0 0.0
    %3236 = vmatprep.subr.mxu0 %v3203
    %3237 = vmatpush1.msra.mxu0 %v3202
    %3238 = vmatprep.subr.mxu0 %v3201
    %3239 = vmatpush1.msra.mxu0 %v3200
    %3240 = vmatprep.subr.mxu0 %v3199
    %3241 = vmatpush1.msra.mxu0 %v3198
    %3242 = vmatprep.subr.mxu0 %v3197
    %3243 = vmatpush1.msra.mxu0 %v3196
    %3244 = vmatprep.subr.mxu0 %v3195
    %3245 = vmatpush1.msra.mxu0 %v3194
    %3246 = vmatprep.subr.mxu0 %v3193
    %3247 = vmatpush1.msra.mxu0 %v3192
    %3248 = vmatprep.subr.mxu0 0.0
    %3249 = vmatpush2.msra.mxu0 0.0
    %3250 = vmatprep.subr.mxu0 0.0
    %3251 = vmatpush2.msra.mxu0 0.0
    %3252 = vmatprep.subr.mxu0 0.0
    %3253 = vmatpush2.msra.mxu0 0.0
    %3254 = vmatprep.subr.mxu0 0.0
    %3255 = vmatpush2.msra.mxu0 0.0
    %3256 = vmatprep.subr.mxu0 0.0
    %3257 = vmatpush2.msra.mxu0 0.0
    %3258 = vmatprep.subr.mxu0 0.0
    %3259 = vmatpush2.msra.mxu0 0.0
    %3260 = vmatprep.subr.mxu0 0.0
    %3261 = vmatpush2.msra.mxu0 0.0
    %3262 = vmatprep.subr.mxu0 0.0
    %3263 = vmatpush2.msra.mxu0 0.0
    %3264 = vmatprep.subr.mxu0 0.0
    %3265 = vmatpush2.msra.mxu0 0.0
    %3266 = vmatprep.subr.mxu0 0.0
    %3267 = vmatpush2.msra.mxu0 0.0
    %3268 = vmatprep.subr.mxu0 0.0
    %3269 = vmatpush2.msra.mxu0 0.0
    %3270 = vmatprep.subr.mxu0 0.0
    %3271 = vmatpush2.msra.mxu0 0.0
    %3272 = vmatprep.subr.mxu0 0.0
    %3273 = vmatpush2.msra.mxu0 0.0
    %3274 = vmatprep.subr.mxu0 0.0
    %3275 = vmatpush2.msra.mxu0 0.0
    %3276 = vmatprep.subr.mxu0 0.0
    %3277 = vmatpush2.msra.mxu0 0.0
    %3278 = vmatprep.subr.mxu0 0.0
    %3279 = vmatpush2.msra.mxu0 0.0
    %3280 = vmatprep.mubr.f32.mxu0 0.0
    %3281 = vmatmul.mubr.f32.gmra.mxu0 %v3205
    %v3282 = vpop.f32.mrf.mxu0
    %v3283 = vadd.f32 0.0, %v3282
    %v3284 = vpop.f32.mrf.mxu0
    %v3285 = vadd.f32 0.0, %v3284
    %3286 = vmatprep.mubr.f32.mxu0 0.0
    %3287 = vmatmul.mubr.f32.gmra.mxu0 %v3208
    %v3288 = vpop.f32.mrf.mxu0
    %v3289 = vadd.f32 0.0, %v3288
    %v3290 = vpop.f32.mrf.mxu0
    %v3291 = vadd.f32 0.0, %v3290
    %3292 = vmatprep.mubr.f32.mxu0 0.0
    %3293 = vmatmul.mubr.f32.gmra.mxu0 %v3211
    %v3294 = vpop.f32.mrf.mxu0
    %v3295 = vadd.f32 0.0, %v3294
    %v3296 = vpop.f32.mrf.mxu0
    %v3297 = vadd.f32 0.0, %v3296
    %3298 = vmatprep.mubr.f32.mxu0 0.0
    %3299 = vmatmul.mubr.f32.gmra.mxu0 %v3214
    %v3300 = vpop.f32.mrf.mxu0
    %v3301 = vadd.f32 0.0, %v3300
    %v3302 = vpop.f32.mrf.mxu0
    %v3303 = vadd.f32 0.0, %v3302
    %3304 = vdwg.mxu0
    %v3305 = vmul.f32 %v3283, 0.5
    %v3306 = vmul.f32 %v3285, 0.5
    %v3307 = vmul.f32 %v3289, 0.5
    %v3308 = vmul.f32 %v3291, 0.5
    %v3309 = vmul.f32 %v3295, 0.5
    %v3310 = vmul.f32 %v3297, 0.5
    %v3311 = vmul.f32 %v3301, 0.5
    %v3312 = vmul.f32 %v3303, 0.5
    %v3313 = vmul.f32 %v3283, 0.70710677
    %v3314 = vmul.f32 %v3285, 0.70710677
    %v3315 = vmul.f32 %v3289, 0.70710677
    %v3316 = vmul.f32 %v3291, 0.70710677
    %v3317 = vmul.f32 %v3295, 0.70710677
    %v3318 = vmul.f32 %v3297, 0.70710677
    %v3319 = vmul.f32 %v3301, 0.70710677
    %v3320 = vmul.f32 %v3303, 0.70710677
    %vm3321 = vcmp.ge.f32.partialorder %v3313, 0.0
    %vm3322 = vcmp.ge.f32.partialorder %v3314, 0.0
    %vm3323 = vcmp.ge.f32.partialorder %v3315, 0.0
    %vm3324 = vcmp.ge.f32.partialorder %v3316, 0.0
    %vm3325 = vcmp.ge.f32.partialorder %v3317, 0.0
    %vm3326 = vcmp.ge.f32.partialorder %v3318, 0.0
    %vm3327 = vcmp.ge.f32.partialorder %v3319, 0.0
    %vm3328 = vcmp.ge.f32.partialorder %v3320, 0.0
    %v3329 = vsel %vm3321, 1.0, -1.0
    %v3330 = vsel %vm3322, 1.0, -1.0
    %v3331 = vsel %vm3323, 1.0, -1.0
    %v3332 = vsel %vm3324, 1.0, -1.0
    %v3333 = vsel %vm3325, 1.0, -1.0
    %v3334 = vsel %vm3326, 1.0, -1.0
    %v3335 = vsel %vm3327, 1.0, -1.0
    %v3336 = vsel %vm3328, 1.0, -1.0
    %v3337 = vand.u32 2147483647, %v3313
    %v3338 = vand.u32 2147483647, %v3314
    %v3339 = vand.u32 2147483647, %v3315
    %v3340 = vand.u32 2147483647, %v3316
    %v3341 = vand.u32 2147483647, %v3317
    %v3342 = vand.u32 2147483647, %v3318
    %v3343 = vand.u32 2147483647, %v3319
    %v3344 = vand.u32 2147483647, %v3320
    %v3345 = vmul.f32 %v3337, 0.3275911
    %v3346 = vmul.f32 %v3338, 0.3275911
    %v3347 = vmul.f32 %v3339, 0.3275911
    %v3348 = vmul.f32 %v3340, 0.3275911
    %v3349 = vmul.f32 %v3341, 0.3275911
    %v3350 = vmul.f32 %v3342, 0.3275911
    %v3351 = vmul.f32 %v3343, 0.3275911
    %v3352 = vmul.f32 %v3344, 0.3275911
    %v3353 = vadd.f32 %v3345, 1.0
    %v3354 = vadd.f32 %v3346, 1.0
    %v3355 = vadd.f32 %v3347, 1.0
    %v3356 = vadd.f32 %v3348, 1.0
    %v3357 = vadd.f32 %v3349, 1.0
    %v3358 = vadd.f32 %v3350, 1.0
    %v3359 = vadd.f32 %v3351, 1.0
    %v3360 = vadd.f32 %v3352, 1.0
    %v3361 = vrcp.pop %v3353
    %v3362 = vmul.f32 1.0, %v3361
    %v3363 = vrcp.pop %v3354
    %v3364 = vmul.f32 1.0, %v3363
    %v3365 = vrcp.pop %v3355
    %v3366 = vmul.f32 1.0, %v3365
    %v3367 = vrcp.pop %v3356
    %v3368 = vmul.f32 1.0, %v3367
    %v3369 = vrcp.pop %v3357
    %v3370 = vmul.f32 1.0, %v3369
    %v3371 = vrcp.pop %v3358
    %v3372 = vmul.f32 1.0, %v3371
    %v3373 = vrcp.pop %v3359
    %v3374 = vmul.f32 1.0, %v3373
    %v3375 = vrcp.pop %v3360
    %v3376 = vmul.f32 1.0, %v3375
    %v3377 = vmul.f32 %v3362, 1.0614054
    %v3378 = vmul.f32 %v3364, 1.0614054
    %v3379 = vmul.f32 %v3366, 1.0614054
    %v3380 = vmul.f32 %v3368, 1.0614054
    %v3381 = vmul.f32 %v3370, 1.0614054
    %v3382 = vmul.f32 %v3372, 1.0614054
    %v3383 = vmul.f32 %v3374, 1.0614054
    %v3384 = vmul.f32 %v3376, 1.0614054
    %v3385 = vsub.f32 %v3377, 1.4531521
    %v3386 = vsub.f32 %v3378, 1.4531521
    %v3387 = vsub.f32 %v3379, 1.4531521
    %v3388 = vsub.f32 %v3380, 1.4531521
    %v3389 = vsub.f32 %v3381, 1.4531521
    %v3390 = vsub.f32 %v3382, 1.4531521
    %v3391 = vsub.f32 %v3383, 1.4531521
    %v3392 = vsub.f32 %v3384, 1.4531521
    %v3393 = vmul.f32 %v3385, %v3362
    %v3394 = vmul.f32 %v3386, %v3364
    %v3395 = vmul.f32 %v3387, %v3366
    %v3396 = vmul.f32 %v3388, %v3368
    %v3397 = vmul.f32 %v3389, %v3370
    %v3398 = vmul.f32 %v3390, %v3372
    %v3399 = vmul.f32 %v3391, %v3374
    %v3400 = vmul.f32 %v3392, %v3376
    %v3401 = vadd.f32 %v3393, 1.4214138
    %v3402 = vadd.f32 %v3394, 1.4214138
    %v3403 = vadd.f32 %v3395, 1.4214138
    %v3404 = vadd.f32 %v3396, 1.4214138
    %v3405 = vadd.f32 %v3397, 1.4214138
    %v3406 = vadd.f32 %v3398, 1.4214138
    %v3407 = vadd.f32 %v3399, 1.4214138
    %v3408 = vadd.f32 %v3400, 1.4214138
    %v3409 = vmul.f32 %v3401, %v3362
    %v3410 = vmul.f32 %v3402, %v3364
    %v3411 = vmul.f32 %v3403, %v3366
    %v3412 = vmul.f32 %v3404, %v3368
    %v3413 = vmul.f32 %v3405, %v3370
    %v3414 = vmul.f32 %v3406, %v3372
    %v3415 = vmul.f32 %v3407, %v3374
    %v3416 = vmul.f32 %v3408, %v3376
    %v3417 = vsub.f32 %v3409, 0.28449672
    %v3418 = vsub.f32 %v3410, 0.28449672
    %v3419 = vsub.f32 %v3411, 0.28449672
    %v3420 = vsub.f32 %v3412, 0.28449672
    %v3421 = vsub.f32 %v3413, 0.28449672
    %v3422 = vsub.f32 %v3414, 0.28449672
    %v3423 = vsub.f32 %v3415, 0.28449672
    %v3424 = vsub.f32 %v3416, 0.28449672
    %v3425 = vmul.f32 %v3417, %v3362
    %v3426 = vmul.f32 %v3418, %v3364
    %v3427 = vmul.f32 %v3419, %v3366
    %v3428 = vmul.f32 %v3420, %v3368
    %v3429 = vmul.f32 %v3421, %v3370
    %v3430 = vmul.f32 %v3422, %v3372
    %v3431 = vmul.f32 %v3423, %v3374
    %v3432 = vmul.f32 %v3424, %v3376
    %v3433 = vadd.f32 %v3425, 0.2548296
    %v3434 = vadd.f32 %v3426, 0.2548296
    %v3435 = vadd.f32 %v3427, 0.2548296
    %v3436 = vadd.f32 %v3428, 0.2548296
    %v3437 = vadd.f32 %v3429, 0.2548296
    %v3438 = vadd.f32 %v3430, 0.2548296
    %v3439 = vadd.f32 %v3431, 0.2548296
    %v3440 = vadd.f32 %v3432, 0.2548296
    %v3441 = vmul.f32 %v3433, %v3362
    %v3442 = vmul.f32 %v3434, %v3364
    %v3443 = vmul.f32 %v3435, %v3366
    %v3444 = vmul.f32 %v3436, %v3368
    %v3445 = vmul.f32 %v3437, %v3370
    %v3446 = vmul.f32 %v3438, %v3372
    %v3447 = vmul.f32 %v3439, %v3374
    %v3448 = vmul.f32 %v3440, %v3376
    %v3449 = vsub.f32 0.0, %v3337
    %v3450 = vsub.f32 0.0, %v3338
    %v3451 = vsub.f32 0.0, %v3339
    %v3452 = vsub.f32 0.0, %v3340
    %v3453 = vsub.f32 0.0, %v3341
    %v3454 = vsub.f32 0.0, %v3342
    %v3455 = vsub.f32 0.0, %v3343
    %v3456 = vsub.f32 0.0, %v3344
    %v3457 = vmul.f32 %v3449, %v3337
    %v3458 = vmul.f32 %v3450, %v3338
    %v3459 = vmul.f32 %v3451, %v3339
    %v3460 = vmul.f32 %v3452, %v3340
    %v3461 = vmul.f32 %v3453, %v3341
    %v3462 = vmul.f32 %v3454, %v3342
    %v3463 = vmul.f32 %v3455, %v3343
    %v3464 = vmul.f32 %v3456, %v3344
    %v3465 = vmul.f32 %v3457, 1.442695
    %v3466 = vpow.pop %v3465
    %v3467 = vmul.f32 %v3458, 1.442695
    %v3468 = vpow.pop %v3467
    %v3469 = vmul.f32 %v3459, 1.442695
    %v3470 = vpow.pop %v3469
    %v3471 = vmul.f32 %v3460, 1.442695
    %v3472 = vpow.pop %v3471
    %v3473 = vmul.f32 %v3461, 1.442695
    %v3474 = vpow.pop %v3473
    %v3475 = vmul.f32 %v3462, 1.442695
    %v3476 = vpow.pop %v3475
    %v3477 = vmul.f32 %v3463, 1.442695
    %v3478 = vpow.pop %v3477
    %v3479 = vmul.f32 %v3464, 1.442695
    %v3480 = vpow.pop %v3479
    %v3481 = vmul.f32 %v3441, %v3466
    %v3482 = vmul.f32 %v3442, %v3468
    %v3483 = vmul.f32 %v3443, %v3470
    %v3484 = vmul.f32 %v3444, %v3472
    %v3485 = vmul.f32 %v3445, %v3474
    %v3486 = vmul.f32 %v3446, %v3476
    %v3487 = vmul.f32 %v3447, %v3478
    %v3488 = vmul.f32 %v3448, %v3480
    %v3489 = vsub.f32 1.0, %v3481
    %v3490 = vsub.f32 1.0, %v3482
    %v3491 = vsub.f32 1.0, %v3483
    %v3492 = vsub.f32 1.0, %v3484
    %v3493 = vsub.f32 1.0, %v3485
    %v3494 = vsub.f32 1.0, %v3486
    %v3495 = vsub.f32 1.0, %v3487
    %v3496 = vsub.f32 1.0, %v3488
    %v3497 = vmul.f32 %v3329, %v3489
    %v3498 = vmul.f32 %v3330, %v3490
    %v3499 = vmul.f32 %v3331, %v3491
    %v3500 = vmul.f32 %v3332, %v3492
    %v3501 = vmul.f32 %v3333, %v3493
    %v3502 = vmul.f32 %v3334, %v3494
    %v3503 = vmul.f32 %v3335, %v3495
    %v3504 = vmul.f32 %v3336, %v3496
    %v3505 = vadd.f32 %v3497, 1.0
    %v3506 = vadd.f32 %v3498, 1.0
    %v3507 = vadd.f32 %v3499, 1.0
    %v3508 = vadd.f32 %v3500, 1.0
    %v3509 = vadd.f32 %v3501, 1.0
    %v3510 = vadd.f32 %v3502, 1.0
    %v3511 = vadd.f32 %v3503, 1.0
    %v3512 = vadd.f32 %v3504, 1.0
    %v3513 = vmul.f32 %v3305, %v3505
    %v3514 = vmul.f32 %v3306, %v3506
    %v3515 = vmul.f32 %v3307, %v3507
    %v3516 = vmul.f32 %v3308, %v3508
    %v3517 = vmul.f32 %v3309, %v3509
    %v3518 = vmul.f32 %v3310, %v3510
    %v3519 = vmul.f32 %v3311, %v3511
    %v3520 = vmul.f32 %v3312, %v3512
    %v3521 = vld [vmem:[%s7] sm:$0xff]
    %v3522 = vld [vmem:[%s7 + $0x8] sm:$0xff]
    %v3523 = vld [vmem:[%s7 + $0x10] sm:$0xff]
    %v3524 = vld [vmem:[%s7 + $0x18] sm:$0xff]
    %v3525 = vld [vmem:[%s7 + $0x20] sm:$0xff]
    %v3526 = vld [vmem:[%s7 + $0x28] sm:$0xff]
    %v3527 = vld [vmem:[%s7 + $0x30] sm:$0xff]
    %v3528 = vld [vmem:[%s7 + $0x38] sm:$0xff]
    %v3529 = vld [vmem:[%s7 + $0x40] sm:$0xff]
    %v3530 = vld [vmem:[%s7 + $0x48] sm:$0xff]
    %v3531 = vld [vmem:[%s7 + $0x50] sm:$0xff]
    %v3532 = vld [vmem:[%s7 + $0x58] sm:$0xff]
    %v3533 = vld [vmem:[%s7 + $0x60] sm:$0xff]
    %v3534 = vld [vmem:[%s7 + $0x68] sm:$0xff]
    %v3535 = vld [vmem:[%s7 + $0x70] sm:$0xff]
    %v3536 = vld [vmem:[%s7 + $0x78] sm:$0xff]
    %v3537 = vld [vmem:[%s7 + $0x80] sm:$0xff]
    %v3538 = vld [vmem:[%s7 + $0x88] sm:$0xff]
    %v3539 = vld [vmem:[%s7 + $0x90] sm:$0xff]
    %v3540 = vld [vmem:[%s7 + $0x98] sm:$0xff]
    %v3541 = vld [vmem:[%s7 + $0xa0] sm:$0xff]
    %v3542 = vld [vmem:[%s7 + $0xa8] sm:$0xff]
    %v3543 = vld [vmem:[%s7 + $0xb0] sm:$0xff]
    %v3544 = vld [vmem:[%s7 + $0xb8] sm:$0xff]
    %vm3545 = vcmask 523264
    %v3547 = vsel %vm3545, %v3514, 0
    %v3550 = vsel %vm3545, %v3516, 0
    %v3553 = vsel %vm3545, %v3518, 0
    %v3556 = vsel %vm3545, %v3520, 0
    %3558 = vmatprep.subr.mxu0 0.0
    %3559 = vmatpush1.msra.mxu0 %v3536
    %3560 = vmatprep.subr.mxu0 0.0
    %3561 = vmatpush1.msra.mxu0 %v3535
    %3562 = vmatprep.subr.mxu0 0.0
    %3563 = vmatpush1.msra.mxu0 %v3534
    %3564 = vmatprep.subr.mxu0 0.0
    %3565 = vmatpush1.msra.mxu0 %v3533
    %3566 = vmatprep.subr.mxu0 0.0
    %3567 = vmatpush1.msra.mxu0 %v3532
    %3568 = vmatprep.subr.mxu0 0.0
    %3569 = vmatpush1.msra.mxu0 %v3531
    %3570 = vmatprep.subr.mxu0 0.0
    %3571 = vmatpush1.msra.mxu0 %v3530
    %3572 = vmatprep.subr.mxu0 0.0
    %3573 = vmatpush1.msra.mxu0 %v3529
    %3574 = vmatprep.subr.mxu0 0.0
    %3575 = vmatpush1.msra.mxu0 %v3528
    %3576 = vmatprep.subr.mxu0 0.0
    %3577 = vmatpush1.msra.mxu0 %v3527
    %3578 = vmatprep.subr.mxu0 0.0
    %3579 = vmatpush1.msra.mxu0 %v3526
    %3580 = vmatprep.subr.mxu0 0.0
    %3581 = vmatpush1.msra.mxu0 %v3525
    %3582 = vmatprep.subr.mxu0 0.0
    %3583 = vmatpush1.msra.mxu0 %v3524
    %3584 = vmatprep.subr.mxu0 0.0
    %3585 = vmatpush1.msra.mxu0 %v3523
    %3586 = vmatprep.subr.mxu0 0.0
    %3587 = vmatpush1.msra.mxu0 %v3522
    %3588 = vmatprep.subr.mxu0 0.0
    %3589 = vmatpush1.msra.mxu0 %v3521
    %3590 = vmatprep.subr.mxu0 0.0
    %3591 = vmatpush2.msra.mxu0 0.0
    %3592 = vmatprep.subr.mxu0 0.0
    %3593 = vmatpush2.msra.mxu0 0.0
    %3594 = vmatprep.subr.mxu0 0.0
    %3595 = vmatpush2.msra.mxu0 0.0
    %3596 = vmatprep.subr.mxu0 0.0
    %3597 = vmatpush2.msra.mxu0 0.0
    %3598 = vmatprep.subr.mxu0 0.0
    %3599 = vmatpush2.msra.mxu0 0.0
    %3600 = vmatprep.subr.mxu0 0.0
    %3601 = vmatpush2.msra.mxu0 0.0
    %3602 = vmatprep.subr.mxu0 0.0
    %3603 = vmatpush2.msra.mxu0 0.0
    %3604 = vmatprep.subr.mxu0 0.0
    %3605 = vmatpush2.msra.mxu0 0.0
    %3606 = vmatprep.subr.mxu0 0.0
    %3607 = vmatpush2.msra.mxu0 %v3544
    %3608 = vmatprep.subr.mxu0 0.0
    %3609 = vmatpush2.msra.mxu0 %v3543
    %3610 = vmatprep.subr.mxu0 0.0
    %3611 = vmatpush2.msra.mxu0 %v3542
    %3612 = vmatprep.subr.mxu0 0.0
    %3613 = vmatpush2.msra.mxu0 %v3541
    %3614 = vmatprep.subr.mxu0 0.0
    %3615 = vmatpush2.msra.mxu0 %v3540
    %3616 = vmatprep.subr.mxu0 0.0
    %3617 = vmatpush2.msra.mxu0 %v3539
    %3618 = vmatprep.subr.mxu0 0.0
    %3619 = vmatpush2.msra.mxu0 %v3538
    %3620 = vmatprep.subr.mxu0 0.0
    %3621 = vmatpush2.msra.mxu0 %v3537
    %3622 = vmatprep.mubr.f32.mxu0 %v3547
    %3623 = vmatmul.mubr.f32.gmra.mxu0 %v3513
    %v3624 = vpop.f32.mrf.mxu0
    %v3625 = vadd.f32 0.0, %v3624
    %v3626 = vpop.f32.mrf.mxu0
    %3627 = vmatprep.mubr.f32.mxu0 %v3550
    %3628 = vmatmul.mubr.f32.gmra.mxu0 %v3515
    %v3629 = vpop.f32.mrf.mxu0
    %v3630 = vadd.f32 0.0, %v3629
    %v3631 = vpop.f32.mrf.mxu0
    %3632 = vmatprep.mubr.f32.mxu0 %v3553
    %3633 = vmatmul.mubr.f32.gmra.mxu0 %v3517
    %v3634 = vpop.f32.mrf.mxu0
    %v3635 = vadd.f32 0.0, %v3634
    %v3636 = vpop.f32.mrf.mxu0
    %3637 = vmatprep.mubr.f32.mxu0 %v3556
    %3638 = vmatmul.mubr.f32.gmra.mxu0 %v3519
    %v3639 = vpop.f32.mrf.mxu0
    %v3640 = vadd.f32 0.0, %v3639
    %v3641 = vpop.f32.mrf.mxu0
    %3642 = vdwg.mxu0
    %v3643 = vadd.f32 %v3136, %v3625
    %v3644 = vadd.f32 %v3137, %v3630
    %v3645 = vadd.f32 %v3138, %v3635
    %v3646 = vadd.f32 %v3139, %v3640
    %v3647 = vsel %vm67, %v3643, 0.0
    %3648 = vadd.xlane.f32.xlu0 %v3647
    %v3649 = vpop.xlane.xlu0 %3648
    %v3650 = vsel %vm67, %v3644, 0.0
    %3651 = vadd.xlane.f32.xlu0 %v3650
    %v3652 = vpop.xlane.xlu0 %3651
    %v3653 = vsel %vm67, %v3645, 0.0
    %3654 = vadd.xlane.f32.xlu0 %v3653
    %v3655 = vpop.xlane.xlu0 %3654
    %v3656 = vsel %vm67, %v3646, 0.0
    %3657 = vadd.xlane.f32.xlu0 %v3656
    %v3658 = vpop.xlane.xlu0 %3657
    %v3659 = vmul.f32 %v3649, %v80
    %v3660 = vmul.f32 %v3652, %v80
    %v3661 = vmul.f32 %v3655, %v80
    %v3662 = vmul.f32 %v3658, %v80
    %v3663 = vsub.f32 %v3643, %v3659
    %v3664 = vsub.f32 %v3644, %v3660
    %v3665 = vsub.f32 %v3645, %v3661
    %v3666 = vsub.f32 %v3646, %v3662
    %v3667 = vmul.f32 %v3663, %v3663
    %v3668 = vmul.f32 %v3664, %v3664
    %v3669 = vmul.f32 %v3665, %v3665
    %v3670 = vmul.f32 %v3666, %v3666
    %v3671 = vsel %vm67, %v3667, 0.0
    %3672 = vadd.xlane.f32.xlu0 %v3671
    %v3673 = vpop.xlane.xlu0 %3672
    %v3674 = vsel %vm67, %v3668, 0.0
    %3675 = vadd.xlane.f32.xlu0 %v3674
    %v3676 = vpop.xlane.xlu0 %3675
    %v3677 = vsel %vm67, %v3669, 0.0
    %3678 = vadd.xlane.f32.xlu0 %v3677
    %v3679 = vpop.xlane.xlu0 %3678
    %v3680 = vsel %vm67, %v3670, 0.0
    %3681 = vadd.xlane.f32.xlu0 %v3680
    %v3682 = vpop.xlane.xlu0 %3681
    %v3683 = vmul.f32 %v3673, %v80
    %v3684 = vmul.f32 %v3676, %v80
    %v3685 = vmul.f32 %v3679, %v80
    %v3686 = vmul.f32 %v3682, %v80
    %v3687 = vadd.f32 %v3683, 1e-08
    %v3688 = vadd.f32 %v3684, 1e-08
    %v3689 = vadd.f32 %v3685, 1e-08
    %v3690 = vadd.f32 %v3686, 1e-08
    %v3691 = vrsqrt.pop %v3687
    %v3692 = vrsqrt.pop %v3688
    %v3693 = vrsqrt.pop %v3689
    %v3694 = vrsqrt.pop %v3690
    %v3695 = vmul.f32 %v3663, %v3691
    %v3696 = vmul.f32 %v3664, %v3692
    %v3697 = vmul.f32 %v3665, %v3693
    %v3698 = vmul.f32 %v3666, %v3694
    %s3699 = scalar_lea.vmem %s4, 96
    %v3700 = vld [vmem:[%s3699] sm:$0xff]
    %v3701 = vld [vmem:[%s3699 + $0x8] sm:$0xff]
    %v3702 = vld [vmem:[%s3699 + $0x10] sm:$0xff]
    %v3703 = vld [vmem:[%s3699 + $0x18] sm:$0xff]
    %v3704 = vld [vmem:[%s3699 + $0x20] sm:$0xff]
    %v3705 = vld [vmem:[%s3699 + $0x28] sm:$0xff]
    %v3706 = vld [vmem:[%s3699 + $0x30] sm:$0xff]
    %v3707 = vld [vmem:[%s3699 + $0x38] sm:$0xff]
    %v3708 = vld [vmem:[%s3699 + $0x40] sm:$0xff]
    %v3709 = vld [vmem:[%s3699 + $0x48] sm:$0xff]
    %v3710 = vld [vmem:[%s3699 + $0x50] sm:$0xff]
    %v3711 = vld [vmem:[%s3699 + $0x58] sm:$0xff]
    %v3713 = vsel %vm67, %v3695, 0
    %v3716 = vsel %vm67, %v3696, 0
    %v3719 = vsel %vm67, %v3697, 0
    %v3722 = vsel %vm67, %v3698, 0
    %3724 = vmatprep.subr.mxu0 0.0
    %3725 = vmatpush1.msra.mxu0 0.0
    %3726 = vmatprep.subr.mxu0 0.0
    %3727 = vmatpush1.msra.mxu0 0.0
    %3728 = vmatprep.subr.mxu0 0.0
    %3729 = vmatpush1.msra.mxu0 0.0
    %3730 = vmatprep.subr.mxu0 0.0
    %3731 = vmatpush1.msra.mxu0 0.0
    %3732 = vmatprep.subr.mxu0 0.0
    %3733 = vmatpush1.msra.mxu0 0.0
    %3734 = vmatprep.subr.mxu0 0.0
    %3735 = vmatpush1.msra.mxu0 0.0
    %3736 = vmatprep.subr.mxu0 0.0
    %3737 = vmatpush1.msra.mxu0 0.0
    %3738 = vmatprep.subr.mxu0 0.0
    %3739 = vmatpush1.msra.mxu0 0.0
    %3740 = vmatprep.subr.mxu0 0.0
    %3741 = vmatpush1.msra.mxu0 0.0
    %3742 = vmatprep.subr.mxu0 0.0
    %3743 = vmatpush1.msra.mxu0 0.0
    %3744 = vmatprep.subr.mxu0 %v3711
    %3745 = vmatpush1.msra.mxu0 %v3710
    %3746 = vmatprep.subr.mxu0 %v3709
    %3747 = vmatpush1.msra.mxu0 %v3708
    %3748 = vmatprep.subr.mxu0 %v3707
    %3749 = vmatpush1.msra.mxu0 %v3706
    %3750 = vmatprep.subr.mxu0 %v3705
    %3751 = vmatpush1.msra.mxu0 %v3704
    %3752 = vmatprep.subr.mxu0 %v3703
    %3753 = vmatpush1.msra.mxu0 %v3702
    %3754 = vmatprep.subr.mxu0 %v3701
    %3755 = vmatpush1.msra.mxu0 %v3700
    %3756 = vmatprep.subr.mxu0 0.0
    %3757 = vmatpush2.msra.mxu0 0.0
    %3758 = vmatprep.subr.mxu0 0.0
    %3759 = vmatpush2.msra.mxu0 0.0
    %3760 = vmatprep.subr.mxu0 0.0
    %3761 = vmatpush2.msra.mxu0 0.0
    %3762 = vmatprep.subr.mxu0 0.0
    %3763 = vmatpush2.msra.mxu0 0.0
    %3764 = vmatprep.subr.mxu0 0.0
    %3765 = vmatpush2.msra.mxu0 0.0
    %3766 = vmatprep.subr.mxu0 0.0
    %3767 = vmatpush2.msra.mxu0 0.0
    %3768 = vmatprep.subr.mxu0 0.0
    %3769 = vmatpush2.msra.mxu0 0.0
    %3770 = vmatprep.subr.mxu0 0.0
    %3771 = vmatpush2.msra.mxu0 0.0
    %3772 = vmatprep.subr.mxu0 0.0
    %3773 = vmatpush2.msra.mxu0 0.0
    %3774 = vmatprep.subr.mxu0 0.0
    %3775 = vmatpush2.msra.mxu0 0.0
    %3776 = vmatprep.subr.mxu0 0.0
    %3777 = vmatpush2.msra.mxu0 0.0
    %3778 = vmatprep.subr.mxu0 0.0
    %3779 = vmatpush2.msra.mxu0 0.0
    %3780 = vmatprep.subr.mxu0 0.0
    %3781 = vmatpush2.msra.mxu0 0.0
    %3782 = vmatprep.subr.mxu0 0.0
    %3783 = vmatpush2.msra.mxu0 0.0
    %3784 = vmatprep.subr.mxu0 0.0
    %3785 = vmatpush2.msra.mxu0 0.0
    %3786 = vmatprep.subr.mxu0 0.0
    %3787 = vmatpush2.msra.mxu0 0.0
    %3788 = vmatprep.mubr.f32.mxu0 0.0
    %3789 = vmatmul.mubr.f32.gmra.mxu0 %v3713
    %v3790 = vpop.f32.mrf.mxu0
    %v3791 = vadd.f32 0.0, %v3790
    %v3792 = vpop.f32.mrf.mxu0
    %v3793 = vadd.f32 0.0, %v3792
    %3794 = vmatprep.mubr.f32.mxu0 0.0
    %3795 = vmatmul.mubr.f32.gmra.mxu0 %v3716
    %v3796 = vpop.f32.mrf.mxu0
    %v3797 = vadd.f32 0.0, %v3796
    %v3798 = vpop.f32.mrf.mxu0
    %v3799 = vadd.f32 0.0, %v3798
    %3800 = vmatprep.mubr.f32.mxu0 0.0
    %3801 = vmatmul.mubr.f32.gmra.mxu0 %v3719
    %v3802 = vpop.f32.mrf.mxu0
    %v3803 = vadd.f32 0.0, %v3802
    %v3804 = vpop.f32.mrf.mxu0
    %v3805 = vadd.f32 0.0, %v3804
    %3806 = vmatprep.mubr.f32.mxu0 0.0
    %3807 = vmatmul.mubr.f32.gmra.mxu0 %v3722
    %v3808 = vpop.f32.mrf.mxu0
    %v3809 = vadd.f32 0.0, %v3808
    %v3810 = vpop.f32.mrf.mxu0
    %v3811 = vadd.f32 0.0, %v3810
    %3812 = vdwg.mxu0
    %v3813 = vmul.f32 %v3791, %v46
    %v3814 = vmul.f32 %v3797, %v47
    %v3815 = vmul.f32 %v3803, %v48
    %v3816 = vmul.f32 %v3809, %v49
    %v3818 = vsel %vm67, %v3791, 0
    %v3821 = vsel %vm67, %v3797, 0
    %v3824 = vsel %vm67, %v3803, 0
    %v3827 = vsel %vm67, %v3809, 0
    %3829 = vmatprep.subr.mxu0 0.0
    %3830 = vmatpush1.msra.mxu0 0.0
    %3831 = vmatprep.subr.mxu0 0.0
    %3832 = vmatpush1.msra.mxu0 0.0
    %3833 = vmatprep.subr.mxu0 0.0
    %3834 = vmatpush1.msra.mxu0 0.0
    %3835 = vmatprep.subr.mxu0 0.0
    %3836 = vmatpush1.msra.mxu0 0.0
    %3837 = vmatprep.subr.mxu0 0.0
    %3838 = vmatpush1.msra.mxu0 0.0
    %3839 = vmatprep.subr.mxu0 0.0
    %3840 = vmatpush1.msra.mxu0 0.0
    %3841 = vmatprep.subr.mxu0 0.0
    %3842 = vmatpush1.msra.mxu0 0.0
    %3843 = vmatprep.subr.mxu0 0.0
    %3844 = vmatpush1.msra.mxu0 0.0
    %3845 = vmatprep.subr.mxu0 0.0
    %3846 = vmatpush1.msra.mxu0 0.0
    %3847 = vmatprep.subr.mxu0 0.0
    %3848 = vmatpush1.msra.mxu0 0.0
    %3849 = vmatprep.subr.mxu0 0.0
    %3850 = vmatpush1.msra.mxu0 %v59
    %3851 = vmatprep.subr.mxu0 0.0
    %3852 = vmatpush1.msra.mxu0 %v58
    %3853 = vmatprep.subr.mxu0 0.0
    %3854 = vmatpush1.msra.mxu0 %v57
    %3855 = vmatprep.subr.mxu0 0.0
    %3856 = vmatpush1.msra.mxu0 %v56
    %3857 = vmatprep.subr.mxu0 0.0
    %3858 = vmatpush1.msra.mxu0 %v55
    %3859 = vmatprep.subr.mxu0 0.0
    %3860 = vmatpush1.msra.mxu0 %v54
    %3861 = vmatprep.subr.mxu0 0.0
    %3862 = vmatpush2.msra.mxu0 0.0
    %3863 = vmatprep.subr.mxu0 0.0
    %3864 = vmatpush2.msra.mxu0 0.0
    %3865 = vmatprep.subr.mxu0 0.0
    %3866 = vmatpush2.msra.mxu0 0.0
    %3867 = vmatprep.subr.mxu0 0.0
    %3868 = vmatpush2.msra.mxu0 0.0
    %3869 = vmatprep.subr.mxu0 0.0
    %3870 = vmatpush2.msra.mxu0 0.0
    %3871 = vmatprep.subr.mxu0 0.0
    %3872 = vmatpush2.msra.mxu0 0.0
    %3873 = vmatprep.subr.mxu0 0.0
    %3874 = vmatpush2.msra.mxu0 0.0
    %3875 = vmatprep.subr.mxu0 0.0
    %3876 = vmatpush2.msra.mxu0 0.0
    %3877 = vmatprep.subr.mxu0 0.0
    %3878 = vmatpush2.msra.mxu0 0.0
    %3879 = vmatprep.subr.mxu0 0.0
    %3880 = vmatpush2.msra.mxu0 0.0
    %3881 = vmatprep.subr.mxu0 0.0
    %3882 = vmatpush2.msra.mxu0 0.0
    %3883 = vmatprep.subr.mxu0 0.0
    %3884 = vmatpush2.msra.mxu0 0.0
    %3885 = vmatprep.subr.mxu0 0.0
    %3886 = vmatpush2.msra.mxu0 0.0
    %3887 = vmatprep.subr.mxu0 0.0
    %3888 = vmatpush2.msra.mxu0 0.0
    %3889 = vmatprep.subr.mxu0 0.0
    %3890 = vmatpush2.msra.mxu0 0.0
    %3891 = vmatprep.subr.mxu0 0.0
    %3892 = vmatpush2.msra.mxu0 0.0
    %3893 = vmatprep.mubr.f32.mxu0 0.0
    %3894 = vmatmul.mubr.f32.gmra.mxu0 %v3818
    %v3895 = vpop.f32.mrf.mxu0
    %v3896 = vadd.f32 0.0, %v3895
    %v3897 = vpop.f32.mrf.mxu0
    %3898 = vmatprep.mubr.f32.mxu0 0.0
    %3899 = vmatmul.mubr.f32.gmra.mxu0 %v3821
    %v3900 = vpop.f32.mrf.mxu0
    %v3901 = vadd.f32 0.0, %v3900
    %v3902 = vpop.f32.mrf.mxu0
    %3903 = vmatprep.mubr.f32.mxu0 0.0
    %3904 = vmatmul.mubr.f32.gmra.mxu0 %v3824
    %v3905 = vpop.f32.mrf.mxu0
    %v3906 = vadd.f32 0.0, %v3905
    %v3907 = vpop.f32.mrf.mxu0
    %3908 = vmatprep.mubr.f32.mxu0 0.0
    %3909 = vmatmul.mubr.f32.gmra.mxu0 %v3827
    %v3910 = vpop.f32.mrf.mxu0
    %v3911 = vadd.f32 0.0, %v3910
    %v3912 = vpop.f32.mrf.mxu0
    %3913 = vdwg.mxu0
    %v3914 = vmul.f32 %v3896, %v50
    %v3915 = vmul.f32 %v3901, %v51
    %v3916 = vmul.f32 %v3906, %v52
    %v3917 = vmul.f32 %v3911, %v53
    %v3918 = vadd.f32 %v3813, %v3914
    %v3919 = vadd.f32 %v3814, %v3915
    %v3920 = vadd.f32 %v3815, %v3916
    %v3921 = vadd.f32 %v3816, %v3917
    %v3922 = vmul.f32 %v3791, %v348
    %v3923 = vmul.f32 %v3797, %v350
    %v3924 = vmul.f32 %v3803, %v352
    %v3925 = vmul.f32 %v3809, %v354
    %3926 = vrot.lane.b32.xlu0 %v3791, 80
    %v3927 = vpop.permute.xlu0 %3926
    %3928 = vrot.lane.b32.xlu0 %v3797, 80
    %v3929 = vpop.permute.xlu0 %3928
    %3930 = vrot.lane.b32.xlu0 %v3803, 80
    %v3931 = vpop.permute.xlu0 %3930
    %3932 = vrot.lane.b32.xlu0 %v3809, 80
    %v3933 = vpop.permute.xlu0 %3932
    %v3934 = vsel %vm67, %v3927, 0
    %v3936 = vsel %vm67, %v3929, 0
    %v3938 = vsel %vm67, %v3931, 0
    %v3940 = vsel %vm67, %v3933, 0
    %3942 = vmatprep.subr.mxu0 0.0
    %3943 = vmatpush1.msra.mxu0 0.0
    %3944 = vmatprep.subr.mxu0 0.0
    %3945 = vmatpush1.msra.mxu0 0.0
    %3946 = vmatprep.subr.mxu0 0.0
    %3947 = vmatpush1.msra.mxu0 0.0
    %3948 = vmatprep.subr.mxu0 0.0
    %3949 = vmatpush1.msra.mxu0 0.0
    %3950 = vmatprep.subr.mxu0 0.0
    %3951 = vmatpush1.msra.mxu0 0.0
    %3952 = vmatprep.subr.mxu0 0.0
    %3953 = vmatpush1.msra.mxu0 0.0
    %3954 = vmatprep.subr.mxu0 0.0
    %3955 = vmatpush1.msra.mxu0 0.0
    %3956 = vmatprep.subr.mxu0 0.0
    %3957 = vmatpush1.msra.mxu0 0.0
    %3958 = vmatprep.subr.mxu0 0.0
    %3959 = vmatpush1.msra.mxu0 0.0
    %3960 = vmatprep.subr.mxu0 0.0
    %3961 = vmatpush1.msra.mxu0 0.0
    %3962 = vmatprep.subr.mxu0 0.0
    %3963 = vmatpush1.msra.mxu0 %v59
    %3964 = vmatprep.subr.mxu0 0.0
    %3965 = vmatpush1.msra.mxu0 %v58
    %3966 = vmatprep.subr.mxu0 0.0
    %3967 = vmatpush1.msra.mxu0 %v57
    %3968 = vmatprep.subr.mxu0 0.0
    %3969 = vmatpush1.msra.mxu0 %v56
    %3970 = vmatprep.subr.mxu0 0.0
    %3971 = vmatpush1.msra.mxu0 %v55
    %3972 = vmatprep.subr.mxu0 0.0
    %3973 = vmatpush1.msra.mxu0 %v54
    %3974 = vmatprep.subr.mxu0 0.0
    %3975 = vmatpush2.msra.mxu0 0.0
    %3976 = vmatprep.subr.mxu0 0.0
    %3977 = vmatpush2.msra.mxu0 0.0
    %3978 = vmatprep.subr.mxu0 0.0
    %3979 = vmatpush2.msra.mxu0 0.0
    %3980 = vmatprep.subr.mxu0 0.0
    %3981 = vmatpush2.msra.mxu0 0.0
    %3982 = vmatprep.subr.mxu0 0.0
    %3983 = vmatpush2.msra.mxu0 0.0
    %3984 = vmatprep.subr.mxu0 0.0
    %3985 = vmatpush2.msra.mxu0 0.0
    %3986 = vmatprep.subr.mxu0 0.0
    %3987 = vmatpush2.msra.mxu0 0.0
    %3988 = vmatprep.subr.mxu0 0.0
    %3989 = vmatpush2.msra.mxu0 0.0
    %3990 = vmatprep.subr.mxu0 0.0
    %3991 = vmatpush2.msra.mxu0 0.0
    %3992 = vmatprep.subr.mxu0 0.0
    %3993 = vmatpush2.msra.mxu0 0.0
    %3994 = vmatprep.subr.mxu0 0.0
    %3995 = vmatpush2.msra.mxu0 0.0
    %3996 = vmatprep.subr.mxu0 0.0
    %3997 = vmatpush2.msra.mxu0 0.0
    %3998 = vmatprep.subr.mxu0 0.0
    %3999 = vmatpush2.msra.mxu0 0.0
    %4000 = vmatprep.subr.mxu0 0.0
    %4001 = vmatpush2.msra.mxu0 0.0
    %4002 = vmatprep.subr.mxu0 0.0
    %4003 = vmatpush2.msra.mxu0 0.0
    %4004 = vmatprep.subr.mxu0 0.0
    %4005 = vmatpush2.msra.mxu0 0.0
    %4006 = vmatprep.mubr.f32.mxu0 0.0
    %4007 = vmatmul.mubr.f32.gmra.mxu0 %v3934
    %v4008 = vpop.f32.mrf.mxu0
    %v4009 = vadd.f32 0.0, %v4008
    %v4010 = vpop.f32.mrf.mxu0
    %4011 = vmatprep.mubr.f32.mxu0 0.0
    %4012 = vmatmul.mubr.f32.gmra.mxu0 %v3936
    %v4013 = vpop.f32.mrf.mxu0
    %v4014 = vadd.f32 0.0, %v4013
    %v4015 = vpop.f32.mrf.mxu0
    %4016 = vmatprep.mubr.f32.mxu0 0.0
    %4017 = vmatmul.mubr.f32.gmra.mxu0 %v3938
    %v4018 = vpop.f32.mrf.mxu0
    %v4019 = vadd.f32 0.0, %v4018
    %v4020 = vpop.f32.mrf.mxu0
    %4021 = vmatprep.mubr.f32.mxu0 0.0
    %4022 = vmatmul.mubr.f32.gmra.mxu0 %v3940
    %v4023 = vpop.f32.mrf.mxu0
    %v4024 = vadd.f32 0.0, %v4023
    %v4025 = vpop.f32.mrf.mxu0
    %4026 = vdwg.mxu0
    %v4027 = vmul.f32 %v4009, %v50
    %v4028 = vmul.f32 %v4014, %v51
    %v4029 = vmul.f32 %v4019, %v52
    %v4030 = vmul.f32 %v4024, %v53
    %4035 = vrot.lane.b32.xlu0 %v4027, 48
    %v4036 = vpop.permute.xlu0 %4035
    %4037 = vrot.lane.b32.xlu0 %v4028, 48
    %v4038 = vpop.permute.xlu0 %4037
    %4039 = vrot.lane.b32.xlu0 %v4029, 48
    %v4040 = vpop.permute.xlu0 %4039
    %4041 = vrot.lane.b32.xlu0 %v4030, 48
    %v4042 = vpop.permute.xlu0 %4041
    %v4047 = vadd.f32 %v3922, %v4036
    %v4048 = vadd.f32 %v3923, %v4038
    %v4049 = vadd.f32 %v3924, %v4040
    %v4050 = vadd.f32 %v3925, %v4042
    %4053 = vrot.lane.b32.xlu0 %v4047, 80
    %v4054 = vpop.permute.xlu0 %4053
    %4055 = vrot.lane.b32.xlu0 %v4048, 80
    %v4056 = vpop.permute.xlu0 %4055
    %v4058 = vsel %vm494, %v3918, 0
    %v4061 = vsel %vm494, %v3919, 0
    %v4063 = vsel %vm494, %v4054, 0
    %v4065 = vsel %vm494, %v4056, 0
    %4067 = vmatprep.subr.mxu0 0.0
    %4068 = vmatpush1.xpose.msra.mxu0 0.0
    %4069 = vmatprep.subr.mxu0 0.0
    %4070 = vmatpush1.xpose.msra.mxu0 0.0
    %4071 = vmatprep.subr.mxu0 0.0
    %4072 = vmatpush1.xpose.msra.mxu0 0.0
    %4073 = vmatprep.subr.mxu0 0.0
    %4074 = vmatpush1.xpose.msra.mxu0 0.0
    %4075 = vmatprep.subr.mxu0 0.0
    %4076 = vmatpush1.xpose.msra.mxu0 0.0
    %4077 = vmatprep.subr.mxu0 0.0
    %4078 = vmatpush1.xpose.msra.mxu0 0.0
    %4079 = vmatprep.subr.mxu0 0.0
    %4080 = vmatpush1.xpose.msra.mxu0 0.0
    %4081 = vmatprep.subr.mxu0 0.0
    %4082 = vmatpush1.xpose.msra.mxu0 0.0
    %4083 = vmatprep.subr.mxu0 0.0
    %4084 = vmatpush1.xpose.msra.mxu0 0.0
    %4085 = vmatprep.subr.mxu0 0.0
    %4086 = vmatpush1.xpose.msra.mxu0 0.0
    %4087 = vmatprep.subr.mxu0 0.0
    %4088 = vmatpush1.xpose.msra.mxu0 0.0
    %4089 = vmatprep.subr.mxu0 0.0
    %4090 = vmatpush1.xpose.msra.mxu0 0.0
    %4091 = vmatprep.subr.mxu0 0.0
    %4092 = vmatpush1.xpose.msra.mxu0 0.0
    %4093 = vmatprep.subr.mxu0 0.0
    %4094 = vmatpush1.xpose.msra.mxu0 0.0
    %4095 = vmatprep.subr.mxu0 0.0
    %4096 = vmatpush1.xpose.msra.mxu0 %v4065
    %4097 = vmatprep.subr.mxu0 0.0
    %4098 = vmatpush1.xpose.msra.mxu0 %v4063
    %4099 = vmatprep.subr.mxu0 0.0
    %4100 = vmatpush2.xpose.msra.mxu0 0.0
    %4101 = vmatprep.subr.mxu0 0.0
    %4102 = vmatpush2.xpose.msra.mxu0 0.0
    %4103 = vmatprep.subr.mxu0 0.0
    %4104 = vmatpush2.xpose.msra.mxu0 0.0
    %4105 = vmatprep.subr.mxu0 0.0
    %4106 = vmatpush2.xpose.msra.mxu0 0.0
    %4107 = vmatprep.subr.mxu0 0.0
    %4108 = vmatpush2.xpose.msra.mxu0 0.0
    %4109 = vmatprep.subr.mxu0 0.0
    %4110 = vmatpush2.xpose.msra.mxu0 0.0
    %4111 = vmatprep.subr.mxu0 0.0
    %4112 = vmatpush2.xpose.msra.mxu0 0.0
    %4113 = vmatprep.subr.mxu0 0.0
    %4114 = vmatpush2.xpose.msra.mxu0 0.0
    %4115 = vmatprep.subr.mxu0 0.0
    %4116 = vmatpush2.xpose.msra.mxu0 0.0
    %4117 = vmatprep.subr.mxu0 0.0
    %4118 = vmatpush2.xpose.msra.mxu0 0.0
    %4119 = vmatprep.subr.mxu0 0.0
    %4120 = vmatpush2.xpose.msra.mxu0 0.0
    %4121 = vmatprep.subr.mxu0 0.0
    %4122 = vmatpush2.xpose.msra.mxu0 0.0
    %4123 = vmatprep.subr.mxu0 0.0
    %4124 = vmatpush2.xpose.msra.mxu0 0.0
    %4125 = vmatprep.subr.mxu0 0.0
    %4126 = vmatpush2.xpose.msra.mxu0 0.0
    %4127 = vmatprep.subr.mxu0 0.0
    %4128 = vmatpush2.xpose.msra.mxu0 0.0
    %4129 = vmatprep.subr.mxu0 0.0
    %4130 = vmatpush2.xpose.msra.mxu0 0.0
    %4131 = vmatprep.mubr.f32.mxu0 0.0
    %4132 = vmatmul.mubr.f32.gmra.mxu0 %v4058
    %v4133 = vpop.f32.mrf.mxu0
    %v4134 = vadd.f32 0.0, %v4133
    %v4135 = vpop.f32.mrf.mxu0
    %4136 = vmatprep.mubr.f32.mxu0 0.0
    %4137 = vmatmul.mubr.f32.gmra.mxu0 %v4061
    %v4138 = vpop.f32.mrf.mxu0
    %v4139 = vadd.f32 0.0, %v4138
    %v4140 = vpop.f32.mrf.mxu0
    %4141 = vdwg.mxu0
    %v4142 = vmul.f32 %v4134, 0.35355338
    %v4143 = vmul.f32 %v4139, 0.35355338
    %v4144 = vsel %vm65, -inf, %v4142
    %v4145 = vsel %vm66, -inf, %v4143
    %v4146 = vsel %vm584, %v4144, -inf
    %4147 = vmax.xlane.f32.xlu0 %v4146
    %v4148 = vpop.xlane.xlu0 %4147
    %v4149 = vsel %vm584, %v4145, -inf
    %4150 = vmax.xlane.f32.xlu0 %v4149
    %v4151 = vpop.xlane.xlu0 %4150
    %v4152 = vsub.f32 %v4144, %v4148
    %v4153 = vsub.f32 %v4145, %v4151
    %v4154 = vmul.f32 %v4152, 1.442695
    %v4155 = vpow.pop %v4154
    %v4156 = vmul.f32 %v4153, 1.442695
    %v4157 = vpow.pop %v4156
    %v4158 = vsel %vm584, %v4155, 0.0
    %4159 = vadd.xlane.f32.xlu0 %v4158
    %v4160 = vpop.xlane.xlu0 %4159
    %v4161 = vsel %vm584, %v4157, 0.0
    %4162 = vadd.xlane.f32.xlu0 %v4161
    %v4163 = vpop.xlane.xlu0 %4162
    %v4164 = vrcp.pop %v4160
    %v4165 = vrcp.pop %v4163
    %v4166 = vmul.f32 %v4155, %v4164
    %v4167 = vmul.f32 %v4157, %v4165
    %4168 = vrot.lane.b32.xlu0 %v3791, 32
    %v4169 = vpop.permute.xlu0 %4168
    %4170 = vrot.lane.b32.xlu0 %v3797, 32
    %v4171 = vpop.permute.xlu0 %4170
    %v4175 = vsel %vm584, %v4166, 0
    %v4178 = vsel %vm584, %v4167, 0
    %4180 = vmatprep.subr.mxu0 0.0
    %4181 = vmatpush1.msra.mxu0 0.0
    %4182 = vmatprep.subr.mxu0 0.0
    %4183 = vmatpush1.msra.mxu0 0.0
    %4184 = vmatprep.subr.mxu0 0.0
    %4185 = vmatpush1.msra.mxu0 0.0
    %4186 = vmatprep.subr.mxu0 0.0
    %4187 = vmatpush1.msra.mxu0 0.0
    %4188 = vmatprep.subr.mxu0 0.0
    %4189 = vmatpush1.msra.mxu0 0.0
    %4190 = vmatprep.subr.mxu0 0.0
    %4191 = vmatpush1.msra.mxu0 0.0
    %4192 = vmatprep.subr.mxu0 0.0
    %4193 = vmatpush1.msra.mxu0 0.0
    %4194 = vmatprep.subr.mxu0 0.0
    %4195 = vmatpush1.msra.mxu0 0.0
    %4196 = vmatprep.subr.mxu0 0.0
    %4197 = vmatpush1.msra.mxu0 0.0
    %4198 = vmatprep.subr.mxu0 0.0
    %4199 = vmatpush1.msra.mxu0 0.0
    %4200 = vmatprep.subr.mxu0 0.0
    %4201 = vmatpush1.msra.mxu0 0.0
    %4202 = vmatprep.subr.mxu0 0.0
    %4203 = vmatpush1.msra.mxu0 0.0
    %4204 = vmatprep.subr.mxu0 0.0
    %4205 = vmatpush1.msra.mxu0 0.0
    %4206 = vmatprep.subr.mxu0 0.0
    %4207 = vmatpush1.msra.mxu0 0.0
    %4208 = vmatprep.subr.mxu0 0.0
    %4209 = vmatpush1.msra.mxu0 %v4171
    %4210 = vmatprep.subr.mxu0 0.0
    %4211 = vmatpush1.msra.mxu0 %v4169
    %4212 = vmatprep.subr.mxu0 0.0
    %4213 = vmatpush2.msra.mxu0 0.0
    %4214 = vmatprep.subr.mxu0 0.0
    %4215 = vmatpush2.msra.mxu0 0.0
    %4216 = vmatprep.subr.mxu0 0.0
    %4217 = vmatpush2.msra.mxu0 0.0
    %4218 = vmatprep.subr.mxu0 0.0
    %4219 = vmatpush2.msra.mxu0 0.0
    %4220 = vmatprep.subr.mxu0 0.0
    %4221 = vmatpush2.msra.mxu0 0.0
    %4222 = vmatprep.subr.mxu0 0.0
    %4223 = vmatpush2.msra.mxu0 0.0
    %4224 = vmatprep.subr.mxu0 0.0
    %4225 = vmatpush2.msra.mxu0 0.0
    %4226 = vmatprep.subr.mxu0 0.0
    %4227 = vmatpush2.msra.mxu0 0.0
    %4228 = vmatprep.subr.mxu0 0.0
    %4229 = vmatpush2.msra.mxu0 0.0
    %4230 = vmatprep.subr.mxu0 0.0
    %4231 = vmatpush2.msra.mxu0 0.0
    %4232 = vmatprep.subr.mxu0 0.0
    %4233 = vmatpush2.msra.mxu0 0.0
    %4234 = vmatprep.subr.mxu0 0.0
    %4235 = vmatpush2.msra.mxu0 0.0
    %4236 = vmatprep.subr.mxu0 0.0
    %4237 = vmatpush2.msra.mxu0 0.0
    %4238 = vmatprep.subr.mxu0 0.0
    %4239 = vmatpush2.msra.mxu0 0.0
    %4240 = vmatprep.subr.mxu0 0.0
    %4241 = vmatpush2.msra.mxu0 0.0
    %4242 = vmatprep.subr.mxu0 0.0
    %4243 = vmatpush2.msra.mxu0 0.0
    %4244 = vmatprep.mubr.f32.mxu0 0.0
    %4245 = vmatmul.mubr.f32.gmra.mxu0 %v4175
    %v4246 = vpop.f32.mrf.mxu0
    %v4247 = vadd.f32 0.0, %v4246
    %v4248 = vpop.f32.mrf.mxu0
    %4249 = vmatprep.mubr.f32.mxu0 0.0
    %4250 = vmatmul.mubr.f32.gmra.mxu0 %v4178
    %v4251 = vpop.f32.mrf.mxu0
    %v4252 = vadd.f32 0.0, %v4251
    %v4253 = vpop.f32.mrf.mxu0
    %4254 = vdwg.mxu0
    %4255 = vrot.lane.b32.xlu0 %v3918, 120
    %v4256 = vpop.permute.xlu0 %4255
    %4257 = vrot.lane.b32.xlu0 %v3919, 120
    %v4258 = vpop.permute.xlu0 %4257
    %4259 = vrot.lane.b32.xlu0 %v4047, 72
    %v4260 = vpop.permute.xlu0 %4259
    %4261 = vrot.lane.b32.xlu0 %v4048, 72
    %v4262 = vpop.permute.xlu0 %4261
    %v4263 = vsel %vm494, %v4256, 0
    %v4265 = vsel %vm494, %v4258, 0
    %v4267 = vsel %vm494, %v4260, 0
    %v4269 = vsel %vm494, %v4262, 0
    %4271 = vmatprep.subr.mxu0 0.0
    %4272 = vmatpush1.xpose.msra.mxu0 0.0
    %4273 = vmatprep.subr.mxu0 0.0
    %4274 = vmatpush1.xpose.msra.mxu0 0.0
    %4275 = vmatprep.subr.mxu0 0.0
    %4276 = vmatpush1.xpose.msra.mxu0 0.0
    %4277 = vmatprep.subr.mxu0 0.0
    %4278 = vmatpush1.xpose.msra.mxu0 0.0
    %4279 = vmatprep.subr.mxu0 0.0
    %4280 = vmatpush1.xpose.msra.mxu0 0.0
    %4281 = vmatprep.subr.mxu0 0.0
    %4282 = vmatpush1.xpose.msra.mxu0 0.0
    %4283 = vmatprep.subr.mxu0 0.0
    %4284 = vmatpush1.xpose.msra.mxu0 0.0
    %4285 = vmatprep.subr.mxu0 0.0
    %4286 = vmatpush1.xpose.msra.mxu0 0.0
    %4287 = vmatprep.subr.mxu0 0.0
    %4288 = vmatpush1.xpose.msra.mxu0 0.0
    %4289 = vmatprep.subr.mxu0 0.0
    %4290 = vmatpush1.xpose.msra.mxu0 0.0
    %4291 = vmatprep.subr.mxu0 0.0
    %4292 = vmatpush1.xpose.msra.mxu0 0.0
    %4293 = vmatprep.subr.mxu0 0.0
    %4294 = vmatpush1.xpose.msra.mxu0 0.0
    %4295 = vmatprep.subr.mxu0 0.0
    %4296 = vmatpush1.xpose.msra.mxu0 0.0
    %4297 = vmatprep.subr.mxu0 0.0
    %4298 = vmatpush1.xpose.msra.mxu0 0.0
    %4299 = vmatprep.subr.mxu0 0.0
    %4300 = vmatpush1.xpose.msra.mxu0 %v4269
    %4301 = vmatprep.subr.mxu0 0.0
    %4302 = vmatpush1.xpose.msra.mxu0 %v4267
    %4303 = vmatprep.subr.mxu0 0.0
    %4304 = vmatpush2.xpose.msra.mxu0 0.0
    %4305 = vmatprep.subr.mxu0 0.0
    %4306 = vmatpush2.xpose.msra.mxu0 0.0
    %4307 = vmatprep.subr.mxu0 0.0
    %4308 = vmatpush2.xpose.msra.mxu0 0.0
    %4309 = vmatprep.subr.mxu0 0.0
    %4310 = vmatpush2.xpose.msra.mxu0 0.0
    %4311 = vmatprep.subr.mxu0 0.0
    %4312 = vmatpush2.xpose.msra.mxu0 0.0
    %4313 = vmatprep.subr.mxu0 0.0
    %4314 = vmatpush2.xpose.msra.mxu0 0.0
    %4315 = vmatprep.subr.mxu0 0.0
    %4316 = vmatpush2.xpose.msra.mxu0 0.0
    %4317 = vmatprep.subr.mxu0 0.0
    %4318 = vmatpush2.xpose.msra.mxu0 0.0
    %4319 = vmatprep.subr.mxu0 0.0
    %4320 = vmatpush2.xpose.msra.mxu0 0.0
    %4321 = vmatprep.subr.mxu0 0.0
    %4322 = vmatpush2.xpose.msra.mxu0 0.0
    %4323 = vmatprep.subr.mxu0 0.0
    %4324 = vmatpush2.xpose.msra.mxu0 0.0
    %4325 = vmatprep.subr.mxu0 0.0
    %4326 = vmatpush2.xpose.msra.mxu0 0.0
    %4327 = vmatprep.subr.mxu0 0.0
    %4328 = vmatpush2.xpose.msra.mxu0 0.0
    %4329 = vmatprep.subr.mxu0 0.0
    %4330 = vmatpush2.xpose.msra.mxu0 0.0
    %4331 = vmatprep.subr.mxu0 0.0
    %4332 = vmatpush2.xpose.msra.mxu0 0.0
    %4333 = vmatprep.subr.mxu0 0.0
    %4334 = vmatpush2.xpose.msra.mxu0 0.0
    %4335 = vmatprep.mubr.f32.mxu0 0.0
    %4336 = vmatmul.mubr.f32.gmra.mxu0 %v4263
    %v4337 = vpop.f32.mrf.mxu0
    %v4338 = vadd.f32 0.0, %v4337
    %v4339 = vpop.f32.mrf.mxu0
    %4340 = vmatprep.mubr.f32.mxu0 0.0
    %4341 = vmatmul.mubr.f32.gmra.mxu0 %v4265
    %v4342 = vpop.f32.mrf.mxu0
    %v4343 = vadd.f32 0.0, %v4342
    %v4344 = vpop.f32.mrf.mxu0
    %4345 = vdwg.mxu0
    %v4346 = vmul.f32 %v4338, 0.35355338
    %v4347 = vmul.f32 %v4343, 0.35355338
    %v4348 = vsel %vm65, -inf, %v4346
    %v4349 = vsel %vm66, -inf, %v4347
    %v4350 = vsel %vm584, %v4348, -inf
    %4351 = vmax.xlane.f32.xlu0 %v4350
    %v4352 = vpop.xlane.xlu0 %4351
    %v4353 = vsel %vm584, %v4349, -inf
    %4354 = vmax.xlane.f32.xlu0 %v4353
    %v4355 = vpop.xlane.xlu0 %4354
    %v4356 = vsub.f32 %v4348, %v4352
    %v4357 = vsub.f32 %v4349, %v4355
    %v4358 = vmul.f32 %v4356, 1.442695
    %v4359 = vpow.pop %v4358
    %v4360 = vmul.f32 %v4357, 1.442695
    %v4361 = vpow.pop %v4360
    %v4362 = vsel %vm584, %v4359, 0.0
    %4363 = vadd.xlane.f32.xlu0 %v4362
    %v4364 = vpop.xlane.xlu0 %4363
    %v4365 = vsel %vm584, %v4361, 0.0
    %4366 = vadd.xlane.f32.xlu0 %v4365
    %v4367 = vpop.xlane.xlu0 %4366
    %v4368 = vrcp.pop %v4364
    %v4369 = vrcp.pop %v4367
    %v4370 = vmul.f32 %v4359, %v4368
    %v4371 = vmul.f32 %v4361, %v4369
    %4372 = vrot.lane.b32.xlu0 %v3791, 24
    %v4373 = vpop.permute.xlu0 %4372
    %4374 = vrot.lane.b32.xlu0 %v3797, 24
    %v4375 = vpop.permute.xlu0 %4374
    %v4379 = vsel %vm584, %v4370, 0
    %v4382 = vsel %vm584, %v4371, 0
    %4384 = vmatprep.subr.mxu0 0.0
    %4385 = vmatpush1.msra.mxu0 0.0
    %4386 = vmatprep.subr.mxu0 0.0
    %4387 = vmatpush1.msra.mxu0 0.0
    %4388 = vmatprep.subr.mxu0 0.0
    %4389 = vmatpush1.msra.mxu0 0.0
    %4390 = vmatprep.subr.mxu0 0.0
    %4391 = vmatpush1.msra.mxu0 0.0
    %4392 = vmatprep.subr.mxu0 0.0
    %4393 = vmatpush1.msra.mxu0 0.0
    %4394 = vmatprep.subr.mxu0 0.0
    %4395 = vmatpush1.msra.mxu0 0.0
    %4396 = vmatprep.subr.mxu0 0.0
    %4397 = vmatpush1.msra.mxu0 0.0
    %4398 = vmatprep.subr.mxu0 0.0
    %4399 = vmatpush1.msra.mxu0 0.0
    %4400 = vmatprep.subr.mxu0 0.0
    %4401 = vmatpush1.msra.mxu0 0.0
    %4402 = vmatprep.subr.mxu0 0.0
    %4403 = vmatpush1.msra.mxu0 0.0
    %4404 = vmatprep.subr.mxu0 0.0
    %4405 = vmatpush1.msra.mxu0 0.0
    %4406 = vmatprep.subr.mxu0 0.0
    %4407 = vmatpush1.msra.mxu0 0.0
    %4408 = vmatprep.subr.mxu0 0.0
    %4409 = vmatpush1.msra.mxu0 0.0
    %4410 = vmatprep.subr.mxu0 0.0
    %4411 = vmatpush1.msra.mxu0 0.0
    %4412 = vmatprep.subr.mxu0 0.0
    %4413 = vmatpush1.msra.mxu0 %v4375
    %4414 = vmatprep.subr.mxu0 0.0
    %4415 = vmatpush1.msra.mxu0 %v4373
    %4416 = vmatprep.subr.mxu0 0.0
    %4417 = vmatpush2.msra.mxu0 0.0
    %4418 = vmatprep.subr.mxu0 0.0
    %4419 = vmatpush2.msra.mxu0 0.0
    %4420 = vmatprep.subr.mxu0 0.0
    %4421 = vmatpush2.msra.mxu0 0.0
    %4422 = vmatprep.subr.mxu0 0.0
    %4423 = vmatpush2.msra.mxu0 0.0
    %4424 = vmatprep.subr.mxu0 0.0
    %4425 = vmatpush2.msra.mxu0 0.0
    %4426 = vmatprep.subr.mxu0 0.0
    %4427 = vmatpush2.msra.mxu0 0.0
    %4428 = vmatprep.subr.mxu0 0.0
    %4429 = vmatpush2.msra.mxu0 0.0
    %4430 = vmatprep.subr.mxu0 0.0
    %4431 = vmatpush2.msra.mxu0 0.0
    %4432 = vmatprep.subr.mxu0 0.0
    %4433 = vmatpush2.msra.mxu0 0.0
    %4434 = vmatprep.subr.mxu0 0.0
    %4435 = vmatpush2.msra.mxu0 0.0
    %4436 = vmatprep.subr.mxu0 0.0
    %4437 = vmatpush2.msra.mxu0 0.0
    %4438 = vmatprep.subr.mxu0 0.0
    %4439 = vmatpush2.msra.mxu0 0.0
    %4440 = vmatprep.subr.mxu0 0.0
    %4441 = vmatpush2.msra.mxu0 0.0
    %4442 = vmatprep.subr.mxu0 0.0
    %4443 = vmatpush2.msra.mxu0 0.0
    %4444 = vmatprep.subr.mxu0 0.0
    %4445 = vmatpush2.msra.mxu0 0.0
    %4446 = vmatprep.subr.mxu0 0.0
    %4447 = vmatpush2.msra.mxu0 0.0
    %4448 = vmatprep.mubr.f32.mxu0 0.0
    %4449 = vmatmul.mubr.f32.gmra.mxu0 %v4379
    %v4450 = vpop.f32.mrf.mxu0
    %v4451 = vadd.f32 0.0, %v4450
    %v4452 = vpop.f32.mrf.mxu0
    %4453 = vmatprep.mubr.f32.mxu0 0.0
    %4454 = vmatmul.mubr.f32.gmra.mxu0 %v4382
    %v4455 = vpop.f32.mrf.mxu0
    %v4456 = vadd.f32 0.0, %v4455
    %v4457 = vpop.f32.mrf.mxu0
    %4458 = vdwg.mxu0
    %4459 = vrot.lane.b32.xlu0 %v3918, 112
    %v4460 = vpop.permute.xlu0 %4459
    %4461 = vrot.lane.b32.xlu0 %v3919, 112
    %v4462 = vpop.permute.xlu0 %4461
    %4463 = vrot.lane.b32.xlu0 %v4047, 64
    %v4464 = vpop.permute.xlu0 %4463
    %4465 = vrot.lane.b32.xlu0 %v4048, 64
    %v4466 = vpop.permute.xlu0 %4465
    %v4467 = vsel %vm494, %v4460, 0
    %v4469 = vsel %vm494, %v4462, 0
    %v4471 = vsel %vm494, %v4464, 0
    %v4473 = vsel %vm494, %v4466, 0
    %4475 = vmatprep.subr.mxu0 0.0
    %4476 = vmatpush1.xpose.msra.mxu0 0.0
    %4477 = vmatprep.subr.mxu0 0.0
    %4478 = vmatpush1.xpose.msra.mxu0 0.0
    %4479 = vmatprep.subr.mxu0 0.0
    %4480 = vmatpush1.xpose.msra.mxu0 0.0
    %4481 = vmatprep.subr.mxu0 0.0
    %4482 = vmatpush1.xpose.msra.mxu0 0.0
    %4483 = vmatprep.subr.mxu0 0.0
    %4484 = vmatpush1.xpose.msra.mxu0 0.0
    %4485 = vmatprep.subr.mxu0 0.0
    %4486 = vmatpush1.xpose.msra.mxu0 0.0
    %4487 = vmatprep.subr.mxu0 0.0
    %4488 = vmatpush1.xpose.msra.mxu0 0.0
    %4489 = vmatprep.subr.mxu0 0.0
    %4490 = vmatpush1.xpose.msra.mxu0 0.0
    %4491 = vmatprep.subr.mxu0 0.0
    %4492 = vmatpush1.xpose.msra.mxu0 0.0
    %4493 = vmatprep.subr.mxu0 0.0
    %4494 = vmatpush1.xpose.msra.mxu0 0.0
    %4495 = vmatprep.subr.mxu0 0.0
    %4496 = vmatpush1.xpose.msra.mxu0 0.0
    %4497 = vmatprep.subr.mxu0 0.0
    %4498 = vmatpush1.xpose.msra.mxu0 0.0
    %4499 = vmatprep.subr.mxu0 0.0
    %4500 = vmatpush1.xpose.msra.mxu0 0.0
    %4501 = vmatprep.subr.mxu0 0.0
    %4502 = vmatpush1.xpose.msra.mxu0 0.0
    %4503 = vmatprep.subr.mxu0 0.0
    %4504 = vmatpush1.xpose.msra.mxu0 %v4473
    %4505 = vmatprep.subr.mxu0 0.0
    %4506 = vmatpush1.xpose.msra.mxu0 %v4471
    %4507 = vmatprep.subr.mxu0 0.0
    %4508 = vmatpush2.xpose.msra.mxu0 0.0
    %4509 = vmatprep.subr.mxu0 0.0
    %4510 = vmatpush2.xpose.msra.mxu0 0.0
    %4511 = vmatprep.subr.mxu0 0.0
    %4512 = vmatpush2.xpose.msra.mxu0 0.0
    %4513 = vmatprep.subr.mxu0 0.0
    %4514 = vmatpush2.xpose.msra.mxu0 0.0
    %4515 = vmatprep.subr.mxu0 0.0
    %4516 = vmatpush2.xpose.msra.mxu0 0.0
    %4517 = vmatprep.subr.mxu0 0.0
    %4518 = vmatpush2.xpose.msra.mxu0 0.0
    %4519 = vmatprep.subr.mxu0 0.0
    %4520 = vmatpush2.xpose.msra.mxu0 0.0
    %4521 = vmatprep.subr.mxu0 0.0
    %4522 = vmatpush2.xpose.msra.mxu0 0.0
    %4523 = vmatprep.subr.mxu0 0.0
    %4524 = vmatpush2.xpose.msra.mxu0 0.0
    %4525 = vmatprep.subr.mxu0 0.0
    %4526 = vmatpush2.xpose.msra.mxu0 0.0
    %4527 = vmatprep.subr.mxu0 0.0
    %4528 = vmatpush2.xpose.msra.mxu0 0.0
    %4529 = vmatprep.subr.mxu0 0.0
    %4530 = vmatpush2.xpose.msra.mxu0 0.0
    %4531 = vmatprep.subr.mxu0 0.0
    %4532 = vmatpush2.xpose.msra.mxu0 0.0
    %4533 = vmatprep.subr.mxu0 0.0
    %4534 = vmatpush2.xpose.msra.mxu0 0.0
    %4535 = vmatprep.subr.mxu0 0.0
    %4536 = vmatpush2.xpose.msra.mxu0 0.0
    %4537 = vmatprep.subr.mxu0 0.0
    %4538 = vmatpush2.xpose.msra.mxu0 0.0
    %4539 = vmatprep.mubr.f32.mxu0 0.0
    %4540 = vmatmul.mubr.f32.gmra.mxu0 %v4467
    %v4541 = vpop.f32.mrf.mxu0
    %v4542 = vadd.f32 0.0, %v4541
    %v4543 = vpop.f32.mrf.mxu0
    %4544 = vmatprep.mubr.f32.mxu0 0.0
    %4545 = vmatmul.mubr.f32.gmra.mxu0 %v4469
    %v4546 = vpop.f32.mrf.mxu0
    %v4547 = vadd.f32 0.0, %v4546
    %v4548 = vpop.f32.mrf.mxu0
    %4549 = vdwg.mxu0
    %v4550 = vmul.f32 %v4542, 0.35355338
    %v4551 = vmul.f32 %v4547, 0.35355338
    %v4552 = vsel %vm65, -inf, %v4550
    %v4553 = vsel %vm66, -inf, %v4551
    %v4554 = vsel %vm584, %v4552, -inf
    %4555 = vmax.xlane.f32.xlu0 %v4554
    %v4556 = vpop.xlane.xlu0 %4555
    %v4557 = vsel %vm584, %v4553, -inf
    %4558 = vmax.xlane.f32.xlu0 %v4557
    %v4559 = vpop.xlane.xlu0 %4558
    %v4560 = vsub.f32 %v4552, %v4556
    %v4561 = vsub.f32 %v4553, %v4559
    %v4562 = vmul.f32 %v4560, 1.442695
    %v4563 = vpow.pop %v4562
    %v4564 = vmul.f32 %v4561, 1.442695
    %v4565 = vpow.pop %v4564
    %v4566 = vsel %vm584, %v4563, 0.0
    %4567 = vadd.xlane.f32.xlu0 %v4566
    %v4568 = vpop.xlane.xlu0 %4567
    %v4569 = vsel %vm584, %v4565, 0.0
    %4570 = vadd.xlane.f32.xlu0 %v4569
    %v4571 = vpop.xlane.xlu0 %4570
    %v4572 = vrcp.pop %v4568
    %v4573 = vrcp.pop %v4571
    %v4574 = vmul.f32 %v4563, %v4572
    %v4575 = vmul.f32 %v4565, %v4573
    %4576 = vrot.lane.b32.xlu0 %v3791, 16
    %v4577 = vpop.permute.xlu0 %4576
    %4578 = vrot.lane.b32.xlu0 %v3797, 16
    %v4579 = vpop.permute.xlu0 %4578
    %v4583 = vsel %vm584, %v4574, 0
    %v4586 = vsel %vm584, %v4575, 0
    %4588 = vmatprep.subr.mxu0 0.0
    %4589 = vmatpush1.msra.mxu0 0.0
    %4590 = vmatprep.subr.mxu0 0.0
    %4591 = vmatpush1.msra.mxu0 0.0
    %4592 = vmatprep.subr.mxu0 0.0
    %4593 = vmatpush1.msra.mxu0 0.0
    %4594 = vmatprep.subr.mxu0 0.0
    %4595 = vmatpush1.msra.mxu0 0.0
    %4596 = vmatprep.subr.mxu0 0.0
    %4597 = vmatpush1.msra.mxu0 0.0
    %4598 = vmatprep.subr.mxu0 0.0
    %4599 = vmatpush1.msra.mxu0 0.0
    %4600 = vmatprep.subr.mxu0 0.0
    %4601 = vmatpush1.msra.mxu0 0.0
    %4602 = vmatprep.subr.mxu0 0.0
    %4603 = vmatpush1.msra.mxu0 0.0
    %4604 = vmatprep.subr.mxu0 0.0
    %4605 = vmatpush1.msra.mxu0 0.0
    %4606 = vmatprep.subr.mxu0 0.0
    %4607 = vmatpush1.msra.mxu0 0.0
    %4608 = vmatprep.subr.mxu0 0.0
    %4609 = vmatpush1.msra.mxu0 0.0
    %4610 = vmatprep.subr.mxu0 0.0
    %4611 = vmatpush1.msra.mxu0 0.0
    %4612 = vmatprep.subr.mxu0 0.0
    %4613 = vmatpush1.msra.mxu0 0.0
    %4614 = vmatprep.subr.mxu0 0.0
    %4615 = vmatpush1.msra.mxu0 0.0
    %4616 = vmatprep.subr.mxu0 0.0
    %4617 = vmatpush1.msra.mxu0 %v4579
    %4618 = vmatprep.subr.mxu0 0.0
    %4619 = vmatpush1.msra.mxu0 %v4577
    %4620 = vmatprep.subr.mxu0 0.0
    %4621 = vmatpush2.msra.mxu0 0.0
    %4622 = vmatprep.subr.mxu0 0.0
    %4623 = vmatpush2.msra.mxu0 0.0
    %4624 = vmatprep.subr.mxu0 0.0
    %4625 = vmatpush2.msra.mxu0 0.0
    %4626 = vmatprep.subr.mxu0 0.0
    %4627 = vmatpush2.msra.mxu0 0.0
    %4628 = vmatprep.subr.mxu0 0.0
    %4629 = vmatpush2.msra.mxu0 0.0
    %4630 = vmatprep.subr.mxu0 0.0
    %4631 = vmatpush2.msra.mxu0 0.0
    %4632 = vmatprep.subr.mxu0 0.0
    %4633 = vmatpush2.msra.mxu0 0.0
    %4634 = vmatprep.subr.mxu0 0.0
    %4635 = vmatpush2.msra.mxu0 0.0
    %4636 = vmatprep.subr.mxu0 0.0
    %4637 = vmatpush2.msra.mxu0 0.0
    %4638 = vmatprep.subr.mxu0 0.0
    %4639 = vmatpush2.msra.mxu0 0.0
    %4640 = vmatprep.subr.mxu0 0.0
    %4641 = vmatpush2.msra.mxu0 0.0
    %4642 = vmatprep.subr.mxu0 0.0
    %4643 = vmatpush2.msra.mxu0 0.0
    %4644 = vmatprep.subr.mxu0 0.0
    %4645 = vmatpush2.msra.mxu0 0.0
    %4646 = vmatprep.subr.mxu0 0.0
    %4647 = vmatpush2.msra.mxu0 0.0
    %4648 = vmatprep.subr.mxu0 0.0
    %4649 = vmatpush2.msra.mxu0 0.0
    %4650 = vmatprep.subr.mxu0 0.0
    %4651 = vmatpush2.msra.mxu0 0.0
    %4652 = vmatprep.mubr.f32.mxu0 0.0
    %4653 = vmatmul.mubr.f32.gmra.mxu0 %v4583
    %v4654 = vpop.f32.mrf.mxu0
    %v4655 = vadd.f32 0.0, %v4654
    %v4656 = vpop.f32.mrf.mxu0
    %4657 = vmatprep.mubr.f32.mxu0 0.0
    %4658 = vmatmul.mubr.f32.gmra.mxu0 %v4586
    %v4659 = vpop.f32.mrf.mxu0
    %v4660 = vadd.f32 0.0, %v4659
    %v4661 = vpop.f32.mrf.mxu0
    %4662 = vdwg.mxu0
    %4663 = vrot.lane.b32.xlu0 %v3918, 104
    %v4664 = vpop.permute.xlu0 %4663
    %4665 = vrot.lane.b32.xlu0 %v3919, 104
    %v4666 = vpop.permute.xlu0 %4665
    %4667 = vrot.lane.b32.xlu0 %v4047, 56
    %v4668 = vpop.permute.xlu0 %4667
    %4669 = vrot.lane.b32.xlu0 %v4048, 56
    %v4670 = vpop.permute.xlu0 %4669
    %v4671 = vsel %vm494, %v4664, 0
    %v4673 = vsel %vm494, %v4666, 0
    %v4675 = vsel %vm494, %v4668, 0
    %v4677 = vsel %vm494, %v4670, 0
    %4679 = vmatprep.subr.mxu0 0.0
    %4680 = vmatpush1.xpose.msra.mxu0 0.0
    %4681 = vmatprep.subr.mxu0 0.0
    %4682 = vmatpush1.xpose.msra.mxu0 0.0
    %4683 = vmatprep.subr.mxu0 0.0
    %4684 = vmatpush1.xpose.msra.mxu0 0.0
    %4685 = vmatprep.subr.mxu0 0.0
    %4686 = vmatpush1.xpose.msra.mxu0 0.0
    %4687 = vmatprep.subr.mxu0 0.0
    %4688 = vmatpush1.xpose.msra.mxu0 0.0
    %4689 = vmatprep.subr.mxu0 0.0
    %4690 = vmatpush1.xpose.msra.mxu0 0.0
    %4691 = vmatprep.subr.mxu0 0.0
    %4692 = vmatpush1.xpose.msra.mxu0 0.0
    %4693 = vmatprep.subr.mxu0 0.0
    %4694 = vmatpush1.xpose.msra.mxu0 0.0
    %4695 = vmatprep.subr.mxu0 0.0
    %4696 = vmatpush1.xpose.msra.mxu0 0.0
    %4697 = vmatprep.subr.mxu0 0.0
    %4698 = vmatpush1.xpose.msra.mxu0 0.0
    %4699 = vmatprep.subr.mxu0 0.0
    %4700 = vmatpush1.xpose.msra.mxu0 0.0
    %4701 = vmatprep.subr.mxu0 0.0
    %4702 = vmatpush1.xpose.msra.mxu0 0.0
    %4703 = vmatprep.subr.mxu0 0.0
    %4704 = vmatpush1.xpose.msra.mxu0 0.0
    %4705 = vmatprep.subr.mxu0 0.0
    %4706 = vmatpush1.xpose.msra.mxu0 0.0
    %4707 = vmatprep.subr.mxu0 0.0
    %4708 = vmatpush1.xpose.msra.mxu0 %v4677
    %4709 = vmatprep.subr.mxu0 0.0
    %4710 = vmatpush1.xpose.msra.mxu0 %v4675
    %4711 = vmatprep.subr.mxu0 0.0
    %4712 = vmatpush2.xpose.msra.mxu0 0.0
    %4713 = vmatprep.subr.mxu0 0.0
    %4714 = vmatpush2.xpose.msra.mxu0 0.0
    %4715 = vmatprep.subr.mxu0 0.0
    %4716 = vmatpush2.xpose.msra.mxu0 0.0
    %4717 = vmatprep.subr.mxu0 0.0
    %4718 = vmatpush2.xpose.msra.mxu0 0.0
    %4719 = vmatprep.subr.mxu0 0.0
    %4720 = vmatpush2.xpose.msra.mxu0 0.0
    %4721 = vmatprep.subr.mxu0 0.0
    %4722 = vmatpush2.xpose.msra.mxu0 0.0
    %4723 = vmatprep.subr.mxu0 0.0
    %4724 = vmatpush2.xpose.msra.mxu0 0.0
    %4725 = vmatprep.subr.mxu0 0.0
    %4726 = vmatpush2.xpose.msra.mxu0 0.0
    %4727 = vmatprep.subr.mxu0 0.0
    %4728 = vmatpush2.xpose.msra.mxu0 0.0
    %4729 = vmatprep.subr.mxu0 0.0
    %4730 = vmatpush2.xpose.msra.mxu0 0.0
    %4731 = vmatprep.subr.mxu0 0.0
    %4732 = vmatpush2.xpose.msra.mxu0 0.0
    %4733 = vmatprep.subr.mxu0 0.0
    %4734 = vmatpush2.xpose.msra.mxu0 0.0
    %4735 = vmatprep.subr.mxu0 0.0
    %4736 = vmatpush2.xpose.msra.mxu0 0.0
    %4737 = vmatprep.subr.mxu0 0.0
    %4738 = vmatpush2.xpose.msra.mxu0 0.0
    %4739 = vmatprep.subr.mxu0 0.0
    %4740 = vmatpush2.xpose.msra.mxu0 0.0
    %4741 = vmatprep.subr.mxu0 0.0
    %4742 = vmatpush2.xpose.msra.mxu0 0.0
    %4743 = vmatprep.mubr.f32.mxu0 0.0
    %4744 = vmatmul.mubr.f32.gmra.mxu0 %v4671
    %v4745 = vpop.f32.mrf.mxu0
    %v4746 = vadd.f32 0.0, %v4745
    %v4747 = vpop.f32.mrf.mxu0
    %4748 = vmatprep.mubr.f32.mxu0 0.0
    %4749 = vmatmul.mubr.f32.gmra.mxu0 %v4673
    %v4750 = vpop.f32.mrf.mxu0
    %v4751 = vadd.f32 0.0, %v4750
    %v4752 = vpop.f32.mrf.mxu0
    %4753 = vdwg.mxu0
    %v4754 = vmul.f32 %v4746, 0.35355338
    %v4755 = vmul.f32 %v4751, 0.35355338
    %v4756 = vsel %vm65, -inf, %v4754
    %v4757 = vsel %vm66, -inf, %v4755
    %v4758 = vsel %vm584, %v4756, -inf
    %4759 = vmax.xlane.f32.xlu0 %v4758
    %v4760 = vpop.xlane.xlu0 %4759
    %v4761 = vsel %vm584, %v4757, -inf
    %4762 = vmax.xlane.f32.xlu0 %v4761
    %v4763 = vpop.xlane.xlu0 %4762
    %v4764 = vsub.f32 %v4756, %v4760
    %v4765 = vsub.f32 %v4757, %v4763
    %v4766 = vmul.f32 %v4764, 1.442695
    %v4767 = vpow.pop %v4766
    %v4768 = vmul.f32 %v4765, 1.442695
    %v4769 = vpow.pop %v4768
    %v4770 = vsel %vm584, %v4767, 0.0
    %4771 = vadd.xlane.f32.xlu0 %v4770
    %v4772 = vpop.xlane.xlu0 %4771
    %v4773 = vsel %vm584, %v4769, 0.0
    %4774 = vadd.xlane.f32.xlu0 %v4773
    %v4775 = vpop.xlane.xlu0 %4774
    %v4776 = vrcp.pop %v4772
    %v4777 = vrcp.pop %v4775
    %v4778 = vmul.f32 %v4767, %v4776
    %v4779 = vmul.f32 %v4769, %v4777
    %4780 = vrot.lane.b32.xlu0 %v3791, 8
    %v4781 = vpop.permute.xlu0 %4780
    %4782 = vrot.lane.b32.xlu0 %v3797, 8
    %v4783 = vpop.permute.xlu0 %4782
    %v4787 = vsel %vm584, %v4778, 0
    %v4790 = vsel %vm584, %v4779, 0
    %4792 = vmatprep.subr.mxu0 0.0
    %4793 = vmatpush1.msra.mxu0 0.0
    %4794 = vmatprep.subr.mxu0 0.0
    %4795 = vmatpush1.msra.mxu0 0.0
    %4796 = vmatprep.subr.mxu0 0.0
    %4797 = vmatpush1.msra.mxu0 0.0
    %4798 = vmatprep.subr.mxu0 0.0
    %4799 = vmatpush1.msra.mxu0 0.0
    %4800 = vmatprep.subr.mxu0 0.0
    %4801 = vmatpush1.msra.mxu0 0.0
    %4802 = vmatprep.subr.mxu0 0.0
    %4803 = vmatpush1.msra.mxu0 0.0
    %4804 = vmatprep.subr.mxu0 0.0
    %4805 = vmatpush1.msra.mxu0 0.0
    %4806 = vmatprep.subr.mxu0 0.0
    %4807 = vmatpush1.msra.mxu0 0.0
    %4808 = vmatprep.subr.mxu0 0.0
    %4809 = vmatpush1.msra.mxu0 0.0
    %4810 = vmatprep.subr.mxu0 0.0
    %4811 = vmatpush1.msra.mxu0 0.0
    %4812 = vmatprep.subr.mxu0 0.0
    %4813 = vmatpush1.msra.mxu0 0.0
    %4814 = vmatprep.subr.mxu0 0.0
    %4815 = vmatpush1.msra.mxu0 0.0
    %4816 = vmatprep.subr.mxu0 0.0
    %4817 = vmatpush1.msra.mxu0 0.0
    %4818 = vmatprep.subr.mxu0 0.0
    %4819 = vmatpush1.msra.mxu0 0.0
    %4820 = vmatprep.subr.mxu0 0.0
    %4821 = vmatpush1.msra.mxu0 %v4783
    %4822 = vmatprep.subr.mxu0 0.0
    %4823 = vmatpush1.msra.mxu0 %v4781
    %4824 = vmatprep.subr.mxu0 0.0
    %4825 = vmatpush2.msra.mxu0 0.0
    %4826 = vmatprep.subr.mxu0 0.0
    %4827 = vmatpush2.msra.mxu0 0.0
    %4828 = vmatprep.subr.mxu0 0.0
    %4829 = vmatpush2.msra.mxu0 0.0
    %4830 = vmatprep.subr.mxu0 0.0
    %4831 = vmatpush2.msra.mxu0 0.0
    %4832 = vmatprep.subr.mxu0 0.0
    %4833 = vmatpush2.msra.mxu0 0.0
    %4834 = vmatprep.subr.mxu0 0.0
    %4835 = vmatpush2.msra.mxu0 0.0
    %4836 = vmatprep.subr.mxu0 0.0
    %4837 = vmatpush2.msra.mxu0 0.0
    %4838 = vmatprep.subr.mxu0 0.0
    %4839 = vmatpush2.msra.mxu0 0.0
    %4840 = vmatprep.subr.mxu0 0.0
    %4841 = vmatpush2.msra.mxu0 0.0
    %4842 = vmatprep.subr.mxu0 0.0
    %4843 = vmatpush2.msra.mxu0 0.0
    %4844 = vmatprep.subr.mxu0 0.0
    %4845 = vmatpush2.msra.mxu0 0.0
    %4846 = vmatprep.subr.mxu0 0.0
    %4847 = vmatpush2.msra.mxu0 0.0
    %4848 = vmatprep.subr.mxu0 0.0
    %4849 = vmatpush2.msra.mxu0 0.0
    %4850 = vmatprep.subr.mxu0 0.0
    %4851 = vmatpush2.msra.mxu0 0.0
    %4852 = vmatprep.subr.mxu0 0.0
    %4853 = vmatpush2.msra.mxu0 0.0
    %4854 = vmatprep.subr.mxu0 0.0
    %4855 = vmatpush2.msra.mxu0 0.0
    %4856 = vmatprep.mubr.f32.mxu0 0.0
    %4857 = vmatmul.mubr.f32.gmra.mxu0 %v4787
    %v4858 = vpop.f32.mrf.mxu0
    %v4859 = vadd.f32 0.0, %v4858
    %v4860 = vpop.f32.mrf.mxu0
    %4861 = vmatprep.mubr.f32.mxu0 0.0
    %4862 = vmatmul.mubr.f32.gmra.mxu0 %v4790
    %v4863 = vpop.f32.mrf.mxu0
    %v4864 = vadd.f32 0.0, %v4863
    %v4865 = vpop.f32.mrf.mxu0
    %4866 = vdwg.mxu0
    %4867 = vrot.lane.b32.xlu0 %v3918, 96
    %v4868 = vpop.permute.xlu0 %4867
    %4869 = vrot.lane.b32.xlu0 %v3919, 96
    %v4870 = vpop.permute.xlu0 %4869
    %4871 = vrot.lane.b32.xlu0 %v4047, 48
    %v4872 = vpop.permute.xlu0 %4871
    %4873 = vrot.lane.b32.xlu0 %v4048, 48
    %v4874 = vpop.permute.xlu0 %4873
    %v4875 = vsel %vm494, %v4868, 0
    %v4877 = vsel %vm494, %v4870, 0
    %v4879 = vsel %vm494, %v4872, 0
    %v4881 = vsel %vm494, %v4874, 0
    %4883 = vmatprep.subr.mxu0 0.0
    %4884 = vmatpush1.xpose.msra.mxu0 0.0
    %4885 = vmatprep.subr.mxu0 0.0
    %4886 = vmatpush1.xpose.msra.mxu0 0.0
    %4887 = vmatprep.subr.mxu0 0.0
    %4888 = vmatpush1.xpose.msra.mxu0 0.0
    %4889 = vmatprep.subr.mxu0 0.0
    %4890 = vmatpush1.xpose.msra.mxu0 0.0
    %4891 = vmatprep.subr.mxu0 0.0
    %4892 = vmatpush1.xpose.msra.mxu0 0.0
    %4893 = vmatprep.subr.mxu0 0.0
    %4894 = vmatpush1.xpose.msra.mxu0 0.0
    %4895 = vmatprep.subr.mxu0 0.0
    %4896 = vmatpush1.xpose.msra.mxu0 0.0
    %4897 = vmatprep.subr.mxu0 0.0
    %4898 = vmatpush1.xpose.msra.mxu0 0.0
    %4899 = vmatprep.subr.mxu0 0.0
    %4900 = vmatpush1.xpose.msra.mxu0 0.0
    %4901 = vmatprep.subr.mxu0 0.0
    %4902 = vmatpush1.xpose.msra.mxu0 0.0
    %4903 = vmatprep.subr.mxu0 0.0
    %4904 = vmatpush1.xpose.msra.mxu0 0.0
    %4905 = vmatprep.subr.mxu0 0.0
    %4906 = vmatpush1.xpose.msra.mxu0 0.0
    %4907 = vmatprep.subr.mxu0 0.0
    %4908 = vmatpush1.xpose.msra.mxu0 0.0
    %4909 = vmatprep.subr.mxu0 0.0
    %4910 = vmatpush1.xpose.msra.mxu0 0.0
    %4911 = vmatprep.subr.mxu0 0.0
    %4912 = vmatpush1.xpose.msra.mxu0 %v4881
    %4913 = vmatprep.subr.mxu0 0.0
    %4914 = vmatpush1.xpose.msra.mxu0 %v4879
    %4915 = vmatprep.subr.mxu0 0.0
    %4916 = vmatpush2.xpose.msra.mxu0 0.0
    %4917 = vmatprep.subr.mxu0 0.0
    %4918 = vmatpush2.xpose.msra.mxu0 0.0
    %4919 = vmatprep.subr.mxu0 0.0
    %4920 = vmatpush2.xpose.msra.mxu0 0.0
    %4921 = vmatprep.subr.mxu0 0.0
    %4922 = vmatpush2.xpose.msra.mxu0 0.0
    %4923 = vmatprep.subr.mxu0 0.0
    %4924 = vmatpush2.xpose.msra.mxu0 0.0
    %4925 = vmatprep.subr.mxu0 0.0
    %4926 = vmatpush2.xpose.msra.mxu0 0.0
    %4927 = vmatprep.subr.mxu0 0.0
    %4928 = vmatpush2.xpose.msra.mxu0 0.0
    %4929 = vmatprep.subr.mxu0 0.0
    %4930 = vmatpush2.xpose.msra.mxu0 0.0
    %4931 = vmatprep.subr.mxu0 0.0
    %4932 = vmatpush2.xpose.msra.mxu0 0.0
    %4933 = vmatprep.subr.mxu0 0.0
    %4934 = vmatpush2.xpose.msra.mxu0 0.0
    %4935 = vmatprep.subr.mxu0 0.0
    %4936 = vmatpush2.xpose.msra.mxu0 0.0
    %4937 = vmatprep.subr.mxu0 0.0
    %4938 = vmatpush2.xpose.msra.mxu0 0.0
    %4939 = vmatprep.subr.mxu0 0.0
    %4940 = vmatpush2.xpose.msra.mxu0 0.0
    %4941 = vmatprep.subr.mxu0 0.0
    %4942 = vmatpush2.xpose.msra.mxu0 0.0
    %4943 = vmatprep.subr.mxu0 0.0
    %4944 = vmatpush2.xpose.msra.mxu0 0.0
    %4945 = vmatprep.subr.mxu0 0.0
    %4946 = vmatpush2.xpose.msra.mxu0 0.0
    %4947 = vmatprep.mubr.f32.mxu0 0.0
    %4948 = vmatmul.mubr.f32.gmra.mxu0 %v4875
    %v4949 = vpop.f32.mrf.mxu0
    %v4950 = vadd.f32 0.0, %v4949
    %v4951 = vpop.f32.mrf.mxu0
    %4952 = vmatprep.mubr.f32.mxu0 0.0
    %4953 = vmatmul.mubr.f32.gmra.mxu0 %v4877
    %v4954 = vpop.f32.mrf.mxu0
    %v4955 = vadd.f32 0.0, %v4954
    %v4956 = vpop.f32.mrf.mxu0
    %4957 = vdwg.mxu0
    %v4958 = vmul.f32 %v4950, 0.35355338
    %v4959 = vmul.f32 %v4955, 0.35355338
    %v4960 = vsel %vm65, -inf, %v4958
    %v4961 = vsel %vm66, -inf, %v4959
    %v4962 = vsel %vm584, %v4960, -inf
    %4963 = vmax.xlane.f32.xlu0 %v4962
    %v4964 = vpop.xlane.xlu0 %4963
    %v4965 = vsel %vm584, %v4961, -inf
    %4966 = vmax.xlane.f32.xlu0 %v4965
    %v4967 = vpop.xlane.xlu0 %4966
    %v4968 = vsub.f32 %v4960, %v4964
    %v4969 = vsub.f32 %v4961, %v4967
    %v4970 = vmul.f32 %v4968, 1.442695
    %v4971 = vpow.pop %v4970
    %v4972 = vmul.f32 %v4969, 1.442695
    %v4973 = vpow.pop %v4972
    %v4974 = vsel %vm584, %v4971, 0.0
    %4975 = vadd.xlane.f32.xlu0 %v4974
    %v4976 = vpop.xlane.xlu0 %4975
    %v4977 = vsel %vm584, %v4973, 0.0
    %4978 = vadd.xlane.f32.xlu0 %v4977
    %v4979 = vpop.xlane.xlu0 %4978
    %v4980 = vrcp.pop %v4976
    %v4981 = vrcp.pop %v4979
    %v4982 = vmul.f32 %v4971, %v4980
    %v4983 = vmul.f32 %v4973, %v4981
    %v4985 = vsel %vm584, %v4982, 0
    %v4988 = vsel %vm584, %v4983, 0
    %4990 = vmatprep.subr.mxu0 0.0
    %4991 = vmatpush1.msra.mxu0 0.0
    %4992 = vmatprep.subr.mxu0 0.0
    %4993 = vmatpush1.msra.mxu0 0.0
    %4994 = vmatprep.subr.mxu0 0.0
    %4995 = vmatpush1.msra.mxu0 0.0
    %4996 = vmatprep.subr.mxu0 0.0
    %4997 = vmatpush1.msra.mxu0 0.0
    %4998 = vmatprep.subr.mxu0 0.0
    %4999 = vmatpush1.msra.mxu0 0.0
    %5000 = vmatprep.subr.mxu0 0.0
    %5001 = vmatpush1.msra.mxu0 0.0
    %5002 = vmatprep.subr.mxu0 0.0
    %5003 = vmatpush1.msra.mxu0 0.0
    %5004 = vmatprep.subr.mxu0 0.0
    %5005 = vmatpush1.msra.mxu0 0.0
    %5006 = vmatprep.subr.mxu0 0.0
    %5007 = vmatpush1.msra.mxu0 0.0
    %5008 = vmatprep.subr.mxu0 0.0
    %5009 = vmatpush1.msra.mxu0 0.0
    %5010 = vmatprep.subr.mxu0 0.0
    %5011 = vmatpush1.msra.mxu0 0.0
    %5012 = vmatprep.subr.mxu0 0.0
    %5013 = vmatpush1.msra.mxu0 0.0
    %5014 = vmatprep.subr.mxu0 0.0
    %5015 = vmatpush1.msra.mxu0 0.0
    %5016 = vmatprep.subr.mxu0 0.0
    %5017 = vmatpush1.msra.mxu0 0.0
    %5018 = vmatprep.subr.mxu0 0.0
    %5019 = vmatpush1.msra.mxu0 %v3799
    %5020 = vmatprep.subr.mxu0 0.0
    %5021 = vmatpush1.msra.mxu0 %v3793
    %5022 = vmatprep.subr.mxu0 0.0
    %5023 = vmatpush2.msra.mxu0 0.0
    %5024 = vmatprep.subr.mxu0 0.0
    %5025 = vmatpush2.msra.mxu0 0.0
    %5026 = vmatprep.subr.mxu0 0.0
    %5027 = vmatpush2.msra.mxu0 0.0
    %5028 = vmatprep.subr.mxu0 0.0
    %5029 = vmatpush2.msra.mxu0 0.0
    %5030 = vmatprep.subr.mxu0 0.0
    %5031 = vmatpush2.msra.mxu0 0.0
    %5032 = vmatprep.subr.mxu0 0.0
    %5033 = vmatpush2.msra.mxu0 0.0
    %5034 = vmatprep.subr.mxu0 0.0
    %5035 = vmatpush2.msra.mxu0 0.0
    %5036 = vmatprep.subr.mxu0 0.0
    %5037 = vmatpush2.msra.mxu0 0.0
    %5038 = vmatprep.subr.mxu0 0.0
    %5039 = vmatpush2.msra.mxu0 0.0
    %5040 = vmatprep.subr.mxu0 0.0
    %5041 = vmatpush2.msra.mxu0 0.0
    %5042 = vmatprep.subr.mxu0 0.0
    %5043 = vmatpush2.msra.mxu0 0.0
    %5044 = vmatprep.subr.mxu0 0.0
    %5045 = vmatpush2.msra.mxu0 0.0
    %5046 = vmatprep.subr.mxu0 0.0
    %5047 = vmatpush2.msra.mxu0 0.0
    %5048 = vmatprep.subr.mxu0 0.0
    %5049 = vmatpush2.msra.mxu0 0.0
    %5050 = vmatprep.subr.mxu0 0.0
    %5051 = vmatpush2.msra.mxu0 0.0
    %5052 = vmatprep.subr.mxu0 0.0
    %5053 = vmatpush2.msra.mxu0 0.0
    %5054 = vmatprep.mubr.f32.mxu0 0.0
    %5055 = vmatmul.mubr.f32.gmra.mxu0 %v4985
    %v5056 = vpop.f32.mrf.mxu0
    %v5057 = vadd.f32 0.0, %v5056
    %v5058 = vpop.f32.mrf.mxu0
    %5059 = vmatprep.mubr.f32.mxu0 0.0
    %5060 = vmatmul.mubr.f32.gmra.mxu0 %v4988
    %v5061 = vpop.f32.mrf.mxu0
    %v5062 = vadd.f32 0.0, %v5061
    %v5063 = vpop.f32.mrf.mxu0
    %5064 = vdwg.mxu0
    %5065 = vrot.lane.b32.xlu0 %v3918, 88
    %v5066 = vpop.permute.xlu0 %5065
    %5067 = vrot.lane.b32.xlu0 %v3919, 88
    %v5068 = vpop.permute.xlu0 %5067
    %5069 = vrot.lane.b32.xlu0 %v4047, 40
    %v5070 = vpop.permute.xlu0 %5069
    %5071 = vrot.lane.b32.xlu0 %v4048, 40
    %v5072 = vpop.permute.xlu0 %5071
    %v5073 = vsel %vm494, %v5066, 0
    %v5075 = vsel %vm494, %v5068, 0
    %v5077 = vsel %vm494, %v5070, 0
    %v5079 = vsel %vm494, %v5072, 0
    %5081 = vmatprep.subr.mxu0 0.0
    %5082 = vmatpush1.xpose.msra.mxu0 0.0
    %5083 = vmatprep.subr.mxu0 0.0
    %5084 = vmatpush1.xpose.msra.mxu0 0.0
    %5085 = vmatprep.subr.mxu0 0.0
    %5086 = vmatpush1.xpose.msra.mxu0 0.0
    %5087 = vmatprep.subr.mxu0 0.0
    %5088 = vmatpush1.xpose.msra.mxu0 0.0
    %5089 = vmatprep.subr.mxu0 0.0
    %5090 = vmatpush1.xpose.msra.mxu0 0.0
    %5091 = vmatprep.subr.mxu0 0.0
    %5092 = vmatpush1.xpose.msra.mxu0 0.0
    %5093 = vmatprep.subr.mxu0 0.0
    %5094 = vmatpush1.xpose.msra.mxu0 0.0
    %5095 = vmatprep.subr.mxu0 0.0
    %5096 = vmatpush1.xpose.msra.mxu0 0.0
    %5097 = vmatprep.subr.mxu0 0.0
    %5098 = vmatpush1.xpose.msra.mxu0 0.0
    %5099 = vmatprep.subr.mxu0 0.0
    %5100 = vmatpush1.xpose.msra.mxu0 0.0
    %5101 = vmatprep.subr.mxu0 0.0
    %5102 = vmatpush1.xpose.msra.mxu0 0.0
    %5103 = vmatprep.subr.mxu0 0.0
    %5104 = vmatpush1.xpose.msra.mxu0 0.0
    %5105 = vmatprep.subr.mxu0 0.0
    %5106 = vmatpush1.xpose.msra.mxu0 0.0
    %5107 = vmatprep.subr.mxu0 0.0
    %5108 = vmatpush1.xpose.msra.mxu0 0.0
    %5109 = vmatprep.subr.mxu0 0.0
    %5110 = vmatpush1.xpose.msra.mxu0 %v5079
    %5111 = vmatprep.subr.mxu0 0.0
    %5112 = vmatpush1.xpose.msra.mxu0 %v5077
    %5113 = vmatprep.subr.mxu0 0.0
    %5114 = vmatpush2.xpose.msra.mxu0 0.0
    %5115 = vmatprep.subr.mxu0 0.0
    %5116 = vmatpush2.xpose.msra.mxu0 0.0
    %5117 = vmatprep.subr.mxu0 0.0
    %5118 = vmatpush2.xpose.msra.mxu0 0.0
    %5119 = vmatprep.subr.mxu0 0.0
    %5120 = vmatpush2.xpose.msra.mxu0 0.0
    %5121 = vmatprep.subr.mxu0 0.0
    %5122 = vmatpush2.xpose.msra.mxu0 0.0
    %5123 = vmatprep.subr.mxu0 0.0
    %5124 = vmatpush2.xpose.msra.mxu0 0.0
    %5125 = vmatprep.subr.mxu0 0.0
    %5126 = vmatpush2.xpose.msra.mxu0 0.0
    %5127 = vmatprep.subr.mxu0 0.0
    %5128 = vmatpush2.xpose.msra.mxu0 0.0
    %5129 = vmatprep.subr.mxu0 0.0
    %5130 = vmatpush2.xpose.msra.mxu0 0.0
    %5131 = vmatprep.subr.mxu0 0.0
    %5132 = vmatpush2.xpose.msra.mxu0 0.0
    %5133 = vmatprep.subr.mxu0 0.0
    %5134 = vmatpush2.xpose.msra.mxu0 0.0
    %5135 = vmatprep.subr.mxu0 0.0
    %5136 = vmatpush2.xpose.msra.mxu0 0.0
    %5137 = vmatprep.subr.mxu0 0.0
    %5138 = vmatpush2.xpose.msra.mxu0 0.0
    %5139 = vmatprep.subr.mxu0 0.0
    %5140 = vmatpush2.xpose.msra.mxu0 0.0
    %5141 = vmatprep.subr.mxu0 0.0
    %5142 = vmatpush2.xpose.msra.mxu0 0.0
    %5143 = vmatprep.subr.mxu0 0.0
    %5144 = vmatpush2.xpose.msra.mxu0 0.0
    %5145 = vmatprep.mubr.f32.mxu0 0.0
    %5146 = vmatmul.mubr.f32.gmra.mxu0 %v5073
    %v5147 = vpop.f32.mrf.mxu0
    %v5148 = vadd.f32 0.0, %v5147
    %v5149 = vpop.f32.mrf.mxu0
    %5150 = vmatprep.mubr.f32.mxu0 0.0
    %5151 = vmatmul.mubr.f32.gmra.mxu0 %v5075
    %v5152 = vpop.f32.mrf.mxu0
    %v5153 = vadd.f32 0.0, %v5152
    %v5154 = vpop.f32.mrf.mxu0
    %5155 = vdwg.mxu0
    %v5156 = vmul.f32 %v5148, 0.35355338
    %v5157 = vmul.f32 %v5153, 0.35355338
    %v5158 = vsel %vm65, -inf, %v5156
    %v5159 = vsel %vm66, -inf, %v5157
    %v5160 = vsel %vm584, %v5158, -inf
    %5161 = vmax.xlane.f32.xlu0 %v5160
    %v5162 = vpop.xlane.xlu0 %5161
    %v5163 = vsel %vm584, %v5159, -inf
    %5164 = vmax.xlane.f32.xlu0 %v5163
    %v5165 = vpop.xlane.xlu0 %5164
    %v5166 = vsub.f32 %v5158, %v5162
    %v5167 = vsub.f32 %v5159, %v5165
    %v5168 = vmul.f32 %v5166, 1.442695
    %v5169 = vpow.pop %v5168
    %v5170 = vmul.f32 %v5167, 1.442695
    %v5171 = vpow.pop %v5170
    %v5172 = vsel %vm584, %v5169, 0.0
    %5173 = vadd.xlane.f32.xlu0 %v5172
    %v5174 = vpop.xlane.xlu0 %5173
    %v5175 = vsel %vm584, %v5171, 0.0
    %5176 = vadd.xlane.f32.xlu0 %v5175
    %v5177 = vpop.xlane.xlu0 %5176
    %v5178 = vrcp.pop %v5174
    %v5179 = vrcp.pop %v5177
    %v5180 = vmul.f32 %v5169, %v5178
    %v5181 = vmul.f32 %v5171, %v5179
    %5184 = vrot.lane.b32.xlu0 %v3793, 120
    %v5185 = vpop.permute.xlu0 %5184
    %5186 = vrot.lane.b32.xlu0 %v3799, 120
    %v5187 = vpop.permute.xlu0 %5186
    %v5191 = vsel %vm584, %v5180, 0
    %v5194 = vsel %vm584, %v5181, 0
    %5196 = vmatprep.subr.mxu0 0.0
    %5197 = vmatpush1.msra.mxu0 0.0
    %5198 = vmatprep.subr.mxu0 0.0
    %5199 = vmatpush1.msra.mxu0 0.0
    %5200 = vmatprep.subr.mxu0 0.0
    %5201 = vmatpush1.msra.mxu0 0.0
    %5202 = vmatprep.subr.mxu0 0.0
    %5203 = vmatpush1.msra.mxu0 0.0
    %5204 = vmatprep.subr.mxu0 0.0
    %5205 = vmatpush1.msra.mxu0 0.0
    %5206 = vmatprep.subr.mxu0 0.0
    %5207 = vmatpush1.msra.mxu0 0.0
    %5208 = vmatprep.subr.mxu0 0.0
    %5209 = vmatpush1.msra.mxu0 0.0
    %5210 = vmatprep.subr.mxu0 0.0
    %5211 = vmatpush1.msra.mxu0 0.0
    %5212 = vmatprep.subr.mxu0 0.0
    %5213 = vmatpush1.msra.mxu0 0.0
    %5214 = vmatprep.subr.mxu0 0.0
    %5215 = vmatpush1.msra.mxu0 0.0
    %5216 = vmatprep.subr.mxu0 0.0
    %5217 = vmatpush1.msra.mxu0 0.0
    %5218 = vmatprep.subr.mxu0 0.0
    %5219 = vmatpush1.msra.mxu0 0.0
    %5220 = vmatprep.subr.mxu0 0.0
    %5221 = vmatpush1.msra.mxu0 0.0
    %5222 = vmatprep.subr.mxu0 0.0
    %5223 = vmatpush1.msra.mxu0 0.0
    %5224 = vmatprep.subr.mxu0 0.0
    %5225 = vmatpush1.msra.mxu0 %v5187
    %5226 = vmatprep.subr.mxu0 0.0
    %5227 = vmatpush1.msra.mxu0 %v5185
    %5228 = vmatprep.subr.mxu0 0.0
    %5229 = vmatpush2.msra.mxu0 0.0
    %5230 = vmatprep.subr.mxu0 0.0
    %5231 = vmatpush2.msra.mxu0 0.0
    %5232 = vmatprep.subr.mxu0 0.0
    %5233 = vmatpush2.msra.mxu0 0.0
    %5234 = vmatprep.subr.mxu0 0.0
    %5235 = vmatpush2.msra.mxu0 0.0
    %5236 = vmatprep.subr.mxu0 0.0
    %5237 = vmatpush2.msra.mxu0 0.0
    %5238 = vmatprep.subr.mxu0 0.0
    %5239 = vmatpush2.msra.mxu0 0.0
    %5240 = vmatprep.subr.mxu0 0.0
    %5241 = vmatpush2.msra.mxu0 0.0
    %5242 = vmatprep.subr.mxu0 0.0
    %5243 = vmatpush2.msra.mxu0 0.0
    %5244 = vmatprep.subr.mxu0 0.0
    %5245 = vmatpush2.msra.mxu0 0.0
    %5246 = vmatprep.subr.mxu0 0.0
    %5247 = vmatpush2.msra.mxu0 0.0
    %5248 = vmatprep.subr.mxu0 0.0
    %5249 = vmatpush2.msra.mxu0 0.0
    %5250 = vmatprep.subr.mxu0 0.0
    %5251 = vmatpush2.msra.mxu0 0.0
    %5252 = vmatprep.subr.mxu0 0.0
    %5253 = vmatpush2.msra.mxu0 0.0
    %5254 = vmatprep.subr.mxu0 0.0
    %5255 = vmatpush2.msra.mxu0 0.0
    %5256 = vmatprep.subr.mxu0 0.0
    %5257 = vmatpush2.msra.mxu0 0.0
    %5258 = vmatprep.subr.mxu0 0.0
    %5259 = vmatpush2.msra.mxu0 0.0
    %5260 = vmatprep.mubr.f32.mxu0 0.0
    %5261 = vmatmul.mubr.f32.gmra.mxu0 %v5191
    %v5262 = vpop.f32.mrf.mxu0
    %v5263 = vadd.f32 0.0, %v5262
    %v5264 = vpop.f32.mrf.mxu0
    %5265 = vmatprep.mubr.f32.mxu0 0.0
    %5266 = vmatmul.mubr.f32.gmra.mxu0 %v5194
    %v5267 = vpop.f32.mrf.mxu0
    %v5268 = vadd.f32 0.0, %v5267
    %v5269 = vpop.f32.mrf.mxu0
    %5270 = vdwg.mxu0
    %5273 = vrot.lane.b32.xlu0 %v4451, 8
    %v5274 = vpop.permute.xlu0 %5273
    %5275 = vrot.lane.b32.xlu0 %v4456, 8
    %v5276 = vpop.permute.xlu0 %5275
    %5281 = vrot.lane.b32.xlu0 %v4655, 16
    %v5282 = vpop.permute.xlu0 %5281
    %5283 = vrot.lane.b32.xlu0 %v4660, 16
    %v5284 = vpop.permute.xlu0 %5283
    %5289 = vrot.lane.b32.xlu0 %v4859, 24
    %v5290 = vpop.permute.xlu0 %5289
    %5291 = vrot.lane.b32.xlu0 %v4864, 24
    %v5292 = vpop.permute.xlu0 %5291
    %5297 = vrot.lane.b32.xlu0 %v5057, 32
    %v5298 = vpop.permute.xlu0 %5297
    %5299 = vrot.lane.b32.xlu0 %v5062, 32
    %v5300 = vpop.permute.xlu0 %5299
    %5305 = vrot.lane.b32.xlu0 %v5263, 40
    %v5306 = vpop.permute.xlu0 %5305
    %5307 = vrot.lane.b32.xlu0 %v5268, 40
    %v5308 = vpop.permute.xlu0 %5307
    %v5311 = vsel %vm494, %v4247, %v5274
    %v5312 = vsel %vm494, %v4252, %v5276
    %v5313 = vsel %vm584, %v5311, %v5282
    %v5314 = vsel %vm584, %v5312, %v5284
    %v5315 = vsel %vm1754, %v5313, %v5290
    %v5316 = vsel %vm1754, %v5314, %v5292
    %v5317 = vsel %vm1757, %v5315, %v5298
    %v5318 = vsel %vm1757, %v5316, %v5300
    %v5319 = vsel %vm1760, %v5317, %v5306
    %v5320 = vsel %vm1760, %v5318, %v5308
    %5323 = vrot.lane.b32.xlu0 %v4049, 80
    %v5324 = vpop.permute.xlu0 %5323
    %5325 = vrot.lane.b32.xlu0 %v4050, 80
    %v5326 = vpop.permute.xlu0 %5325
    %v5328 = vsel %vm494, %v3920, 0
    %v5331 = vsel %vm494, %v3921, 0
    %v5333 = vsel %vm494, %v5324, 0
    %v5335 = vsel %vm494, %v5326, 0
    %5337 = vmatprep.subr.mxu0 0.0
    %5338 = vmatpush1.xpose.msra.mxu0 0.0
    %5339 = vmatprep.subr.mxu0 0.0
    %5340 = vmatpush1.xpose.msra.mxu0 0.0
    %5341 = vmatprep.subr.mxu0 0.0
    %5342 = vmatpush1.xpose.msra.mxu0 0.0
    %5343 = vmatprep.subr.mxu0 0.0
    %5344 = vmatpush1.xpose.msra.mxu0 0.0
    %5345 = vmatprep.subr.mxu0 0.0
    %5346 = vmatpush1.xpose.msra.mxu0 0.0
    %5347 = vmatprep.subr.mxu0 0.0
    %5348 = vmatpush1.xpose.msra.mxu0 0.0
    %5349 = vmatprep.subr.mxu0 0.0
    %5350 = vmatpush1.xpose.msra.mxu0 0.0
    %5351 = vmatprep.subr.mxu0 0.0
    %5352 = vmatpush1.xpose.msra.mxu0 0.0
    %5353 = vmatprep.subr.mxu0 0.0
    %5354 = vmatpush1.xpose.msra.mxu0 0.0
    %5355 = vmatprep.subr.mxu0 0.0
    %5356 = vmatpush1.xpose.msra.mxu0 0.0
    %5357 = vmatprep.subr.mxu0 0.0
    %5358 = vmatpush1.xpose.msra.mxu0 0.0
    %5359 = vmatprep.subr.mxu0 0.0
    %5360 = vmatpush1.xpose.msra.mxu0 0.0
    %5361 = vmatprep.subr.mxu0 0.0
    %5362 = vmatpush1.xpose.msra.mxu0 0.0
    %5363 = vmatprep.subr.mxu0 0.0
    %5364 = vmatpush1.xpose.msra.mxu0 0.0
    %5365 = vmatprep.subr.mxu0 0.0
    %5366 = vmatpush1.xpose.msra.mxu0 %v5335
    %5367 = vmatprep.subr.mxu0 0.0
    %5368 = vmatpush1.xpose.msra.mxu0 %v5333
    %5369 = vmatprep.subr.mxu0 0.0
    %5370 = vmatpush2.xpose.msra.mxu0 0.0
    %5371 = vmatprep.subr.mxu0 0.0
    %5372 = vmatpush2.xpose.msra.mxu0 0.0
    %5373 = vmatprep.subr.mxu0 0.0
    %5374 = vmatpush2.xpose.msra.mxu0 0.0
    %5375 = vmatprep.subr.mxu0 0.0
    %5376 = vmatpush2.xpose.msra.mxu0 0.0
    %5377 = vmatprep.subr.mxu0 0.0
    %5378 = vmatpush2.xpose.msra.mxu0 0.0
    %5379 = vmatprep.subr.mxu0 0.0
    %5380 = vmatpush2.xpose.msra.mxu0 0.0
    %5381 = vmatprep.subr.mxu0 0.0
    %5382 = vmatpush2.xpose.msra.mxu0 0.0
    %5383 = vmatprep.subr.mxu0 0.0
    %5384 = vmatpush2.xpose.msra.mxu0 0.0
    %5385 = vmatprep.subr.mxu0 0.0
    %5386 = vmatpush2.xpose.msra.mxu0 0.0
    %5387 = vmatprep.subr.mxu0 0.0
    %5388 = vmatpush2.xpose.msra.mxu0 0.0
    %5389 = vmatprep.subr.mxu0 0.0
    %5390 = vmatpush2.xpose.msra.mxu0 0.0
    %5391 = vmatprep.subr.mxu0 0.0
    %5392 = vmatpush2.xpose.msra.mxu0 0.0
    %5393 = vmatprep.subr.mxu0 0.0
    %5394 = vmatpush2.xpose.msra.mxu0 0.0
    %5395 = vmatprep.subr.mxu0 0.0
    %5396 = vmatpush2.xpose.msra.mxu0 0.0
    %5397 = vmatprep.subr.mxu0 0.0
    %5398 = vmatpush2.xpose.msra.mxu0 0.0
    %5399 = vmatprep.subr.mxu0 0.0
    %5400 = vmatpush2.xpose.msra.mxu0 0.0
    %5401 = vmatprep.mubr.f32.mxu0 0.0
    %5402 = vmatmul.mubr.f32.gmra.mxu0 %v5328
    %v5403 = vpop.f32.mrf.mxu0
    %v5404 = vadd.f32 0.0, %v5403
    %v5405 = vpop.f32.mrf.mxu0
    %5406 = vmatprep.mubr.f32.mxu0 0.0
    %5407 = vmatmul.mubr.f32.gmra.mxu0 %v5331
    %v5408 = vpop.f32.mrf.mxu0
    %v5409 = vadd.f32 0.0, %v5408
    %v5410 = vpop.f32.mrf.mxu0
    %5411 = vdwg.mxu0
    %v5412 = vmul.f32 %v5404, 0.35355338
    %v5413 = vmul.f32 %v5409, 0.35355338
    %v5414 = vsel %vm65, -inf, %v5412
    %v5415 = vsel %vm66, -inf, %v5413
    %v5416 = vsel %vm584, %v5414, -inf
    %5417 = vmax.xlane.f32.xlu0 %v5416
    %v5418 = vpop.xlane.xlu0 %5417
    %v5419 = vsel %vm584, %v5415, -inf
    %5420 = vmax.xlane.f32.xlu0 %v5419
    %v5421 = vpop.xlane.xlu0 %5420
    %v5422 = vsub.f32 %v5414, %v5418
    %v5423 = vsub.f32 %v5415, %v5421
    %v5424 = vmul.f32 %v5422, 1.442695
    %v5425 = vpow.pop %v5424
    %v5426 = vmul.f32 %v5423, 1.442695
    %v5427 = vpow.pop %v5426
    %v5428 = vsel %vm584, %v5425, 0.0
    %5429 = vadd.xlane.f32.xlu0 %v5428
    %v5430 = vpop.xlane.xlu0 %5429
    %v5431 = vsel %vm584, %v5427, 0.0
    %5432 = vadd.xlane.f32.xlu0 %v5431
    %v5433 = vpop.xlane.xlu0 %5432
    %v5434 = vrcp.pop %v5430
    %v5435 = vrcp.pop %v5433
    %v5436 = vmul.f32 %v5425, %v5434
    %v5437 = vmul.f32 %v5427, %v5435
    %5438 = vrot.lane.b32.xlu0 %v3803, 32
    %v5439 = vpop.permute.xlu0 %5438
    %5440 = vrot.lane.b32.xlu0 %v3809, 32
    %v5441 = vpop.permute.xlu0 %5440
    %v5445 = vsel %vm584, %v5436, 0
    %v5448 = vsel %vm584, %v5437, 0
    %5450 = vmatprep.subr.mxu0 0.0
    %5451 = vmatpush1.msra.mxu0 0.0
    %5452 = vmatprep.subr.mxu0 0.0
    %5453 = vmatpush1.msra.mxu0 0.0
    %5454 = vmatprep.subr.mxu0 0.0
    %5455 = vmatpush1.msra.mxu0 0.0
    %5456 = vmatprep.subr.mxu0 0.0
    %5457 = vmatpush1.msra.mxu0 0.0
    %5458 = vmatprep.subr.mxu0 0.0
    %5459 = vmatpush1.msra.mxu0 0.0
    %5460 = vmatprep.subr.mxu0 0.0
    %5461 = vmatpush1.msra.mxu0 0.0
    %5462 = vmatprep.subr.mxu0 0.0
    %5463 = vmatpush1.msra.mxu0 0.0
    %5464 = vmatprep.subr.mxu0 0.0
    %5465 = vmatpush1.msra.mxu0 0.0
    %5466 = vmatprep.subr.mxu0 0.0
    %5467 = vmatpush1.msra.mxu0 0.0
    %5468 = vmatprep.subr.mxu0 0.0
    %5469 = vmatpush1.msra.mxu0 0.0
    %5470 = vmatprep.subr.mxu0 0.0
    %5471 = vmatpush1.msra.mxu0 0.0
    %5472 = vmatprep.subr.mxu0 0.0
    %5473 = vmatpush1.msra.mxu0 0.0
    %5474 = vmatprep.subr.mxu0 0.0
    %5475 = vmatpush1.msra.mxu0 0.0
    %5476 = vmatprep.subr.mxu0 0.0
    %5477 = vmatpush1.msra.mxu0 0.0
    %5478 = vmatprep.subr.mxu0 0.0
    %5479 = vmatpush1.msra.mxu0 %v5441
    %5480 = vmatprep.subr.mxu0 0.0
    %5481 = vmatpush1.msra.mxu0 %v5439
    %5482 = vmatprep.subr.mxu0 0.0
    %5483 = vmatpush2.msra.mxu0 0.0
    %5484 = vmatprep.subr.mxu0 0.0
    %5485 = vmatpush2.msra.mxu0 0.0
    %5486 = vmatprep.subr.mxu0 0.0
    %5487 = vmatpush2.msra.mxu0 0.0
    %5488 = vmatprep.subr.mxu0 0.0
    %5489 = vmatpush2.msra.mxu0 0.0
    %5490 = vmatprep.subr.mxu0 0.0
    %5491 = vmatpush2.msra.mxu0 0.0
    %5492 = vmatprep.subr.mxu0 0.0
    %5493 = vmatpush2.msra.mxu0 0.0
    %5494 = vmatprep.subr.mxu0 0.0
    %5495 = vmatpush2.msra.mxu0 0.0
    %5496 = vmatprep.subr.mxu0 0.0
    %5497 = vmatpush2.msra.mxu0 0.0
    %5498 = vmatprep.subr.mxu0 0.0
    %5499 = vmatpush2.msra.mxu0 0.0
    %5500 = vmatprep.subr.mxu0 0.0
    %5501 = vmatpush2.msra.mxu0 0.0
    %5502 = vmatprep.subr.mxu0 0.0
    %5503 = vmatpush2.msra.mxu0 0.0
    %5504 = vmatprep.subr.mxu0 0.0
    %5505 = vmatpush2.msra.mxu0 0.0
    %5506 = vmatprep.subr.mxu0 0.0
    %5507 = vmatpush2.msra.mxu0 0.0
    %5508 = vmatprep.subr.mxu0 0.0
    %5509 = vmatpush2.msra.mxu0 0.0
    %5510 = vmatprep.subr.mxu0 0.0
    %5511 = vmatpush2.msra.mxu0 0.0
    %5512 = vmatprep.subr.mxu0 0.0
    %5513 = vmatpush2.msra.mxu0 0.0
    %5514 = vmatprep.mubr.f32.mxu0 0.0
    %5515 = vmatmul.mubr.f32.gmra.mxu0 %v5445
    %v5516 = vpop.f32.mrf.mxu0
    %v5517 = vadd.f32 0.0, %v5516
    %v5518 = vpop.f32.mrf.mxu0
    %5519 = vmatprep.mubr.f32.mxu0 0.0
    %5520 = vmatmul.mubr.f32.gmra.mxu0 %v5448
    %v5521 = vpop.f32.mrf.mxu0
    %v5522 = vadd.f32 0.0, %v5521
    %v5523 = vpop.f32.mrf.mxu0
    %5524 = vdwg.mxu0
    %5525 = vrot.lane.b32.xlu0 %v3920, 120
    %v5526 = vpop.permute.xlu0 %5525
    %5527 = vrot.lane.b32.xlu0 %v3921, 120
    %v5528 = vpop.permute.xlu0 %5527
    %5529 = vrot.lane.b32.xlu0 %v4049, 72
    %v5530 = vpop.permute.xlu0 %5529
    %5531 = vrot.lane.b32.xlu0 %v4050, 72
    %v5532 = vpop.permute.xlu0 %5531
    %v5533 = vsel %vm494, %v5526, 0
    %v5535 = vsel %vm494, %v5528, 0
    %v5537 = vsel %vm494, %v5530, 0
    %v5539 = vsel %vm494, %v5532, 0
    %5541 = vmatprep.subr.mxu0 0.0
    %5542 = vmatpush1.xpose.msra.mxu0 0.0
    %5543 = vmatprep.subr.mxu0 0.0
    %5544 = vmatpush1.xpose.msra.mxu0 0.0
    %5545 = vmatprep.subr.mxu0 0.0
    %5546 = vmatpush1.xpose.msra.mxu0 0.0
    %5547 = vmatprep.subr.mxu0 0.0
    %5548 = vmatpush1.xpose.msra.mxu0 0.0
    %5549 = vmatprep.subr.mxu0 0.0
    %5550 = vmatpush1.xpose.msra.mxu0 0.0
    %5551 = vmatprep.subr.mxu0 0.0
    %5552 = vmatpush1.xpose.msra.mxu0 0.0
    %5553 = vmatprep.subr.mxu0 0.0
    %5554 = vmatpush1.xpose.msra.mxu0 0.0
    %5555 = vmatprep.subr.mxu0 0.0
    %5556 = vmatpush1.xpose.msra.mxu0 0.0
    %5557 = vmatprep.subr.mxu0 0.0
    %5558 = vmatpush1.xpose.msra.mxu0 0.0
    %5559 = vmatprep.subr.mxu0 0.0
    %5560 = vmatpush1.xpose.msra.mxu0 0.0
    %5561 = vmatprep.subr.mxu0 0.0
    %5562 = vmatpush1.xpose.msra.mxu0 0.0
    %5563 = vmatprep.subr.mxu0 0.0
    %5564 = vmatpush1.xpose.msra.mxu0 0.0
    %5565 = vmatprep.subr.mxu0 0.0
    %5566 = vmatpush1.xpose.msra.mxu0 0.0
    %5567 = vmatprep.subr.mxu0 0.0
    %5568 = vmatpush1.xpose.msra.mxu0 0.0
    %5569 = vmatprep.subr.mxu0 0.0
    %5570 = vmatpush1.xpose.msra.mxu0 %v5539
    %5571 = vmatprep.subr.mxu0 0.0
    %5572 = vmatpush1.xpose.msra.mxu0 %v5537
    %5573 = vmatprep.subr.mxu0 0.0
    %5574 = vmatpush2.xpose.msra.mxu0 0.0
    %5575 = vmatprep.subr.mxu0 0.0
    %5576 = vmatpush2.xpose.msra.mxu0 0.0
    %5577 = vmatprep.subr.mxu0 0.0
    %5578 = vmatpush2.xpose.msra.mxu0 0.0
    %5579 = vmatprep.subr.mxu0 0.0
    %5580 = vmatpush2.xpose.msra.mxu0 0.0
    %5581 = vmatprep.subr.mxu0 0.0
    %5582 = vmatpush2.xpose.msra.mxu0 0.0
    %5583 = vmatprep.subr.mxu0 0.0
    %5584 = vmatpush2.xpose.msra.mxu0 0.0
    %5585 = vmatprep.subr.mxu0 0.0
    %5586 = vmatpush2.xpose.msra.mxu0 0.0
    %5587 = vmatprep.subr.mxu0 0.0
    %5588 = vmatpush2.xpose.msra.mxu0 0.0
    %5589 = vmatprep.subr.mxu0 0.0
    %5590 = vmatpush2.xpose.msra.mxu0 0.0
    %5591 = vmatprep.subr.mxu0 0.0
    %5592 = vmatpush2.xpose.msra.mxu0 0.0
    %5593 = vmatprep.subr.mxu0 0.0
    %5594 = vmatpush2.xpose.msra.mxu0 0.0
    %5595 = vmatprep.subr.mxu0 0.0
    %5596 = vmatpush2.xpose.msra.mxu0 0.0
    %5597 = vmatprep.subr.mxu0 0.0
    %5598 = vmatpush2.xpose.msra.mxu0 0.0
    %5599 = vmatprep.subr.mxu0 0.0
    %5600 = vmatpush2.xpose.msra.mxu0 0.0
    %5601 = vmatprep.subr.mxu0 0.0
    %5602 = vmatpush2.xpose.msra.mxu0 0.0
    %5603 = vmatprep.subr.mxu0 0.0
    %5604 = vmatpush2.xpose.msra.mxu0 0.0
    %5605 = vmatprep.mubr.f32.mxu0 0.0
    %5606 = vmatmul.mubr.f32.gmra.mxu0 %v5533
    %v5607 = vpop.f32.mrf.mxu0
    %v5608 = vadd.f32 0.0, %v5607
    %v5609 = vpop.f32.mrf.mxu0
    %5610 = vmatprep.mubr.f32.mxu0 0.0
    %5611 = vmatmul.mubr.f32.gmra.mxu0 %v5535
    %v5612 = vpop.f32.mrf.mxu0
    %v5613 = vadd.f32 0.0, %v5612
    %v5614 = vpop.f32.mrf.mxu0
    %5615 = vdwg.mxu0
    %v5616 = vmul.f32 %v5608, 0.35355338
    %v5617 = vmul.f32 %v5613, 0.35355338
    %v5618 = vsel %vm65, -inf, %v5616
    %v5619 = vsel %vm66, -inf, %v5617
    %v5620 = vsel %vm584, %v5618, -inf
    %5621 = vmax.xlane.f32.xlu0 %v5620
    %v5622 = vpop.xlane.xlu0 %5621
    %v5623 = vsel %vm584, %v5619, -inf
    %5624 = vmax.xlane.f32.xlu0 %v5623
    %v5625 = vpop.xlane.xlu0 %5624
    %v5626 = vsub.f32 %v5618, %v5622
    %v5627 = vsub.f32 %v5619, %v5625
    %v5628 = vmul.f32 %v5626, 1.442695
    %v5629 = vpow.pop %v5628
    %v5630 = vmul.f32 %v5627, 1.442695
    %v5631 = vpow.pop %v5630
    %v5632 = vsel %vm584, %v5629, 0.0
    %5633 = vadd.xlane.f32.xlu0 %v5632
    %v5634 = vpop.xlane.xlu0 %5633
    %v5635 = vsel %vm584, %v5631, 0.0
    %5636 = vadd.xlane.f32.xlu0 %v5635
    %v5637 = vpop.xlane.xlu0 %5636
    %v5638 = vrcp.pop %v5634
    %v5639 = vrcp.pop %v5637
    %v5640 = vmul.f32 %v5629, %v5638
    %v5641 = vmul.f32 %v5631, %v5639
    %5642 = vrot.lane.b32.xlu0 %v3803, 24
    %v5643 = vpop.permute.xlu0 %5642
    %5644 = vrot.lane.b32.xlu0 %v3809, 24
    %v5645 = vpop.permute.xlu0 %5644
    %v5649 = vsel %vm584, %v5640, 0
    %v5652 = vsel %vm584, %v5641, 0
    %5654 = vmatprep.subr.mxu0 0.0
    %5655 = vmatpush1.msra.mxu0 0.0
    %5656 = vmatprep.subr.mxu0 0.0
    %5657 = vmatpush1.msra.mxu0 0.0
    %5658 = vmatprep.subr.mxu0 0.0
    %5659 = vmatpush1.msra.mxu0 0.0
    %5660 = vmatprep.subr.mxu0 0.0
    %5661 = vmatpush1.msra.mxu0 0.0
    %5662 = vmatprep.subr.mxu0 0.0
    %5663 = vmatpush1.msra.mxu0 0.0
    %5664 = vmatprep.subr.mxu0 0.0
    %5665 = vmatpush1.msra.mxu0 0.0
    %5666 = vmatprep.subr.mxu0 0.0
    %5667 = vmatpush1.msra.mxu0 0.0
    %5668 = vmatprep.subr.mxu0 0.0
    %5669 = vmatpush1.msra.mxu0 0.0
    %5670 = vmatprep.subr.mxu0 0.0
    %5671 = vmatpush1.msra.mxu0 0.0
    %5672 = vmatprep.subr.mxu0 0.0
    %5673 = vmatpush1.msra.mxu0 0.0
    %5674 = vmatprep.subr.mxu0 0.0
    %5675 = vmatpush1.msra.mxu0 0.0
    %5676 = vmatprep.subr.mxu0 0.0
    %5677 = vmatpush1.msra.mxu0 0.0
    %5678 = vmatprep.subr.mxu0 0.0
    %5679 = vmatpush1.msra.mxu0 0.0
    %5680 = vmatprep.subr.mxu0 0.0
    %5681 = vmatpush1.msra.mxu0 0.0
    %5682 = vmatprep.subr.mxu0 0.0
    %5683 = vmatpush1.msra.mxu0 %v5645
    %5684 = vmatprep.subr.mxu0 0.0
    %5685 = vmatpush1.msra.mxu0 %v5643
    %5686 = vmatprep.subr.mxu0 0.0
    %5687 = vmatpush2.msra.mxu0 0.0
    %5688 = vmatprep.subr.mxu0 0.0
    %5689 = vmatpush2.msra.mxu0 0.0
    %5690 = vmatprep.subr.mxu0 0.0
    %5691 = vmatpush2.msra.mxu0 0.0
    %5692 = vmatprep.subr.mxu0 0.0
    %5693 = vmatpush2.msra.mxu0 0.0
    %5694 = vmatprep.subr.mxu0 0.0
    %5695 = vmatpush2.msra.mxu0 0.0
    %5696 = vmatprep.subr.mxu0 0.0
    %5697 = vmatpush2.msra.mxu0 0.0
    %5698 = vmatprep.subr.mxu0 0.0
    %5699 = vmatpush2.msra.mxu0 0.0
    %5700 = vmatprep.subr.mxu0 0.0
    %5701 = vmatpush2.msra.mxu0 0.0
    %5702 = vmatprep.subr.mxu0 0.0
    %5703 = vmatpush2.msra.mxu0 0.0
    %5704 = vmatprep.subr.mxu0 0.0
    %5705 = vmatpush2.msra.mxu0 0.0
    %5706 = vmatprep.subr.mxu0 0.0
    %5707 = vmatpush2.msra.mxu0 0.0
    %5708 = vmatprep.subr.mxu0 0.0
    %5709 = vmatpush2.msra.mxu0 0.0
    %5710 = vmatprep.subr.mxu0 0.0
    %5711 = vmatpush2.msra.mxu0 0.0
    %5712 = vmatprep.subr.mxu0 0.0
    %5713 = vmatpush2.msra.mxu0 0.0
    %5714 = vmatprep.subr.mxu0 0.0
    %5715 = vmatpush2.msra.mxu0 0.0
    %5716 = vmatprep.subr.mxu0 0.0
    %5717 = vmatpush2.msra.mxu0 0.0
    %5718 = vmatprep.mubr.f32.mxu0 0.0
    %5719 = vmatmul.mubr.f32.gmra.mxu0 %v5649
    %v5720 = vpop.f32.mrf.mxu0
    %v5721 = vadd.f32 0.0, %v5720
    %v5722 = vpop.f32.mrf.mxu0
    %5723 = vmatprep.mubr.f32.mxu0 0.0
    %5724 = vmatmul.mubr.f32.gmra.mxu0 %v5652
    %v5725 = vpop.f32.mrf.mxu0
    %v5726 = vadd.f32 0.0, %v5725
    %v5727 = vpop.f32.mrf.mxu0
    %5728 = vdwg.mxu0
    %5729 = vrot.lane.b32.xlu0 %v3920, 112
    %v5730 = vpop.permute.xlu0 %5729
    %5731 = vrot.lane.b32.xlu0 %v3921, 112
    %v5732 = vpop.permute.xlu0 %5731
    %5733 = vrot.lane.b32.xlu0 %v4049, 64
    %v5734 = vpop.permute.xlu0 %5733
    %5735 = vrot.lane.b32.xlu0 %v4050, 64
    %v5736 = vpop.permute.xlu0 %5735
    %v5737 = vsel %vm494, %v5730, 0
    %v5739 = vsel %vm494, %v5732, 0
    %v5741 = vsel %vm494, %v5734, 0
    %v5743 = vsel %vm494, %v5736, 0
    %5745 = vmatprep.subr.mxu0 0.0
    %5746 = vmatpush1.xpose.msra.mxu0 0.0
    %5747 = vmatprep.subr.mxu0 0.0
    %5748 = vmatpush1.xpose.msra.mxu0 0.0
    %5749 = vmatprep.subr.mxu0 0.0
    %5750 = vmatpush1.xpose.msra.mxu0 0.0
    %5751 = vmatprep.subr.mxu0 0.0
    %5752 = vmatpush1.xpose.msra.mxu0 0.0
    %5753 = vmatprep.subr.mxu0 0.0
    %5754 = vmatpush1.xpose.msra.mxu0 0.0
    %5755 = vmatprep.subr.mxu0 0.0
    %5756 = vmatpush1.xpose.msra.mxu0 0.0
    %5757 = vmatprep.subr.mxu0 0.0
    %5758 = vmatpush1.xpose.msra.mxu0 0.0
    %5759 = vmatprep.subr.mxu0 0.0
    %5760 = vmatpush1.xpose.msra.mxu0 0.0
    %5761 = vmatprep.subr.mxu0 0.0
    %5762 = vmatpush1.xpose.msra.mxu0 0.0
    %5763 = vmatprep.subr.mxu0 0.0
    %5764 = vmatpush1.xpose.msra.mxu0 0.0
    %5765 = vmatprep.subr.mxu0 0.0
    %5766 = vmatpush1.xpose.msra.mxu0 0.0
    %5767 = vmatprep.subr.mxu0 0.0
    %5768 = vmatpush1.xpose.msra.mxu0 0.0
    %5769 = vmatprep.subr.mxu0 0.0
    %5770 = vmatpush1.xpose.msra.mxu0 0.0
    %5771 = vmatprep.subr.mxu0 0.0
    %5772 = vmatpush1.xpose.msra.mxu0 0.0
    %5773 = vmatprep.subr.mxu0 0.0
    %5774 = vmatpush1.xpose.msra.mxu0 %v5743
    %5775 = vmatprep.subr.mxu0 0.0
    %5776 = vmatpush1.xpose.msra.mxu0 %v5741
    %5777 = vmatprep.subr.mxu0 0.0
    %5778 = vmatpush2.xpose.msra.mxu0 0.0
    %5779 = vmatprep.subr.mxu0 0.0
    %5780 = vmatpush2.xpose.msra.mxu0 0.0
    %5781 = vmatprep.subr.mxu0 0.0
    %5782 = vmatpush2.xpose.msra.mxu0 0.0
    %5783 = vmatprep.subr.mxu0 0.0
    %5784 = vmatpush2.xpose.msra.mxu0 0.0
    %5785 = vmatprep.subr.mxu0 0.0
    %5786 = vmatpush2.xpose.msra.mxu0 0.0
    %5787 = vmatprep.subr.mxu0 0.0
    %5788 = vmatpush2.xpose.msra.mxu0 0.0
    %5789 = vmatprep.subr.mxu0 0.0
    %5790 = vmatpush2.xpose.msra.mxu0 0.0
    %5791 = vmatprep.subr.mxu0 0.0
    %5792 = vmatpush2.xpose.msra.mxu0 0.0
    %5793 = vmatprep.subr.mxu0 0.0
    %5794 = vmatpush2.xpose.msra.mxu0 0.0
    %5795 = vmatprep.subr.mxu0 0.0
    %5796 = vmatpush2.xpose.msra.mxu0 0.0
    %5797 = vmatprep.subr.mxu0 0.0
    %5798 = vmatpush2.xpose.msra.mxu0 0.0
    %5799 = vmatprep.subr.mxu0 0.0
    %5800 = vmatpush2.xpose.msra.mxu0 0.0
    %5801 = vmatprep.subr.mxu0 0.0
    %5802 = vmatpush2.xpose.msra.mxu0 0.0
    %5803 = vmatprep.subr.mxu0 0.0
    %5804 = vmatpush2.xpose.msra.mxu0 0.0
    %5805 = vmatprep.subr.mxu0 0.0
    %5806 = vmatpush2.xpose.msra.mxu0 0.0
    %5807 = vmatprep.subr.mxu0 0.0
    %5808 = vmatpush2.xpose.msra.mxu0 0.0
    %5809 = vmatprep.mubr.f32.mxu0 0.0
    %5810 = vmatmul.mubr.f32.gmra.mxu0 %v5737
    %v5811 = vpop.f32.mrf.mxu0
    %v5812 = vadd.f32 0.0, %v5811
    %v5813 = vpop.f32.mrf.mxu0
    %5814 = vmatprep.mubr.f32.mxu0 0.0
    %5815 = vmatmul.mubr.f32.gmra.mxu0 %v5739
    %v5816 = vpop.f32.mrf.mxu0
    %v5817 = vadd.f32 0.0, %v5816
    %v5818 = vpop.f32.mrf.mxu0
    %5819 = vdwg.mxu0
    %v5820 = vmul.f32 %v5812, 0.35355338
    %v5821 = vmul.f32 %v5817, 0.35355338
    %v5822 = vsel %vm65, -inf, %v5820
    %v5823 = vsel %vm66, -inf, %v5821
    %v5824 = vsel %vm584, %v5822, -inf
    %5825 = vmax.xlane.f32.xlu0 %v5824
    %v5826 = vpop.xlane.xlu0 %5825
    %v5827 = vsel %vm584, %v5823, -inf
    %5828 = vmax.xlane.f32.xlu0 %v5827
    %v5829 = vpop.xlane.xlu0 %5828
    %v5830 = vsub.f32 %v5822, %v5826
    %v5831 = vsub.f32 %v5823, %v5829
    %v5832 = vmul.f32 %v5830, 1.442695
    %v5833 = vpow.pop %v5832
    %v5834 = vmul.f32 %v5831, 1.442695
    %v5835 = vpow.pop %v5834
    %v5836 = vsel %vm584, %v5833, 0.0
    %5837 = vadd.xlane.f32.xlu0 %v5836
    %v5838 = vpop.xlane.xlu0 %5837
    %v5839 = vsel %vm584, %v5835, 0.0
    %5840 = vadd.xlane.f32.xlu0 %v5839
    %v5841 = vpop.xlane.xlu0 %5840
    %v5842 = vrcp.pop %v5838
    %v5843 = vrcp.pop %v5841
    %v5844 = vmul.f32 %v5833, %v5842
    %v5845 = vmul.f32 %v5835, %v5843
    %5846 = vrot.lane.b32.xlu0 %v3803, 16
    %v5847 = vpop.permute.xlu0 %5846
    %5848 = vrot.lane.b32.xlu0 %v3809, 16
    %v5849 = vpop.permute.xlu0 %5848
    %v5853 = vsel %vm584, %v5844, 0
    %v5856 = vsel %vm584, %v5845, 0
    %5858 = vmatprep.subr.mxu0 0.0
    %5859 = vmatpush1.msra.mxu0 0.0
    %5860 = vmatprep.subr.mxu0 0.0
    %5861 = vmatpush1.msra.mxu0 0.0
    %5862 = vmatprep.subr.mxu0 0.0
    %5863 = vmatpush1.msra.mxu0 0.0
    %5864 = vmatprep.subr.mxu0 0.0
    %5865 = vmatpush1.msra.mxu0 0.0
    %5866 = vmatprep.subr.mxu0 0.0
    %5867 = vmatpush1.msra.mxu0 0.0
    %5868 = vmatprep.subr.mxu0 0.0
    %5869 = vmatpush1.msra.mxu0 0.0
    %5870 = vmatprep.subr.mxu0 0.0
    %5871 = vmatpush1.msra.mxu0 0.0
    %5872 = vmatprep.subr.mxu0 0.0
    %5873 = vmatpush1.msra.mxu0 0.0
    %5874 = vmatprep.subr.mxu0 0.0
    %5875 = vmatpush1.msra.mxu0 0.0
    %5876 = vmatprep.subr.mxu0 0.0
    %5877 = vmatpush1.msra.mxu0 0.0
    %5878 = vmatprep.subr.mxu0 0.0
    %5879 = vmatpush1.msra.mxu0 0.0
    %5880 = vmatprep.subr.mxu0 0.0
    %5881 = vmatpush1.msra.mxu0 0.0
    %5882 = vmatprep.subr.mxu0 0.0
    %5883 = vmatpush1.msra.mxu0 0.0
    %5884 = vmatprep.subr.mxu0 0.0
    %5885 = vmatpush1.msra.mxu0 0.0
    %5886 = vmatprep.subr.mxu0 0.0
    %5887 = vmatpush1.msra.mxu0 %v5849
    %5888 = vmatprep.subr.mxu0 0.0
    %5889 = vmatpush1.msra.mxu0 %v5847
    %5890 = vmatprep.subr.mxu0 0.0
    %5891 = vmatpush2.msra.mxu0 0.0
    %5892 = vmatprep.subr.mxu0 0.0
    %5893 = vmatpush2.msra.mxu0 0.0
    %5894 = vmatprep.subr.mxu0 0.0
    %5895 = vmatpush2.msra.mxu0 0.0
    %5896 = vmatprep.subr.mxu0 0.0
    %5897 = vmatpush2.msra.mxu0 0.0
    %5898 = vmatprep.subr.mxu0 0.0
    %5899 = vmatpush2.msra.mxu0 0.0
    %5900 = vmatprep.subr.mxu0 0.0
    %5901 = vmatpush2.msra.mxu0 0.0
    %5902 = vmatprep.subr.mxu0 0.0
    %5903 = vmatpush2.msra.mxu0 0.0
    %5904 = vmatprep.subr.mxu0 0.0
    %5905 = vmatpush2.msra.mxu0 0.0
    %5906 = vmatprep.subr.mxu0 0.0
    %5907 = vmatpush2.msra.mxu0 0.0
    %5908 = vmatprep.subr.mxu0 0.0
    %5909 = vmatpush2.msra.mxu0 0.0
    %5910 = vmatprep.subr.mxu0 0.0
    %5911 = vmatpush2.msra.mxu0 0.0
    %5912 = vmatprep.subr.mxu0 0.0
    %5913 = vmatpush2.msra.mxu0 0.0
    %5914 = vmatprep.subr.mxu0 0.0
    %5915 = vmatpush2.msra.mxu0 0.0
    %5916 = vmatprep.subr.mxu0 0.0
    %5917 = vmatpush2.msra.mxu0 0.0
    %5918 = vmatprep.subr.mxu0 0.0
    %5919 = vmatpush2.msra.mxu0 0.0
    %5920 = vmatprep.subr.mxu0 0.0
    %5921 = vmatpush2.msra.mxu0 0.0
    %5922 = vmatprep.mubr.f32.mxu0 0.0
    %5923 = vmatmul.mubr.f32.gmra.mxu0 %v5853
    %v5924 = vpop.f32.mrf.mxu0
    %v5925 = vadd.f32 0.0, %v5924
    %v5926 = vpop.f32.mrf.mxu0
    %5927 = vmatprep.mubr.f32.mxu0 0.0
    %5928 = vmatmul.mubr.f32.gmra.mxu0 %v5856
    %v5929 = vpop.f32.mrf.mxu0
    %v5930 = vadd.f32 0.0, %v5929
    %v5931 = vpop.f32.mrf.mxu0
    %5932 = vdwg.mxu0
    %5933 = vrot.lane.b32.xlu0 %v3920, 104
    %v5934 = vpop.permute.xlu0 %5933
    %5935 = vrot.lane.b32.xlu0 %v3921, 104
    %v5936 = vpop.permute.xlu0 %5935
    %5937 = vrot.lane.b32.xlu0 %v4049, 56
    %v5938 = vpop.permute.xlu0 %5937
    %5939 = vrot.lane.b32.xlu0 %v4050, 56
    %v5940 = vpop.permute.xlu0 %5939
    %v5941 = vsel %vm494, %v5934, 0
    %v5943 = vsel %vm494, %v5936, 0
    %v5945 = vsel %vm494, %v5938, 0
    %v5947 = vsel %vm494, %v5940, 0
    %5949 = vmatprep.subr.mxu0 0.0
    %5950 = vmatpush1.xpose.msra.mxu0 0.0
    %5951 = vmatprep.subr.mxu0 0.0
    %5952 = vmatpush1.xpose.msra.mxu0 0.0
    %5953 = vmatprep.subr.mxu0 0.0
    %5954 = vmatpush1.xpose.msra.mxu0 0.0
    %5955 = vmatprep.subr.mxu0 0.0
    %5956 = vmatpush1.xpose.msra.mxu0 0.0
    %5957 = vmatprep.subr.mxu0 0.0
    %5958 = vmatpush1.xpose.msra.mxu0 0.0
    %5959 = vmatprep.subr.mxu0 0.0
    %5960 = vmatpush1.xpose.msra.mxu0 0.0
    %5961 = vmatprep.subr.mxu0 0.0
    %5962 = vmatpush1.xpose.msra.mxu0 0.0
    %5963 = vmatprep.subr.mxu0 0.0
    %5964 = vmatpush1.xpose.msra.mxu0 0.0
    %5965 = vmatprep.subr.mxu0 0.0
    %5966 = vmatpush1.xpose.msra.mxu0 0.0
    %5967 = vmatprep.subr.mxu0 0.0
    %5968 = vmatpush1.xpose.msra.mxu0 0.0
    %5969 = vmatprep.subr.mxu0 0.0
    %5970 = vmatpush1.xpose.msra.mxu0 0.0
    %5971 = vmatprep.subr.mxu0 0.0
    %5972 = vmatpush1.xpose.msra.mxu0 0.0
    %5973 = vmatprep.subr.mxu0 0.0
    %5974 = vmatpush1.xpose.msra.mxu0 0.0
    %5975 = vmatprep.subr.mxu0 0.0
    %5976 = vmatpush1.xpose.msra.mxu0 0.0
    %5977 = vmatprep.subr.mxu0 0.0
    %5978 = vmatpush1.xpose.msra.mxu0 %v5947
    %5979 = vmatprep.subr.mxu0 0.0
    %5980 = vmatpush1.xpose.msra.mxu0 %v5945
    %5981 = vmatprep.subr.mxu0 0.0
    %5982 = vmatpush2.xpose.msra.mxu0 0.0
    %5983 = vmatprep.subr.mxu0 0.0
    %5984 = vmatpush2.xpose.msra.mxu0 0.0
    %5985 = vmatprep.subr.mxu0 0.0
    %5986 = vmatpush2.xpose.msra.mxu0 0.0
    %5987 = vmatprep.subr.mxu0 0.0
    %5988 = vmatpush2.xpose.msra.mxu0 0.0
    %5989 = vmatprep.subr.mxu0 0.0
    %5990 = vmatpush2.xpose.msra.mxu0 0.0
    %5991 = vmatprep.subr.mxu0 0.0
    %5992 = vmatpush2.xpose.msra.mxu0 0.0
    %5993 = vmatprep.subr.mxu0 0.0
    %5994 = vmatpush2.xpose.msra.mxu0 0.0
    %5995 = vmatprep.subr.mxu0 0.0
    %5996 = vmatpush2.xpose.msra.mxu0 0.0
    %5997 = vmatprep.subr.mxu0 0.0
    %5998 = vmatpush2.xpose.msra.mxu0 0.0
    %5999 = vmatprep.subr.mxu0 0.0
    %6000 = vmatpush2.xpose.msra.mxu0 0.0
    %6001 = vmatprep.subr.mxu0 0.0
    %6002 = vmatpush2.xpose.msra.mxu0 0.0
    %6003 = vmatprep.subr.mxu0 0.0
    %6004 = vmatpush2.xpose.msra.mxu0 0.0
    %6005 = vmatprep.subr.mxu0 0.0
    %6006 = vmatpush2.xpose.msra.mxu0 0.0
    %6007 = vmatprep.subr.mxu0 0.0
    %6008 = vmatpush2.xpose.msra.mxu0 0.0
    %6009 = vmatprep.subr.mxu0 0.0
    %6010 = vmatpush2.xpose.msra.mxu0 0.0
    %6011 = vmatprep.subr.mxu0 0.0
    %6012 = vmatpush2.xpose.msra.mxu0 0.0
    %6013 = vmatprep.mubr.f32.mxu0 0.0
    %6014 = vmatmul.mubr.f32.gmra.mxu0 %v5941
    %v6015 = vpop.f32.mrf.mxu0
    %v6016 = vadd.f32 0.0, %v6015
    %v6017 = vpop.f32.mrf.mxu0
    %6018 = vmatprep.mubr.f32.mxu0 0.0
    %6019 = vmatmul.mubr.f32.gmra.mxu0 %v5943
    %v6020 = vpop.f32.mrf.mxu0
    %v6021 = vadd.f32 0.0, %v6020
    %v6022 = vpop.f32.mrf.mxu0
    %6023 = vdwg.mxu0
    %v6024 = vmul.f32 %v6016, 0.35355338
    %v6025 = vmul.f32 %v6021, 0.35355338
    %v6026 = vsel %vm65, -inf, %v6024
    %v6027 = vsel %vm66, -inf, %v6025
    %v6028 = vsel %vm584, %v6026, -inf
    %6029 = vmax.xlane.f32.xlu0 %v6028
    %v6030 = vpop.xlane.xlu0 %6029
    %v6031 = vsel %vm584, %v6027, -inf
    %6032 = vmax.xlane.f32.xlu0 %v6031
    %v6033 = vpop.xlane.xlu0 %6032
    %v6034 = vsub.f32 %v6026, %v6030
    %v6035 = vsub.f32 %v6027, %v6033
    %v6036 = vmul.f32 %v6034, 1.442695
    %v6037 = vpow.pop %v6036
    %v6038 = vmul.f32 %v6035, 1.442695
    %v6039 = vpow.pop %v6038
    %v6040 = vsel %vm584, %v6037, 0.0
    %6041 = vadd.xlane.f32.xlu0 %v6040
    %v6042 = vpop.xlane.xlu0 %6041
    %v6043 = vsel %vm584, %v6039, 0.0
    %6044 = vadd.xlane.f32.xlu0 %v6043
    %v6045 = vpop.xlane.xlu0 %6044
    %v6046 = vrcp.pop %v6042
    %v6047 = vrcp.pop %v6045
    %v6048 = vmul.f32 %v6037, %v6046
    %v6049 = vmul.f32 %v6039, %v6047
    %6050 = vrot.lane.b32.xlu0 %v3803, 8
    %v6051 = vpop.permute.xlu0 %6050
    %6052 = vrot.lane.b32.xlu0 %v3809, 8
    %v6053 = vpop.permute.xlu0 %6052
    %v6057 = vsel %vm584, %v6048, 0
    %v6060 = vsel %vm584, %v6049, 0
    %6062 = vmatprep.subr.mxu0 0.0
    %6063 = vmatpush1.msra.mxu0 0.0
    %6064 = vmatprep.subr.mxu0 0.0
    %6065 = vmatpush1.msra.mxu0 0.0
    %6066 = vmatprep.subr.mxu0 0.0
    %6067 = vmatpush1.msra.mxu0 0.0
    %6068 = vmatprep.subr.mxu0 0.0
    %6069 = vmatpush1.msra.mxu0 0.0
    %6070 = vmatprep.subr.mxu0 0.0
    %6071 = vmatpush1.msra.mxu0 0.0
    %6072 = vmatprep.subr.mxu0 0.0
    %6073 = vmatpush1.msra.mxu0 0.0
    %6074 = vmatprep.subr.mxu0 0.0
    %6075 = vmatpush1.msra.mxu0 0.0
    %6076 = vmatprep.subr.mxu0 0.0
    %6077 = vmatpush1.msra.mxu0 0.0
    %6078 = vmatprep.subr.mxu0 0.0
    %6079 = vmatpush1.msra.mxu0 0.0
    %6080 = vmatprep.subr.mxu0 0.0
    %6081 = vmatpush1.msra.mxu0 0.0
    %6082 = vmatprep.subr.mxu0 0.0
    %6083 = vmatpush1.msra.mxu0 0.0
    %6084 = vmatprep.subr.mxu0 0.0
    %6085 = vmatpush1.msra.mxu0 0.0
    %6086 = vmatprep.subr.mxu0 0.0
    %6087 = vmatpush1.msra.mxu0 0.0
    %6088 = vmatprep.subr.mxu0 0.0
    %6089 = vmatpush1.msra.mxu0 0.0
    %6090 = vmatprep.subr.mxu0 0.0
    %6091 = vmatpush1.msra.mxu0 %v6053
    %6092 = vmatprep.subr.mxu0 0.0
    %6093 = vmatpush1.msra.mxu0 %v6051
    %6094 = vmatprep.subr.mxu0 0.0
    %6095 = vmatpush2.msra.mxu0 0.0
    %6096 = vmatprep.subr.mxu0 0.0
    %6097 = vmatpush2.msra.mxu0 0.0
    %6098 = vmatprep.subr.mxu0 0.0
    %6099 = vmatpush2.msra.mxu0 0.0
    %6100 = vmatprep.subr.mxu0 0.0
    %6101 = vmatpush2.msra.mxu0 0.0
    %6102 = vmatprep.subr.mxu0 0.0
    %6103 = vmatpush2.msra.mxu0 0.0
    %6104 = vmatprep.subr.mxu0 0.0
    %6105 = vmatpush2.msra.mxu0 0.0
    %6106 = vmatprep.subr.mxu0 0.0
    %6107 = vmatpush2.msra.mxu0 0.0
    %6108 = vmatprep.subr.mxu0 0.0
    %6109 = vmatpush2.msra.mxu0 0.0
    %6110 = vmatprep.subr.mxu0 0.0
    %6111 = vmatpush2.msra.mxu0 0.0
    %6112 = vmatprep.subr.mxu0 0.0
    %6113 = vmatpush2.msra.mxu0 0.0
    %6114 = vmatprep.subr.mxu0 0.0
    %6115 = vmatpush2.msra.mxu0 0.0
    %6116 = vmatprep.subr.mxu0 0.0
    %6117 = vmatpush2.msra.mxu0 0.0
    %6118 = vmatprep.subr.mxu0 0.0
    %6119 = vmatpush2.msra.mxu0 0.0
    %6120 = vmatprep.subr.mxu0 0.0
    %6121 = vmatpush2.msra.mxu0 0.0
    %6122 = vmatprep.subr.mxu0 0.0
    %6123 = vmatpush2.msra.mxu0 0.0
    %6124 = vmatprep.subr.mxu0 0.0
    %6125 = vmatpush2.msra.mxu0 0.0
    %6126 = vmatprep.mubr.f32.mxu0 0.0
    %6127 = vmatmul.mubr.f32.gmra.mxu0 %v6057
    %v6128 = vpop.f32.mrf.mxu0
    %v6129 = vadd.f32 0.0, %v6128
    %v6130 = vpop.f32.mrf.mxu0
    %6131 = vmatprep.mubr.f32.mxu0 0.0
    %6132 = vmatmul.mubr.f32.gmra.mxu0 %v6060
    %v6133 = vpop.f32.mrf.mxu0
    %v6134 = vadd.f32 0.0, %v6133
    %v6135 = vpop.f32.mrf.mxu0
    %6136 = vdwg.mxu0
    %6137 = vrot.lane.b32.xlu0 %v3920, 96
    %v6138 = vpop.permute.xlu0 %6137
    %6139 = vrot.lane.b32.xlu0 %v3921, 96
    %v6140 = vpop.permute.xlu0 %6139
    %6141 = vrot.lane.b32.xlu0 %v4049, 48
    %v6142 = vpop.permute.xlu0 %6141
    %6143 = vrot.lane.b32.xlu0 %v4050, 48
    %v6144 = vpop.permute.xlu0 %6143
    %v6145 = vsel %vm494, %v6138, 0
    %v6147 = vsel %vm494, %v6140, 0
    %v6149 = vsel %vm494, %v6142, 0
    %v6151 = vsel %vm494, %v6144, 0
    %6153 = vmatprep.subr.mxu0 0.0
    %6154 = vmatpush1.xpose.msra.mxu0 0.0
    %6155 = vmatprep.subr.mxu0 0.0
    %6156 = vmatpush1.xpose.msra.mxu0 0.0
    %6157 = vmatprep.subr.mxu0 0.0
    %6158 = vmatpush1.xpose.msra.mxu0 0.0
    %6159 = vmatprep.subr.mxu0 0.0
    %6160 = vmatpush1.xpose.msra.mxu0 0.0
    %6161 = vmatprep.subr.mxu0 0.0
    %6162 = vmatpush1.xpose.msra.mxu0 0.0
    %6163 = vmatprep.subr.mxu0 0.0
    %6164 = vmatpush1.xpose.msra.mxu0 0.0
    %6165 = vmatprep.subr.mxu0 0.0
    %6166 = vmatpush1.xpose.msra.mxu0 0.0
    %6167 = vmatprep.subr.mxu0 0.0
    %6168 = vmatpush1.xpose.msra.mxu0 0.0
    %6169 = vmatprep.subr.mxu0 0.0
    %6170 = vmatpush1.xpose.msra.mxu0 0.0
    %6171 = vmatprep.subr.mxu0 0.0
    %6172 = vmatpush1.xpose.msra.mxu0 0.0
    %6173 = vmatprep.subr.mxu0 0.0
    %6174 = vmatpush1.xpose.msra.mxu0 0.0
    %6175 = vmatprep.subr.mxu0 0.0
    %6176 = vmatpush1.xpose.msra.mxu0 0.0
    %6177 = vmatprep.subr.mxu0 0.0
    %6178 = vmatpush1.xpose.msra.mxu0 0.0
    %6179 = vmatprep.subr.mxu0 0.0
    %6180 = vmatpush1.xpose.msra.mxu0 0.0
    %6181 = vmatprep.subr.mxu0 0.0
    %6182 = vmatpush1.xpose.msra.mxu0 %v6151
    %6183 = vmatprep.subr.mxu0 0.0
    %6184 = vmatpush1.xpose.msra.mxu0 %v6149
    %6185 = vmatprep.subr.mxu0 0.0
    %6186 = vmatpush2.xpose.msra.mxu0 0.0
    %6187 = vmatprep.subr.mxu0 0.0
    %6188 = vmatpush2.xpose.msra.mxu0 0.0
    %6189 = vmatprep.subr.mxu0 0.0
    %6190 = vmatpush2.xpose.msra.mxu0 0.0
    %6191 = vmatprep.subr.mxu0 0.0
    %6192 = vmatpush2.xpose.msra.mxu0 0.0
    %6193 = vmatprep.subr.mxu0 0.0
    %6194 = vmatpush2.xpose.msra.mxu0 0.0
    %6195 = vmatprep.subr.mxu0 0.0
    %6196 = vmatpush2.xpose.msra.mxu0 0.0
    %6197 = vmatprep.subr.mxu0 0.0
    %6198 = vmatpush2.xpose.msra.mxu0 0.0
    %6199 = vmatprep.subr.mxu0 0.0
    %6200 = vmatpush2.xpose.msra.mxu0 0.0
    %6201 = vmatprep.subr.mxu0 0.0
    %6202 = vmatpush2.xpose.msra.mxu0 0.0
    %6203 = vmatprep.subr.mxu0 0.0
    %6204 = vmatpush2.xpose.msra.mxu0 0.0
    %6205 = vmatprep.subr.mxu0 0.0
    %6206 = vmatpush2.xpose.msra.mxu0 0.0
    %6207 = vmatprep.subr.mxu0 0.0
    %6208 = vmatpush2.xpose.msra.mxu0 0.0
    %6209 = vmatprep.subr.mxu0 0.0
    %6210 = vmatpush2.xpose.msra.mxu0 0.0
    %6211 = vmatprep.subr.mxu0 0.0
    %6212 = vmatpush2.xpose.msra.mxu0 0.0
    %6213 = vmatprep.subr.mxu0 0.0
    %6214 = vmatpush2.xpose.msra.mxu0 0.0
    %6215 = vmatprep.subr.mxu0 0.0
    %6216 = vmatpush2.xpose.msra.mxu0 0.0
    %6217 = vmatprep.mubr.f32.mxu0 0.0
    %6218 = vmatmul.mubr.f32.gmra.mxu0 %v6145
    %v6219 = vpop.f32.mrf.mxu0
    %v6220 = vadd.f32 0.0, %v6219
    %v6221 = vpop.f32.mrf.mxu0
    %6222 = vmatprep.mubr.f32.mxu0 0.0
    %6223 = vmatmul.mubr.f32.gmra.mxu0 %v6147
    %v6224 = vpop.f32.mrf.mxu0
    %v6225 = vadd.f32 0.0, %v6224
    %v6226 = vpop.f32.mrf.mxu0
    %6227 = vdwg.mxu0
    %v6228 = vmul.f32 %v6220, 0.35355338
    %v6229 = vmul.f32 %v6225, 0.35355338
    %v6230 = vsel %vm65, -inf, %v6228
    %v6231 = vsel %vm66, -inf, %v6229
    %v6232 = vsel %vm584, %v6230, -inf
    %6233 = vmax.xlane.f32.xlu0 %v6232
    %v6234 = vpop.xlane.xlu0 %6233
    %v6235 = vsel %vm584, %v6231, -inf
    %6236 = vmax.xlane.f32.xlu0 %v6235
    %v6237 = vpop.xlane.xlu0 %6236
    %v6238 = vsub.f32 %v6230, %v6234
    %v6239 = vsub.f32 %v6231, %v6237
    %v6240 = vmul.f32 %v6238, 1.442695
    %v6241 = vpow.pop %v6240
    %v6242 = vmul.f32 %v6239, 1.442695
    %v6243 = vpow.pop %v6242
    %v6244 = vsel %vm584, %v6241, 0.0
    %6245 = vadd.xlane.f32.xlu0 %v6244
    %v6246 = vpop.xlane.xlu0 %6245
    %v6247 = vsel %vm584, %v6243, 0.0
    %6248 = vadd.xlane.f32.xlu0 %v6247
    %v6249 = vpop.xlane.xlu0 %6248
    %v6250 = vrcp.pop %v6246
    %v6251 = vrcp.pop %v6249
    %v6252 = vmul.f32 %v6241, %v6250
    %v6253 = vmul.f32 %v6243, %v6251
    %v6255 = vsel %vm584, %v6252, 0
    %v6258 = vsel %vm584, %v6253, 0
    %6260 = vmatprep.subr.mxu0 0.0
    %6261 = vmatpush1.msra.mxu0 0.0
    %6262 = vmatprep.subr.mxu0 0.0
    %6263 = vmatpush1.msra.mxu0 0.0
    %6264 = vmatprep.subr.mxu0 0.0
    %6265 = vmatpush1.msra.mxu0 0.0
    %6266 = vmatprep.subr.mxu0 0.0
    %6267 = vmatpush1.msra.mxu0 0.0
    %6268 = vmatprep.subr.mxu0 0.0
    %6269 = vmatpush1.msra.mxu0 0.0
    %6270 = vmatprep.subr.mxu0 0.0
    %6271 = vmatpush1.msra.mxu0 0.0
    %6272 = vmatprep.subr.mxu0 0.0
    %6273 = vmatpush1.msra.mxu0 0.0
    %6274 = vmatprep.subr.mxu0 0.0
    %6275 = vmatpush1.msra.mxu0 0.0
    %6276 = vmatprep.subr.mxu0 0.0
    %6277 = vmatpush1.msra.mxu0 0.0
    %6278 = vmatprep.subr.mxu0 0.0
    %6279 = vmatpush1.msra.mxu0 0.0
    %6280 = vmatprep.subr.mxu0 0.0
    %6281 = vmatpush1.msra.mxu0 0.0
    %6282 = vmatprep.subr.mxu0 0.0
    %6283 = vmatpush1.msra.mxu0 0.0
    %6284 = vmatprep.subr.mxu0 0.0
    %6285 = vmatpush1.msra.mxu0 0.0
    %6286 = vmatprep.subr.mxu0 0.0
    %6287 = vmatpush1.msra.mxu0 0.0
    %6288 = vmatprep.subr.mxu0 0.0
    %6289 = vmatpush1.msra.mxu0 %v3811
    %6290 = vmatprep.subr.mxu0 0.0
    %6291 = vmatpush1.msra.mxu0 %v3805
    %6292 = vmatprep.subr.mxu0 0.0
    %6293 = vmatpush2.msra.mxu0 0.0
    %6294 = vmatprep.subr.mxu0 0.0
    %6295 = vmatpush2.msra.mxu0 0.0
    %6296 = vmatprep.subr.mxu0 0.0
    %6297 = vmatpush2.msra.mxu0 0.0
    %6298 = vmatprep.subr.mxu0 0.0
    %6299 = vmatpush2.msra.mxu0 0.0
    %6300 = vmatprep.subr.mxu0 0.0
    %6301 = vmatpush2.msra.mxu0 0.0
    %6302 = vmatprep.subr.mxu0 0.0
    %6303 = vmatpush2.msra.mxu0 0.0
    %6304 = vmatprep.subr.mxu0 0.0
    %6305 = vmatpush2.msra.mxu0 0.0
    %6306 = vmatprep.subr.mxu0 0.0
    %6307 = vmatpush2.msra.mxu0 0.0
    %6308 = vmatprep.subr.mxu0 0.0
    %6309 = vmatpush2.msra.mxu0 0.0
    %6310 = vmatprep.subr.mxu0 0.0
    %6311 = vmatpush2.msra.mxu0 0.0
    %6312 = vmatprep.subr.mxu0 0.0
    %6313 = vmatpush2.msra.mxu0 0.0
    %6314 = vmatprep.subr.mxu0 0.0
    %6315 = vmatpush2.msra.mxu0 0.0
    %6316 = vmatprep.subr.mxu0 0.0
    %6317 = vmatpush2.msra.mxu0 0.0
    %6318 = vmatprep.subr.mxu0 0.0
    %6319 = vmatpush2.msra.mxu0 0.0
    %6320 = vmatprep.subr.mxu0 0.0
    %6321 = vmatpush2.msra.mxu0 0.0
    %6322 = vmatprep.subr.mxu0 0.0
    %6323 = vmatpush2.msra.mxu0 0.0
    %6324 = vmatprep.mubr.f32.mxu0 0.0
    %6325 = vmatmul.mubr.f32.gmra.mxu0 %v6255
    %v6326 = vpop.f32.mrf.mxu0
    %v6327 = vadd.f32 0.0, %v6326
    %v6328 = vpop.f32.mrf.mxu0
    %6329 = vmatprep.mubr.f32.mxu0 0.0
    %6330 = vmatmul.mubr.f32.gmra.mxu0 %v6258
    %v6331 = vpop.f32.mrf.mxu0
    %v6332 = vadd.f32 0.0, %v6331
    %v6333 = vpop.f32.mrf.mxu0
    %6334 = vdwg.mxu0
    %6335 = vrot.lane.b32.xlu0 %v3920, 88
    %v6336 = vpop.permute.xlu0 %6335
    %6337 = vrot.lane.b32.xlu0 %v3921, 88
    %v6338 = vpop.permute.xlu0 %6337
    %6339 = vrot.lane.b32.xlu0 %v4049, 40
    %v6340 = vpop.permute.xlu0 %6339
    %6341 = vrot.lane.b32.xlu0 %v4050, 40
    %v6342 = vpop.permute.xlu0 %6341
    %v6343 = vsel %vm494, %v6336, 0
    %v6345 = vsel %vm494, %v6338, 0
    %v6347 = vsel %vm494, %v6340, 0
    %v6349 = vsel %vm494, %v6342, 0
    %6351 = vmatprep.subr.mxu0 0.0
    %6352 = vmatpush1.xpose.msra.mxu0 0.0
    %6353 = vmatprep.subr.mxu0 0.0
    %6354 = vmatpush1.xpose.msra.mxu0 0.0
    %6355 = vmatprep.subr.mxu0 0.0
    %6356 = vmatpush1.xpose.msra.mxu0 0.0
    %6357 = vmatprep.subr.mxu0 0.0
    %6358 = vmatpush1.xpose.msra.mxu0 0.0
    %6359 = vmatprep.subr.mxu0 0.0
    %6360 = vmatpush1.xpose.msra.mxu0 0.0
    %6361 = vmatprep.subr.mxu0 0.0
    %6362 = vmatpush1.xpose.msra.mxu0 0.0
    %6363 = vmatprep.subr.mxu0 0.0
    %6364 = vmatpush1.xpose.msra.mxu0 0.0
    %6365 = vmatprep.subr.mxu0 0.0
    %6366 = vmatpush1.xpose.msra.mxu0 0.0
    %6367 = vmatprep.subr.mxu0 0.0
    %6368 = vmatpush1.xpose.msra.mxu0 0.0
    %6369 = vmatprep.subr.mxu0 0.0
    %6370 = vmatpush1.xpose.msra.mxu0 0.0
    %6371 = vmatprep.subr.mxu0 0.0
    %6372 = vmatpush1.xpose.msra.mxu0 0.0
    %6373 = vmatprep.subr.mxu0 0.0
    %6374 = vmatpush1.xpose.msra.mxu0 0.0
    %6375 = vmatprep.subr.mxu0 0.0
    %6376 = vmatpush1.xpose.msra.mxu0 0.0
    %6377 = vmatprep.subr.mxu0 0.0
    %6378 = vmatpush1.xpose.msra.mxu0 0.0
    %6379 = vmatprep.subr.mxu0 0.0
    %6380 = vmatpush1.xpose.msra.mxu0 %v6349
    %6381 = vmatprep.subr.mxu0 0.0
    %6382 = vmatpush1.xpose.msra.mxu0 %v6347
    %6383 = vmatprep.subr.mxu0 0.0
    %6384 = vmatpush2.xpose.msra.mxu0 0.0
    %6385 = vmatprep.subr.mxu0 0.0
    %6386 = vmatpush2.xpose.msra.mxu0 0.0
    %6387 = vmatprep.subr.mxu0 0.0
    %6388 = vmatpush2.xpose.msra.mxu0 0.0
    %6389 = vmatprep.subr.mxu0 0.0
    %6390 = vmatpush2.xpose.msra.mxu0 0.0
    %6391 = vmatprep.subr.mxu0 0.0
    %6392 = vmatpush2.xpose.msra.mxu0 0.0
    %6393 = vmatprep.subr.mxu0 0.0
    %6394 = vmatpush2.xpose.msra.mxu0 0.0
    %6395 = vmatprep.subr.mxu0 0.0
    %6396 = vmatpush2.xpose.msra.mxu0 0.0
    %6397 = vmatprep.subr.mxu0 0.0
    %6398 = vmatpush2.xpose.msra.mxu0 0.0
    %6399 = vmatprep.subr.mxu0 0.0
    %6400 = vmatpush2.xpose.msra.mxu0 0.0
    %6401 = vmatprep.subr.mxu0 0.0
    %6402 = vmatpush2.xpose.msra.mxu0 0.0
    %6403 = vmatprep.subr.mxu0 0.0
    %6404 = vmatpush2.xpose.msra.mxu0 0.0
    %6405 = vmatprep.subr.mxu0 0.0
    %6406 = vmatpush2.xpose.msra.mxu0 0.0
    %6407 = vmatprep.subr.mxu0 0.0
    %6408 = vmatpush2.xpose.msra.mxu0 0.0
    %6409 = vmatprep.subr.mxu0 0.0
    %6410 = vmatpush2.xpose.msra.mxu0 0.0
    %6411 = vmatprep.subr.mxu0 0.0
    %6412 = vmatpush2.xpose.msra.mxu0 0.0
    %6413 = vmatprep.subr.mxu0 0.0
    %6414 = vmatpush2.xpose.msra.mxu0 0.0
    %6415 = vmatprep.mubr.f32.mxu0 0.0
    %6416 = vmatmul.mubr.f32.gmra.mxu0 %v6343
    %v6417 = vpop.f32.mrf.mxu0
    %v6418 = vadd.f32 0.0, %v6417
    %v6419 = vpop.f32.mrf.mxu0
    %6420 = vmatprep.mubr.f32.mxu0 0.0
    %6421 = vmatmul.mubr.f32.gmra.mxu0 %v6345
    %v6422 = vpop.f32.mrf.mxu0
    %v6423 = vadd.f32 0.0, %v6422
    %v6424 = vpop.f32.mrf.mxu0
    %6425 = vdwg.mxu0
    %v6426 = vmul.f32 %v6418, 0.35355338
    %v6427 = vmul.f32 %v6423, 0.35355338
    %v6428 = vsel %vm65, -inf, %v6426
    %v6429 = vsel %vm66, -inf, %v6427
    %v6430 = vsel %vm584, %v6428, -inf
    %6431 = vmax.xlane.f32.xlu0 %v6430
    %v6432 = vpop.xlane.xlu0 %6431
    %v6433 = vsel %vm584, %v6429, -inf
    %6434 = vmax.xlane.f32.xlu0 %v6433
    %v6435 = vpop.xlane.xlu0 %6434
    %v6436 = vsub.f32 %v6428, %v6432
    %v6437 = vsub.f32 %v6429, %v6435
    %v6438 = vmul.f32 %v6436, 1.442695
    %v6439 = vpow.pop %v6438
    %v6440 = vmul.f32 %v6437, 1.442695
    %v6441 = vpow.pop %v6440
    %v6442 = vsel %vm584, %v6439, 0.0
    %6443 = vadd.xlane.f32.xlu0 %v6442
    %v6444 = vpop.xlane.xlu0 %6443
    %v6445 = vsel %vm584, %v6441, 0.0
    %6446 = vadd.xlane.f32.xlu0 %v6445
    %v6447 = vpop.xlane.xlu0 %6446
    %v6448 = vrcp.pop %v6444
    %v6449 = vrcp.pop %v6447
    %v6450 = vmul.f32 %v6439, %v6448
    %v6451 = vmul.f32 %v6441, %v6449
    %6454 = vrot.lane.b32.xlu0 %v3805, 120
    %v6455 = vpop.permute.xlu0 %6454
    %6456 = vrot.lane.b32.xlu0 %v3811, 120
    %v6457 = vpop.permute.xlu0 %6456
    %v6461 = vsel %vm584, %v6450, 0
    %v6464 = vsel %vm584, %v6451, 0
    %6466 = vmatprep.subr.mxu0 0.0
    %6467 = vmatpush1.msra.mxu0 0.0
    %6468 = vmatprep.subr.mxu0 0.0
    %6469 = vmatpush1.msra.mxu0 0.0
    %6470 = vmatprep.subr.mxu0 0.0
    %6471 = vmatpush1.msra.mxu0 0.0
    %6472 = vmatprep.subr.mxu0 0.0
    %6473 = vmatpush1.msra.mxu0 0.0
    %6474 = vmatprep.subr.mxu0 0.0
    %6475 = vmatpush1.msra.mxu0 0.0
    %6476 = vmatprep.subr.mxu0 0.0
    %6477 = vmatpush1.msra.mxu0 0.0
    %6478 = vmatprep.subr.mxu0 0.0
    %6479 = vmatpush1.msra.mxu0 0.0
    %6480 = vmatprep.subr.mxu0 0.0
    %6481 = vmatpush1.msra.mxu0 0.0
    %6482 = vmatprep.subr.mxu0 0.0
    %6483 = vmatpush1.msra.mxu0 0.0
    %6484 = vmatprep.subr.mxu0 0.0
    %6485 = vmatpush1.msra.mxu0 0.0
    %6486 = vmatprep.subr.mxu0 0.0
    %6487 = vmatpush1.msra.mxu0 0.0
    %6488 = vmatprep.subr.mxu0 0.0
    %6489 = vmatpush1.msra.mxu0 0.0
    %6490 = vmatprep.subr.mxu0 0.0
    %6491 = vmatpush1.msra.mxu0 0.0
    %6492 = vmatprep.subr.mxu0 0.0
    %6493 = vmatpush1.msra.mxu0 0.0
    %6494 = vmatprep.subr.mxu0 0.0
    %6495 = vmatpush1.msra.mxu0 %v6457
    %6496 = vmatprep.subr.mxu0 0.0
    %6497 = vmatpush1.msra.mxu0 %v6455
    %6498 = vmatprep.subr.mxu0 0.0
    %6499 = vmatpush2.msra.mxu0 0.0
    %6500 = vmatprep.subr.mxu0 0.0
    %6501 = vmatpush2.msra.mxu0 0.0
    %6502 = vmatprep.subr.mxu0 0.0
    %6503 = vmatpush2.msra.mxu0 0.0
    %6504 = vmatprep.subr.mxu0 0.0
    %6505 = vmatpush2.msra.mxu0 0.0
    %6506 = vmatprep.subr.mxu0 0.0
    %6507 = vmatpush2.msra.mxu0 0.0
    %6508 = vmatprep.subr.mxu0 0.0
    %6509 = vmatpush2.msra.mxu0 0.0
    %6510 = vmatprep.subr.mxu0 0.0
    %6511 = vmatpush2.msra.mxu0 0.0
    %6512 = vmatprep.subr.mxu0 0.0
    %6513 = vmatpush2.msra.mxu0 0.0
    %6514 = vmatprep.subr.mxu0 0.0
    %6515 = vmatpush2.msra.mxu0 0.0
    %6516 = vmatprep.subr.mxu0 0.0
    %6517 = vmatpush2.msra.mxu0 0.0
    %6518 = vmatprep.subr.mxu0 0.0
    %6519 = vmatpush2.msra.mxu0 0.0
    %6520 = vmatprep.subr.mxu0 0.0
    %6521 = vmatpush2.msra.mxu0 0.0
    %6522 = vmatprep.subr.mxu0 0.0
    %6523 = vmatpush2.msra.mxu0 0.0
    %6524 = vmatprep.subr.mxu0 0.0
    %6525 = vmatpush2.msra.mxu0 0.0
    %6526 = vmatprep.subr.mxu0 0.0
    %6527 = vmatpush2.msra.mxu0 0.0
    %6528 = vmatprep.subr.mxu0 0.0
    %6529 = vmatpush2.msra.mxu0 0.0
    %6530 = vmatprep.mubr.f32.mxu0 0.0
    %6531 = vmatmul.mubr.f32.gmra.mxu0 %v6461
    %v6532 = vpop.f32.mrf.mxu0
    %v6533 = vadd.f32 0.0, %v6532
    %v6534 = vpop.f32.mrf.mxu0
    %6535 = vmatprep.mubr.f32.mxu0 0.0
    %6536 = vmatmul.mubr.f32.gmra.mxu0 %v6464
    %v6537 = vpop.f32.mrf.mxu0
    %v6538 = vadd.f32 0.0, %v6537
    %v6539 = vpop.f32.mrf.mxu0
    %6540 = vdwg.mxu0
    %6543 = vrot.lane.b32.xlu0 %v5721, 8
    %v6544 = vpop.permute.xlu0 %6543
    %6545 = vrot.lane.b32.xlu0 %v5726, 8
    %v6546 = vpop.permute.xlu0 %6545
    %6551 = vrot.lane.b32.xlu0 %v5925, 16
    %v6552 = vpop.permute.xlu0 %6551
    %6553 = vrot.lane.b32.xlu0 %v5930, 16
    %v6554 = vpop.permute.xlu0 %6553
    %6559 = vrot.lane.b32.xlu0 %v6129, 24
    %v6560 = vpop.permute.xlu0 %6559
    %6561 = vrot.lane.b32.xlu0 %v6134, 24
    %v6562 = vpop.permute.xlu0 %6561
    %6567 = vrot.lane.b32.xlu0 %v6327, 32
    %v6568 = vpop.permute.xlu0 %6567
    %6569 = vrot.lane.b32.xlu0 %v6332, 32
    %v6570 = vpop.permute.xlu0 %6569
    %6575 = vrot.lane.b32.xlu0 %v6533, 40
    %v6576 = vpop.permute.xlu0 %6575
    %6577 = vrot.lane.b32.xlu0 %v6538, 40
    %v6578 = vpop.permute.xlu0 %6577
    %v6581 = vsel %vm494, %v5517, %v6544
    %v6582 = vsel %vm494, %v5522, %v6546
    %v6583 = vsel %vm584, %v6581, %v6552
    %v6584 = vsel %vm584, %v6582, %v6554
    %v6585 = vsel %vm1754, %v6583, %v6560
    %v6586 = vsel %vm1754, %v6584, %v6562
    %v6587 = vsel %vm1757, %v6585, %v6568
    %v6588 = vsel %vm1757, %v6586, %v6570
    %v6589 = vsel %vm1760, %v6587, %v6576
    %v6590 = vsel %vm1760, %v6588, %v6578
    %s6591 = scalar_lea.vmem %s5, 48
    %v6592 = vld [vmem:[%s6591] sm:$0xff]
    %v6593 = vld [vmem:[%s6591 + $0x8] sm:$0xff]
    %v6594 = vld [vmem:[%s6591 + $0x10] sm:$0xff]
    %v6595 = vld [vmem:[%s6591 + $0x18] sm:$0xff]
    %v6596 = vld [vmem:[%s6591 + $0x20] sm:$0xff]
    %v6597 = vld [vmem:[%s6591 + $0x28] sm:$0xff]
    %v6599 = vsel %vm67, %v5319, 0
    %v6602 = vsel %vm67, %v5320, 0
    %v6605 = vsel %vm67, %v6589, 0
    %v6608 = vsel %vm67, %v6590, 0
    %6610 = vmatprep.subr.mxu0 0.0
    %6611 = vmatpush1.msra.mxu0 0.0
    %6612 = vmatprep.subr.mxu0 0.0
    %6613 = vmatpush1.msra.mxu0 0.0
    %6614 = vmatprep.subr.mxu0 0.0
    %6615 = vmatpush1.msra.mxu0 0.0
    %6616 = vmatprep.subr.mxu0 0.0
    %6617 = vmatpush1.msra.mxu0 0.0
    %6618 = vmatprep.subr.mxu0 0.0
    %6619 = vmatpush1.msra.mxu0 0.0
    %6620 = vmatprep.subr.mxu0 0.0
    %6621 = vmatpush1.msra.mxu0 0.0
    %6622 = vmatprep.subr.mxu0 0.0
    %6623 = vmatpush1.msra.mxu0 0.0
    %6624 = vmatprep.subr.mxu0 0.0
    %6625 = vmatpush1.msra.mxu0 0.0
    %6626 = vmatprep.subr.mxu0 0.0
    %6627 = vmatpush1.msra.mxu0 0.0
    %6628 = vmatprep.subr.mxu0 0.0
    %6629 = vmatpush1.msra.mxu0 0.0
    %6630 = vmatprep.subr.mxu0 0.0
    %6631 = vmatpush1.msra.mxu0 %v6597
    %6632 = vmatprep.subr.mxu0 0.0
    %6633 = vmatpush1.msra.mxu0 %v6596
    %6634 = vmatprep.subr.mxu0 0.0
    %6635 = vmatpush1.msra.mxu0 %v6595
    %6636 = vmatprep.subr.mxu0 0.0
    %6637 = vmatpush1.msra.mxu0 %v6594
    %6638 = vmatprep.subr.mxu0 0.0
    %6639 = vmatpush1.msra.mxu0 %v6593
    %6640 = vmatprep.subr.mxu0 0.0
    %6641 = vmatpush1.msra.mxu0 %v6592
    %6642 = vmatprep.subr.mxu0 0.0
    %6643 = vmatpush2.msra.mxu0 0.0
    %6644 = vmatprep.subr.mxu0 0.0
    %6645 = vmatpush2.msra.mxu0 0.0
    %6646 = vmatprep.subr.mxu0 0.0
    %6647 = vmatpush2.msra.mxu0 0.0
    %6648 = vmatprep.subr.mxu0 0.0
    %6649 = vmatpush2.msra.mxu0 0.0
    %6650 = vmatprep.subr.mxu0 0.0
    %6651 = vmatpush2.msra.mxu0 0.0
    %6652 = vmatprep.subr.mxu0 0.0
    %6653 = vmatpush2.msra.mxu0 0.0
    %6654 = vmatprep.subr.mxu0 0.0
    %6655 = vmatpush2.msra.mxu0 0.0
    %6656 = vmatprep.subr.mxu0 0.0
    %6657 = vmatpush2.msra.mxu0 0.0
    %6658 = vmatprep.subr.mxu0 0.0
    %6659 = vmatpush2.msra.mxu0 0.0
    %6660 = vmatprep.subr.mxu0 0.0
    %6661 = vmatpush2.msra.mxu0 0.0
    %6662 = vmatprep.subr.mxu0 0.0
    %6663 = vmatpush2.msra.mxu0 0.0
    %6664 = vmatprep.subr.mxu0 0.0
    %6665 = vmatpush2.msra.mxu0 0.0
    %6666 = vmatprep.subr.mxu0 0.0
    %6667 = vmatpush2.msra.mxu0 0.0
    %6668 = vmatprep.subr.mxu0 0.0
    %6669 = vmatpush2.msra.mxu0 0.0
    %6670 = vmatprep.subr.mxu0 0.0
    %6671 = vmatpush2.msra.mxu0 0.0
    %6672 = vmatprep.subr.mxu0 0.0
    %6673 = vmatpush2.msra.mxu0 0.0
    %6674 = vmatprep.mubr.f32.mxu0 0.0
    %6675 = vmatmul.mubr.f32.gmra.mxu0 %v6599
    %v6676 = vpop.f32.mrf.mxu0
    %v6677 = vadd.f32 0.0, %v6676
    %v6678 = vpop.f32.mrf.mxu0
    %6679 = vmatprep.mubr.f32.mxu0 0.0
    %6680 = vmatmul.mubr.f32.gmra.mxu0 %v6602
    %v6681 = vpop.f32.mrf.mxu0
    %v6682 = vadd.f32 0.0, %v6681
    %v6683 = vpop.f32.mrf.mxu0
    %6684 = vmatprep.mubr.f32.mxu0 0.0
    %6685 = vmatmul.mubr.f32.gmra.mxu0 %v6605
    %v6686 = vpop.f32.mrf.mxu0
    %v6687 = vadd.f32 0.0, %v6686
    %v6688 = vpop.f32.mrf.mxu0
    %6689 = vmatprep.mubr.f32.mxu0 0.0
    %6690 = vmatmul.mubr.f32.gmra.mxu0 %v6608
    %v6691 = vpop.f32.mrf.mxu0
    %v6692 = vadd.f32 0.0, %v6691
    %v6693 = vpop.f32.mrf.mxu0
    %6694 = vdwg.mxu0
    %v6695 = vadd.f32 %v3643, %v6677
    %v6696 = vadd.f32 %v3644, %v6682
    %v6697 = vadd.f32 %v3645, %v6687
    %v6698 = vadd.f32 %v3646, %v6692
    %v6699 = vsel %vm67, %v6695, 0.0
    %6700 = vadd.xlane.f32.xlu0 %v6699
    %v6701 = vpop.xlane.xlu0 %6700
    %v6702 = vsel %vm67, %v6696, 0.0
    %6703 = vadd.xlane.f32.xlu0 %v6702
    %v6704 = vpop.xlane.xlu0 %6703
    %v6705 = vsel %vm67, %v6697, 0.0
    %6706 = vadd.xlane.f32.xlu0 %v6705
    %v6707 = vpop.xlane.xlu0 %6706
    %v6708 = vsel %vm67, %v6698, 0.0
    %6709 = vadd.xlane.f32.xlu0 %v6708
    %v6710 = vpop.xlane.xlu0 %6709
    %v6711 = vmul.f32 %v6701, %v80
    %v6712 = vmul.f32 %v6704, %v80
    %v6713 = vmul.f32 %v6707, %v80
    %v6714 = vmul.f32 %v6710, %v80
    %v6715 = vsub.f32 %v6695, %v6711
    %v6716 = vsub.f32 %v6696, %v6712
    %v6717 = vsub.f32 %v6697, %v6713
    %v6718 = vsub.f32 %v6698, %v6714
    %v6719 = vmul.f32 %v6715, %v6715
    %v6720 = vmul.f32 %v6716, %v6716
    %v6721 = vmul.f32 %v6717, %v6717
    %v6722 = vmul.f32 %v6718, %v6718
    %v6723 = vsel %vm67, %v6719, 0.0
    %6724 = vadd.xlane.f32.xlu0 %v6723
    %v6725 = vpop.xlane.xlu0 %6724
    %v6726 = vsel %vm67, %v6720, 0.0
    %6727 = vadd.xlane.f32.xlu0 %v6726
    %v6728 = vpop.xlane.xlu0 %6727
    %v6729 = vsel %vm67, %v6721, 0.0
    %6730 = vadd.xlane.f32.xlu0 %v6729
    %v6731 = vpop.xlane.xlu0 %6730
    %v6732 = vsel %vm67, %v6722, 0.0
    %6733 = vadd.xlane.f32.xlu0 %v6732
    %v6734 = vpop.xlane.xlu0 %6733
    %v6735 = vmul.f32 %v6725, %v80
    %v6736 = vmul.f32 %v6728, %v80
    %v6737 = vmul.f32 %v6731, %v80
    %v6738 = vmul.f32 %v6734, %v80
    %v6739 = vadd.f32 %v6735, 1e-08
    %v6740 = vadd.f32 %v6736, 1e-08
    %v6741 = vadd.f32 %v6737, 1e-08
    %v6742 = vadd.f32 %v6738, 1e-08
    %v6743 = vrsqrt.pop %v6739
    %v6744 = vrsqrt.pop %v6740
    %v6745 = vrsqrt.pop %v6741
    %v6746 = vrsqrt.pop %v6742
    %v6747 = vmul.f32 %v6715, %v6743
    %v6748 = vmul.f32 %v6716, %v6744
    %v6749 = vmul.f32 %v6717, %v6745
    %v6750 = vmul.f32 %v6718, %v6746
    %s6751 = scalar_lea.vmem %s6, 96
    %v6752 = vld [vmem:[%s6751] sm:$0xff]
    %v6753 = vld [vmem:[%s6751 + $0x8] sm:$0xff]
    %v6754 = vld [vmem:[%s6751 + $0x10] sm:$0xff]
    %v6755 = vld [vmem:[%s6751 + $0x18] sm:$0xff]
    %v6756 = vld [vmem:[%s6751 + $0x20] sm:$0xff]
    %v6757 = vld [vmem:[%s6751 + $0x28] sm:$0xff]
    %v6758 = vld [vmem:[%s6751 + $0x30] sm:$0xff]
    %v6759 = vld [vmem:[%s6751 + $0x38] sm:$0xff]
    %v6760 = vld [vmem:[%s6751 + $0x40] sm:$0xff]
    %v6761 = vld [vmem:[%s6751 + $0x48] sm:$0xff]
    %v6762 = vld [vmem:[%s6751 + $0x50] sm:$0xff]
    %v6763 = vld [vmem:[%s6751 + $0x58] sm:$0xff]
    %v6765 = vsel %vm67, %v6747, 0
    %v6768 = vsel %vm67, %v6748, 0
    %v6771 = vsel %vm67, %v6749, 0
    %v6774 = vsel %vm67, %v6750, 0
    %6776 = vmatprep.subr.mxu0 0.0
    %6777 = vmatpush1.msra.mxu0 0.0
    %6778 = vmatprep.subr.mxu0 0.0
    %6779 = vmatpush1.msra.mxu0 0.0
    %6780 = vmatprep.subr.mxu0 0.0
    %6781 = vmatpush1.msra.mxu0 0.0
    %6782 = vmatprep.subr.mxu0 0.0
    %6783 = vmatpush1.msra.mxu0 0.0
    %6784 = vmatprep.subr.mxu0 0.0
    %6785 = vmatpush1.msra.mxu0 0.0
    %6786 = vmatprep.subr.mxu0 0.0
    %6787 = vmatpush1.msra.mxu0 0.0
    %6788 = vmatprep.subr.mxu0 0.0
    %6789 = vmatpush1.msra.mxu0 0.0
    %6790 = vmatprep.subr.mxu0 0.0
    %6791 = vmatpush1.msra.mxu0 0.0
    %6792 = vmatprep.subr.mxu0 0.0
    %6793 = vmatpush1.msra.mxu0 0.0
    %6794 = vmatprep.subr.mxu0 0.0
    %6795 = vmatpush1.msra.mxu0 0.0
    %6796 = vmatprep.subr.mxu0 %v6763
    %6797 = vmatpush1.msra.mxu0 %v6762
    %6798 = vmatprep.subr.mxu0 %v6761
    %6799 = vmatpush1.msra.mxu0 %v6760
    %6800 = vmatprep.subr.mxu0 %v6759
    %6801 = vmatpush1.msra.mxu0 %v6758
    %6802 = vmatprep.subr.mxu0 %v6757
    %6803 = vmatpush1.msra.mxu0 %v6756
    %6804 = vmatprep.subr.mxu0 %v6755
    %6805 = vmatpush1.msra.mxu0 %v6754
    %6806 = vmatprep.subr.mxu0 %v6753
    %6807 = vmatpush1.msra.mxu0 %v6752
    %6808 = vmatprep.subr.mxu0 0.0
    %6809 = vmatpush2.msra.mxu0 0.0
    %6810 = vmatprep.subr.mxu0 0.0
    %6811 = vmatpush2.msra.mxu0 0.0
    %6812 = vmatprep.subr.mxu0 0.0
    %6813 = vmatpush2.msra.mxu0 0.0
    %6814 = vmatprep.subr.mxu0 0.0
    %6815 = vmatpush2.msra.mxu0 0.0
    %6816 = vmatprep.subr.mxu0 0.0
    %6817 = vmatpush2.msra.mxu0 0.0
    %6818 = vmatprep.subr.mxu0 0.0
    %6819 = vmatpush2.msra.mxu0 0.0
    %6820 = vmatprep.subr.mxu0 0.0
    %6821 = vmatpush2.msra.mxu0 0.0
    %6822 = vmatprep.subr.mxu0 0.0
    %6823 = vmatpush2.msra.mxu0 0.0
    %6824 = vmatprep.subr.mxu0 0.0
    %6825 = vmatpush2.msra.mxu0 0.0
    %6826 = vmatprep.subr.mxu0 0.0
    %6827 = vmatpush2.msra.mxu0 0.0
    %6828 = vmatprep.subr.mxu0 0.0
    %6829 = vmatpush2.msra.mxu0 0.0
    %6830 = vmatprep.subr.mxu0 0.0
    %6831 = vmatpush2.msra.mxu0 0.0
    %6832 = vmatprep.subr.mxu0 0.0
    %6833 = vmatpush2.msra.mxu0 0.0
    %6834 = vmatprep.subr.mxu0 0.0
    %6835 = vmatpush2.msra.mxu0 0.0
    %6836 = vmatprep.subr.mxu0 0.0
    %6837 = vmatpush2.msra.mxu0 0.0
    %6838 = vmatprep.subr.mxu0 0.0
    %6839 = vmatpush2.msra.mxu0 0.0
    %6840 = vmatprep.mubr.f32.mxu0 0.0
    %6841 = vmatmul.mubr.f32.gmra.mxu0 %v6765
    %v6842 = vpop.f32.mrf.mxu0
    %v6843 = vadd.f32 0.0, %v6842
    %v6844 = vpop.f32.mrf.mxu0
    %v6845 = vadd.f32 0.0, %v6844
    %6846 = vmatprep.mubr.f32.mxu0 0.0
    %6847 = vmatmul.mubr.f32.gmra.mxu0 %v6768
    %v6848 = vpop.f32.mrf.mxu0
    %v6849 = vadd.f32 0.0, %v6848
    %v6850 = vpop.f32.mrf.mxu0
    %v6851 = vadd.f32 0.0, %v6850
    %6852 = vmatprep.mubr.f32.mxu0 0.0
    %6853 = vmatmul.mubr.f32.gmra.mxu0 %v6771
    %v6854 = vpop.f32.mrf.mxu0
    %v6855 = vadd.f32 0.0, %v6854
    %v6856 = vpop.f32.mrf.mxu0
    %v6857 = vadd.f32 0.0, %v6856
    %6858 = vmatprep.mubr.f32.mxu0 0.0
    %6859 = vmatmul.mubr.f32.gmra.mxu0 %v6774
    %v6860 = vpop.f32.mrf.mxu0
    %v6861 = vadd.f32 0.0, %v6860
    %v6862 = vpop.f32.mrf.mxu0
    %v6863 = vadd.f32 0.0, %v6862
    %6864 = vdwg.mxu0
    %v6865 = vmul.f32 %v6843, 0.5
    %v6866 = vmul.f32 %v6845, 0.5
    %v6867 = vmul.f32 %v6849, 0.5
    %v6868 = vmul.f32 %v6851, 0.5
    %v6869 = vmul.f32 %v6855, 0.5
    %v6870 = vmul.f32 %v6857, 0.5
    %v6871 = vmul.f32 %v6861, 0.5
    %v6872 = vmul.f32 %v6863, 0.5
    %v6873 = vmul.f32 %v6843, 0.70710677
    %v6874 = vmul.f32 %v6845, 0.70710677
    %v6875 = vmul.f32 %v6849, 0.70710677
    %v6876 = vmul.f32 %v6851, 0.70710677
    %v6877 = vmul.f32 %v6855, 0.70710677
    %v6878 = vmul.f32 %v6857, 0.70710677
    %v6879 = vmul.f32 %v6861, 0.70710677
    %v6880 = vmul.f32 %v6863, 0.70710677
    %vm6881 = vcmp.ge.f32.partialorder %v6873, 0.0
    %vm6882 = vcmp.ge.f32.partialorder %v6874, 0.0
    %vm6883 = vcmp.ge.f32.partialorder %v6875, 0.0
    %vm6884 = vcmp.ge.f32.partialorder %v6876, 0.0
    %vm6885 = vcmp.ge.f32.partialorder %v6877, 0.0
    %vm6886 = vcmp.ge.f32.partialorder %v6878, 0.0
    %vm6887 = vcmp.ge.f32.partialorder %v6879, 0.0
    %vm6888 = vcmp.ge.f32.partialorder %v6880, 0.0
    %v6889 = vsel %vm6881, 1.0, -1.0
    %v6890 = vsel %vm6882, 1.0, -1.0
    %v6891 = vsel %vm6883, 1.0, -1.0
    %v6892 = vsel %vm6884, 1.0, -1.0
    %v6893 = vsel %vm6885, 1.0, -1.0
    %v6894 = vsel %vm6886, 1.0, -1.0
    %v6895 = vsel %vm6887, 1.0, -1.0
    %v6896 = vsel %vm6888, 1.0, -1.0
    %v6897 = vand.u32 2147483647, %v6873
    %v6898 = vand.u32 2147483647, %v6874
    %v6899 = vand.u32 2147483647, %v6875
    %v6900 = vand.u32 2147483647, %v6876
    %v6901 = vand.u32 2147483647, %v6877
    %v6902 = vand.u32 2147483647, %v6878
    %v6903 = vand.u32 2147483647, %v6879
    %v6904 = vand.u32 2147483647, %v6880
    %v6905 = vmul.f32 %v6897, 0.3275911
    %v6906 = vmul.f32 %v6898, 0.3275911
    %v6907 = vmul.f32 %v6899, 0.3275911
    %v6908 = vmul.f32 %v6900, 0.3275911
    %v6909 = vmul.f32 %v6901, 0.3275911
    %v6910 = vmul.f32 %v6902, 0.3275911
    %v6911 = vmul.f32 %v6903, 0.3275911
    %v6912 = vmul.f32 %v6904, 0.3275911
    %v6913 = vadd.f32 %v6905, 1.0
    %v6914 = vadd.f32 %v6906, 1.0
    %v6915 = vadd.f32 %v6907, 1.0
    %v6916 = vadd.f32 %v6908, 1.0
    %v6917 = vadd.f32 %v6909, 1.0
    %v6918 = vadd.f32 %v6910, 1.0
    %v6919 = vadd.f32 %v6911, 1.0
    %v6920 = vadd.f32 %v6912, 1.0
    %v6921 = vrcp.pop %v6913
    %v6922 = vmul.f32 1.0, %v6921
    %v6923 = vrcp.pop %v6914
    %v6924 = vmul.f32 1.0, %v6923
    %v6925 = vrcp.pop %v6915
    %v6926 = vmul.f32 1.0, %v6925
    %v6927 = vrcp.pop %v6916
    %v6928 = vmul.f32 1.0, %v6927
    %v6929 = vrcp.pop %v6917
    %v6930 = vmul.f32 1.0, %v6929
    %v6931 = vrcp.pop %v6918
    %v6932 = vmul.f32 1.0, %v6931
    %v6933 = vrcp.pop %v6919
    %v6934 = vmul.f32 1.0, %v6933
    %v6935 = vrcp.pop %v6920
    %v6936 = vmul.f32 1.0, %v6935
    %v6937 = vmul.f32 %v6922, 1.0614054
    %v6938 = vmul.f32 %v6924, 1.0614054
    %v6939 = vmul.f32 %v6926, 1.0614054
    %v6940 = vmul.f32 %v6928, 1.0614054
    %v6941 = vmul.f32 %v6930, 1.0614054
    %v6942 = vmul.f32 %v6932, 1.0614054
    %v6943 = vmul.f32 %v6934, 1.0614054
    %v6944 = vmul.f32 %v6936, 1.0614054
    %v6945 = vsub.f32 %v6937, 1.4531521
    %v6946 = vsub.f32 %v6938, 1.4531521
    %v6947 = vsub.f32 %v6939, 1.4531521
    %v6948 = vsub.f32 %v6940, 1.4531521
    %v6949 = vsub.f32 %v6941, 1.4531521
    %v6950 = vsub.f32 %v6942, 1.4531521
    %v6951 = vsub.f32 %v6943, 1.4531521
    %v6952 = vsub.f32 %v6944, 1.4531521
    %v6953 = vmul.f32 %v6945, %v6922
    %v6954 = vmul.f32 %v6946, %v6924
    %v6955 = vmul.f32 %v6947, %v6926
    %v6956 = vmul.f32 %v6948, %v6928
    %v6957 = vmul.f32 %v6949, %v6930
    %v6958 = vmul.f32 %v6950, %v6932
    %v6959 = vmul.f32 %v6951, %v6934
    %v6960 = vmul.f32 %v6952, %v6936
    %v6961 = vadd.f32 %v6953, 1.4214138
    %v6962 = vadd.f32 %v6954, 1.4214138
    %v6963 = vadd.f32 %v6955, 1.4214138
    %v6964 = vadd.f32 %v6956, 1.4214138
    %v6965 = vadd.f32 %v6957, 1.4214138
    %v6966 = vadd.f32 %v6958, 1.4214138
    %v6967 = vadd.f32 %v6959, 1.4214138
    %v6968 = vadd.f32 %v6960, 1.4214138
    %v6969 = vmul.f32 %v6961, %v6922
    %v6970 = vmul.f32 %v6962, %v6924
    %v6971 = vmul.f32 %v6963, %v6926
    %v6972 = vmul.f32 %v6964, %v6928
    %v6973 = vmul.f32 %v6965, %v6930
    %v6974 = vmul.f32 %v6966, %v6932
    %v6975 = vmul.f32 %v6967, %v6934
    %v6976 = vmul.f32 %v6968, %v6936
    %v6977 = vsub.f32 %v6969, 0.28449672
    %v6978 = vsub.f32 %v6970, 0.28449672
    %v6979 = vsub.f32 %v6971, 0.28449672
    %v6980 = vsub.f32 %v6972, 0.28449672
    %v6981 = vsub.f32 %v6973, 0.28449672
    %v6982 = vsub.f32 %v6974, 0.28449672
    %v6983 = vsub.f32 %v6975, 0.28449672
    %v6984 = vsub.f32 %v6976, 0.28449672
    %v6985 = vmul.f32 %v6977, %v6922
    %v6986 = vmul.f32 %v6978, %v6924
    %v6987 = vmul.f32 %v6979, %v6926
    %v6988 = vmul.f32 %v6980, %v6928
    %v6989 = vmul.f32 %v6981, %v6930
    %v6990 = vmul.f32 %v6982, %v6932
    %v6991 = vmul.f32 %v6983, %v6934
    %v6992 = vmul.f32 %v6984, %v6936
    %v6993 = vadd.f32 %v6985, 0.2548296
    %v6994 = vadd.f32 %v6986, 0.2548296
    %v6995 = vadd.f32 %v6987, 0.2548296
    %v6996 = vadd.f32 %v6988, 0.2548296
    %v6997 = vadd.f32 %v6989, 0.2548296
    %v6998 = vadd.f32 %v6990, 0.2548296
    %v6999 = vadd.f32 %v6991, 0.2548296
    %v7000 = vadd.f32 %v6992, 0.2548296
    %v7001 = vmul.f32 %v6993, %v6922
    %v7002 = vmul.f32 %v6994, %v6924
    %v7003 = vmul.f32 %v6995, %v6926
    %v7004 = vmul.f32 %v6996, %v6928
    %v7005 = vmul.f32 %v6997, %v6930
    %v7006 = vmul.f32 %v6998, %v6932
    %v7007 = vmul.f32 %v6999, %v6934
    %v7008 = vmul.f32 %v7000, %v6936
    %v7009 = vsub.f32 0.0, %v6897
    %v7010 = vsub.f32 0.0, %v6898
    %v7011 = vsub.f32 0.0, %v6899
    %v7012 = vsub.f32 0.0, %v6900
    %v7013 = vsub.f32 0.0, %v6901
    %v7014 = vsub.f32 0.0, %v6902
    %v7015 = vsub.f32 0.0, %v6903
    %v7016 = vsub.f32 0.0, %v6904
    %v7017 = vmul.f32 %v7009, %v6897
    %v7018 = vmul.f32 %v7010, %v6898
    %v7019 = vmul.f32 %v7011, %v6899
    %v7020 = vmul.f32 %v7012, %v6900
    %v7021 = vmul.f32 %v7013, %v6901
    %v7022 = vmul.f32 %v7014, %v6902
    %v7023 = vmul.f32 %v7015, %v6903
    %v7024 = vmul.f32 %v7016, %v6904
    %v7025 = vmul.f32 %v7017, 1.442695
    %v7026 = vpow.pop %v7025
    %v7027 = vmul.f32 %v7018, 1.442695
    %v7028 = vpow.pop %v7027
    %v7029 = vmul.f32 %v7019, 1.442695
    %v7030 = vpow.pop %v7029
    %v7031 = vmul.f32 %v7020, 1.442695
    %v7032 = vpow.pop %v7031
    %v7033 = vmul.f32 %v7021, 1.442695
    %v7034 = vpow.pop %v7033
    %v7035 = vmul.f32 %v7022, 1.442695
    %v7036 = vpow.pop %v7035
    %v7037 = vmul.f32 %v7023, 1.442695
    %v7038 = vpow.pop %v7037
    %v7039 = vmul.f32 %v7024, 1.442695
    %v7040 = vpow.pop %v7039
    %v7041 = vmul.f32 %v7001, %v7026
    %v7042 = vmul.f32 %v7002, %v7028
    %v7043 = vmul.f32 %v7003, %v7030
    %v7044 = vmul.f32 %v7004, %v7032
    %v7045 = vmul.f32 %v7005, %v7034
    %v7046 = vmul.f32 %v7006, %v7036
    %v7047 = vmul.f32 %v7007, %v7038
    %v7048 = vmul.f32 %v7008, %v7040
    %v7049 = vsub.f32 1.0, %v7041
    %v7050 = vsub.f32 1.0, %v7042
    %v7051 = vsub.f32 1.0, %v7043
    %v7052 = vsub.f32 1.0, %v7044
    %v7053 = vsub.f32 1.0, %v7045
    %v7054 = vsub.f32 1.0, %v7046
    %v7055 = vsub.f32 1.0, %v7047
    %v7056 = vsub.f32 1.0, %v7048
    %v7057 = vmul.f32 %v6889, %v7049
    %v7058 = vmul.f32 %v6890, %v7050
    %v7059 = vmul.f32 %v6891, %v7051
    %v7060 = vmul.f32 %v6892, %v7052
    %v7061 = vmul.f32 %v6893, %v7053
    %v7062 = vmul.f32 %v6894, %v7054
    %v7063 = vmul.f32 %v6895, %v7055
    %v7064 = vmul.f32 %v6896, %v7056
    %v7065 = vadd.f32 %v7057, 1.0
    %v7066 = vadd.f32 %v7058, 1.0
    %v7067 = vadd.f32 %v7059, 1.0
    %v7068 = vadd.f32 %v7060, 1.0
    %v7069 = vadd.f32 %v7061, 1.0
    %v7070 = vadd.f32 %v7062, 1.0
    %v7071 = vadd.f32 %v7063, 1.0
    %v7072 = vadd.f32 %v7064, 1.0
    %v7073 = vmul.f32 %v6865, %v7065
    %v7074 = vmul.f32 %v6866, %v7066
    %v7075 = vmul.f32 %v6867, %v7067
    %v7076 = vmul.f32 %v6868, %v7068
    %v7077 = vmul.f32 %v6869, %v7069
    %v7078 = vmul.f32 %v6870, %v7070
    %v7079 = vmul.f32 %v6871, %v7071
    %v7080 = vmul.f32 %v6872, %v7072
    %s7081 = scalar_lea.vmem %s7, 192
    %v7082 = vld [vmem:[%s7081] sm:$0xff]
    %v7083 = vld [vmem:[%s7081 + $0x8] sm:$0xff]
    %v7084 = vld [vmem:[%s7081 + $0x10] sm:$0xff]
    %v7085 = vld [vmem:[%s7081 + $0x18] sm:$0xff]
    %v7086 = vld [vmem:[%s7081 + $0x20] sm:$0xff]
    %v7087 = vld [vmem:[%s7081 + $0x28] sm:$0xff]
    %v7088 = vld [vmem:[%s7081 + $0x30] sm:$0xff]
    %v7089 = vld [vmem:[%s7081 + $0x38] sm:$0xff]
    %v7090 = vld [vmem:[%s7081 + $0x40] sm:$0xff]
    %v7091 = vld [vmem:[%s7081 + $0x48] sm:$0xff]
    %v7092 = vld [vmem:[%s7081 + $0x50] sm:$0xff]
    %v7093 = vld [vmem:[%s7081 + $0x58] sm:$0xff]
    %v7094 = vld [vmem:[%s7081 + $0x60] sm:$0xff]
    %v7095 = vld [vmem:[%s7081 + $0x68] sm:$0xff]
    %v7096 = vld [vmem:[%s7081 + $0x70] sm:$0xff]
    %v7097 = vld [vmem:[%s7081 + $0x78] sm:$0xff]
    %v7098 = vld [vmem:[%s7081 + $0x80] sm:$0xff]
    %v7099 = vld [vmem:[%s7081 + $0x88] sm:$0xff]
    %v7100 = vld [vmem:[%s7081 + $0x90] sm:$0xff]
    %v7101 = vld [vmem:[%s7081 + $0x98] sm:$0xff]
    %v7102 = vld [vmem:[%s7081 + $0xa0] sm:$0xff]
    %v7103 = vld [vmem:[%s7081 + $0xa8] sm:$0xff]
    %v7104 = vld [vmem:[%s7081 + $0xb0] sm:$0xff]
    %v7105 = vld [vmem:[%s7081 + $0xb8] sm:$0xff]
    %v7107 = vsel %vm3545, %v7074, 0
    %v7110 = vsel %vm3545, %v7076, 0
    %v7113 = vsel %vm3545, %v7078, 0
    %v7116 = vsel %vm3545, %v7080, 0
    %7118 = vmatprep.subr.mxu0 0.0
    %7119 = vmatpush1.msra.mxu0 %v7097
    %7120 = vmatprep.subr.mxu0 0.0
    %7121 = vmatpush1.msra.mxu0 %v7096
    %7122 = vmatprep.subr.mxu0 0.0
    %7123 = vmatpush1.msra.mxu0 %v7095
    %7124 = vmatprep.subr.mxu0 0.0
    %7125 = vmatpush1.msra.mxu0 %v7094
    %7126 = vmatprep.subr.mxu0 0.0
    %7127 = vmatpush1.msra.mxu0 %v7093
    %7128 = vmatprep.subr.mxu0 0.0
    %7129 = vmatpush1.msra.mxu0 %v7092
    %7130 = vmatprep.subr.mxu0 0.0
    %7131 = vmatpush1.msra.mxu0 %v7091
    %7132 = vmatprep.subr.mxu0 0.0
    %7133 = vmatpush1.msra.mxu0 %v7090
    %7134 = vmatprep.subr.mxu0 0.0
    %7135 = vmatpush1.msra.mxu0 %v7089
    %7136 = vmatprep.subr.mxu0 0.0
    %7137 = vmatpush1.msra.mxu0 %v7088
    %7138 = vmatprep.subr.mxu0 0.0
    %7139 = vmatpush1.msra.mxu0 %v7087
    %7140 = vmatprep.subr.mxu0 0.0
    %7141 = vmatpush1.msra.mxu0 %v7086
    %7142 = vmatprep.subr.mxu0 0.0
    %7143 = vmatpush1.msra.mxu0 %v7085
    %7144 = vmatprep.subr.mxu0 0.0
    %7145 = vmatpush1.msra.mxu0 %v7084
    %7146 = vmatprep.subr.mxu0 0.0
    %7147 = vmatpush1.msra.mxu0 %v7083
    %7148 = vmatprep.subr.mxu0 0.0
    %7149 = vmatpush1.msra.mxu0 %v7082
    %7150 = vmatprep.subr.mxu0 0.0
    %7151 = vmatpush2.msra.mxu0 0.0
    %7152 = vmatprep.subr.mxu0 0.0
    %7153 = vmatpush2.msra.mxu0 0.0
    %7154 = vmatprep.subr.mxu0 0.0
    %7155 = vmatpush2.msra.mxu0 0.0
    %7156 = vmatprep.subr.mxu0 0.0
    %7157 = vmatpush2.msra.mxu0 0.0
    %7158 = vmatprep.subr.mxu0 0.0
    %7159 = vmatpush2.msra.mxu0 0.0
    %7160 = vmatprep.subr.mxu0 0.0
    %7161 = vmatpush2.msra.mxu0 0.0
    %7162 = vmatprep.subr.mxu0 0.0
    %7163 = vmatpush2.msra.mxu0 0.0
    %7164 = vmatprep.subr.mxu0 0.0
    %7165 = vmatpush2.msra.mxu0 0.0
    %7166 = vmatprep.subr.mxu0 0.0
    %7167 = vmatpush2.msra.mxu0 %v7105
    %7168 = vmatprep.subr.mxu0 0.0
    %7169 = vmatpush2.msra.mxu0 %v7104
    %7170 = vmatprep.subr.mxu0 0.0
    %7171 = vmatpush2.msra.mxu0 %v7103
    %7172 = vmatprep.subr.mxu0 0.0
    %7173 = vmatpush2.msra.mxu0 %v7102
    %7174 = vmatprep.subr.mxu0 0.0
    %7175 = vmatpush2.msra.mxu0 %v7101
    %7176 = vmatprep.subr.mxu0 0.0
    %7177 = vmatpush2.msra.mxu0 %v7100
    %7178 = vmatprep.subr.mxu0 0.0
    %7179 = vmatpush2.msra.mxu0 %v7099
    %7180 = vmatprep.subr.mxu0 0.0
    %7181 = vmatpush2.msra.mxu0 %v7098
    %7182 = vmatprep.mubr.f32.mxu0 %v7107
    %7183 = vmatmul.mubr.f32.gmra.mxu0 %v7073
    %v7184 = vpop.f32.mrf.mxu0
    %v7185 = vadd.f32 0.0, %v7184
    %v7186 = vpop.f32.mrf.mxu0
    %7187 = vmatprep.mubr.f32.mxu0 %v7110
    %7188 = vmatmul.mubr.f32.gmra.mxu0 %v7075
    %v7189 = vpop.f32.mrf.mxu0
    %v7190 = vadd.f32 0.0, %v7189
    %v7191 = vpop.f32.mrf.mxu0
    %7192 = vmatprep.mubr.f32.mxu0 %v7113
    %7193 = vmatmul.mubr.f32.gmra.mxu0 %v7077
    %v7194 = vpop.f32.mrf.mxu0
    %v7195 = vadd.f32 0.0, %v7194
    %v7196 = vpop.f32.mrf.mxu0
    %7197 = vmatprep.mubr.f32.mxu0 %v7116
    %7198 = vmatmul.mubr.f32.gmra.mxu0 %v7079
    %v7199 = vpop.f32.mrf.mxu0
    %v7200 = vadd.f32 0.0, %v7199
    %v7201 = vpop.f32.mrf.mxu0
    %7202 = vdwg.mxu0
    %v7203 = vadd.f32 %v6695, %v7185
    %v7204 = vadd.f32 %v6696, %v7190
    %v7205 = vadd.f32 %v6697, %v7195
    %v7206 = vadd.f32 %v6698, %v7200
    %v7207 = vsel %vm67, %v7203, 0.0
    %7208 = vadd.xlane.f32.xlu0 %v7207
    %v7209 = vpop.xlane.xlu0 %7208
    %v7210 = vsel %vm67, %v7204, 0.0
    %7211 = vadd.xlane.f32.xlu0 %v7210
    %v7212 = vpop.xlane.xlu0 %7211
    %v7213 = vsel %vm67, %v7205, 0.0
    %7214 = vadd.xlane.f32.xlu0 %v7213
    %v7215 = vpop.xlane.xlu0 %7214
    %v7216 = vsel %vm67, %v7206, 0.0
    %7217 = vadd.xlane.f32.xlu0 %v7216
    %v7218 = vpop.xlane.xlu0 %7217
    %v7219 = vmul.f32 %v7209, %v80
    %v7220 = vmul.f32 %v7212, %v80
    %v7221 = vmul.f32 %v7215, %v80
    %v7222 = vmul.f32 %v7218, %v80
    %v7223 = vsub.f32 %v7203, %v7219
    %v7224 = vsub.f32 %v7204, %v7220
    %v7225 = vsub.f32 %v7205, %v7221
    %v7226 = vsub.f32 %v7206, %v7222
    %v7227 = vmul.f32 %v7223, %v7223
    %v7228 = vmul.f32 %v7224, %v7224
    %v7229 = vmul.f32 %v7225, %v7225
    %v7230 = vmul.f32 %v7226, %v7226
    %v7231 = vsel %vm67, %v7227, 0.0
    %7232 = vadd.xlane.f32.xlu0 %v7231
    %v7233 = vpop.xlane.xlu0 %7232
    %v7234 = vsel %vm67, %v7228, 0.0
    %7235 = vadd.xlane.f32.xlu0 %v7234
    %v7236 = vpop.xlane.xlu0 %7235
    %v7237 = vsel %vm67, %v7229, 0.0
    %7238 = vadd.xlane.f32.xlu0 %v7237
    %v7239 = vpop.xlane.xlu0 %7238
    %v7240 = vsel %vm67, %v7230, 0.0
    %7241 = vadd.xlane.f32.xlu0 %v7240
    %v7242 = vpop.xlane.xlu0 %7241
    %v7243 = vmul.f32 %v7233, %v80
    %v7244 = vmul.f32 %v7236, %v80
    %v7245 = vmul.f32 %v7239, %v80
    %v7246 = vmul.f32 %v7242, %v80
    %v7247 = vadd.f32 %v7243, 1e-08
    %v7248 = vadd.f32 %v7244, 1e-08
    %v7249 = vadd.f32 %v7245, 1e-08
    %v7250 = vadd.f32 %v7246, 1e-08
    %v7251 = vrsqrt.pop %v7247
    %v7252 = vrsqrt.pop %v7248
    %v7253 = vrsqrt.pop %v7249
    %v7254 = vrsqrt.pop %v7250
    %v7255 = vmul.f32 %v7223, %v7251
    %v7256 = vmul.f32 %v7224, %v7252
    %v7257 = vmul.f32 %v7225, %v7253
    %v7258 = vmul.f32 %v7226, %v7254
    %v7259 = vld [vmem:[%s8] sm:$0xff]
    %v7260 = vld [vmem:[%s8 + $0x8] sm:$0xff]
    %v7261 = vld [vmem:[%s8 + $0x10] sm:$0xff]
    %v7262 = vld [vmem:[%s8 + $0x18] sm:$0xff]
    %v7263 = vld [vmem:[%s8 + $0x20] sm:$0xff]
    %v7264 = vld [vmem:[%s8 + $0x28] sm:$0xff]
    %v7265 = vld [vmem:[%s9] sm:$0x1]
    %v7267 = vlaneseq
    %v7268 = vshrl.u32 %v7267, 7
    %v7269 = vsub.s32 0, %v7268
    %v7270 = vrot.slane %v7265, %v7269
    %v7273 = vsel %vm67, %v7255, 0
    %v7276 = vsel %vm67, %v7256, 0
    %v7279 = vsel %vm67, %v7257, 0
    %v7282 = vsel %vm67, %v7258, 0
    %7284 = vmatprep.subr.mxu0 0.0
    %7285 = vmatpush1.msra.mxu0 0.0
    %7286 = vmatprep.subr.mxu0 0.0
    %7287 = vmatpush1.msra.mxu0 0.0
    %7288 = vmatprep.subr.mxu0 0.0
    %7289 = vmatpush1.msra.mxu0 0.0
    %7290 = vmatprep.subr.mxu0 0.0
    %7291 = vmatpush1.msra.mxu0 0.0
    %7292 = vmatprep.subr.mxu0 0.0
    %7293 = vmatpush1.msra.mxu0 0.0
    %7294 = vmatprep.subr.mxu0 0.0
    %7295 = vmatpush1.msra.mxu0 0.0
    %7296 = vmatprep.subr.mxu0 0.0
    %7297 = vmatpush1.msra.mxu0 0.0
    %7298 = vmatprep.subr.mxu0 0.0
    %7299 = vmatpush1.msra.mxu0 0.0
    %7300 = vmatprep.subr.mxu0 0.0
    %7301 = vmatpush1.msra.mxu0 0.0
    %7302 = vmatprep.subr.mxu0 0.0
    %7303 = vmatpush1.msra.mxu0 0.0
    %7304 = vmatprep.subr.mxu0 0.0
    %7305 = vmatpush1.msra.mxu0 %v7264
    %7306 = vmatprep.subr.mxu0 0.0
    %7307 = vmatpush1.msra.mxu0 %v7263
    %7308 = vmatprep.subr.mxu0 0.0
    %7309 = vmatpush1.msra.mxu0 %v7262
    %7310 = vmatprep.subr.mxu0 0.0
    %7311 = vmatpush1.msra.mxu0 %v7261
    %7312 = vmatprep.subr.mxu0 0.0
    %7313 = vmatpush1.msra.mxu0 %v7260
    %7314 = vmatprep.subr.mxu0 0.0
    %7315 = vmatpush1.msra.mxu0 %v7259
    %7316 = vmatprep.subr.mxu0 0.0
    %7317 = vmatpush2.msra.mxu0 0.0
    %7318 = vmatprep.subr.mxu0 0.0
    %7319 = vmatpush2.msra.mxu0 0.0
    %7320 = vmatprep.subr.mxu0 0.0
    %7321 = vmatpush2.msra.mxu0 0.0
    %7322 = vmatprep.subr.mxu0 0.0
    %7323 = vmatpush2.msra.mxu0 0.0
    %7324 = vmatprep.subr.mxu0 0.0
    %7325 = vmatpush2.msra.mxu0 0.0
    %7326 = vmatprep.subr.mxu0 0.0
    %7327 = vmatpush2.msra.mxu0 0.0
    %7328 = vmatprep.subr.mxu0 0.0
    %7329 = vmatpush2.msra.mxu0 0.0
    %7330 = vmatprep.subr.mxu0 0.0
    %7331 = vmatpush2.msra.mxu0 0.0
    %7332 = vmatprep.subr.mxu0 0.0
    %7333 = vmatpush2.msra.mxu0 0.0
    %7334 = vmatprep.subr.mxu0 0.0
    %7335 = vmatpush2.msra.mxu0 0.0
    %7336 = vmatprep.subr.mxu0 0.0
    %7337 = vmatpush2.msra.mxu0 0.0
    %7338 = vmatprep.subr.mxu0 0.0
    %7339 = vmatpush2.msra.mxu0 0.0
    %7340 = vmatprep.subr.mxu0 0.0
    %7341 = vmatpush2.msra.mxu0 0.0
    %7342 = vmatprep.subr.mxu0 0.0
    %7343 = vmatpush2.msra.mxu0 0.0
    %7344 = vmatprep.subr.mxu0 0.0
    %7345 = vmatpush2.msra.mxu0 0.0
    %7346 = vmatprep.subr.mxu0 0.0
    %7347 = vmatpush2.msra.mxu0 0.0
    %7348 = vmatprep.mubr.f32.mxu0 0.0
    %7349 = vmatmul.mubr.f32.gmra.mxu0 %v7273
    %v7350 = vpop.f32.mrf.mxu0
    %v7351 = vadd.f32 %v7270, %v7350
    %v7352 = vpop.f32.mrf.mxu0
    %7353 = vmatprep.mubr.f32.mxu0 0.0
    %7354 = vmatmul.mubr.f32.gmra.mxu0 %v7276
    %v7355 = vpop.f32.mrf.mxu0
    %v7356 = vadd.f32 %v7270, %v7355
    %v7357 = vpop.f32.mrf.mxu0
    %7358 = vmatprep.mubr.f32.mxu0 0.0
    %7359 = vmatmul.mubr.f32.gmra.mxu0 %v7279
    %v7360 = vpop.f32.mrf.mxu0
    %v7361 = vadd.f32 %v7270, %v7360
    %v7362 = vpop.f32.mrf.mxu0
    %7363 = vmatprep.mubr.f32.mxu0 0.0
    %7364 = vmatmul.mubr.f32.gmra.mxu0 %v7282
    %v7365 = vpop.f32.mrf.mxu0
    %v7366 = vadd.f32 %v7270, %v7365
    %v7367 = vpop.f32.mrf.mxu0
    %7368 = vdwg.mxu0
    %vm7369 = vcmask 252928
    %v7370 = vsel %vm7369, %v7351, -inf
    %7371 = vmax.xlane.f32.xlu0 %v7370
    %v7372 = vpop.xlane.xlu0 %7371
    %v7373 = vsel %vm7369, %v7356, -inf
    %7374 = vmax.xlane.f32.xlu0 %v7373
    %v7375 = vpop.xlane.xlu0 %7374
    %v7376 = vsel %vm7369, %v7361, -inf
    %7377 = vmax.xlane.f32.xlu0 %v7376
    %v7378 = vpop.xlane.xlu0 %7377
    %v7379 = vsel %vm7369, %v7366, -inf
    %7380 = vmax.xlane.f32.xlu0 %v7379
    %v7381 = vpop.xlane.xlu0 %7380
    %v7382 = vsub.f32 %v7351, %v7372
    %v7383 = vsub.f32 %v7356, %v7375
    %v7384 = vsub.f32 %v7361, %v7378
    %v7385 = vsub.f32 %v7366, %v7381
    %v7386 = vmul.f32 %v7382, 1.442695
    %v7387 = vpow.pop %v7386
    %v7388 = vmul.f32 %v7383, 1.442695
    %v7389 = vpow.pop %v7388
    %v7390 = vmul.f32 %v7384, 1.442695
    %v7391 = vpow.pop %v7390
    %v7392 = vmul.f32 %v7385, 1.442695
    %v7393 = vpow.pop %v7392
    %v7394 = vsel %vm7369, %v7387, 0.0
    %7395 = vadd.xlane.f32.xlu0 %v7394
    %v7396 = vpop.xlane.xlu0 %7395
    %v7397 = vsel %vm7369, %v7389, 0.0
    %7398 = vadd.xlane.f32.xlu0 %v7397
    %v7399 = vpop.xlane.xlu0 %7398
    %v7400 = vsel %vm7369, %v7391, 0.0
    %7401 = vadd.xlane.f32.xlu0 %v7400
    %v7402 = vpop.xlane.xlu0 %7401
    %v7403 = vsel %vm7369, %v7393, 0.0
    %7404 = vadd.xlane.f32.xlu0 %v7403
    %v7405 = vpop.xlane.xlu0 %7404
    %v7406 = vlog2.pop %v7396
    %v7407 = vmul.f32 %v7406, 0.6931472
    %v7408 = vlog2.pop %v7399
    %v7409 = vmul.f32 %v7408, 0.6931472
    %v7410 = vlog2.pop %v7402
    %v7411 = vmul.f32 %v7410, 0.6931472
    %v7412 = vlog2.pop %v7405
    %v7413 = vmul.f32 %v7412, 0.6931472
    %v7414 = vadd.f32 %v7407, %v7372
    %v7415 = vadd.f32 %v7409, %v7375
    %v7416 = vadd.f32 %v7411, %v7378
    %v7417 = vadd.f32 %v7413, %v7381
    %v7418 = vld [vmem:[%s10] sm:$0xff]
    %v7419 = vld [vmem:[%s10 + $0x8] sm:$0xff]
    %v7420 = vld [vmem:[%s10 + $0x10] sm:$0xff]
    %v7421 = vld [vmem:[%s10 + $0x18] sm:$0xff]
    %v7422 = vmul.f32 %v7351, %v7418
    %v7423 = vmul.f32 %v7356, %v7419
    %v7424 = vmul.f32 %v7361, %v7420
    %v7425 = vmul.f32 %v7366, %v7421
    %v7426 = vsel %vm7369, %v7422, 0.0
    %7427 = vadd.xlane.f32.xlu0 %v7426
    %v7428 = vpop.xlane.xlu0 %7427
    %v7429 = vsel %vm7369, %v7423, 0.0
    %7430 = vadd.xlane.f32.xlu0 %v7429
    %v7431 = vpop.xlane.xlu0 %7430
    %v7432 = vsel %vm7369, %v7424, 0.0
    %7433 = vadd.xlane.f32.xlu0 %v7432
    %v7434 = vpop.xlane.xlu0 %7433
    %v7435 = vsel %vm7369, %v7425, 0.0
    %7436 = vadd.xlane.f32.xlu0 %v7435
    %v7437 = vpop.xlane.xlu0 %7436
    %v7438 = vsel %vm7369, %v7418, 0.0
    %7439 = vadd.xlane.f32.xlu0 %v7438
    %v7440 = vpop.xlane.xlu0 %7439
    %v7441 = vsel %vm7369, %v7419, 0.0
    %7442 = vadd.xlane.f32.xlu0 %v7441
    %v7443 = vpop.xlane.xlu0 %7442
    %v7444 = vsel %vm7369, %v7420, 0.0
    %7445 = vadd.xlane.f32.xlu0 %v7444
    %v7446 = vpop.xlane.xlu0 %7445
    %v7447 = vsel %vm7369, %v7421, 0.0
    %7448 = vadd.xlane.f32.xlu0 %v7447
    %v7449 = vpop.xlane.xlu0 %7448
    %v7450 = vsub.f32 %v7414, %v7428
    %v7451 = vsub.f32 %v7415, %v7431
    %v7452 = vsub.f32 %v7416, %v7434
    %v7453 = vsub.f32 %v7417, %v7437
    %v7454 = vmul.f32 %v7450, %v7440
    %v7455 = vmul.f32 %v7451, %v7443
    %v7456 = vmul.f32 %v7452, %v7446
    %v7457 = vmul.f32 %v7453, %v7449
    %vm7458 = vcmask 7168
    %v7459 = vsel %vm7458, %v7454, 0.0
    %v7460 = vsel %vm7458, %v7455, 0.0
    %v7461 = vadd.f32 %v7459, %v7460
    %v7462 = vsel %vm7458, %v7456, 0.0
    %v7463 = vadd.f32 %v7461, %v7462
    %v7464 = vsel %vm7458, %v7457, 0.0
    %v7465 = vadd.f32 %v7463, %v7464
    %7466 = vadd.xlane.f32.xlu0 %v7465
    %v7467 = vpop.xlane.xlu0 %7466
    %v7468 = vrot.slane %v7467, 4
    %v7469 = vadd.f32 %v7467, %v7468
    %v7470 = vrot.slane %v7469, 2
    %v7471 = vadd.f32 %v7469, %v7470
    %v7472 = vrot.slane %v7471, 1
    %v7473 = vadd.f32 %v7471, %v7472
    %s7474 = vtos %v7473
    %s7475 = scalar_lea.smem [#allocation2], 0
    %7476 = sst [smem:[%s7475]] %s7474
    %v7477 = vsel %vm7458, %v7440, 0.0
    %v7478 = vsel %vm7458, %v7443, 0.0
    %v7479 = vadd.f32 %v7477, %v7478
    %v7480 = vsel %vm7458, %v7446, 0.0
    %v7481 = vadd.f32 %v7479, %v7480
    %v7482 = vsel %vm7458, %v7449, 0.0
    %v7483 = vadd.f32 %v7481, %v7482
    %7484 = vadd.xlane.f32.xlu0 %v7483
    %v7485 = vpop.xlane.xlu0 %7484
    %v7486 = vrot.slane %v7485, 4
    %v7487 = vadd.f32 %v7485, %v7486
    %v7488 = vrot.slane %v7487, 2
    %v7489 = vadd.f32 %v7487, %v7488
    %v7490 = vrot.slane %v7489, 1
    %v7491 = vadd.f32 %v7489, %v7490
    %s7492 = vtos %v7491
    %s7493 = scalar_lea.smem [#allocation4], 0
    %7494 = sst [smem:[%s7493]] %s7492
    // Predicated region
    $region46: #{transformer_forward.1} parent=1 // pred_check
      _
    $region47: #{transformer_forward.1} parent=1 // pred_check_branch
      %7496 = sbr.rel (0) target = $region49
    $region48: #{transformer_forward.1} parent=1 // pred_region
      %s7498 = ssub.s32 16, 16
      %7499 = vsyncadd [#allocation3], %s7498
      %7502 = dma.smem_to_hbm [#allocation2], 16, %s11, [#allocation3]
    $region49: #{transformer_forward.1} parent=1 // pred_fallthru
      _
    // Predicated region
    $region50: #{transformer_forward.1} parent=1 // pred_check
      _
    $region51: #{transformer_forward.1} parent=1 // pred_check_branch
      %7504 = sbr.rel (0) target = $region53
    $region52: #{transformer_forward.1} parent=1 // pred_region
      %s7506 = ssub.s32 16, 16
      %7507 = vsyncadd [#allocation5], %s7506
      %7510 = dma.smem_to_hbm [#allocation4], 16, %s12, [#allocation5]
    $region53: #{transformer_forward.1} parent=1 // pred_fallthru
      _
    // Predicated region
    $region54: #{transformer_forward.1} parent=1 // pred_check
      _
    $region55: #{transformer_forward.1} parent=1 // pred_check_branch
      %7512 = sbr.rel (0) target = $region57
    $region56: #{transformer_forward.1} parent=1 // pred_region
      %7513 = dma.done [#allocation3], 16
    $region57: #{transformer_forward.1} parent=1 // pred_fallthru
      _
    // Predicated region
    $region58: #{transformer_forward.1} parent=1 // pred_check
      _
    $region59: #{transformer_forward.1} parent=1 // pred_check_branch
      %7515 = sbr.rel (0) target = $region61
    $region60: #{transformer_forward.1} parent=1 // pred_region
      %7516 = dma.done [#allocation5], 16
    $region61: #{transformer_forward.1} parent=1 // pred_fallthru
      _
    %7517 = sfence
    %7518 = vsyncpa [#allocation3], 1
    %7519 = vsyncpa [#allocation5], 1

</llo_original>
